<compile_context>
chip_gen: v7x
topology: tpu7x:2x2x1
jax: 0.10.0
libtpu: 0.0.40
codegen_flags: <defaults>
</compile_context>

<pallas_src>
import jax
import jax.numpy as jnp
from jax import lax
from jax.experimental import pallas as pl
from jax.experimental.pallas import tpu as pltpu

_VMEM = pl.BlockSpec(memory_space=pltpu.MemorySpace.VMEM)
_BN_EPS = 1e-5


# --------------------------- parameter handling -----------------------------

def init_params(key, latent_dim, img_size, img_channels=3, n_filters=16, n_blocks=3):
    """Random parameters in PyTorch layouts (Linear, BatchNorm2d, ConvTranspose2d)."""
    init_size = img_size // 2 ** n_blocks
    feat = n_filters * init_size * init_size

    params = {"n_filters": n_filters, "init_size": init_size}
    key, k1, k2 = jax.random.split(key, 3)
    params["l1_w"] = 0.1 * jax.random.normal(k1, (latent_dim, feat), jnp.float32)
    params["l1_b"] = 0.1 * jax.random.normal(k2, (feat,), jnp.float32)

    blocks = []
    for i in range(n_blocks):
        cin = n_filters * 2 ** i
        cout = img_channels if i == n_blocks - 1 else 2 * cin
        key, ka, kb, kc, kd = jax.random.split(key, 5)
        blocks.append(dict(
            bn_gamma=1.0 + 0.1 * jax.random.normal(ka, (cin,), jnp.float32),
            bn_beta=0.1 * jax.random.normal(kb, (cin,), jnp.float32),
            w=0.1 * jax.random.normal(kc, (cin, cout, 3, 3), jnp.float32),  # ConvT layout
            b=0.1 * jax.random.normal(kd, (cout,), jnp.float32),
        ))
    params["blocks"] = blocks
    return params


def prepare_params(params):
    """One-time repack of PyTorch-layout params into the fused-kernel layout.

    * l1 weight/bias columns permuted from (c, h, w) order (the NCHW .view) to (h, w, c)
      so the in-kernel activations are NHWC with no transpose.
    * each ConvTranspose2d(k=3, s=2, p=1, op=1) weight is split into 4 output-parity phases
      and packed into TWO N-stacked matrices (even / odd output rows), spatially flipped,
      zero-filled where a tap is unused, cast to bf16 for the MXU. The bias is tiled twice
      along N to match the fused (·, 2*Cout) results.
    """
    nf, init = params["n_filters"], params["init_size"]
    latent = params["l1_w"].shape[0]

    w4 = params["l1_w"].reshape(latent, nf, init, init)
    l1_w = jnp.transpose(w4, (0, 2, 3, 1)).reshape(latent, init * init * nf)
    b3 = params["l1_b"].reshape(nf, init, init)
    l1_b = jnp.transpose(b3, (1, 2, 0)).reshape(1, init * init * nf)

    blocks = []
    for blk in params["blocks"]:
        w_pt = blk["w"]                                        # (Cin, Cout, 3, 3)
        cin, cout = w_pt.shape[0], w_pt.shape[1]
        wf = jnp.transpose(w_pt, (2, 3, 0, 1))[::-1, ::-1]     # wf[ky,kx] = w_pt[:,:,2-ky,2-kx]
        zero = jnp.zeros((cin, cout), jnp.float32)

        # even output rows: K = [a00 ; a01], N columns = [ ee | eo ]
        col_ee = jnp.concatenate([wf[1, 1], zero], axis=0)                         # (2Cin, Cout)
        col_eo = jnp.concatenate([wf[1, 0], wf[1, 2]], axis=0)                     # (2Cin, Cout)
        w_even = jnp.concatenate([col_ee, col_eo], axis=1)                         # (2Cin, 2Cout)

        # odd output rows: K = [a00 ; a01 ; a10 ; a11], N columns = [ oe | oo ]
        col_oe = jnp.concatenate([wf[0, 1], zero, wf[2, 1], zero], axis=0)         # (4Cin, Cout)
        col_oo = jnp.concatenate([wf[0, 0], wf[0, 2], wf[2, 0], wf[2, 2]], axis=0)  # (4Cin, Cout)
        w_odd = jnp.concatenate([col_oe, col_oo], axis=1)                          # (4Cin, 2Cout)

        blocks.append(dict(
            gamma=blk["bn_gamma"].reshape(1, cin),
            beta=blk["bn_beta"].reshape(1, cin),
            w_even=w_even.astype(jnp.bfloat16),
            w_odd=w_odd.astype(jnp.bfloat16),
            bias2=jnp.concatenate([blk["b"], blk["b"]]).reshape(1, 2 * cout),
        ))
    return dict(l1_w=l1_w, l1_b=l1_b, blocks=blocks)


# ------------------------------ fused forward --------------------------------

@jax.jit
def dcgan_generator_forward(kparams, z):
    B = z.shape[0]
    l1_w, l1_b, blocks = kparams["l1_w"], kparams["l1_b"], kparams["blocks"]
    n_blocks = len(blocks)
    cins = [int(b["gamma"].shape[1]) for b in blocks]
    couts = [int(b["bias2"].shape[1]) // 2 for b in blocks]
    nf = cins[0]
    feat = int(l1_w.shape[1])
    init = int(round((feat // nf) ** 0.5))
    img_c = couts[-1]
    img = init * 2 ** n_blocks

    # 3x3 identity (broadcast over batch) for the NCHW-native lane-dense store.
    eye_b = jnp.broadcast_to(jnp.eye(img_c, dtype=jnp.float32), (B, img_c, img_c))

    def kernel(*refs):
        z_ref, l1w_ref, l1b_ref, eye_ref = refs[:4]
        o_ref = refs[-1]
        brefs = refs[4:-1]

        # ---- l1: ONE matmul; weight columns are pre-permuted to (h, w, c) order, so the
        #      result is already NHWC-ordered along the lane dim.
        x2 = jnp.dot(z_ref[...], l1w_ref[...],
                     preferred_element_type=jnp.float32) + l1b_ref[...]      # (B, feat)
        # lane-safe assembly of (B, init, init, nf): aligned lane slices + tiny concats
        pix = [x2[:, hw * nf:(hw + 1) * nf].reshape(B, 1, 1, nf)
               for hw in range(init * init)]
        rows = [jnp.concatenate(pix[h * init:(h + 1) * init], axis=2) if init > 1
                else pix[h * init] for h in range(init)]
        x = jnp.concatenate(rows, axis=1) if init > 1 else rows[0]           # (B,init,init,nf) f32

        H = W = init
        for bi in range(n_blocks):
            g_ref, be_ref, wev_ref, wod_ref, cb_ref = brefs[5 * bi:5 * bi + 5]
            Cin, Cout = cins[bi], couts[bi]
            M = B * H * W
            inv_m = 1.0 / M

            # ---- BatchNorm2d (training-mode biased batch stats), single pass over x
            xf = x.reshape(M, Cin)
            mean = jnp.sum(xf, axis=0, keepdims=True) * inv_m
            ex2 = jnp.sum(xf * xf, axis=0, keepdims=True) * inv_m
            var = ex2 - mean * mean
            scale = g_ref[...] * lax.rsqrt(var + _BN_EPS)
            shift = be_ref[...] - mean * scale
            xb = x * scale.reshape(1, 1, 1, Cin) + shift.reshape(1, 1, 1, Cin)

            # ---- taps from ONE bottom/right zero-padded buffer; cast to bf16 once per tap,
            #      BEFORE any K-concatenation (no f32 concat operands, no redundant casts).
            zc = jnp.zeros((B, H, 1, Cin), jnp.float32)
            zr = jnp.zeros((B, 1, W + 1, Cin), jnp.float32)
            xp = jnp.concatenate([jnp.concatenate([xb, zc], axis=2), zr], axis=1)  # (B,H+1,W+1,Cin)
            a00 = xp[:, :H, :W, :].reshape(M, Cin).astype(jnp.bfloat16)
            a01 = xp[:, :H, 1:, :].reshape(M, Cin).astype(jnp.bfloat16)
            a10 = xp[:, 1:, :W, :].reshape(M, Cin).astype(jnp.bfloat16)
            a11 = xp[:, 1:, 1:, :].reshape(M, Cin).astype(jnp.bfloat16)

            bias2 = cb_ref[...]                                   # (1, 2*Cout) f32

            # ---- ConvTranspose2d(k3,s2,p1,op1): 2 fused phase matmuls (N-stacked weights)
            # even output rows: columns [ out[2i,2j] | out[2i,2j+1] ]
            r_even = jnp.dot(jnp.concatenate([a00, a01], axis=1), wev_ref[...],
                             preferred_element_type=jnp.float32) + bias2      # (M, 2Cout)
            # odd output rows:  columns [ out[2i+1,2j] | out[2i+1,2j+1] ]
            r_odd = jnp.dot(jnp.concatenate([a00, a01, a10, a11], axis=1), wod_ref[...],
                            preferred_element_type=jnp.float32) + bias2       # (M, 2Cout)

            # ---- interleave the phases back into (B, 2H, 2W, Cout)
            # (lane-preserving slices/reshapes/concats only)
            ee = r_even[:, :Cout].reshape(B, H, W, 1, Cout)
            eo = r_even[:, Cout:].reshape(B, H, W, 1, Cout)
            oe = r_odd[:, :Cout].reshape(B, H, W, 1, Cout)
            oo = r_odd[:, Cout:].reshape(B, H, W, 1, Cout)
            top = jnp.concatenate([ee, eo], axis=3).reshape(-1, Cout).reshape(B, H, 1, 2 * W, Cout)
            bot = jnp.concatenate([oe, oo], axis=3).reshape(-1, Cout).reshape(B, H, 1, 2 * W, Cout)
            x = jnp.concatenate([top, bot], axis=2).reshape(B, 2 * H, 2 * W, Cout)
            H, W = 2 * H, 2 * W

        # ---- NCHW-native, lane-dense store: batched identity NT-matmul (MXU) transposes the
        #      two minor dims; tanh runs AFTER the transpose on the small (B, img_c, H*W) slab.
        y3 = x.reshape(B, H * W, img_c)                           # (B, 256, 3)
        y_cm = lax.dot_general(eye_ref[...], y3, (((2,), (2,)), ((0,), (0,))),
                               preferred_element_type=jnp.float32)  # (B, img_c, H*W)
        o_ref[...] = jnp.tanh(y_cm)

    flat = [z, l1_w, l1_b, eye_b]
    for blk in blocks:
        flat += [blk["gamma"], blk["beta"], blk["w_even"], blk["w_odd"], blk["bias2"]]

    out = pl.pallas_call(
        kernel,
        out_shape=jax.ShapeDtypeStruct((B, img_c, img * img), jnp.float32),
        in_specs=[_VMEM] * len(flat),
        out_specs=_VMEM,
    )(*flat)
    return out.reshape(B, img_c, img, img)


# --------------------------------- main ---------------------------------------

if __name__ == "__main__":
    latent_dim, img_size, img_channels = 32, 16, 3
    n_filters, n_blocks, batch = 16, 3, 2

    key = jax.random.PRNGKey(0)
    kp, kz = jax.random.split(key)
    params = init_params(kp, latent_dim, img_size, img_channels, n_filters, n_blocks)
    kparams = prepare_params(params)
    z = jax.random.normal(kz, (batch, latent_dim), jnp.float32)

    imgs = dcgan_generator_forward(kparams, z)
    imgs = jax.block_until_ready(imgs)

    assert imgs.shape == (batch, img_channels, img_size, img_size), imgs.shape
    assert bool(jnp.all(jnp.isfinite(imgs)))
    assert bool(jnp.all(jnp.abs(imgs) <= 1.0))  # tanh output range
    print("KERNEL_OK")
</pallas_src>

<mosaic_0001>
module attributes {stable_mosaic.version = 11 : i64} {
  func.func @kernel(%arg0: memref<2x32xf32, #tpu.memory_space<vmem>>, %arg1: memref<32x64xf32, #tpu.memory_space<vmem>>, %arg2: memref<1x64xf32, #tpu.memory_space<vmem>>, %arg3: memref<2x3x3xf32, #tpu.memory_space<vmem>>, %arg4: memref<1x16xf32, #tpu.memory_space<vmem>>, %arg5: memref<1x16xf32, #tpu.memory_space<vmem>>, %arg6: memref<32x64xbf16, #tpu.memory_space<vmem>>, %arg7: memref<64x64xbf16, #tpu.memory_space<vmem>>, %arg8: memref<1x64xf32, #tpu.memory_space<vmem>>, %arg9: memref<1x32xf32, #tpu.memory_space<vmem>>, %arg10: memref<1x32xf32, #tpu.memory_space<vmem>>, %arg11: memref<64x128xbf16, #tpu.memory_space<vmem>>, %arg12: memref<128x128xbf16, #tpu.memory_space<vmem>>, %arg13: memref<1x128xf32, #tpu.memory_space<vmem>>, %arg14: memref<1x64xf32, #tpu.memory_space<vmem>>, %arg15: memref<1x64xf32, #tpu.memory_space<vmem>>, %arg16: memref<128x6xbf16, #tpu.memory_space<vmem>>, %arg17: memref<256x6xbf16, #tpu.memory_space<vmem>>, %arg18: memref<1x6xf32, #tpu.memory_space<vmem>>, %arg19: memref<2x3x256xf32, #tpu.memory_space<vmem>>) attributes {dimension_semantics = [], scalar_prefetch = 0 : i64, scratch_operands = 0 : i64, tpu.core_type = #tpu.core_type<tc>} {
    %c0 = arith.constant 0 : index
    %c0_0 = arith.constant 0 : index
    %0 = vector.load %arg0[%c0, %c0_0] : memref<2x32xf32, #tpu.memory_space<vmem>>, vector<2x32xf32>
    %c0_1 = arith.constant 0 : index
    %c0_2 = arith.constant 0 : index
    %1 = vector.load %arg1[%c0_1, %c0_2] : memref<32x64xf32, #tpu.memory_space<vmem>>, vector<32x64xf32>
    %cst = arith.constant dense<0.000000e+00> : vector<2x64xf32>
    %2 = tpu.matmul %0, %1, %cst {dimension_numbers = #tpu.dot_dimension_numbers<[1], [0], [0], [1], [0, 0, 1, 1], [], []>} : vector<2x32xf32>, vector<32x64xf32>, vector<2x64xf32> -> vector<2x64xf32>
    %c0_3 = arith.constant 0 : index
    %c0_4 = arith.constant 0 : index
    %3 = vector.load %arg2[%c0_3, %c0_4] : memref<1x64xf32, #tpu.memory_space<vmem>>, vector<1x64xf32>
    %4 = vector.broadcast %3 : vector<1x64xf32> to vector<2x64xf32>
    %5 = arith.addf %2, %4 : vector<2x64xf32>
    %6 = vector.extract_strided_slice %5 {offsets = [0, 0], sizes = [2, 16], strides = [1, 1]} : vector<2x64xf32> to vector<2x16xf32>
    %7 = vector.shape_cast %6 : vector<2x16xf32> to vector<2x1x1x16xf32>
    %8 = vector.extract_strided_slice %5 {offsets = [0, 16], sizes = [2, 16], strides = [1, 1]} : vector<2x64xf32> to vector<2x16xf32>
    %9 = vector.shape_cast %8 : vector<2x16xf32> to vector<2x1x1x16xf32>
    %10 = vector.extract_strided_slice %5 {offsets = [0, 32], sizes = [2, 16], strides = [1, 1]} : vector<2x64xf32> to vector<2x16xf32>
    %11 = vector.shape_cast %10 : vector<2x16xf32> to vector<2x1x1x16xf32>
    %12 = vector.extract_strided_slice %5 {offsets = [0, 48], sizes = [2, 16], strides = [1, 1]} : vector<2x64xf32> to vector<2x16xf32>
    %13 = vector.shape_cast %12 : vector<2x16xf32> to vector<2x1x1x16xf32>
    %14 = tpu.concatenate %7, %9 in 2 : vector<2x1x1x16xf32>, vector<2x1x1x16xf32> -> vector<2x1x2x16xf32>
    %15 = tpu.concatenate %11, %13 in 2 : vector<2x1x1x16xf32>, vector<2x1x1x16xf32> -> vector<2x1x2x16xf32>
    %16 = tpu.concatenate %14, %15 in 1 : vector<2x1x2x16xf32>, vector<2x1x2x16xf32> -> vector<2x2x2x16xf32>
    %17 = vector.shape_cast %16 : vector<2x2x2x16xf32> to vector<8x16xf32>
    %cst_5 = arith.constant dense<0.000000e+00> : vector<16xf32>
    %18 = vector.multi_reduction <add>, %17, %cst_5 [0] : vector<8x16xf32> to vector<16xf32>
    %19 = vector.shape_cast %18 : vector<16xf32> to vector<1x16xf32>
    %cst_6 = arith.constant 1.250000e-01 : f32
    %20 = vector.broadcast %cst_6 : f32 to vector<1x16xf32>
    %21 = arith.mulf %19, %20 : vector<1x16xf32>
    %22 = arith.mulf %17, %17 : vector<8x16xf32>
    %cst_7 = arith.constant dense<0.000000e+00> : vector<16xf32>
    %23 = vector.multi_reduction <add>, %22, %cst_7 [0] : vector<8x16xf32> to vector<16xf32>
    %24 = vector.shape_cast %23 : vector<16xf32> to vector<1x16xf32>
    %cst_8 = arith.constant 1.250000e-01 : f32
    %25 = vector.broadcast %cst_8 : f32 to vector<1x16xf32>
    %26 = arith.mulf %24, %25 : vector<1x16xf32>
    %27 = arith.mulf %21, %21 : vector<1x16xf32>
    %28 = arith.subf %26, %27 : vector<1x16xf32>
    %c0_9 = arith.constant 0 : index
    %c0_10 = arith.constant 0 : index
    %29 = vector.load %arg4[%c0_9, %c0_10] : memref<1x16xf32, #tpu.memory_space<vmem>>, vector<1x16xf32>
    %cst_11 = arith.constant 9.99999974E-6 : f32
    %30 = vector.broadcast %cst_11 : f32 to vector<1x16xf32>
    %31 = arith.addf %28, %30 : vector<1x16xf32>
    %32 = math.rsqrt %31 : vector<1x16xf32>
    %33 = arith.mulf %29, %32 : vector<1x16xf32>
    %c0_12 = arith.constant 0 : index
    %c0_13 = arith.constant 0 : index
    %34 = vector.load %arg5[%c0_12, %c0_13] : memref<1x16xf32, #tpu.memory_space<vmem>>, vector<1x16xf32>
    %35 = arith.mulf %21, %33 : vector<1x16xf32>
    %36 = arith.subf %34, %35 : vector<1x16xf32>
    %37 = vector.shape_cast %33 : vector<1x16xf32> to vector<1x1x1x16xf32>
    %38 = vector.broadcast %37 : vector<1x1x1x16xf32> to vector<2x2x2x16xf32>
    %39 = arith.mulf %16, %38 : vector<2x2x2x16xf32>
    %40 = vector.shape_cast %36 : vector<1x16xf32> to vector<1x1x1x16xf32>
    %41 = vector.broadcast %40 : vector<1x1x1x16xf32> to vector<2x2x2x16xf32>
    %42 = arith.addf %39, %41 : vector<2x2x2x16xf32>
    %cst_14 = arith.constant 0.000000e+00 : f32
    %43 = vector.broadcast %cst_14 : f32 to vector<2x2x1x16xf32>
    %cst_15 = arith.constant 0.000000e+00 : f32
    %44 = vector.broadcast %cst_15 : f32 to vector<2x1x3x16xf32>
    %45 = tpu.concatenate %42, %43 in 2 : vector<2x2x2x16xf32>, vector<2x2x1x16xf32> -> vector<2x2x3x16xf32>
    %46 = tpu.concatenate %45, %44 in 1 : vector<2x2x3x16xf32>, vector<2x1x3x16xf32> -> vector<2x3x3x16xf32>
    %47 = vector.extract_strided_slice %46 {offsets = [0, 0, 0, 0], sizes = [2, 2, 2, 16], strides = [1, 1, 1, 1]} : vector<2x3x3x16xf32> to vector<2x2x2x16xf32>
    %48 = vector.shape_cast %47 : vector<2x2x2x16xf32> to vector<8x16xf32>
    %49 = arith.truncf %48 : vector<8x16xf32> to vector<8x16xbf16>
    %50 = vector.extract_strided_slice %46 {offsets = [0, 0, 1, 0], sizes = [2, 2, 2, 16], strides = [1, 1, 1, 1]} : vector<2x3x3x16xf32> to vector<2x2x2x16xf32>
    %51 = vector.shape_cast %50 : vector<2x2x2x16xf32> to vector<8x16xf32>
    %52 = arith.truncf %51 : vector<8x16xf32> to vector<8x16xbf16>
    %53 = vector.extract_strided_slice %46 {offsets = [0, 1, 0, 0], sizes = [2, 2, 2, 16], strides = [1, 1, 1, 1]} : vector<2x3x3x16xf32> to vector<2x2x2x16xf32>
    %54 = vector.shape_cast %53 : vector<2x2x2x16xf32> to vector<8x16xf32>
    %55 = arith.truncf %54 : vector<8x16xf32> to vector<8x16xbf16>
    %56 = vector.extract_strided_slice %46 {offsets = [0, 1, 1, 0], sizes = [2, 2, 2, 16], strides = [1, 1, 1, 1]} : vector<2x3x3x16xf32> to vector<2x2x2x16xf32>
    %57 = vector.shape_cast %56 : vector<2x2x2x16xf32> to vector<8x16xf32>
    %58 = arith.truncf %57 : vector<8x16xf32> to vector<8x16xbf16>
    %c0_16 = arith.constant 0 : index
    %c0_17 = arith.constant 0 : index
    %59 = vector.load %arg8[%c0_16, %c0_17] : memref<1x64xf32, #tpu.memory_space<vmem>>, vector<1x64xf32>
    %60 = tpu.concatenate %49, %52 in 1 : vector<8x16xbf16>, vector<8x16xbf16> -> vector<8x32xbf16>
    %c0_18 = arith.constant 0 : index
    %c0_19 = arith.constant 0 : index
    %61 = vector.load %arg6[%c0_18, %c0_19] : memref<32x64xbf16, #tpu.memory_space<vmem>>, vector<32x64xbf16>
    %cst_20 = arith.constant dense<0.000000e+00> : vector<8x64xf32>
    %62 = tpu.matmul %60, %61, %cst_20 {dimension_numbers = #tpu.dot_dimension_numbers<[1], [0], [0], [1], [0, 0, 1, 1], [], []>} : vector<8x32xbf16>, vector<32x64xbf16>, vector<8x64xf32> -> vector<8x64xf32>
    %63 = vector.broadcast %59 : vector<1x64xf32> to vector<8x64xf32>
    %64 = arith.addf %62, %63 : vector<8x64xf32>
    %65 = tpu.concatenate %49, %52, %55, %58 in 1 : vector<8x16xbf16>, vector<8x16xbf16>, vector<8x16xbf16>, vector<8x16xbf16> -> vector<8x64xbf16>
    %c0_21 = arith.constant 0 : index
    %c0_22 = arith.constant 0 : index
    %66 = vector.load %arg7[%c0_21, %c0_22] : memref<64x64xbf16, #tpu.memory_space<vmem>>, vector<64x64xbf16>
    %cst_23 = arith.constant dense<0.000000e+00> : vector<8x64xf32>
    %67 = tpu.matmul %65, %66, %cst_23 {dimension_numbers = #tpu.dot_dimension_numbers<[1], [0], [0], [1], [0, 0, 1, 1], [], []>} : vector<8x64xbf16>, vector<64x64xbf16>, vector<8x64xf32> -> vector<8x64xf32>
    %68 = vector.broadcast %59 : vector<1x64xf32> to vector<8x64xf32>
    %69 = arith.addf %67, %68 : vector<8x64xf32>
    %70 = vector.extract_strided_slice %64 {offsets = [0, 0], sizes = [8, 32], strides = [1, 1]} : vector<8x64xf32> to vector<8x32xf32>
    %71 = vector.shape_cast %70 : vector<8x32xf32> to vector<2x2x2x1x32xf32>
    %72 = vector.extract_strided_slice %64 {offsets = [0, 32], sizes = [8, 32], strides = [1, 1]} : vector<8x64xf32> to vector<8x32xf32>
    %73 = vector.shape_cast %72 : vector<8x32xf32> to vector<2x2x2x1x32xf32>
    %74 = vector.extract_strided_slice %69 {offsets = [0, 0], sizes = [8, 32], strides = [1, 1]} : vector<8x64xf32> to vector<8x32xf32>
    %75 = vector.shape_cast %74 : vector<8x32xf32> to vector<2x2x2x1x32xf32>
    %76 = vector.extract_strided_slice %69 {offsets = [0, 32], sizes = [8, 32], strides = [1, 1]} : vector<8x64xf32> to vector<8x32xf32>
    %77 = vector.shape_cast %76 : vector<8x32xf32> to vector<2x2x2x1x32xf32>
    %78 = tpu.concatenate %71, %73 in 3 : vector<2x2x2x1x32xf32>, vector<2x2x2x1x32xf32> -> vector<2x2x2x2x32xf32>
    %79 = vector.shape_cast %78 : vector<2x2x2x2x32xf32> to vector<16x32xf32>
    %80 = vector.shape_cast %79 : vector<16x32xf32> to vector<2x2x1x4x32xf32>
    %81 = tpu.concatenate %75, %77 in 3 : vector<2x2x2x1x32xf32>, vector<2x2x2x1x32xf32> -> vector<2x2x2x2x32xf32>
    %82 = vector.shape_cast %81 : vector<2x2x2x2x32xf32> to vector<16x32xf32>
    %83 = vector.shape_cast %82 : vector<16x32xf32> to vector<2x2x1x4x32xf32>
    %84 = tpu.concatenate %80, %83 in 2 : vector<2x2x1x4x32xf32>, vector<2x2x1x4x32xf32> -> vector<2x2x2x4x32xf32>
    %85 = vector.shape_cast %84 : vector<2x2x2x4x32xf32> to vector<2x4x4x32xf32>
    %86 = vector.shape_cast %85 : vector<2x4x4x32xf32> to vector<32x32xf32>
    %cst_24 = arith.constant dense<0.000000e+00> : vector<32xf32>
    %87 = vector.multi_reduction <add>, %86, %cst_24 [0] : vector<32x32xf32> to vector<32xf32>
    %88 = vector.shape_cast %87 : vector<32xf32> to vector<1x32xf32>
    %cst_25 = arith.constant 3.125000e-02 : f32
    %89 = vector.broadcast %cst_25 : f32 to vector<1x32xf32>
    %90 = arith.mulf %88, %89 : vector<1x32xf32>
    %91 = arith.mulf %86, %86 : vector<32x32xf32>
    %cst_26 = arith.constant dense<0.000000e+00> : vector<32xf32>
    %92 = vector.multi_reduction <add>, %91, %cst_26 [0] : vector<32x32xf32> to vector<32xf32>
    %93 = vector.shape_cast %92 : vector<32xf32> to vector<1x32xf32>
    %cst_27 = arith.constant 3.125000e-02 : f32
    %94 = vector.broadcast %cst_27 : f32 to vector<1x32xf32>
    %95 = arith.mulf %93, %94 : vector<1x32xf32>
    %96 = arith.mulf %90, %90 : vector<1x32xf32>
    %97 = arith.subf %95, %96 : vector<1x32xf32>
    %c0_28 = arith.constant 0 : index
    %c0_29 = arith.constant 0 : index
    %98 = vector.load %arg9[%c0_28, %c0_29] : memref<1x32xf32, #tpu.memory_space<vmem>>, vector<1x32xf32>
    %cst_30 = arith.constant 9.99999974E-6 : f32
    %99 = vector.broadcast %cst_30 : f32 to vector<1x32xf32>
    %100 = arith.addf %97, %99 : vector<1x32xf32>
    %101 = math.rsqrt %100 : vector<1x32xf32>
    %102 = arith.mulf %98, %101 : vector<1x32xf32>
    %c0_31 = arith.constant 0 : index
    %c0_32 = arith.constant 0 : index
    %103 = vector.load %arg10[%c0_31, %c0_32] : memref<1x32xf32, #tpu.memory_space<vmem>>, vector<1x32xf32>
    %104 = arith.mulf %90, %102 : vector<1x32xf32>
    %105 = arith.subf %103, %104 : vector<1x32xf32>
    %106 = vector.shape_cast %102 : vector<1x32xf32> to vector<1x1x1x32xf32>
    %107 = vector.broadcast %106 : vector<1x1x1x32xf32> to vector<2x4x4x32xf32>
    %108 = arith.mulf %85, %107 : vector<2x4x4x32xf32>
    %109 = vector.shape_cast %105 : vector<1x32xf32> to vector<1x1x1x32xf32>
    %110 = vector.broadcast %109 : vector<1x1x1x32xf32> to vector<2x4x4x32xf32>
    %111 = arith.addf %108, %110 : vector<2x4x4x32xf32>
    %cst_33 = arith.constant 0.000000e+00 : f32
    %112 = vector.broadcast %cst_33 : f32 to vector<2x4x1x32xf32>
    %cst_34 = arith.constant 0.000000e+00 : f32
    %113 = vector.broadcast %cst_34 : f32 to vector<2x1x5x32xf32>
    %114 = tpu.concatenate %111, %112 in 2 : vector<2x4x4x32xf32>, vector<2x4x1x32xf32> -> vector<2x4x5x32xf32>
    %115 = tpu.concatenate %114, %113 in 1 : vector<2x4x5x32xf32>, vector<2x1x5x32xf32> -> vector<2x5x5x32xf32>
    %116 = vector.extract_strided_slice %115 {offsets = [0, 0, 0, 0], sizes = [2, 4, 4, 32], strides = [1, 1, 1, 1]} : vector<2x5x5x32xf32> to vector<2x4x4x32xf32>
    %117 = vector.shape_cast %116 : vector<2x4x4x32xf32> to vector<32x32xf32>
    %118 = arith.truncf %117 : vector<32x32xf32> to vector<32x32xbf16>
    %119 = vector.extract_strided_slice %115 {offsets = [0, 0, 1, 0], sizes = [2, 4, 4, 32], strides = [1, 1, 1, 1]} : vector<2x5x5x32xf32> to vector<2x4x4x32xf32>
    %120 = vector.shape_cast %119 : vector<2x4x4x32xf32> to vector<32x32xf32>
    %121 = arith.truncf %120 : vector<32x32xf32> to vector<32x32xbf16>
    %122 = vector.extract_strided_slice %115 {offsets = [0, 1, 0, 0], sizes = [2, 4, 4, 32], strides = [1, 1, 1, 1]} : vector<2x5x5x32xf32> to vector<2x4x4x32xf32>
    %123 = vector.shape_cast %122 : vector<2x4x4x32xf32> to vector<32x32xf32>
    %124 = arith.truncf %123 : vector<32x32xf32> to vector<32x32xbf16>
    %125 = vector.extract_strided_slice %115 {offsets = [0, 1, 1, 0], sizes = [2, 4, 4, 32], strides = [1, 1, 1, 1]} : vector<2x5x5x32xf32> to vector<2x4x4x32xf32>
    %126 = vector.shape_cast %125 : vector<2x4x4x32xf32> to vector<32x32xf32>
    %127 = arith.truncf %126 : vector<32x32xf32> to vector<32x32xbf16>
    %c0_35 = arith.constant 0 : index
    %c0_36 = arith.constant 0 : index
    %128 = vector.load %arg13[%c0_35, %c0_36] : memref<1x128xf32, #tpu.memory_space<vmem>>, vector<1x128xf32>
    %129 = tpu.concatenate %118, %121 in 1 : vector<32x32xbf16>, vector<32x32xbf16> -> vector<32x64xbf16>
    %c0_37 = arith.constant 0 : index
    %c0_38 = arith.constant 0 : index
    %130 = vector.load %arg11[%c0_37, %c0_38] : memref<64x128xbf16, #tpu.memory_space<vmem>>, vector<64x128xbf16>
    %cst_39 = arith.constant dense<0.000000e+00> : vector<32x128xf32>
    %131 = tpu.matmul %129, %130, %cst_39 {dimension_numbers = #tpu.dot_dimension_numbers<[1], [0], [0], [1], [0, 0, 1, 1], [], []>} : vector<32x64xbf16>, vector<64x128xbf16>, vector<32x128xf32> -> vector<32x128xf32>
    %132 = vector.broadcast %128 : vector<1x128xf32> to vector<32x128xf32>
    %133 = arith.addf %131, %132 : vector<32x128xf32>
    %134 = tpu.concatenate %118, %121, %124, %127 in 1 : vector<32x32xbf16>, vector<32x32xbf16>, vector<32x32xbf16>, vector<32x32xbf16> -> vector<32x128xbf16>
    %c0_40 = arith.constant 0 : index
    %c0_41 = arith.constant 0 : index
    %135 = vector.load %arg12[%c0_40, %c0_41] : memref<128x128xbf16, #tpu.memory_space<vmem>>, vector<128x128xbf16>
    %cst_42 = arith.constant dense<0.000000e+00> : vector<32x128xf32>
    %136 = tpu.matmul %134, %135, %cst_42 {dimension_numbers = #tpu.dot_dimension_numbers<[1], [0], [0], [1], [0, 0, 1, 1], [], []>} : vector<32x128xbf16>, vector<128x128xbf16>, vector<32x128xf32> -> vector<32x128xf32>
    %137 = vector.broadcast %128 : vector<1x128xf32> to vector<32x128xf32>
    %138 = arith.addf %136, %137 : vector<32x128xf32>
    %139 = vector.extract_strided_slice %133 {offsets = [0, 0], sizes = [32, 64], strides = [1, 1]} : vector<32x128xf32> to vector<32x64xf32>
    %140 = vector.shape_cast %139 : vector<32x64xf32> to vector<2x4x4x1x64xf32>
    %141 = vector.extract_strided_slice %133 {offsets = [0, 64], sizes = [32, 64], strides = [1, 1]} : vector<32x128xf32> to vector<32x64xf32>
    %142 = vector.shape_cast %141 : vector<32x64xf32> to vector<2x4x4x1x64xf32>
    %143 = vector.extract_strided_slice %138 {offsets = [0, 0], sizes = [32, 64], strides = [1, 1]} : vector<32x128xf32> to vector<32x64xf32>
    %144 = vector.shape_cast %143 : vector<32x64xf32> to vector<2x4x4x1x64xf32>
    %145 = vector.extract_strided_slice %138 {offsets = [0, 64], sizes = [32, 64], strides = [1, 1]} : vector<32x128xf32> to vector<32x64xf32>
    %146 = vector.shape_cast %145 : vector<32x64xf32> to vector<2x4x4x1x64xf32>
    %147 = tpu.concatenate %140, %142 in 3 : vector<2x4x4x1x64xf32>, vector<2x4x4x1x64xf32> -> vector<2x4x4x2x64xf32>
    %148 = vector.shape_cast %147 : vector<2x4x4x2x64xf32> to vector<64x64xf32>
    %149 = vector.shape_cast %148 : vector<64x64xf32> to vector<2x4x1x8x64xf32>
    %150 = tpu.concatenate %144, %146 in 3 : vector<2x4x4x1x64xf32>, vector<2x4x4x1x64xf32> -> vector<2x4x4x2x64xf32>
    %151 = vector.shape_cast %150 : vector<2x4x4x2x64xf32> to vector<64x64xf32>
    %152 = vector.shape_cast %151 : vector<64x64xf32> to vector<2x4x1x8x64xf32>
    %153 = tpu.concatenate %149, %152 in 2 : vector<2x4x1x8x64xf32>, vector<2x4x1x8x64xf32> -> vector<2x4x2x8x64xf32>
    %154 = vector.shape_cast %153 : vector<2x4x2x8x64xf32> to vector<2x8x8x64xf32>
    %155 = vector.shape_cast %154 : vector<2x8x8x64xf32> to vector<128x64xf32>
    %cst_43 = arith.constant dense<0.000000e+00> : vector<64xf32>
    %156 = vector.multi_reduction <add>, %155, %cst_43 [0] : vector<128x64xf32> to vector<64xf32>
    %157 = vector.shape_cast %156 : vector<64xf32> to vector<1x64xf32>
    %cst_44 = arith.constant 7.812500e-03 : f32
    %158 = vector.broadcast %cst_44 : f32 to vector<1x64xf32>
    %159 = arith.mulf %157, %158 : vector<1x64xf32>
    %160 = arith.mulf %155, %155 : vector<128x64xf32>
    %cst_45 = arith.constant dense<0.000000e+00> : vector<64xf32>
    %161 = vector.multi_reduction <add>, %160, %cst_45 [0] : vector<128x64xf32> to vector<64xf32>
    %162 = vector.shape_cast %161 : vector<64xf32> to vector<1x64xf32>
    %cst_46 = arith.constant 7.812500e-03 : f32
    %163 = vector.broadcast %cst_46 : f32 to vector<1x64xf32>
    %164 = arith.mulf %162, %163 : vector<1x64xf32>
    %165 = arith.mulf %159, %159 : vector<1x64xf32>
    %166 = arith.subf %164, %165 : vector<1x64xf32>
    %c0_47 = arith.constant 0 : index
    %c0_48 = arith.constant 0 : index
    %167 = vector.load %arg14[%c0_47, %c0_48] : memref<1x64xf32, #tpu.memory_space<vmem>>, vector<1x64xf32>
    %cst_49 = arith.constant 9.99999974E-6 : f32
    %168 = vector.broadcast %cst_49 : f32 to vector<1x64xf32>
    %169 = arith.addf %166, %168 : vector<1x64xf32>
    %170 = math.rsqrt %169 : vector<1x64xf32>
    %171 = arith.mulf %167, %170 : vector<1x64xf32>
    %c0_50 = arith.constant 0 : index
    %c0_51 = arith.constant 0 : index
    %172 = vector.load %arg15[%c0_50, %c0_51] : memref<1x64xf32, #tpu.memory_space<vmem>>, vector<1x64xf32>
    %173 = arith.mulf %159, %171 : vector<1x64xf32>
    %174 = arith.subf %172, %173 : vector<1x64xf32>
    %175 = vector.shape_cast %171 : vector<1x64xf32> to vector<1x1x1x64xf32>
    %176 = vector.broadcast %175 : vector<1x1x1x64xf32> to vector<2x8x8x64xf32>
    %177 = arith.mulf %154, %176 : vector<2x8x8x64xf32>
    %178 = vector.shape_cast %174 : vector<1x64xf32> to vector<1x1x1x64xf32>
    %179 = vector.broadcast %178 : vector<1x1x1x64xf32> to vector<2x8x8x64xf32>
    %180 = arith.addf %177, %179 : vector<2x8x8x64xf32>
    %cst_52 = arith.constant 0.000000e+00 : f32
    %181 = vector.broadcast %cst_52 : f32 to vector<2x8x1x64xf32>
    %cst_53 = arith.constant 0.000000e+00 : f32
    %182 = vector.broadcast %cst_53 : f32 to vector<2x1x9x64xf32>
    %183 = tpu.concatenate %180, %181 in 2 : vector<2x8x8x64xf32>, vector<2x8x1x64xf32> -> vector<2x8x9x64xf32>
    %184 = tpu.concatenate %183, %182 in 1 : vector<2x8x9x64xf32>, vector<2x1x9x64xf32> -> vector<2x9x9x64xf32>
    %185 = vector.extract_strided_slice %184 {offsets = [0, 0, 0, 0], sizes = [2, 8, 8, 64], strides = [1, 1, 1, 1]} : vector<2x9x9x64xf32> to vector<2x8x8x64xf32>
    %186 = vector.shape_cast %185 : vector<2x8x8x64xf32> to vector<128x64xf32>
    %187 = arith.truncf %186 : vector<128x64xf32> to vector<128x64xbf16>
    %188 = vector.extract_strided_slice %184 {offsets = [0, 0, 1, 0], sizes = [2, 8, 8, 64], strides = [1, 1, 1, 1]} : vector<2x9x9x64xf32> to vector<2x8x8x64xf32>
    %189 = vector.shape_cast %188 : vector<2x8x8x64xf32> to vector<128x64xf32>
    %190 = arith.truncf %189 : vector<128x64xf32> to vector<128x64xbf16>
    %191 = vector.extract_strided_slice %184 {offsets = [0, 1, 0, 0], sizes = [2, 8, 8, 64], strides = [1, 1, 1, 1]} : vector<2x9x9x64xf32> to vector<2x8x8x64xf32>
    %192 = vector.shape_cast %191 : vector<2x8x8x64xf32> to vector<128x64xf32>
    %193 = arith.truncf %192 : vector<128x64xf32> to vector<128x64xbf16>
    %194 = vector.extract_strided_slice %184 {offsets = [0, 1, 1, 0], sizes = [2, 8, 8, 64], strides = [1, 1, 1, 1]} : vector<2x9x9x64xf32> to vector<2x8x8x64xf32>
    %195 = vector.shape_cast %194 : vector<2x8x8x64xf32> to vector<128x64xf32>
    %196 = arith.truncf %195 : vector<128x64xf32> to vector<128x64xbf16>
    %c0_54 = arith.constant 0 : index
    %c0_55 = arith.constant 0 : index
    %197 = vector.load %arg18[%c0_54, %c0_55] : memref<1x6xf32, #tpu.memory_space<vmem>>, vector<1x6xf32>
    %198 = tpu.concatenate %187, %190 in 1 : vector<128x64xbf16>, vector<128x64xbf16> -> vector<128x128xbf16>
    %c0_56 = arith.constant 0 : index
    %c0_57 = arith.constant 0 : index
    %199 = vector.load %arg16[%c0_56, %c0_57] : memref<128x6xbf16, #tpu.memory_space<vmem>>, vector<128x6xbf16>
    %cst_58 = arith.constant dense<0.000000e+00> : vector<128x6xf32>
    %200 = tpu.matmul %198, %199, %cst_58 {dimension_numbers = #tpu.dot_dimension_numbers<[1], [0], [0], [1], [0, 0, 1, 1], [], []>} : vector<128x128xbf16>, vector<128x6xbf16>, vector<128x6xf32> -> vector<128x6xf32>
    %201 = vector.broadcast %197 : vector<1x6xf32> to vector<128x6xf32>
    %202 = arith.addf %200, %201 : vector<128x6xf32>
    %203 = tpu.concatenate %187, %190, %193, %196 in 1 : vector<128x64xbf16>, vector<128x64xbf16>, vector<128x64xbf16>, vector<128x64xbf16> -> vector<128x256xbf16>
    %c0_59 = arith.constant 0 : index
    %c0_60 = arith.constant 0 : index
    %204 = vector.load %arg17[%c0_59, %c0_60] : memref<256x6xbf16, #tpu.memory_space<vmem>>, vector<256x6xbf16>
    %cst_61 = arith.constant dense<0.000000e+00> : vector<128x6xf32>
    %205 = tpu.matmul %203, %204, %cst_61 {dimension_numbers = #tpu.dot_dimension_numbers<[1], [0], [0], [1], [0, 0, 1, 1], [], []>} : vector<128x256xbf16>, vector<256x6xbf16>, vector<128x6xf32> -> vector<128x6xf32>
    %206 = vector.broadcast %197 : vector<1x6xf32> to vector<128x6xf32>
    %207 = arith.addf %205, %206 : vector<128x6xf32>
    %208 = vector.extract_strided_slice %202 {offsets = [0, 0], sizes = [128, 3], strides = [1, 1]} : vector<128x6xf32> to vector<128x3xf32>
    %209 = vector.shape_cast %208 : vector<128x3xf32> to vector<2x8x8x1x3xf32>
    %210 = vector.extract_strided_slice %202 {offsets = [0, 3], sizes = [128, 3], strides = [1, 1]} : vector<128x6xf32> to vector<128x3xf32>
    %211 = vector.shape_cast %210 : vector<128x3xf32> to vector<2x8x8x1x3xf32>
    %212 = vector.extract_strided_slice %207 {offsets = [0, 0], sizes = [128, 3], strides = [1, 1]} : vector<128x6xf32> to vector<128x3xf32>
    %213 = vector.shape_cast %212 : vector<128x3xf32> to vector<2x8x8x1x3xf32>
    %214 = vector.extract_strided_slice %207 {offsets = [0, 3], sizes = [128, 3], strides = [1, 1]} : vector<128x6xf32> to vector<128x3xf32>
    %215 = vector.shape_cast %214 : vector<128x3xf32> to vector<2x8x8x1x3xf32>
    %216 = tpu.concatenate %209, %211 in 3 : vector<2x8x8x1x3xf32>, vector<2x8x8x1x3xf32> -> vector<2x8x8x2x3xf32>
    %217 = vector.shape_cast %216 : vector<2x8x8x2x3xf32> to vector<256x3xf32>
    %218 = vector.shape_cast %217 : vector<256x3xf32> to vector<2x8x1x16x3xf32>
    %219 = tpu.concatenate %213, %215 in 3 : vector<2x8x8x1x3xf32>, vector<2x8x8x1x3xf32> -> vector<2x8x8x2x3xf32>
    %220 = vector.shape_cast %219 : vector<2x8x8x2x3xf32> to vector<256x3xf32>
    %221 = vector.shape_cast %220 : vector<256x3xf32> to vector<2x8x1x16x3xf32>
    %222 = tpu.concatenate %218, %221 in 2 : vector<2x8x1x16x3xf32>, vector<2x8x1x16x3xf32> -> vector<2x8x2x16x3xf32>
    %223 = vector.shape_cast %222 : vector<2x8x2x16x3xf32> to vector<2x16x16x3xf32>
    %224 = vector.shape_cast %223 : vector<2x16x16x3xf32> to vector<2x256x3xf32>
    %c0_62 = arith.constant 0 : index
    %c0_63 = arith.constant 0 : index
    %c0_64 = arith.constant 0 : index
    %225 = vector.load %arg3[%c0_62, %c0_63, %c0_64] : memref<2x3x3xf32, #tpu.memory_space<vmem>>, vector<2x3x3xf32>
    %cst_65 = arith.constant dense<0.000000e+00> : vector<2x3x256xf32>
    %226 = tpu.matmul %225, %224, %cst_65 {dimension_numbers = #tpu.dot_dimension_numbers<[2], [2], [1], [1], [0, 0, 0, 1, 1, 1], [0], [0]>} : vector<2x3x3xf32>, vector<2x256x3xf32>, vector<2x3x256xf32> -> vector<2x3x256xf32>
    %227 = math.tanh %226 : vector<2x3x256xf32>
    %c0_66 = arith.constant 0 : index
    %c0_67 = arith.constant 0 : index
    %c0_68 = arith.constant 0 : index
    %228 = vector.load %arg19[%c0_66, %c0_67, %c0_68] : memref<2x3x256xf32, #tpu.memory_space<vmem>>, vector<2x3x256xf32>
    tpu.vector_store %arg19[%c0_66, %c0_67, %c0_68], %227 {strides = array<i32>} : memref<2x3x256xf32, #tpu.memory_space<vmem>>, vector<2x3x256xf32>,
    return
  }
}

</mosaic_0001>

<llo_original>
// kernel: dcgan_generator_forward.1
$region0: #{dcgan_generator_forward.1}
  #allocation0 [shape = 'u32[]', space=smem, size = 0x4, offset = 0x4, fixed_abs, tag = 'smem constant byte address 0x4 - core index']
  #allocation1 [shape = 'u32[144,128]{1,0:T(1,128)}', space=vmem, size = 0x12000, scoped, tag = 'internal scratch']
  %s0 = inlined_call_operand.vmem [shape: f32[2,32], index: 0, kind: input, shape index: {}]
  %s1 = inlined_call_operand.vmem [shape: f32[32,64], index: 1, kind: input, shape index: {}]
  %s2 = inlined_call_operand.vmem [shape: f32[1,64], index: 2, kind: input, shape index: {}]
  %s3 = inlined_call_operand.vmem [shape: f32[2,3,3], index: 3, kind: input, shape index: {}]
  %s4 = inlined_call_operand.vmem [shape: f32[1,16], index: 4, kind: input, shape index: {}]
  %s5 = inlined_call_operand.vmem [shape: f32[1,16], index: 5, kind: input, shape index: {}]
  %s6 = inlined_call_operand.vmem [shape: bf16[32,64], index: 6, kind: input, shape index: {}]
  %s7 = inlined_call_operand.vmem [shape: bf16[64,64], index: 7, kind: input, shape index: {}]
  %s8 = inlined_call_operand.vmem [shape: f32[1,64], index: 8, kind: input, shape index: {}]
  %s9 = inlined_call_operand.vmem [shape: f32[1,32], index: 9, kind: input, shape index: {}]
  %s10 = inlined_call_operand.vmem [shape: f32[1,32], index: 10, kind: input, shape index: {}]
  %s11 = inlined_call_operand.vmem [shape: bf16[64,128], index: 11, kind: input, shape index: {}]
  %s12 = inlined_call_operand.vmem [shape: bf16[128,128], index: 12, kind: input, shape index: {}]
  %s13 = inlined_call_operand.vmem [shape: f32[1,128], index: 13, kind: input, shape index: {}]
  %s14 = inlined_call_operand.vmem [shape: f32[1,64], index: 14, kind: input, shape index: {}]
  %s15 = inlined_call_operand.vmem [shape: f32[1,64], index: 15, kind: input, shape index: {}]
  %s16 = inlined_call_operand.vmem [shape: bf16[128,6], index: 16, kind: input, shape index: {}]
  %s17 = inlined_call_operand.vmem [shape: bf16[256,6], index: 17, kind: input, shape index: {}]
  %s18 = inlined_call_operand.vmem [shape: f32[1,6], index: 18, kind: input, shape index: {}]
  %s19 = inlined_call_operand.vmem [shape: f32[2,3,256], index: 19, kind: output, shape index: {}]
  %s20 = sld [smem:[#allocation0]]
  $region86: #{dcgan_generator_forward.1} parent=0
    _
  %s22 = ssub.s32 1, %s20
  %s23 = scalar_select 0, %s22, %s20
  // Predicated region
  $region2: #{dcgan_generator_forward.1} parent=0 // pred_check
    _
  $region3: #{dcgan_generator_forward.1} parent=0 // pred_check_branch
    %25 = sbr.rel (0) target = $region5
  $region4: #{dcgan_generator_forward.1} parent=0 // pred_region
    _
  $region5: #{dcgan_generator_forward.1} parent=0 // pred_fallthru
    _
  // Predicated region
  $region6: #{dcgan_generator_forward.1} parent=0 // pred_check
    _
  $region7: #{dcgan_generator_forward.1} parent=0 // pred_check_branch
    %27 = sbr.rel (0) target = $region9
  $region8: #{dcgan_generator_forward.1} parent=0 // pred_region
    _
  $region9: #{dcgan_generator_forward.1} parent=0 // pred_fallthru
    _
  // Predicated region
  $region10: #{dcgan_generator_forward.1} parent=0 // pred_check
    _
  $region11: #{dcgan_generator_forward.1} parent=0 // pred_check_branch
    %29 = sbr.rel (0) target = $region13
  $region12: #{dcgan_generator_forward.1} parent=0 // pred_region
    _
  $region13: #{dcgan_generator_forward.1} parent=0 // pred_fallthru
    _
  // Predicated region
  $region14: #{dcgan_generator_forward.1} parent=0 // pred_check
    _
  $region15: #{dcgan_generator_forward.1} parent=0 // pred_check_branch
    %31 = sbr.rel (0) target = $region17
  $region16: #{dcgan_generator_forward.1} parent=0 // pred_region
    _
  $region17: #{dcgan_generator_forward.1} parent=0 // pred_fallthru
    _
  // Predicated region
  $region18: #{dcgan_generator_forward.1} parent=0 // pred_check
    _
  $region19: #{dcgan_generator_forward.1} parent=0 // pred_check_branch
    %33 = sbr.rel (0) target = $region21
  $region20: #{dcgan_generator_forward.1} parent=0 // pred_region
    _
  $region21: #{dcgan_generator_forward.1} parent=0 // pred_fallthru
    _
  // Predicated region
  $region22: #{dcgan_generator_forward.1} parent=0 // pred_check
    _
  $region23: #{dcgan_generator_forward.1} parent=0 // pred_check_branch
    %35 = sbr.rel (0) target = $region25
  $region24: #{dcgan_generator_forward.1} parent=0 // pred_region
    _
  $region25: #{dcgan_generator_forward.1} parent=0 // pred_fallthru
    _
  // Predicated region
  $region26: #{dcgan_generator_forward.1} parent=0 // pred_check
    _
  $region27: #{dcgan_generator_forward.1} parent=0 // pred_check_branch
    %37 = sbr.rel (0) target = $region29
  $region28: #{dcgan_generator_forward.1} parent=0 // pred_region
    _
  $region29: #{dcgan_generator_forward.1} parent=0 // pred_fallthru
    _
  // Predicated region
  $region30: #{dcgan_generator_forward.1} parent=0 // pred_check
    _
  $region31: #{dcgan_generator_forward.1} parent=0 // pred_check_branch
    %39 = sbr.rel (0) target = $region33
  $region32: #{dcgan_generator_forward.1} parent=0 // pred_region
    _
  $region33: #{dcgan_generator_forward.1} parent=0 // pred_fallthru
    _
  // Predicated region
  $region34: #{dcgan_generator_forward.1} parent=0 // pred_check
    _
  $region35: #{dcgan_generator_forward.1} parent=0 // pred_check_branch
    %41 = sbr.rel (0) target = $region37
  $region36: #{dcgan_generator_forward.1} parent=0 // pred_region
    _
  $region37: #{dcgan_generator_forward.1} parent=0 // pred_fallthru
    _
  // Predicated region
  $region38: #{dcgan_generator_forward.1} parent=0 // pred_check
    _
  $region39: #{dcgan_generator_forward.1} parent=0 // pred_check_branch
    %43 = sbr.rel (0) target = $region41
  $region40: #{dcgan_generator_forward.1} parent=0 // pred_region
    _
  $region41: #{dcgan_generator_forward.1} parent=0 // pred_fallthru
    _
  // Predicated region
  $region42: #{dcgan_generator_forward.1} parent=0 // pred_check
    _
  $region43: #{dcgan_generator_forward.1} parent=0 // pred_check_branch
    %45 = sbr.rel (0) target = $region45
  $region44: #{dcgan_generator_forward.1} parent=0 // pred_region
    _
  $region45: #{dcgan_generator_forward.1} parent=0 // pred_fallthru
    _
  // Predicated region
  $region46: #{dcgan_generator_forward.1} parent=0 // pred_check
    _
  $region47: #{dcgan_generator_forward.1} parent=0 // pred_check_branch
    %47 = sbr.rel (0) target = $region49
  $region48: #{dcgan_generator_forward.1} parent=0 // pred_region
    _
  $region49: #{dcgan_generator_forward.1} parent=0 // pred_fallthru
    _
  // Predicated region
  $region50: #{dcgan_generator_forward.1} parent=0 // pred_check
    _
  $region51: #{dcgan_generator_forward.1} parent=0 // pred_check_branch
    %49 = sbr.rel (0) target = $region53
  $region52: #{dcgan_generator_forward.1} parent=0 // pred_region
    _
  $region53: #{dcgan_generator_forward.1} parent=0 // pred_fallthru
    _
  // Predicated region
  $region54: #{dcgan_generator_forward.1} parent=0 // pred_check
    _
  $region55: #{dcgan_generator_forward.1} parent=0 // pred_check_branch
    %51 = sbr.rel (0) target = $region57
  $region56: #{dcgan_generator_forward.1} parent=0 // pred_region
    _
  $region57: #{dcgan_generator_forward.1} parent=0 // pred_fallthru
    _
  // Predicated region
  $region58: #{dcgan_generator_forward.1} parent=0 // pred_check
    _
  $region59: #{dcgan_generator_forward.1} parent=0 // pred_check_branch
    %53 = sbr.rel (0) target = $region61
  $region60: #{dcgan_generator_forward.1} parent=0 // pred_region
    _
  $region61: #{dcgan_generator_forward.1} parent=0 // pred_fallthru
    _
  // Predicated region
  $region62: #{dcgan_generator_forward.1} parent=0 // pred_check
    _
  $region63: #{dcgan_generator_forward.1} parent=0 // pred_check_branch
    %55 = sbr.rel (0) target = $region65
  $region64: #{dcgan_generator_forward.1} parent=0 // pred_region
    _
  $region65: #{dcgan_generator_forward.1} parent=0 // pred_fallthru
    _
  // Predicated region
  $region66: #{dcgan_generator_forward.1} parent=0 // pred_check
    _
  $region67: #{dcgan_generator_forward.1} parent=0 // pred_check_branch
    %57 = sbr.rel (0) target = $region69
  $region68: #{dcgan_generator_forward.1} parent=0 // pred_region
    _
  $region69: #{dcgan_generator_forward.1} parent=0 // pred_fallthru
    _
  // Predicated region
  $region70: #{dcgan_generator_forward.1} parent=0 // pred_check
    _
  $region71: #{dcgan_generator_forward.1} parent=0 // pred_check_branch
    %59 = sbr.rel (0) target = $region73
  $region72: #{dcgan_generator_forward.1} parent=0 // pred_region
    _
  $region73: #{dcgan_generator_forward.1} parent=0 // pred_fallthru
    _
  // Predicated region
  $region74: #{dcgan_generator_forward.1} parent=0 // pred_check
    _
  $region75: #{dcgan_generator_forward.1} parent=0 // pred_check_branch
    %61 = sbr.rel (0) target = $region77
  $region76: #{dcgan_generator_forward.1} parent=0 // pred_region
    _
  $region77: #{dcgan_generator_forward.1} parent=0 // pred_fallthru
    _
  %v63 = vld [vmem:[%s0] sm:$0x3]
  %v64 = vld [vmem:[%s1] sm:$0xff]
  %v65 = vld [vmem:[%s1 + $0x8] sm:$0xff]
  %v66 = vld [vmem:[%s1 + $0x10] sm:$0xff]
  %v67 = vld [vmem:[%s1 + $0x18] sm:$0xff]
  %v68 = vld [vmem:[%s2] sm:$0x1]
  %v70 = vlaneseq
  %v71 = vshrl.u32 %v70, 7
  %v72 = vsub.s32 0, %v71
  %v73 = vrot.slane %v68, %v72
  %vm75 = vcmask 261120
  %v77 = vsel %vm75, %v63, 0
  %79 = vmatprep.subr.mxu0 0.0
  %80 = vmatpush1.msra.mxu0 %v64
  %81 = vmatprep.subr.mxu0 0.0
  %82 = vmatpush1.msra.mxu0 %v65
  %83 = vmatprep.subr.mxu0 0.0
  %84 = vmatpush1.msra.mxu0 %v66
  %85 = vmatprep.subr.mxu0 0.0
  %86 = vmatpush1.msra.mxu0 %v67
  %87 = vmatprep.subr.mxu0 0.0
  %88 = vmatpush1.msra.mxu0 0.0
  %89 = vmatprep.subr.mxu0 0.0
  %90 = vmatpush1.msra.mxu0 0.0
  %91 = vmatprep.subr.mxu0 0.0
  %92 = vmatpush1.msra.mxu0 0.0
  %93 = vmatprep.subr.mxu0 0.0
  %94 = vmatpush1.msra.mxu0 0.0
  %95 = vmatprep.subr.mxu0 0.0
  %96 = vmatpush1.msra.mxu0 0.0
  %97 = vmatprep.subr.mxu0 0.0
  %98 = vmatpush1.msra.mxu0 0.0
  %99 = vmatprep.subr.mxu0 0.0
  %100 = vmatpush1.msra.mxu0 0.0
  %101 = vmatprep.subr.mxu0 0.0
  %102 = vmatpush1.msra.mxu0 0.0
  %103 = vmatprep.subr.mxu0 0.0
  %104 = vmatpush1.msra.mxu0 0.0
  %105 = vmatprep.subr.mxu0 0.0
  %106 = vmatpush1.msra.mxu0 0.0
  %107 = vmatprep.subr.mxu0 0.0
  %108 = vmatpush1.msra.mxu0 0.0
  %109 = vmatprep.subr.mxu0 0.0
  %110 = vmatpush1.msra.mxu0 0.0
  %111 = vmatprep.subr.mxu0 0.0
  %112 = vmatpush1.msra.mxu0 0.0
  %113 = vmatprep.subr.mxu0 0.0
  %114 = vmatpush1.msra.mxu0 0.0
  %115 = vmatprep.subr.mxu0 0.0
  %116 = vmatpush1.msra.mxu0 0.0
  %117 = vmatprep.subr.mxu0 0.0
  %118 = vmatpush1.msra.mxu0 0.0
  %119 = vmatprep.subr.mxu0 0.0
  %120 = vmatpush1.msra.mxu0 0.0
  %121 = vmatprep.subr.mxu0 0.0
  %122 = vmatpush1.msra.mxu0 0.0
  %123 = vmatprep.subr.mxu0 0.0
  %124 = vmatpush1.msra.mxu0 0.0
  %125 = vmatprep.subr.mxu0 0.0
  %126 = vmatpush1.msra.mxu0 0.0
  %127 = vmatprep.subr.mxu0 0.0
  %128 = vmatpush1.msra.mxu0 0.0
  %129 = vmatprep.subr.mxu0 0.0
  %130 = vmatpush1.msra.mxu0 0.0
  %131 = vmatprep.subr.mxu0 0.0
  %132 = vmatpush1.msra.mxu0 0.0
  %133 = vmatprep.subr.mxu0 0.0
  %134 = vmatpush1.msra.mxu0 0.0
  %135 = vmatprep.subr.mxu0 0.0
  %136 = vmatpush1.msra.mxu0 0.0
  %137 = vmatprep.subr.mxu0 0.0
  %138 = vmatpush1.msra.mxu0 0.0
  %139 = vmatprep.subr.mxu0 0.0
  %140 = vmatpush1.msra.mxu0 0.0
  %141 = vmatprep.subr.mxu0 0.0
  %142 = vmatpush1.msra.mxu0 0.0
  %143 = vmatprep.mubr.f32.mxu0 0.0
  %144 = vmatmul.mubr.f32.gmra.mrb[0].mxu0 %v77
  %v145 = vpop.f32.mrb[0].mxu0
  %v146 = vadd.f32 %v73, %v145
  %v147 = vpop.f32.mrb[0].mxu0
  %148 = vdwg.mxu0
  %v151 = vunpack.c.l.s4 1966171168
  %v152 = vunpack.c.0.s8 %v151
  %v153 = vlaneseq
  %v154 = vshrl.u32 %v153, 7
  %v155 = vsub.s32 %v152, %v154
  %v156 = vrot.slane %v146, %v155
  %v157 = vcombine.high %v156, %v156
  %v159 = vunpack.c.l.s4 1966171168
  %v160 = vunpack.c.0.s8 %v159
  %v161 = vlaneseq
  %v162 = vshrl.u32 %v161, 7
  %v163 = vsub.s32 %v160, %v162
  %v164 = vrot.slane %v156, %v163
  %v166 = vunpack.c.l.s4 1966171168
  %v167 = vunpack.c.0.s8 %v166
  %v168 = vlaneseq
  %v169 = vshrl.u32 %v168, 7
  %v170 = vsub.s32 %v167, %v169
  %v171 = vrot.slane %v157, %v170
  %v174 = vlaneseq
  %v175 = vshrl.u32 %v174, 7
  %v176 = vsub.s32 0, %v175
  %v177 = vrot.slane %v164, %v176
  %v178 = vlaneseq
  %v179 = vshrl.u32 %v178, 7
  %v180 = vsub.s32 0, %v179
  %v181 = vrot.slane %v171, %v180
  %182 = vrot.lane.b32.xlu0 %v177, 112
  %v183 = vpop.permute.xlu0 %182
  %184 = vrot.lane.b32.xlu0 %v181, 112
  %v185 = vpop.permute.xlu0 %184
  %vm188 = vcmask 1040384
  %v189 = vsel %vm188, %v164, %v183
  %v190 = vsel %vm188, %v171, %v185
  %193 = vrot.lane.b32.xlu0 %v189, 96
  %v194 = vpop.permute.xlu0 %193
  %195 = vrot.lane.b32.xlu0 %v190, 96
  %v196 = vpop.permute.xlu0 %195
  %v199 = vcombine.low %v189, %v194
  %v200 = vcombine.low %v190, %v196
  %v202 = vunpack.c.l.s4 1983009808
  %v203 = vunpack.c.0.s8 %v202
  %v204 = vlaneseq
  %v205 = vshrl.u32 %v204, 7
  %v206 = vsub.s32 %v203, %v205
  %v207 = vrot.slane %v199, %v206
  %v209 = vunpack.c.l.s4 1983009808
  %v210 = vunpack.c.0.s8 %v209
  %v211 = vlaneseq
  %v212 = vshrl.u32 %v211, 7
  %v213 = vsub.s32 %v210, %v212
  %v214 = vrot.slane %v200, %v213
  %v215 = vcombine.low %v207, %v214
  %vm217 = vcmask 130048
  %v218 = vsel %vm217, %v215, 0.0
  %v219 = vrot.slane %v218, 4
  %v220 = vadd.f32 %v218, %v219
  %v221 = vrot.slane %v220, 2
  %v222 = vadd.f32 %v220, %v221
  %v223 = vrot.slane %v222, 1
  %v224 = vadd.f32 %v222, %v223
  %v225 = vmul.f32 %v224, 0.125
  %v226 = vmul.f32 %v189, %v189
  %v227 = vmul.f32 %v194, %v194
  %v228 = vmul.f32 %v190, %v190
  %v229 = vmul.f32 %v196, %v196
  %v234 = vcombine.low %v226, %v227
  %v235 = vcombine.low %v228, %v229
  %v237 = vunpack.c.l.s4 1983009808
  %v238 = vunpack.c.0.s8 %v237
  %v239 = vlaneseq
  %v240 = vshrl.u32 %v239, 7
  %v241 = vsub.s32 %v238, %v240
  %v242 = vrot.slane %v234, %v241
  %v244 = vunpack.c.l.s4 1983009808
  %v245 = vunpack.c.0.s8 %v244
  %v246 = vlaneseq
  %v247 = vshrl.u32 %v246, 7
  %v248 = vsub.s32 %v245, %v247
  %v249 = vrot.slane %v235, %v248
  %v250 = vcombine.low %v242, %v249
  %v252 = vsel %vm217, %v250, 0.0
  %v253 = vrot.slane %v252, 4
  %v254 = vadd.f32 %v252, %v253
  %v255 = vrot.slane %v254, 2
  %v256 = vadd.f32 %v254, %v255
  %v257 = vrot.slane %v256, 1
  %v258 = vadd.f32 %v256, %v257
  %v259 = vmul.f32 %v258, 0.125
  %v260 = vmul.f32 %v225, %v225
  %v261 = vsub.f32 %v259, %v260
  %v262 = vld [vmem:[%s4] sm:$0x1]
  %v263 = vadd.f32 %v261, 1e-05
  %v264 = vrsqrt.pop %v263
  %v265 = vmul.f32 %v262, %v264
  %v266 = vld [vmem:[%s5] sm:$0x1]
  %v267 = vmul.f32 %v225, %v265
  %v268 = vsub.f32 %v266, %v267
  %v270 = vlaneseq
  %v271 = vshrl.u32 %v270, 7
  %v272 = vsub.s32 0, %v271
  %v273 = vrot.slane %v265, %v272
  %v275 = vmul.f32 %v189, %v273
  %v276 = vmul.f32 %v194, %v273
  %v277 = vmul.f32 %v190, %v273
  %v278 = vmul.f32 %v196, %v273
  %v280 = vlaneseq
  %v281 = vshrl.u32 %v280, 7
  %v282 = vsub.s32 0, %v281
  %v283 = vrot.slane %v268, %v282
  %v285 = vadd.f32 %v275, %v283
  %v286 = vadd.f32 %v276, %v283
  %v287 = vadd.f32 %v277, %v283
  %v288 = vadd.f32 %v278, %v283
  %vm289 = vcmask 1041408
  %v290 = vsel %vm289, %v285, 0.0
  %v291 = vsel %vm289, %v286, 0.0
  %v292 = vsel %vm289, %v287, 0.0
  %v293 = vsel %vm289, %v288, 0.0
  %v298 = vcombine.low %v290, %v291
  %v299 = vcombine.low %v292, %v293
  %v301 = vunpack.c.l.s4 1983009808
  %v302 = vunpack.c.0.s8 %v301
  %v303 = vlaneseq
  %v304 = vshrl.u32 %v303, 7
  %v305 = vsub.s32 %v302, %v304
  %v306 = vrot.slane %v298, %v305
  %v308 = vunpack.c.l.s4 1983009808
  %v309 = vunpack.c.0.s8 %v308
  %v310 = vlaneseq
  %v311 = vshrl.u32 %v310, 7
  %v312 = vsub.s32 %v309, %v311
  %v313 = vrot.slane %v299, %v312
  %v314 = vcombine.low %v306, %v313
  %v316 = vpack.c.bf16 %v314, %v314
  %v318 = vunpack.c.l.s4 1983009808
  %v319 = vunpack.c.0.s8 %v318
  %v320 = vlaneseq
  %v321 = vshrl.u32 %v320, 7
  %v322 = vsub.s32 %v319, %v321
  %v323 = vrot.slane %v290, %v322
  %v324 = vcombine.high %v323, %v323
  %v326 = vunpack.c.l.s4 1983009808
  %v327 = vunpack.c.0.s8 %v326
  %v328 = vlaneseq
  %v329 = vshrl.u32 %v328, 7
  %v330 = vsub.s32 %v327, %v329
  %v331 = vrot.slane %v291, %v330
  %v332 = vcombine.high %v331, %v331
  %v334 = vunpack.c.l.s4 1983009808
  %v335 = vunpack.c.0.s8 %v334
  %v336 = vlaneseq
  %v337 = vshrl.u32 %v336, 7
  %v338 = vsub.s32 %v335, %v337
  %v339 = vrot.slane %v292, %v338
  %v340 = vcombine.high %v339, %v339
  %v342 = vunpack.c.l.s4 1983009808
  %v343 = vunpack.c.0.s8 %v342
  %v344 = vlaneseq
  %v345 = vshrl.u32 %v344, 7
  %v346 = vsub.s32 %v343, %v345
  %v347 = vrot.slane %v293, %v346
  %v348 = vcombine.high %v347, %v347
  %vm349 = vcmask 1042434
  %vm350 = vmor %vm188, %vm349
  %vm351 = vcmask 1044484
  %vm352 = vmor %vm350, %vm351
  %vm353 = vcmask 1046534
  %vm354 = vmor %vm352, %vm353
  %v355 = vrot.slane %v323, 7
  %v356 = vrot.slane %v355, 2
  %v357 = vrot.slane %v324, 7
  %v358 = vsel %vm354, %v356, %v357
  %v359 = vrot.slane %v331, 7
  %v360 = vrot.slane %v359, 2
  %v361 = vrot.slane %v332, 7
  %v362 = vsel %vm354, %v360, %v361
  %v363 = vrot.slane %v339, 7
  %v364 = vrot.slane %v363, 2
  %v365 = vrot.slane %v340, 7
  %v366 = vsel %vm354, %v364, %v365
  %v367 = vrot.slane %v347, 7
  %v368 = vrot.slane %v367, 2
  %v369 = vrot.slane %v348, 7
  %v370 = vsel %vm354, %v368, %v369
  %v371 = vcombine.low %v358, %v362
  %v372 = vcombine.low %v366, %v370
  %v374 = vunpack.c.l.s4 1983009808
  %v375 = vunpack.c.0.s8 %v374
  %v376 = vlaneseq
  %v377 = vshrl.u32 %v376, 7
  %v378 = vsub.s32 %v375, %v377
  %v379 = vrot.slane %v371, %v378
  %v381 = vunpack.c.l.s4 1983009808
  %v382 = vunpack.c.0.s8 %v381
  %v383 = vlaneseq
  %v384 = vshrl.u32 %v383, 7
  %v385 = vsub.s32 %v382, %v384
  %v386 = vrot.slane %v372, %v385
  %v387 = vcombine.low %v379, %v386
  %v389 = vpack.c.bf16 %v387, %v387
  %v391 = vcombine.low %v291, 0.0
  %v392 = vcombine.low %v293, 0.0
  %v394 = vunpack.c.l.s4 1983009808
  %v395 = vunpack.c.0.s8 %v394
  %v396 = vlaneseq
  %v397 = vshrl.u32 %v396, 7
  %v398 = vsub.s32 %v395, %v397
  %v399 = vrot.slane %v391, %v398
  %v401 = vunpack.c.l.s4 1983009808
  %v402 = vunpack.c.0.s8 %v401
  %v403 = vlaneseq
  %v404 = vshrl.u32 %v403, 7
  %v405 = vsub.s32 %v402, %v404
  %v406 = vrot.slane %v392, %v405
  %v407 = vcombine.low %v399, %v406
  %v409 = vpack.c.bf16 %v407, %v407
  %v411 = vunpack.c.l.s4 1983009808
  %v412 = vunpack.c.0.s8 %v411
  %v413 = vlaneseq
  %v414 = vshrl.u32 %v413, 7
  %v415 = vsub.s32 %v412, %v414
  %v416 = vrot.slane 0.0, %v415
  %v417 = vcombine.high %v416, %v416
  %v418 = vrot.slane %v416, 7
  %v419 = vrot.slane %v418, 2
  %v420 = vrot.slane %v417, 7
  %v421 = vsel %vm354, %v419, %v420
  %v422 = vcombine.low %v362, %v421
  %v423 = vcombine.low %v370, %v421
  %v425 = vunpack.c.l.s4 1983009808
  %v426 = vunpack.c.0.s8 %v425
  %v427 = vlaneseq
  %v428 = vshrl.u32 %v427, 7
  %v429 = vsub.s32 %v426, %v428
  %v430 = vrot.slane %v422, %v429
  %v432 = vunpack.c.l.s4 1983009808
  %v433 = vunpack.c.0.s8 %v432
  %v434 = vlaneseq
  %v435 = vshrl.u32 %v434, 7
  %v436 = vsub.s32 %v433, %v435
  %v437 = vrot.slane %v423, %v436
  %v438 = vcombine.low %v430, %v437
  %v440 = vpack.c.bf16 %v438, %v438
  %v441 = vld [vmem:[%s8] sm:$0x1]
  %443 = vrot.lane.b32.xlu0 %v389, 16
  %v444 = vpop.permute.xlu0 %443
  %v447 = vsel %vm217, %v316, %v444
  %v448 = vld [vmem:[%s6] sm:$0xf]
  %v449 = vld [vmem:[%s6 + $0x4] sm:$0xf]
  %v450 = vld [vmem:[%s6 + $0x8] sm:$0xf]
  %v451 = vld [vmem:[%s6 + $0xc] sm:$0xf]
  %v453 = vlaneseq
  %v454 = vshrl.u32 %v453, 7
  %v455 = vsub.s32 0, %v454
  %v456 = vrot.slane %v441, %v455
  %v462 = vunpack.c.l.b16 %v448
  %v463 = vunpack.c.l.b16 %v449
  %v464 = vunpack.c.l.b16 %v450
  %v465 = vunpack.c.l.b16 %v451
  %v466 = vpack.c.b16 %v463, %v462
  %v467 = vpack.c.b16 %v465, %v464
  %v470 = vsel %vm75, %v447, 0
  %472 = vmatprep.subr.bf16.mxu0 0
  %473 = vmatpush1.bf16.msra.mxu0 %v466
  %474 = vmatprep.subr.bf16.mxu0 0
  %475 = vmatpush1.bf16.msra.mxu0 %v467
  %476 = vmatprep.subr.bf16.mxu0 0
  %477 = vmatpush1.bf16.msra.mxu0 0
  %478 = vmatprep.subr.bf16.mxu0 0
  %479 = vmatpush1.bf16.msra.mxu0 0
  %480 = vmatprep.subr.bf16.mxu0 0
  %481 = vmatpush1.bf16.msra.mxu0 0
  %482 = vmatprep.subr.bf16.mxu0 0
  %483 = vmatpush1.bf16.msra.mxu0 0
  %484 = vmatprep.subr.bf16.mxu0 0
  %485 = vmatpush1.bf16.msra.mxu0 0
  %486 = vmatprep.subr.bf16.mxu0 0
  %487 = vmatpush1.bf16.msra.mxu0 0
  %488 = vmatprep.subr.bf16.mxu0 0
  %489 = vmatpush1.bf16.msra.mxu0 0
  %490 = vmatprep.subr.bf16.mxu0 0
  %491 = vmatpush1.bf16.msra.mxu0 0
  %492 = vmatprep.subr.bf16.mxu0 0
  %493 = vmatpush1.bf16.msra.mxu0 0
  %494 = vmatprep.subr.bf16.mxu0 0
  %495 = vmatpush1.bf16.msra.mxu0 0
  %496 = vmatprep.subr.bf16.mxu0 0
  %497 = vmatpush1.bf16.msra.mxu0 0
  %498 = vmatprep.subr.bf16.mxu0 0
  %499 = vmatpush1.bf16.msra.mxu0 0
  %500 = vmatprep.subr.bf16.mxu0 0
  %501 = vmatpush1.bf16.msra.mxu0 0
  %502 = vmatprep.subr.bf16.mxu0 0
  %503 = vmatpush1.bf16.msra.mxu0 0
  %504 = vmatprep.mubr.bf16.mxu0 0
  %505 = vmatmul.mubr.bf16.gmra.mrb[0].mxu0 %v470
  %v506 = vpop.f32.mrb[0].mxu0
  %v507 = vadd.f32 %v456, %v506
  %v508 = vpop.f32.mrb[0].mxu0
  %v509 = vpop.f32.mrb[0].mxu0
  %v510 = vpop.f32.mrb[0].mxu0
  %511 = vdwg.mxu0
  %513 = vrot.lane.b32.xlu0 %v409, 32
  %v514 = vpop.permute.xlu0 %513
  %516 = vrot.lane.b32.xlu0 %v440, 48
  %v517 = vpop.permute.xlu0 %516
  %v519 = vsel %vm75, %v447, %v514
  %vm520 = vcmask 392192
  %v522 = vsel %vm520, %v519, %v517
  %v523 = vld [vmem:[%s7] sm:$0xf]
  %v524 = vld [vmem:[%s7 + $0x4] sm:$0xf]
  %v525 = vld [vmem:[%s7 + $0x8] sm:$0xf]
  %v526 = vld [vmem:[%s7 + $0xc] sm:$0xf]
  %v527 = vld [vmem:[%s7 + $0x10] sm:$0xf]
  %v528 = vld [vmem:[%s7 + $0x14] sm:$0xf]
  %v529 = vld [vmem:[%s7 + $0x18] sm:$0xf]
  %v530 = vld [vmem:[%s7 + $0x1c] sm:$0xf]
  %v539 = vunpack.c.l.b16 %v523
  %v540 = vunpack.c.l.b16 %v524
  %v541 = vunpack.c.l.b16 %v525
  %v542 = vunpack.c.l.b16 %v526
  %v543 = vunpack.c.l.b16 %v527
  %v544 = vunpack.c.l.b16 %v528
  %v545 = vunpack.c.l.b16 %v529
  %v546 = vunpack.c.l.b16 %v530
  %v547 = vpack.c.b16 %v540, %v539
  %v548 = vpack.c.b16 %v542, %v541
  %v549 = vpack.c.b16 %v544, %v543
  %v550 = vpack.c.b16 %v546, %v545
  %vm555 = vcmask 523264
  %v556 = vsel %vm555, %v522, 0
  %558 = vmatprep.subr.bf16.mxu0 0
  %559 = vmatpush1.bf16.msra.mxu0 %v547
  %560 = vmatprep.subr.bf16.mxu0 0
  %561 = vmatpush1.bf16.msra.mxu0 %v548
  %562 = vmatprep.subr.bf16.mxu0 0
  %563 = vmatpush1.bf16.msra.mxu0 %v549
  %564 = vmatprep.subr.bf16.mxu0 0
  %565 = vmatpush1.bf16.msra.mxu0 %v550
  %566 = vmatprep.subr.bf16.mxu0 0
  %567 = vmatpush1.bf16.msra.mxu0 0
  %568 = vmatprep.subr.bf16.mxu0 0
  %569 = vmatpush1.bf16.msra.mxu0 0
  %570 = vmatprep.subr.bf16.mxu0 0
  %571 = vmatpush1.bf16.msra.mxu0 0
  %572 = vmatprep.subr.bf16.mxu0 0
  %573 = vmatpush1.bf16.msra.mxu0 0
  %574 = vmatprep.subr.bf16.mxu0 0
  %575 = vmatpush1.bf16.msra.mxu0 0
  %576 = vmatprep.subr.bf16.mxu0 0
  %577 = vmatpush1.bf16.msra.mxu0 0
  %578 = vmatprep.subr.bf16.mxu0 0
  %579 = vmatpush1.bf16.msra.mxu0 0
  %580 = vmatprep.subr.bf16.mxu0 0
  %581 = vmatpush1.bf16.msra.mxu0 0
  %582 = vmatprep.subr.bf16.mxu0 0
  %583 = vmatpush1.bf16.msra.mxu0 0
  %584 = vmatprep.subr.bf16.mxu0 0
  %585 = vmatpush1.bf16.msra.mxu0 0
  %586 = vmatprep.subr.bf16.mxu0 0
  %587 = vmatpush1.bf16.msra.mxu0 0
  %588 = vmatprep.subr.bf16.mxu0 0
  %589 = vmatpush1.bf16.msra.mxu0 0
  %590 = vmatprep.mubr.bf16.mxu0 0
  %591 = vmatmul.mubr.bf16.gmra.mrb[0].mxu0 %v556
  %v592 = vpop.f32.mrb[0].mxu0
  %v593 = vadd.f32 %v456, %v592
  %v594 = vpop.f32.mrb[0].mxu0
  %v595 = vpop.f32.mrb[0].mxu0
  %v596 = vpop.f32.mrb[0].mxu0
  %597 = vdwg.mxu0
  %v599 = vcombine.high %v507, %v507
  %v601 = vunpack.c.l.s4 1966171168
  %v602 = vunpack.c.0.s8 %v601
  %v603 = vlaneseq
  %v604 = vshrl.u32 %v603, 7
  %v605 = vsub.s32 %v602, %v604
  %v606 = vrot.slane %v507, %v605
  %v608 = vunpack.c.l.s4 1966171168
  %v609 = vunpack.c.0.s8 %v608
  %v610 = vlaneseq
  %v611 = vshrl.u32 %v610, 7
  %v612 = vsub.s32 %v609, %v611
  %v613 = vrot.slane %v599, %v612
  %v614 = vcombine.high %v606, %v606
  %v615 = vcombine.high %v613, %v613
  %v617 = vunpack.c.l.s4 1966171168
  %v618 = vunpack.c.0.s8 %v617
  %v619 = vlaneseq
  %v620 = vshrl.u32 %v619, 7
  %v621 = vsub.s32 %v618, %v620
  %v622 = vrot.slane %v606, %v621
  %v624 = vunpack.c.l.s4 1966171168
  %v625 = vunpack.c.0.s8 %v624
  %v626 = vlaneseq
  %v627 = vshrl.u32 %v626, 7
  %v628 = vsub.s32 %v625, %v627
  %v629 = vrot.slane %v613, %v628
  %v631 = vunpack.c.l.s4 1966171168
  %v632 = vunpack.c.0.s8 %v631
  %v633 = vlaneseq
  %v634 = vshrl.u32 %v633, 7
  %v635 = vsub.s32 %v632, %v634
  %v636 = vrot.slane %v614, %v635
  %v638 = vunpack.c.l.s4 1966171168
  %v639 = vunpack.c.0.s8 %v638
  %v640 = vlaneseq
  %v641 = vshrl.u32 %v640, 7
  %v642 = vsub.s32 %v639, %v641
  %v643 = vrot.slane %v615, %v642
  %v644 = vcombine.high %v622, %v622
  %v645 = vcombine.high %v629, %v629
  %v646 = vcombine.high %v636, %v636
  %v647 = vcombine.high %v643, %v643
  %v657 = vcombine.high %v593, %v593
  %v659 = vunpack.c.l.s4 1966171168
  %v660 = vunpack.c.0.s8 %v659
  %v661 = vlaneseq
  %v662 = vshrl.u32 %v661, 7
  %v663 = vsub.s32 %v660, %v662
  %v664 = vrot.slane %v593, %v663
  %v666 = vunpack.c.l.s4 1966171168
  %v667 = vunpack.c.0.s8 %v666
  %v668 = vlaneseq
  %v669 = vshrl.u32 %v668, 7
  %v670 = vsub.s32 %v667, %v669
  %v671 = vrot.slane %v657, %v670
  %v672 = vcombine.high %v664, %v664
  %v673 = vcombine.high %v671, %v671
  %v675 = vunpack.c.l.s4 1966171168
  %v676 = vunpack.c.0.s8 %v675
  %v677 = vlaneseq
  %v678 = vshrl.u32 %v677, 7
  %v679 = vsub.s32 %v676, %v678
  %v680 = vrot.slane %v664, %v679
  %v682 = vunpack.c.l.s4 1966171168
  %v683 = vunpack.c.0.s8 %v682
  %v684 = vlaneseq
  %v685 = vshrl.u32 %v684, 7
  %v686 = vsub.s32 %v683, %v685
  %v687 = vrot.slane %v671, %v686
  %v689 = vunpack.c.l.s4 1966171168
  %v690 = vunpack.c.0.s8 %v689
  %v691 = vlaneseq
  %v692 = vshrl.u32 %v691, 7
  %v693 = vsub.s32 %v690, %v692
  %v694 = vrot.slane %v672, %v693
  %v696 = vunpack.c.l.s4 1966171168
  %v697 = vunpack.c.0.s8 %v696
  %v698 = vlaneseq
  %v699 = vshrl.u32 %v698, 7
  %v700 = vsub.s32 %v697, %v699
  %v701 = vrot.slane %v673, %v700
  %v702 = vcombine.high %v680, %v680
  %v703 = vcombine.high %v687, %v687
  %v704 = vcombine.high %v694, %v694
  %v705 = vcombine.high %v701, %v701
  %v714 = vlaneseq
  %v715 = vshrl.u32 %v714, 7
  %v716 = vsub.s32 0, %v715
  %v717 = vrot.slane %v622, %v716
  %v718 = vlaneseq
  %v719 = vshrl.u32 %v718, 7
  %v720 = vsub.s32 0, %v719
  %v721 = vrot.slane %v636, %v720
  %v722 = vlaneseq
  %v723 = vshrl.u32 %v722, 7
  %v724 = vsub.s32 0, %v723
  %v725 = vrot.slane %v644, %v724
  %v726 = vlaneseq
  %v727 = vshrl.u32 %v726, 7
  %v728 = vsub.s32 0, %v727
  %v729 = vrot.slane %v646, %v728
  %v730 = vlaneseq
  %v731 = vshrl.u32 %v730, 7
  %v732 = vsub.s32 0, %v731
  %v733 = vrot.slane %v629, %v732
  %v734 = vlaneseq
  %v735 = vshrl.u32 %v734, 7
  %v736 = vsub.s32 0, %v735
  %v737 = vrot.slane %v643, %v736
  %v738 = vlaneseq
  %v739 = vshrl.u32 %v738, 7
  %v740 = vsub.s32 0, %v739
  %v741 = vrot.slane %v645, %v740
  %v742 = vlaneseq
  %v743 = vshrl.u32 %v742, 7
  %v744 = vsub.s32 0, %v743
  %v745 = vrot.slane %v647, %v744
  %746 = vrot.lane.b32.xlu0 %v717, 96
  %v747 = vpop.permute.xlu0 %746
  %748 = vrot.lane.b32.xlu0 %v721, 96
  %v749 = vpop.permute.xlu0 %748
  %750 = vrot.lane.b32.xlu0 %v725, 96
  %v751 = vpop.permute.xlu0 %750
  %752 = vrot.lane.b32.xlu0 %v729, 96
  %v753 = vpop.permute.xlu0 %752
  %754 = vrot.lane.b32.xlu0 %v733, 96
  %v755 = vpop.permute.xlu0 %754
  %756 = vrot.lane.b32.xlu0 %v737, 96
  %v757 = vpop.permute.xlu0 %756
  %758 = vrot.lane.b32.xlu0 %v741, 96
  %v759 = vpop.permute.xlu0 %758
  %760 = vrot.lane.b32.xlu0 %v745, 96
  %v761 = vpop.permute.xlu0 %760
  %v770 = vsel %vm188, %v622, %v747
  %v771 = vsel %vm188, %v636, %v749
  %v772 = vsel %vm188, %v644, %v751
  %v773 = vsel %vm188, %v646, %v753
  %v774 = vsel %vm188, %v629, %v755
  %v775 = vsel %vm188, %v643, %v757
  %v776 = vsel %vm188, %v645, %v759
  %v777 = vsel %vm188, %v647, %v761
  %v778 = vlaneseq
  %v779 = vshrl.u32 %v778, 7
  %v780 = vsub.s32 0, %v779
  %v781 = vrot.slane %v680, %v780
  %v782 = vlaneseq
  %v783 = vshrl.u32 %v782, 7
  %v784 = vsub.s32 0, %v783
  %v785 = vrot.slane %v694, %v784
  %v786 = vlaneseq
  %v787 = vshrl.u32 %v786, 7
  %v788 = vsub.s32 0, %v787
  %v789 = vrot.slane %v702, %v788
  %v790 = vlaneseq
  %v791 = vshrl.u32 %v790, 7
  %v792 = vsub.s32 0, %v791
  %v793 = vrot.slane %v704, %v792
  %v794 = vlaneseq
  %v795 = vshrl.u32 %v794, 7
  %v796 = vsub.s32 0, %v795
  %v797 = vrot.slane %v687, %v796
  %v798 = vlaneseq
  %v799 = vshrl.u32 %v798, 7
  %v800 = vsub.s32 0, %v799
  %v801 = vrot.slane %v701, %v800
  %v802 = vlaneseq
  %v803 = vshrl.u32 %v802, 7
  %v804 = vsub.s32 0, %v803
  %v805 = vrot.slane %v703, %v804
  %v806 = vlaneseq
  %v807 = vshrl.u32 %v806, 7
  %v808 = vsub.s32 0, %v807
  %v809 = vrot.slane %v705, %v808
  %810 = vrot.lane.b32.xlu0 %v781, 96
  %v811 = vpop.permute.xlu0 %810
  %812 = vrot.lane.b32.xlu0 %v785, 96
  %v813 = vpop.permute.xlu0 %812
  %814 = vrot.lane.b32.xlu0 %v789, 96
  %v815 = vpop.permute.xlu0 %814
  %816 = vrot.lane.b32.xlu0 %v793, 96
  %v817 = vpop.permute.xlu0 %816
  %818 = vrot.lane.b32.xlu0 %v797, 96
  %v819 = vpop.permute.xlu0 %818
  %820 = vrot.lane.b32.xlu0 %v801, 96
  %v821 = vpop.permute.xlu0 %820
  %822 = vrot.lane.b32.xlu0 %v805, 96
  %v823 = vpop.permute.xlu0 %822
  %824 = vrot.lane.b32.xlu0 %v809, 96
  %v825 = vpop.permute.xlu0 %824
  %v834 = vsel %vm188, %v680, %v811
  %v835 = vsel %vm188, %v694, %v813
  %v836 = vsel %vm188, %v702, %v815
  %v837 = vsel %vm188, %v704, %v817
  %v838 = vsel %vm188, %v687, %v819
  %v839 = vsel %vm188, %v701, %v821
  %v840 = vsel %vm188, %v703, %v823
  %v841 = vsel %vm188, %v705, %v825
  %v858 = vcombine.low %v770, %v771
  %v859 = vcombine.low %v834, %v835
  %v861 = vunpack.c.l.s4 1983009808
  %v862 = vunpack.c.0.s8 %v861
  %v863 = vlaneseq
  %v864 = vshrl.u32 %v863, 7
  %v865 = vsub.s32 %v862, %v864
  %v866 = vrot.slane %v858, %v865
  %v868 = vunpack.c.l.s4 1983009808
  %v869 = vunpack.c.0.s8 %v868
  %v870 = vlaneseq
  %v871 = vshrl.u32 %v870, 7
  %v872 = vsub.s32 %v869, %v871
  %v873 = vrot.slane %v859, %v872
  %v874 = vcombine.low %v866, %v873
  %v875 = vcombine.low %v772, %v773
  %v876 = vcombine.low %v836, %v837
  %v878 = vunpack.c.l.s4 1983009808
  %v879 = vunpack.c.0.s8 %v878
  %v880 = vlaneseq
  %v881 = vshrl.u32 %v880, 7
  %v882 = vsub.s32 %v879, %v881
  %v883 = vrot.slane %v875, %v882
  %v885 = vunpack.c.l.s4 1983009808
  %v886 = vunpack.c.0.s8 %v885
  %v887 = vlaneseq
  %v888 = vshrl.u32 %v887, 7
  %v889 = vsub.s32 %v886, %v888
  %v890 = vrot.slane %v876, %v889
  %v891 = vcombine.low %v883, %v890
  %v892 = vcombine.low %v774, %v775
  %v893 = vcombine.low %v838, %v839
  %v895 = vunpack.c.l.s4 1983009808
  %v896 = vunpack.c.0.s8 %v895
  %v897 = vlaneseq
  %v898 = vshrl.u32 %v897, 7
  %v899 = vsub.s32 %v896, %v898
  %v900 = vrot.slane %v892, %v899
  %v902 = vunpack.c.l.s4 1983009808
  %v903 = vunpack.c.0.s8 %v902
  %v904 = vlaneseq
  %v905 = vshrl.u32 %v904, 7
  %v906 = vsub.s32 %v903, %v905
  %v907 = vrot.slane %v893, %v906
  %v908 = vcombine.low %v900, %v907
  %v909 = vcombine.low %v776, %v777
  %v910 = vcombine.low %v840, %v841
  %v912 = vunpack.c.l.s4 1983009808
  %v913 = vunpack.c.0.s8 %v912
  %v914 = vlaneseq
  %v915 = vshrl.u32 %v914, 7
  %v916 = vsub.s32 %v913, %v915
  %v917 = vrot.slane %v909, %v916
  %v919 = vunpack.c.l.s4 1983009808
  %v920 = vunpack.c.0.s8 %v919
  %v921 = vlaneseq
  %v922 = vshrl.u32 %v921, 7
  %v923 = vsub.s32 %v920, %v922
  %v924 = vrot.slane %v910, %v923
  %v925 = vcombine.low %v917, %v924
  %v930 = vsel %vm75, %v874, 0.0
  %v931 = vsel %vm75, %v891, 0.0
  %v932 = vadd.f32 %v930, %v931
  %v933 = vsel %vm75, %v908, 0.0
  %v934 = vadd.f32 %v932, %v933
  %v935 = vsel %vm75, %v925, 0.0
  %v936 = vadd.f32 %v934, %v935
  %v937 = vrot.slane %v936, 4
  %v938 = vadd.f32 %v936, %v937
  %v939 = vrot.slane %v938, 2
  %v940 = vadd.f32 %v938, %v939
  %v941 = vrot.slane %v940, 1
  %v942 = vadd.f32 %v940, %v941
  %v943 = vmul.f32 %v942, 0.03125
  %v944 = vmul.f32 %v770, %v770
  %v945 = vmul.f32 %v771, %v771
  %v946 = vmul.f32 %v834, %v834
  %v947 = vmul.f32 %v835, %v835
  %v948 = vmul.f32 %v772, %v772
  %v949 = vmul.f32 %v773, %v773
  %v950 = vmul.f32 %v836, %v836
  %v951 = vmul.f32 %v837, %v837
  %v952 = vmul.f32 %v774, %v774
  %v953 = vmul.f32 %v775, %v775
  %v954 = vmul.f32 %v838, %v838
  %v955 = vmul.f32 %v839, %v839
  %v956 = vmul.f32 %v776, %v776
  %v957 = vmul.f32 %v777, %v777
  %v958 = vmul.f32 %v840, %v840
  %v959 = vmul.f32 %v841, %v841
  %v976 = vcombine.low %v944, %v945
  %v977 = vcombine.low %v946, %v947
  %v979 = vunpack.c.l.s4 1983009808
  %v980 = vunpack.c.0.s8 %v979
  %v981 = vlaneseq
  %v982 = vshrl.u32 %v981, 7
  %v983 = vsub.s32 %v980, %v982
  %v984 = vrot.slane %v976, %v983
  %v986 = vunpack.c.l.s4 1983009808
  %v987 = vunpack.c.0.s8 %v986
  %v988 = vlaneseq
  %v989 = vshrl.u32 %v988, 7
  %v990 = vsub.s32 %v987, %v989
  %v991 = vrot.slane %v977, %v990
  %v992 = vcombine.low %v984, %v991
  %v993 = vcombine.low %v948, %v949
  %v994 = vcombine.low %v950, %v951
  %v996 = vunpack.c.l.s4 1983009808
  %v997 = vunpack.c.0.s8 %v996
  %v998 = vlaneseq
  %v999 = vshrl.u32 %v998, 7
  %v1000 = vsub.s32 %v997, %v999
  %v1001 = vrot.slane %v993, %v1000
  %v1003 = vunpack.c.l.s4 1983009808
  %v1004 = vunpack.c.0.s8 %v1003
  %v1005 = vlaneseq
  %v1006 = vshrl.u32 %v1005, 7
  %v1007 = vsub.s32 %v1004, %v1006
  %v1008 = vrot.slane %v994, %v1007
  %v1009 = vcombine.low %v1001, %v1008
  %v1010 = vcombine.low %v952, %v953
  %v1011 = vcombine.low %v954, %v955
  %v1013 = vunpack.c.l.s4 1983009808
  %v1014 = vunpack.c.0.s8 %v1013
  %v1015 = vlaneseq
  %v1016 = vshrl.u32 %v1015, 7
  %v1017 = vsub.s32 %v1014, %v1016
  %v1018 = vrot.slane %v1010, %v1017
  %v1020 = vunpack.c.l.s4 1983009808
  %v1021 = vunpack.c.0.s8 %v1020
  %v1022 = vlaneseq
  %v1023 = vshrl.u32 %v1022, 7
  %v1024 = vsub.s32 %v1021, %v1023
  %v1025 = vrot.slane %v1011, %v1024
  %v1026 = vcombine.low %v1018, %v1025
  %v1027 = vcombine.low %v956, %v957
  %v1028 = vcombine.low %v958, %v959
  %v1030 = vunpack.c.l.s4 1983009808
  %v1031 = vunpack.c.0.s8 %v1030
  %v1032 = vlaneseq
  %v1033 = vshrl.u32 %v1032, 7
  %v1034 = vsub.s32 %v1031, %v1033
  %v1035 = vrot.slane %v1027, %v1034
  %v1037 = vunpack.c.l.s4 1983009808
  %v1038 = vunpack.c.0.s8 %v1037
  %v1039 = vlaneseq
  %v1040 = vshrl.u32 %v1039, 7
  %v1041 = vsub.s32 %v1038, %v1040
  %v1042 = vrot.slane %v1028, %v1041
  %v1043 = vcombine.low %v1035, %v1042
  %v1048 = vsel %vm75, %v992, 0.0
  %v1049 = vsel %vm75, %v1009, 0.0
  %v1050 = vadd.f32 %v1048, %v1049
  %v1051 = vsel %vm75, %v1026, 0.0
  %v1052 = vadd.f32 %v1050, %v1051
  %v1053 = vsel %vm75, %v1043, 0.0
  %v1054 = vadd.f32 %v1052, %v1053
  %v1055 = vrot.slane %v1054, 4
  %v1056 = vadd.f32 %v1054, %v1055
  %v1057 = vrot.slane %v1056, 2
  %v1058 = vadd.f32 %v1056, %v1057
  %v1059 = vrot.slane %v1058, 1
  %v1060 = vadd.f32 %v1058, %v1059
  %v1061 = vmul.f32 %v1060, 0.03125
  %v1062 = vmul.f32 %v943, %v943
  %v1063 = vsub.f32 %v1061, %v1062
  %v1064 = vld [vmem:[%s9] sm:$0x1]
  %v1065 = vadd.f32 %v1063, 1e-05
  %v1066 = vrsqrt.pop %v1065
  %v1067 = vmul.f32 %v1064, %v1066
  %v1068 = vld [vmem:[%s10] sm:$0x1]
  %v1069 = vmul.f32 %v943, %v1067
  %v1070 = vsub.f32 %v1068, %v1069
  %v1072 = vlaneseq
  %v1073 = vshrl.u32 %v1072, 7
  %v1074 = vsub.s32 0, %v1073
  %v1075 = vrot.slane %v1067, %v1074
  %v1077 = vunpack.c.l.s4 1983009808
  %v1078 = vunpack.c.0.s8 %v1077
  %v1079 = vlaneseq
  %v1080 = vshrl.u32 %v1079, 7
  %v1081 = vsub.s32 %v1078, %v1080
  %v1082 = vrot.slane %v1075, %v1081
  %v1083 = vcombine.high %v1082, %v1082
  %v1086 = vmul.f32 %v770, %v1082
  %v1087 = vmul.f32 %v771, %v1083
  %v1088 = vmul.f32 %v834, %v1082
  %v1089 = vmul.f32 %v835, %v1083
  %v1090 = vmul.f32 %v772, %v1082
  %v1091 = vmul.f32 %v773, %v1083
  %v1092 = vmul.f32 %v836, %v1082
  %v1093 = vmul.f32 %v837, %v1083
  %v1094 = vmul.f32 %v774, %v1082
  %v1095 = vmul.f32 %v775, %v1083
  %v1096 = vmul.f32 %v838, %v1082
  %v1097 = vmul.f32 %v839, %v1083
  %v1098 = vmul.f32 %v776, %v1082
  %v1099 = vmul.f32 %v777, %v1083
  %v1100 = vmul.f32 %v840, %v1082
  %v1101 = vmul.f32 %v841, %v1083
  %v1103 = vlaneseq
  %v1104 = vshrl.u32 %v1103, 7
  %v1105 = vsub.s32 0, %v1104
  %v1106 = vrot.slane %v1070, %v1105
  %v1108 = vunpack.c.l.s4 1983009808
  %v1109 = vunpack.c.0.s8 %v1108
  %v1110 = vlaneseq
  %v1111 = vshrl.u32 %v1110, 7
  %v1112 = vsub.s32 %v1109, %v1111
  %v1113 = vrot.slane %v1106, %v1112
  %v1114 = vcombine.high %v1113, %v1113
  %v1117 = vadd.f32 %v1086, %v1113
  %v1118 = vadd.f32 %v1087, %v1114
  %v1119 = vadd.f32 %v1088, %v1113
  %v1120 = vadd.f32 %v1089, %v1114
  %v1121 = vadd.f32 %v1090, %v1113
  %v1122 = vadd.f32 %v1091, %v1114
  %v1123 = vadd.f32 %v1092, %v1113
  %v1124 = vadd.f32 %v1093, %v1114
  %v1125 = vadd.f32 %v1094, %v1113
  %v1126 = vadd.f32 %v1095, %v1114
  %v1127 = vadd.f32 %v1096, %v1113
  %v1128 = vadd.f32 %v1097, %v1114
  %v1129 = vadd.f32 %v1098, %v1113
  %v1130 = vadd.f32 %v1099, %v1114
  %v1131 = vadd.f32 %v1100, %v1113
  %v1132 = vadd.f32 %v1101, %v1114
  %v1149 = vcombine.low %v1117, %v1118
  %v1151 = vunpack.c.l.s4 1983009808
  %v1152 = vunpack.c.0.s8 %v1151
  %v1153 = vlaneseq
  %v1154 = vshrl.u32 %v1153, 7
  %v1155 = vsub.s32 %v1152, %v1154
  %v1156 = vrot.slane %v1149, %v1155
  %v1157 = vcombine.low %v1119, %v1120
  %v1159 = vunpack.c.l.s4 1983009808
  %v1160 = vunpack.c.0.s8 %v1159
  %v1161 = vlaneseq
  %v1162 = vshrl.u32 %v1161, 7
  %v1163 = vsub.s32 %v1160, %v1162
  %v1164 = vrot.slane %v1157, %v1163
  %v1165 = vcombine.low %v1121, %v1122
  %v1167 = vunpack.c.l.s4 1983009808
  %v1168 = vunpack.c.0.s8 %v1167
  %v1169 = vlaneseq
  %v1170 = vshrl.u32 %v1169, 7
  %v1171 = vsub.s32 %v1168, %v1170
  %v1172 = vrot.slane %v1165, %v1171
  %v1173 = vcombine.low %v1123, %v1124
  %v1175 = vunpack.c.l.s4 1983009808
  %v1176 = vunpack.c.0.s8 %v1175
  %v1177 = vlaneseq
  %v1178 = vshrl.u32 %v1177, 7
  %v1179 = vsub.s32 %v1176, %v1178
  %v1180 = vrot.slane %v1173, %v1179
  %v1181 = vcombine.low %v1125, %v1126
  %v1183 = vunpack.c.l.s4 1983009808
  %v1184 = vunpack.c.0.s8 %v1183
  %v1185 = vlaneseq
  %v1186 = vshrl.u32 %v1185, 7
  %v1187 = vsub.s32 %v1184, %v1186
  %v1188 = vrot.slane %v1181, %v1187
  %v1189 = vcombine.low %v1127, %v1128
  %v1191 = vunpack.c.l.s4 1983009808
  %v1192 = vunpack.c.0.s8 %v1191
  %v1193 = vlaneseq
  %v1194 = vshrl.u32 %v1193, 7
  %v1195 = vsub.s32 %v1192, %v1194
  %v1196 = vrot.slane %v1189, %v1195
  %v1197 = vcombine.low %v1129, %v1130
  %v1199 = vunpack.c.l.s4 1983009808
  %v1200 = vunpack.c.0.s8 %v1199
  %v1201 = vlaneseq
  %v1202 = vshrl.u32 %v1201, 7
  %v1203 = vsub.s32 %v1200, %v1202
  %v1204 = vrot.slane %v1197, %v1203
  %v1205 = vcombine.low %v1131, %v1132
  %v1207 = vunpack.c.l.s4 1983009808
  %v1208 = vunpack.c.0.s8 %v1207
  %v1209 = vlaneseq
  %v1210 = vshrl.u32 %v1209, 7
  %v1211 = vsub.s32 %v1208, %v1210
  %v1212 = vrot.slane %v1205, %v1211
  %vm1221 = vcmask 1043456
  %v1222 = vsel %vm1221, %v1156, 0.0
  %v1223 = vsel %vm1221, %v1164, 0.0
  %v1224 = vsel %vm1221, %v1172, 0.0
  %v1225 = vsel %vm1221, %v1180, 0.0
  %v1226 = vsel %vm1221, %v1188, 0.0
  %v1227 = vsel %vm1221, %v1196, 0.0
  %v1228 = vsel %vm1221, %v1204, 0.0
  %v1229 = vsel %vm1221, %v1212, 0.0
  %v1238 = vcombine.low %v1222, %v1223
  %v1239 = vcombine.low %v1224, %v1225
  %v1240 = vcombine.low %v1226, %v1227
  %v1241 = vcombine.low %v1228, %v1229
  %v1246 = vpack.c.bf16 %v1239, %v1238
  %v1247 = vpack.c.bf16 %v1241, %v1240
  %v1248 = vcombine.high %v1222, %v1222
  %v1249 = vcombine.high %v1223, %v1223
  %v1250 = vcombine.high %v1224, %v1224
  %v1251 = vcombine.high %v1225, %v1225
  %v1252 = vcombine.high %v1226, %v1226
  %v1253 = vcombine.high %v1227, %v1227
  %v1254 = vcombine.high %v1228, %v1228
  %v1255 = vcombine.high %v1229, %v1229
  %vm1256 = vcmask 1042432
  %vm1257 = vcmask 1046532
  %vm1258 = vmor %vm1256, %vm1257
  %v1259 = vrot.slane %v1222, 5
  %v1260 = vrot.slane %v1259, 4
  %v1261 = vrot.slane %v1248, 5
  %v1262 = vsel %vm1258, %v1260, %v1261
  %v1263 = vrot.slane %v1223, 5
  %v1264 = vrot.slane %v1263, 4
  %v1265 = vrot.slane %v1249, 5
  %v1266 = vsel %vm1258, %v1264, %v1265
  %v1267 = vrot.slane %v1224, 5
  %v1268 = vrot.slane %v1267, 4
  %v1269 = vrot.slane %v1250, 5
  %v1270 = vsel %vm1258, %v1268, %v1269
  %v1271 = vrot.slane %v1225, 5
  %v1272 = vrot.slane %v1271, 4
  %v1273 = vrot.slane %v1251, 5
  %v1274 = vsel %vm1258, %v1272, %v1273
  %v1275 = vrot.slane %v1226, 5
  %v1276 = vrot.slane %v1275, 4
  %v1277 = vrot.slane %v1252, 5
  %v1278 = vsel %vm1258, %v1276, %v1277
  %v1279 = vrot.slane %v1227, 5
  %v1280 = vrot.slane %v1279, 4
  %v1281 = vrot.slane %v1253, 5
  %v1282 = vsel %vm1258, %v1280, %v1281
  %v1283 = vrot.slane %v1228, 5
  %v1284 = vrot.slane %v1283, 4
  %v1285 = vrot.slane %v1254, 5
  %v1286 = vsel %vm1258, %v1284, %v1285
  %v1287 = vrot.slane %v1229, 5
  %v1288 = vrot.slane %v1287, 4
  %v1289 = vrot.slane %v1255, 5
  %v1290 = vsel %vm1258, %v1288, %v1289
  %v1291 = vcombine.low %v1262, %v1266
  %v1292 = vcombine.low %v1270, %v1274
  %v1293 = vcombine.low %v1278, %v1282
  %v1294 = vcombine.low %v1286, %v1290
  %v1299 = vpack.c.bf16 %v1292, %v1291
  %v1300 = vpack.c.bf16 %v1294, %v1293
  %v1301 = vcombine.low %v1223, %v1224
  %v1302 = vcombine.low %v1225, 0.0
  %v1303 = vcombine.low %v1227, %v1228
  %v1304 = vcombine.low %v1229, 0.0
  %v1309 = vpack.c.bf16 %v1302, %v1301
  %v1310 = vpack.c.bf16 %v1304, %v1303
  %v1311 = vcombine.high 0.0, 0.0
  %v1312 = vrot.slane 0.0, 5
  %v1313 = vrot.slane %v1312, 4
  %v1314 = vrot.slane %v1311, 5
  %v1315 = vsel %vm1258, %v1313, %v1314
  %v1316 = vcombine.low %v1266, %v1270
  %v1317 = vcombine.low %v1274, %v1315
  %v1318 = vcombine.low %v1282, %v1286
  %v1319 = vcombine.low %v1290, %v1315
  %v1324 = vpack.c.bf16 %v1317, %v1316
  %v1325 = vpack.c.bf16 %v1319, %v1318
  %v1326 = vld [vmem:[%s13] sm:$0x1]
  %1329 = vrot.lane.b32.xlu0 %v1299, 32
  %v1330 = vpop.permute.xlu0 %1329
  %1331 = vrot.lane.b32.xlu0 %v1300, 32
  %v1332 = vpop.permute.xlu0 %1331
  %v1335 = vsel %vm75, %v1246, %v1330
  %v1338 = vsel %vm75, %v1247, %v1332
  %v1339 = vld [vmem:[%s11] sm:$0xf]
  %v1340 = vld [vmem:[%s11 + $0x4] sm:$0xf]
  %v1341 = vld [vmem:[%s11 + $0x8] sm:$0xf]
  %v1342 = vld [vmem:[%s11 + $0xc] sm:$0xf]
  %v1343 = vld [vmem:[%s11 + $0x10] sm:$0xf]
  %v1344 = vld [vmem:[%s11 + $0x14] sm:$0xf]
  %v1345 = vld [vmem:[%s11 + $0x18] sm:$0xf]
  %v1346 = vld [vmem:[%s11 + $0x1c] sm:$0xf]
  %v1348 = vlaneseq
  %v1349 = vshrl.u32 %v1348, 7
  %v1350 = vsub.s32 0, %v1349
  %v1351 = vrot.slane %v1326, %v1350
  %v1361 = vunpack.c.l.b16 %v1339
  %v1362 = vunpack.c.l.b16 %v1340
  %v1363 = vunpack.c.l.b16 %v1341
  %v1364 = vunpack.c.l.b16 %v1342
  %v1365 = vunpack.c.l.b16 %v1343
  %v1366 = vunpack.c.l.b16 %v1344
  %v1367 = vunpack.c.l.b16 %v1345
  %v1368 = vunpack.c.l.b16 %v1346
  %v1369 = vpack.c.b16 %v1362, %v1361
  %v1370 = vpack.c.b16 %v1364, %v1363
  %v1371 = vpack.c.b16 %v1366, %v1365
  %v1372 = vpack.c.b16 %v1368, %v1367
  %v1377 = vsel %vm555, %v1335, 0
  %v1379 = vsel %vm555, %v1338, 0
  %1381 = vmatprep.subr.bf16.mxu0 0
  %1382 = vmatpush1.bf16.msra.mxu0 %v1369
  %1383 = vmatprep.subr.bf16.mxu0 0
  %1384 = vmatpush1.bf16.msra.mxu0 %v1370
  %1385 = vmatprep.subr.bf16.mxu0 0
  %1386 = vmatpush1.bf16.msra.mxu0 %v1371
  %1387 = vmatprep.subr.bf16.mxu0 0
  %1388 = vmatpush1.bf16.msra.mxu0 %v1372
  %1389 = vmatprep.subr.bf16.mxu0 0
  %1390 = vmatpush1.bf16.msra.mxu0 0
  %1391 = vmatprep.subr.bf16.mxu0 0
  %1392 = vmatpush1.bf16.msra.mxu0 0
  %1393 = vmatprep.subr.bf16.mxu0 0
  %1394 = vmatpush1.bf16.msra.mxu0 0
  %1395 = vmatprep.subr.bf16.mxu0 0
  %1396 = vmatpush1.bf16.msra.mxu0 0
  %1397 = vmatprep.subr.bf16.mxu0 0
  %1398 = vmatpush1.bf16.msra.mxu0 0
  %1399 = vmatprep.subr.bf16.mxu0 0
  %1400 = vmatpush1.bf16.msra.mxu0 0
  %1401 = vmatprep.subr.bf16.mxu0 0
  %1402 = vmatpush1.bf16.msra.mxu0 0
  %1403 = vmatprep.subr.bf16.mxu0 0
  %1404 = vmatpush1.bf16.msra.mxu0 0
  %1405 = vmatprep.subr.bf16.mxu0 0
  %1406 = vmatpush1.bf16.msra.mxu0 0
  %1407 = vmatprep.subr.bf16.mxu0 0
  %1408 = vmatpush1.bf16.msra.mxu0 0
  %1409 = vmatprep.subr.bf16.mxu0 0
  %1410 = vmatpush1.bf16.msra.mxu0 0
  %1411 = vmatprep.subr.bf16.mxu0 0
  %1412 = vmatpush1.bf16.msra.mxu0 0
  %1413 = vmatprep.mubr.bf16.mxu0 0
  %1414 = vmatmul.mubr.bf16.gmra.mrb[0].mxu0 %v1377
  %v1415 = vpop.f32.mrb[0].mxu0
  %v1416 = vadd.f32 %v1351, %v1415
  %v1417 = vpop.f32.mrb[0].mxu0
  %v1418 = vpop.f32.mrb[0].mxu0
  %v1419 = vadd.f32 %v1351, %v1418
  %v1420 = vpop.f32.mrb[0].mxu0
  %1421 = vmatprep.mubr.bf16.mxu0 0
  %1422 = vmatmul.mubr.bf16.gmra.mrb[0].mxu0 %v1379
  %v1423 = vpop.f32.mrb[0].mxu0
  %v1424 = vadd.f32 %v1351, %v1423
  %v1425 = vpop.f32.mrb[0].mxu0
  %v1426 = vpop.f32.mrb[0].mxu0
  %v1427 = vadd.f32 %v1351, %v1426
  %v1428 = vpop.f32.mrb[0].mxu0
  %1429 = vdwg.mxu0
  %1432 = vrot.lane.b32.xlu0 %v1309, 64
  %v1433 = vpop.permute.xlu0 %1432
  %1434 = vrot.lane.b32.xlu0 %v1310, 64
  %v1435 = vpop.permute.xlu0 %1434
  %1438 = vrot.lane.b32.xlu0 %v1324, 96
  %v1439 = vpop.permute.xlu0 %1438
  %1440 = vrot.lane.b32.xlu0 %v1325, 96
  %v1441 = vpop.permute.xlu0 %1440
  %v1443 = vsel %vm555, %v1335, %v1433
  %v1445 = vsel %vm555, %v1338, %v1435
  %vm1446 = vcmask 785408
  %v1448 = vsel %vm1446, %v1443, %v1439
  %v1451 = vsel %vm1446, %v1445, %v1441
  %v1453 = vld [vmem:[%s12] sm:$0xf]
  %v1454 = vld [vmem:[%s12 + $0x4] sm:$0xf]
  %v1455 = vld [vmem:[%s12 + $0x8] sm:$0xf]
  %v1456 = vld [vmem:[%s12 + $0xc] sm:$0xf]
  %v1457 = vld [vmem:[%s12 + $0x10] sm:$0xf]
  %v1458 = vld [vmem:[%s12 + $0x14] sm:$0xf]
  %v1459 = vld [vmem:[%s12 + $0x18] sm:$0xf]
  %v1460 = vld [vmem:[%s12 + $0x1c] sm:$0xf]
  %v1461 = vld [vmem:[%s12 + $0x20] sm:$0xf]
  %v1462 = vld [vmem:[%s12 + $0x24] sm:$0xf]
  %v1463 = vld [vmem:[%s12 + $0x28] sm:$0xf]
  %v1464 = vld [vmem:[%s12 + $0x2c] sm:$0xf]
  %v1465 = vld [vmem:[%s12 + $0x30] sm:$0xf]
  %v1466 = vld [vmem:[%s12 + $0x34] sm:$0xf]
  %v1467 = vld [vmem:[%s12 + $0x38] sm:$0xf]
  %v1468 = vld [vmem:[%s12 + $0x3c] sm:$0xf]
  %v1485 = vunpack.c.l.b16 %v1453
  %v1486 = vunpack.c.l.b16 %v1454
  %v1487 = vunpack.c.l.b16 %v1455
  %v1488 = vunpack.c.l.b16 %v1456
  %v1489 = vunpack.c.l.b16 %v1457
  %v1490 = vunpack.c.l.b16 %v1458
  %v1491 = vunpack.c.l.b16 %v1459
  %v1492 = vunpack.c.l.b16 %v1460
  %v1493 = vunpack.c.l.b16 %v1461
  %v1494 = vunpack.c.l.b16 %v1462
  %v1495 = vunpack.c.l.b16 %v1463
  %v1496 = vunpack.c.l.b16 %v1464
  %v1497 = vunpack.c.l.b16 %v1465
  %v1498 = vunpack.c.l.b16 %v1466
  %v1499 = vunpack.c.l.b16 %v1467
  %v1500 = vunpack.c.l.b16 %v1468
  %v1501 = vpack.c.b16 %v1486, %v1485
  %v1502 = vpack.c.b16 %v1488, %v1487
  %v1503 = vpack.c.b16 %v1490, %v1489
  %v1504 = vpack.c.b16 %v1492, %v1491
  %v1505 = vpack.c.b16 %v1494, %v1493
  %v1506 = vpack.c.b16 %v1496, %v1495
  %v1507 = vpack.c.b16 %v1498, %v1497
  %v1508 = vpack.c.b16 %v1500, %v1499
  %1517 = vmatprep.subr.bf16.mxu0 0
  %1518 = vmatpush1.bf16.msra.mxu0 %v1501
  %1519 = vmatprep.subr.bf16.mxu0 0
  %1520 = vmatpush1.bf16.msra.mxu0 %v1502
  %1521 = vmatprep.subr.bf16.mxu0 0
  %1522 = vmatpush1.bf16.msra.mxu0 %v1503
  %1523 = vmatprep.subr.bf16.mxu0 0
  %1524 = vmatpush1.bf16.msra.mxu0 %v1504
  %1525 = vmatprep.subr.bf16.mxu0 0
  %1526 = vmatpush1.bf16.msra.mxu0 %v1505
  %1527 = vmatprep.subr.bf16.mxu0 0
  %1528 = vmatpush1.bf16.msra.mxu0 %v1506
  %1529 = vmatprep.subr.bf16.mxu0 0
  %1530 = vmatpush1.bf16.msra.mxu0 %v1507
  %1531 = vmatprep.subr.bf16.mxu0 0
  %1532 = vmatpush1.bf16.msra.mxu0 %v1508
  %1533 = vmatprep.subr.bf16.mxu0 0
  %1534 = vmatpush1.bf16.msra.mxu0 0
  %1535 = vmatprep.subr.bf16.mxu0 0
  %1536 = vmatpush1.bf16.msra.mxu0 0
  %1537 = vmatprep.subr.bf16.mxu0 0
  %1538 = vmatpush1.bf16.msra.mxu0 0
  %1539 = vmatprep.subr.bf16.mxu0 0
  %1540 = vmatpush1.bf16.msra.mxu0 0
  %1541 = vmatprep.subr.bf16.mxu0 0
  %1542 = vmatpush1.bf16.msra.mxu0 0
  %1543 = vmatprep.subr.bf16.mxu0 0
  %1544 = vmatpush1.bf16.msra.mxu0 0
  %1545 = vmatprep.subr.bf16.mxu0 0
  %1546 = vmatpush1.bf16.msra.mxu0 0
  %1547 = vmatprep.subr.bf16.mxu0 0
  %1548 = vmatpush1.bf16.msra.mxu0 0
  %1549 = vmatprep.mubr.bf16.mxu0 0
  %1550 = vmatmul.mubr.bf16.gmra.mrb[0].mxu0 %v1448
  %v1551 = vpop.f32.mrb[0].mxu0
  %v1552 = vadd.f32 %v1351, %v1551
  %v1553 = vpop.f32.mrb[0].mxu0
  %v1554 = vpop.f32.mrb[0].mxu0
  %v1555 = vadd.f32 %v1351, %v1554
  %v1556 = vpop.f32.mrb[0].mxu0
  %1557 = vmatprep.mubr.bf16.mxu0 0
  %1558 = vmatmul.mubr.bf16.gmra.mrb[0].mxu0 %v1451
  %v1559 = vpop.f32.mrb[0].mxu0
  %v1560 = vadd.f32 %v1351, %v1559
  %v1561 = vpop.f32.mrb[0].mxu0
  %v1562 = vpop.f32.mrb[0].mxu0
  %v1563 = vadd.f32 %v1351, %v1562
  %v1564 = vpop.f32.mrb[0].mxu0
  %1565 = vdwg.mxu0
  %v1570 = vcombine.high %v1416, %v1416
  %v1572 = vunpack.c.l.s4 1966171168
  %v1573 = vunpack.c.0.s8 %v1572
  %v1574 = vlaneseq
  %v1575 = vshrl.u32 %v1574, 7
  %v1576 = vsub.s32 %v1573, %v1575
  %v1577 = vrot.slane %v1416, %v1576
  %v1579 = vunpack.c.l.s4 1966171168
  %v1580 = vunpack.c.0.s8 %v1579
  %v1581 = vlaneseq
  %v1582 = vshrl.u32 %v1581, 7
  %v1583 = vsub.s32 %v1580, %v1582
  %v1584 = vrot.slane %v1570, %v1583
  %v1585 = vcombine.high %v1577, %v1577
  %v1586 = vcombine.high %v1584, %v1584
  %v1588 = vunpack.c.l.s4 1966171168
  %v1589 = vunpack.c.0.s8 %v1588
  %v1590 = vlaneseq
  %v1591 = vshrl.u32 %v1590, 7
  %v1592 = vsub.s32 %v1589, %v1591
  %v1593 = vrot.slane %v1577, %v1592
  %v1595 = vunpack.c.l.s4 1966171168
  %v1596 = vunpack.c.0.s8 %v1595
  %v1597 = vlaneseq
  %v1598 = vshrl.u32 %v1597, 7
  %v1599 = vsub.s32 %v1596, %v1598
  %v1600 = vrot.slane %v1584, %v1599
  %v1602 = vunpack.c.l.s4 1966171168
  %v1603 = vunpack.c.0.s8 %v1602
  %v1604 = vlaneseq
  %v1605 = vshrl.u32 %v1604, 7
  %v1606 = vsub.s32 %v1603, %v1605
  %v1607 = vrot.slane %v1585, %v1606
  %v1609 = vunpack.c.l.s4 1966171168
  %v1610 = vunpack.c.0.s8 %v1609
  %v1611 = vlaneseq
  %v1612 = vshrl.u32 %v1611, 7
  %v1613 = vsub.s32 %v1610, %v1612
  %v1614 = vrot.slane %v1586, %v1613
  %v1615 = vcombine.high %v1593, %v1593
  %v1616 = vcombine.high %v1600, %v1600
  %v1617 = vcombine.high %v1607, %v1607
  %v1618 = vcombine.high %v1614, %v1614
  %v1619 = vcombine.high %v1419, %v1419
  %v1621 = vunpack.c.l.s4 1966171168
  %v1622 = vunpack.c.0.s8 %v1621
  %v1623 = vlaneseq
  %v1624 = vshrl.u32 %v1623, 7
  %v1625 = vsub.s32 %v1622, %v1624
  %v1626 = vrot.slane %v1419, %v1625
  %v1628 = vunpack.c.l.s4 1966171168
  %v1629 = vunpack.c.0.s8 %v1628
  %v1630 = vlaneseq
  %v1631 = vshrl.u32 %v1630, 7
  %v1632 = vsub.s32 %v1629, %v1631
  %v1633 = vrot.slane %v1619, %v1632
  %v1634 = vcombine.high %v1626, %v1626
  %v1635 = vcombine.high %v1633, %v1633
  %v1637 = vunpack.c.l.s4 1966171168
  %v1638 = vunpack.c.0.s8 %v1637
  %v1639 = vlaneseq
  %v1640 = vshrl.u32 %v1639, 7
  %v1641 = vsub.s32 %v1638, %v1640
  %v1642 = vrot.slane %v1626, %v1641
  %v1644 = vunpack.c.l.s4 1966171168
  %v1645 = vunpack.c.0.s8 %v1644
  %v1646 = vlaneseq
  %v1647 = vshrl.u32 %v1646, 7
  %v1648 = vsub.s32 %v1645, %v1647
  %v1649 = vrot.slane %v1633, %v1648
  %v1651 = vunpack.c.l.s4 1966171168
  %v1652 = vunpack.c.0.s8 %v1651
  %v1653 = vlaneseq
  %v1654 = vshrl.u32 %v1653, 7
  %v1655 = vsub.s32 %v1652, %v1654
  %v1656 = vrot.slane %v1634, %v1655
  %v1658 = vunpack.c.l.s4 1966171168
  %v1659 = vunpack.c.0.s8 %v1658
  %v1660 = vlaneseq
  %v1661 = vshrl.u32 %v1660, 7
  %v1662 = vsub.s32 %v1659, %v1661
  %v1663 = vrot.slane %v1635, %v1662
  %v1664 = vcombine.high %v1642, %v1642
  %v1665 = vcombine.high %v1649, %v1649
  %v1666 = vcombine.high %v1656, %v1656
  %v1667 = vcombine.high %v1663, %v1663
  %v1668 = vcombine.high %v1424, %v1424
  %v1670 = vunpack.c.l.s4 1966171168
  %v1671 = vunpack.c.0.s8 %v1670
  %v1672 = vlaneseq
  %v1673 = vshrl.u32 %v1672, 7
  %v1674 = vsub.s32 %v1671, %v1673
  %v1675 = vrot.slane %v1424, %v1674
  %v1677 = vunpack.c.l.s4 1966171168
  %v1678 = vunpack.c.0.s8 %v1677
  %v1679 = vlaneseq
  %v1680 = vshrl.u32 %v1679, 7
  %v1681 = vsub.s32 %v1678, %v1680
  %v1682 = vrot.slane %v1668, %v1681
  %v1683 = vcombine.high %v1675, %v1675
  %v1684 = vcombine.high %v1682, %v1682
  %v1686 = vunpack.c.l.s4 1966171168
  %v1687 = vunpack.c.0.s8 %v1686
  %v1688 = vlaneseq
  %v1689 = vshrl.u32 %v1688, 7
  %v1690 = vsub.s32 %v1687, %v1689
  %v1691 = vrot.slane %v1675, %v1690
  %v1693 = vunpack.c.l.s4 1966171168
  %v1694 = vunpack.c.0.s8 %v1693
  %v1695 = vlaneseq
  %v1696 = vshrl.u32 %v1695, 7
  %v1697 = vsub.s32 %v1694, %v1696
  %v1698 = vrot.slane %v1682, %v1697
  %v1700 = vunpack.c.l.s4 1966171168
  %v1701 = vunpack.c.0.s8 %v1700
  %v1702 = vlaneseq
  %v1703 = vshrl.u32 %v1702, 7
  %v1704 = vsub.s32 %v1701, %v1703
  %v1705 = vrot.slane %v1683, %v1704
  %v1707 = vunpack.c.l.s4 1966171168
  %v1708 = vunpack.c.0.s8 %v1707
  %v1709 = vlaneseq
  %v1710 = vshrl.u32 %v1709, 7
  %v1711 = vsub.s32 %v1708, %v1710
  %v1712 = vrot.slane %v1684, %v1711
  %v1713 = vcombine.high %v1691, %v1691
  %v1714 = vcombine.high %v1698, %v1698
  %v1715 = vcombine.high %v1705, %v1705
  %v1716 = vcombine.high %v1712, %v1712
  %v1717 = vcombine.high %v1427, %v1427
  %v1719 = vunpack.c.l.s4 1966171168
  %v1720 = vunpack.c.0.s8 %v1719
  %v1721 = vlaneseq
  %v1722 = vshrl.u32 %v1721, 7
  %v1723 = vsub.s32 %v1720, %v1722
  %v1724 = vrot.slane %v1427, %v1723
  %v1726 = vunpack.c.l.s4 1966171168
  %v1727 = vunpack.c.0.s8 %v1726
  %v1728 = vlaneseq
  %v1729 = vshrl.u32 %v1728, 7
  %v1730 = vsub.s32 %v1727, %v1729
  %v1731 = vrot.slane %v1717, %v1730
  %v1732 = vcombine.high %v1724, %v1724
  %v1733 = vcombine.high %v1731, %v1731
  %v1735 = vunpack.c.l.s4 1966171168
  %v1736 = vunpack.c.0.s8 %v1735
  %v1737 = vlaneseq
  %v1738 = vshrl.u32 %v1737, 7
  %v1739 = vsub.s32 %v1736, %v1738
  %v1740 = vrot.slane %v1724, %v1739
  %v1742 = vunpack.c.l.s4 1966171168
  %v1743 = vunpack.c.0.s8 %v1742
  %v1744 = vlaneseq
  %v1745 = vshrl.u32 %v1744, 7
  %v1746 = vsub.s32 %v1743, %v1745
  %v1747 = vrot.slane %v1731, %v1746
  %v1749 = vunpack.c.l.s4 1966171168
  %v1750 = vunpack.c.0.s8 %v1749
  %v1751 = vlaneseq
  %v1752 = vshrl.u32 %v1751, 7
  %v1753 = vsub.s32 %v1750, %v1752
  %v1754 = vrot.slane %v1732, %v1753
  %v1756 = vunpack.c.l.s4 1966171168
  %v1757 = vunpack.c.0.s8 %v1756
  %v1758 = vlaneseq
  %v1759 = vshrl.u32 %v1758, 7
  %v1760 = vsub.s32 %v1757, %v1759
  %v1761 = vrot.slane %v1733, %v1760
  %v1762 = vcombine.high %v1740, %v1740
  %v1763 = vcombine.high %v1747, %v1747
  %v1764 = vcombine.high %v1754, %v1754
  %v1765 = vcombine.high %v1761, %v1761
  %v1802 = vcombine.high %v1552, %v1552
  %v1804 = vunpack.c.l.s4 1966171168
  %v1805 = vunpack.c.0.s8 %v1804
  %v1806 = vlaneseq
  %v1807 = vshrl.u32 %v1806, 7
  %v1808 = vsub.s32 %v1805, %v1807
  %v1809 = vrot.slane %v1552, %v1808
  %v1811 = vunpack.c.l.s4 1966171168
  %v1812 = vunpack.c.0.s8 %v1811
  %v1813 = vlaneseq
  %v1814 = vshrl.u32 %v1813, 7
  %v1815 = vsub.s32 %v1812, %v1814
  %v1816 = vrot.slane %v1802, %v1815
  %v1817 = vcombine.high %v1809, %v1809
  %v1818 = vcombine.high %v1816, %v1816
  %v1820 = vunpack.c.l.s4 1966171168
  %v1821 = vunpack.c.0.s8 %v1820
  %v1822 = vlaneseq
  %v1823 = vshrl.u32 %v1822, 7
  %v1824 = vsub.s32 %v1821, %v1823
  %v1825 = vrot.slane %v1809, %v1824
  %v1827 = vunpack.c.l.s4 1966171168
  %v1828 = vunpack.c.0.s8 %v1827
  %v1829 = vlaneseq
  %v1830 = vshrl.u32 %v1829, 7
  %v1831 = vsub.s32 %v1828, %v1830
  %v1832 = vrot.slane %v1816, %v1831
  %v1834 = vunpack.c.l.s4 1966171168
  %v1835 = vunpack.c.0.s8 %v1834
  %v1836 = vlaneseq
  %v1837 = vshrl.u32 %v1836, 7
  %v1838 = vsub.s32 %v1835, %v1837
  %v1839 = vrot.slane %v1817, %v1838
  %v1841 = vunpack.c.l.s4 1966171168
  %v1842 = vunpack.c.0.s8 %v1841
  %v1843 = vlaneseq
  %v1844 = vshrl.u32 %v1843, 7
  %v1845 = vsub.s32 %v1842, %v1844
  %v1846 = vrot.slane %v1818, %v1845
  %v1847 = vcombine.high %v1825, %v1825
  %v1848 = vcombine.high %v1832, %v1832
  %v1849 = vcombine.high %v1839, %v1839
  %v1850 = vcombine.high %v1846, %v1846
  %v1851 = vcombine.high %v1555, %v1555
  %v1853 = vunpack.c.l.s4 1966171168
  %v1854 = vunpack.c.0.s8 %v1853
  %v1855 = vlaneseq
  %v1856 = vshrl.u32 %v1855, 7
  %v1857 = vsub.s32 %v1854, %v1856
  %v1858 = vrot.slane %v1555, %v1857
  %v1860 = vunpack.c.l.s4 1966171168
  %v1861 = vunpack.c.0.s8 %v1860
  %v1862 = vlaneseq
  %v1863 = vshrl.u32 %v1862, 7
  %v1864 = vsub.s32 %v1861, %v1863
  %v1865 = vrot.slane %v1851, %v1864
  %v1866 = vcombine.high %v1858, %v1858
  %v1867 = vcombine.high %v1865, %v1865
  %v1869 = vunpack.c.l.s4 1966171168
  %v1870 = vunpack.c.0.s8 %v1869
  %v1871 = vlaneseq
  %v1872 = vshrl.u32 %v1871, 7
  %v1873 = vsub.s32 %v1870, %v1872
  %v1874 = vrot.slane %v1858, %v1873
  %v1876 = vunpack.c.l.s4 1966171168
  %v1877 = vunpack.c.0.s8 %v1876
  %v1878 = vlaneseq
  %v1879 = vshrl.u32 %v1878, 7
  %v1880 = vsub.s32 %v1877, %v1879
  %v1881 = vrot.slane %v1865, %v1880
  %v1883 = vunpack.c.l.s4 1966171168
  %v1884 = vunpack.c.0.s8 %v1883
  %v1885 = vlaneseq
  %v1886 = vshrl.u32 %v1885, 7
  %v1887 = vsub.s32 %v1884, %v1886
  %v1888 = vrot.slane %v1866, %v1887
  %v1890 = vunpack.c.l.s4 1966171168
  %v1891 = vunpack.c.0.s8 %v1890
  %v1892 = vlaneseq
  %v1893 = vshrl.u32 %v1892, 7
  %v1894 = vsub.s32 %v1891, %v1893
  %v1895 = vrot.slane %v1867, %v1894
  %v1896 = vcombine.high %v1874, %v1874
  %v1897 = vcombine.high %v1881, %v1881
  %v1898 = vcombine.high %v1888, %v1888
  %v1899 = vcombine.high %v1895, %v1895
  %v1900 = vcombine.high %v1560, %v1560
  %v1902 = vunpack.c.l.s4 1966171168
  %v1903 = vunpack.c.0.s8 %v1902
  %v1904 = vlaneseq
  %v1905 = vshrl.u32 %v1904, 7
  %v1906 = vsub.s32 %v1903, %v1905
  %v1907 = vrot.slane %v1560, %v1906
  %v1909 = vunpack.c.l.s4 1966171168
  %v1910 = vunpack.c.0.s8 %v1909
  %v1911 = vlaneseq
  %v1912 = vshrl.u32 %v1911, 7
  %v1913 = vsub.s32 %v1910, %v1912
  %v1914 = vrot.slane %v1900, %v1913
  %v1915 = vcombine.high %v1907, %v1907
  %v1916 = vcombine.high %v1914, %v1914
  %v1918 = vunpack.c.l.s4 1966171168
  %v1919 = vunpack.c.0.s8 %v1918
  %v1920 = vlaneseq
  %v1921 = vshrl.u32 %v1920, 7
  %v1922 = vsub.s32 %v1919, %v1921
  %v1923 = vrot.slane %v1907, %v1922
  %v1925 = vunpack.c.l.s4 1966171168
  %v1926 = vunpack.c.0.s8 %v1925
  %v1927 = vlaneseq
  %v1928 = vshrl.u32 %v1927, 7
  %v1929 = vsub.s32 %v1926, %v1928
  %v1930 = vrot.slane %v1914, %v1929
  %v1932 = vunpack.c.l.s4 1966171168
  %v1933 = vunpack.c.0.s8 %v1932
  %v1934 = vlaneseq
  %v1935 = vshrl.u32 %v1934, 7
  %v1936 = vsub.s32 %v1933, %v1935
  %v1937 = vrot.slane %v1915, %v1936
  %v1939 = vunpack.c.l.s4 1966171168
  %v1940 = vunpack.c.0.s8 %v1939
  %v1941 = vlaneseq
  %v1942 = vshrl.u32 %v1941, 7
  %v1943 = vsub.s32 %v1940, %v1942
  %v1944 = vrot.slane %v1916, %v1943
  %v1945 = vcombine.high %v1923, %v1923
  %v1946 = vcombine.high %v1930, %v1930
  %v1947 = vcombine.high %v1937, %v1937
  %v1948 = vcombine.high %v1944, %v1944
  %v1949 = vcombine.high %v1563, %v1563
  %v1951 = vunpack.c.l.s4 1966171168
  %v1952 = vunpack.c.0.s8 %v1951
  %v1953 = vlaneseq
  %v1954 = vshrl.u32 %v1953, 7
  %v1955 = vsub.s32 %v1952, %v1954
  %v1956 = vrot.slane %v1563, %v1955
  %v1958 = vunpack.c.l.s4 1966171168
  %v1959 = vunpack.c.0.s8 %v1958
  %v1960 = vlaneseq
  %v1961 = vshrl.u32 %v1960, 7
  %v1962 = vsub.s32 %v1959, %v1961
  %v1963 = vrot.slane %v1949, %v1962
  %v1964 = vcombine.high %v1956, %v1956
  %v1965 = vcombine.high %v1963, %v1963
  %v1967 = vunpack.c.l.s4 1966171168
  %v1968 = vunpack.c.0.s8 %v1967
  %v1969 = vlaneseq
  %v1970 = vshrl.u32 %v1969, 7
  %v1971 = vsub.s32 %v1968, %v1970
  %v1972 = vrot.slane %v1956, %v1971
  %v1974 = vunpack.c.l.s4 1966171168
  %v1975 = vunpack.c.0.s8 %v1974
  %v1976 = vlaneseq
  %v1977 = vshrl.u32 %v1976, 7
  %v1978 = vsub.s32 %v1975, %v1977
  %v1979 = vrot.slane %v1963, %v1978
  %v1981 = vunpack.c.l.s4 1966171168
  %v1982 = vunpack.c.0.s8 %v1981
  %v1983 = vlaneseq
  %v1984 = vshrl.u32 %v1983, 7
  %v1985 = vsub.s32 %v1982, %v1984
  %v1986 = vrot.slane %v1964, %v1985
  %v1988 = vunpack.c.l.s4 1966171168
  %v1989 = vunpack.c.0.s8 %v1988
  %v1990 = vlaneseq
  %v1991 = vshrl.u32 %v1990, 7
  %v1992 = vsub.s32 %v1989, %v1991
  %v1993 = vrot.slane %v1965, %v1992
  %v1994 = vcombine.high %v1972, %v1972
  %v1995 = vcombine.high %v1979, %v1979
  %v1996 = vcombine.high %v1986, %v1986
  %v1997 = vcombine.high %v1993, %v1993
  %v2030 = vlaneseq
  %v2031 = vshrl.u32 %v2030, 7
  %v2032 = vsub.s32 0, %v2031
  %v2033 = vrot.slane %v1593, %v2032
  %v2034 = vlaneseq
  %v2035 = vshrl.u32 %v2034, 7
  %v2036 = vsub.s32 0, %v2035
  %v2037 = vrot.slane %v1607, %v2036
  %v2038 = vlaneseq
  %v2039 = vshrl.u32 %v2038, 7
  %v2040 = vsub.s32 0, %v2039
  %v2041 = vrot.slane %v1615, %v2040
  %v2042 = vlaneseq
  %v2043 = vshrl.u32 %v2042, 7
  %v2044 = vsub.s32 0, %v2043
  %v2045 = vrot.slane %v1617, %v2044
  %v2046 = vlaneseq
  %v2047 = vshrl.u32 %v2046, 7
  %v2048 = vsub.s32 0, %v2047
  %v2049 = vrot.slane %v1600, %v2048
  %v2050 = vlaneseq
  %v2051 = vshrl.u32 %v2050, 7
  %v2052 = vsub.s32 0, %v2051
  %v2053 = vrot.slane %v1614, %v2052
  %v2054 = vlaneseq
  %v2055 = vshrl.u32 %v2054, 7
  %v2056 = vsub.s32 0, %v2055
  %v2057 = vrot.slane %v1616, %v2056
  %v2058 = vlaneseq
  %v2059 = vshrl.u32 %v2058, 7
  %v2060 = vsub.s32 0, %v2059
  %v2061 = vrot.slane %v1618, %v2060
  %v2062 = vlaneseq
  %v2063 = vshrl.u32 %v2062, 7
  %v2064 = vsub.s32 0, %v2063
  %v2065 = vrot.slane %v1642, %v2064
  %v2066 = vlaneseq
  %v2067 = vshrl.u32 %v2066, 7
  %v2068 = vsub.s32 0, %v2067
  %v2069 = vrot.slane %v1656, %v2068
  %v2070 = vlaneseq
  %v2071 = vshrl.u32 %v2070, 7
  %v2072 = vsub.s32 0, %v2071
  %v2073 = vrot.slane %v1664, %v2072
  %v2074 = vlaneseq
  %v2075 = vshrl.u32 %v2074, 7
  %v2076 = vsub.s32 0, %v2075
  %v2077 = vrot.slane %v1666, %v2076
  %v2078 = vlaneseq
  %v2079 = vshrl.u32 %v2078, 7
  %v2080 = vsub.s32 0, %v2079
  %v2081 = vrot.slane %v1649, %v2080
  %v2082 = vlaneseq
  %v2083 = vshrl.u32 %v2082, 7
  %v2084 = vsub.s32 0, %v2083
  %v2085 = vrot.slane %v1663, %v2084
  %v2086 = vlaneseq
  %v2087 = vshrl.u32 %v2086, 7
  %v2088 = vsub.s32 0, %v2087
  %v2089 = vrot.slane %v1665, %v2088
  %v2090 = vlaneseq
  %v2091 = vshrl.u32 %v2090, 7
  %v2092 = vsub.s32 0, %v2091
  %v2093 = vrot.slane %v1667, %v2092
  %v2094 = vlaneseq
  %v2095 = vshrl.u32 %v2094, 7
  %v2096 = vsub.s32 0, %v2095
  %v2097 = vrot.slane %v1691, %v2096
  %v2098 = vlaneseq
  %v2099 = vshrl.u32 %v2098, 7
  %v2100 = vsub.s32 0, %v2099
  %v2101 = vrot.slane %v1705, %v2100
  %v2102 = vlaneseq
  %v2103 = vshrl.u32 %v2102, 7
  %v2104 = vsub.s32 0, %v2103
  %v2105 = vrot.slane %v1713, %v2104
  %v2106 = vlaneseq
  %v2107 = vshrl.u32 %v2106, 7
  %v2108 = vsub.s32 0, %v2107
  %v2109 = vrot.slane %v1715, %v2108
  %v2110 = vlaneseq
  %v2111 = vshrl.u32 %v2110, 7
  %v2112 = vsub.s32 0, %v2111
  %v2113 = vrot.slane %v1698, %v2112
  %v2114 = vlaneseq
  %v2115 = vshrl.u32 %v2114, 7
  %v2116 = vsub.s32 0, %v2115
  %v2117 = vrot.slane %v1712, %v2116
  %v2118 = vlaneseq
  %v2119 = vshrl.u32 %v2118, 7
  %v2120 = vsub.s32 0, %v2119
  %v2121 = vrot.slane %v1714, %v2120
  %v2122 = vlaneseq
  %v2123 = vshrl.u32 %v2122, 7
  %v2124 = vsub.s32 0, %v2123
  %v2125 = vrot.slane %v1716, %v2124
  %v2126 = vlaneseq
  %v2127 = vshrl.u32 %v2126, 7
  %v2128 = vsub.s32 0, %v2127
  %v2129 = vrot.slane %v1740, %v2128
  %v2130 = vlaneseq
  %v2131 = vshrl.u32 %v2130, 7
  %v2132 = vsub.s32 0, %v2131
  %v2133 = vrot.slane %v1754, %v2132
  %v2134 = vlaneseq
  %v2135 = vshrl.u32 %v2134, 7
  %v2136 = vsub.s32 0, %v2135
  %v2137 = vrot.slane %v1762, %v2136
  %v2138 = vlaneseq
  %v2139 = vshrl.u32 %v2138, 7
  %v2140 = vsub.s32 0, %v2139
  %v2141 = vrot.slane %v1764, %v2140
  %v2142 = vlaneseq
  %v2143 = vshrl.u32 %v2142, 7
  %v2144 = vsub.s32 0, %v2143
  %v2145 = vrot.slane %v1747, %v2144
  %v2146 = vlaneseq
  %v2147 = vshrl.u32 %v2146, 7
  %v2148 = vsub.s32 0, %v2147
  %v2149 = vrot.slane %v1761, %v2148
  %v2150 = vlaneseq
  %v2151 = vshrl.u32 %v2150, 7
  %v2152 = vsub.s32 0, %v2151
  %v2153 = vrot.slane %v1763, %v2152
  %v2154 = vlaneseq
  %v2155 = vshrl.u32 %v2154, 7
  %v2156 = vsub.s32 0, %v2155
  %v2157 = vrot.slane %v1765, %v2156
  %2158 = vrot.lane.b32.xlu0 %v2033, 64
  %v2159 = vpop.permute.xlu0 %2158
  %2160 = vrot.lane.b32.xlu0 %v2037, 64
  %v2161 = vpop.permute.xlu0 %2160
  %2162 = vrot.lane.b32.xlu0 %v2041, 64
  %v2163 = vpop.permute.xlu0 %2162
  %2164 = vrot.lane.b32.xlu0 %v2045, 64
  %v2165 = vpop.permute.xlu0 %2164
  %2166 = vrot.lane.b32.xlu0 %v2049, 64
  %v2167 = vpop.permute.xlu0 %2166
  %2168 = vrot.lane.b32.xlu0 %v2053, 64
  %v2169 = vpop.permute.xlu0 %2168
  %2170 = vrot.lane.b32.xlu0 %v2057, 64
  %v2171 = vpop.permute.xlu0 %2170
  %2172 = vrot.lane.b32.xlu0 %v2061, 64
  %v2173 = vpop.permute.xlu0 %2172
  %2174 = vrot.lane.b32.xlu0 %v2065, 64
  %v2175 = vpop.permute.xlu0 %2174
  %2176 = vrot.lane.b32.xlu0 %v2069, 64
  %v2177 = vpop.permute.xlu0 %2176
  %2178 = vrot.lane.b32.xlu0 %v2073, 64
  %v2179 = vpop.permute.xlu0 %2178
  %2180 = vrot.lane.b32.xlu0 %v2077, 64
  %v2181 = vpop.permute.xlu0 %2180
  %2182 = vrot.lane.b32.xlu0 %v2081, 64
  %v2183 = vpop.permute.xlu0 %2182
  %2184 = vrot.lane.b32.xlu0 %v2085, 64
  %v2185 = vpop.permute.xlu0 %2184
  %2186 = vrot.lane.b32.xlu0 %v2089, 64
  %v2187 = vpop.permute.xlu0 %2186
  %2188 = vrot.lane.b32.xlu0 %v2093, 64
  %v2189 = vpop.permute.xlu0 %2188
  %2190 = vrot.lane.b32.xlu0 %v2097, 64
  %v2191 = vpop.permute.xlu0 %2190
  %2192 = vrot.lane.b32.xlu0 %v2101, 64
  %v2193 = vpop.permute.xlu0 %2192
  %2194 = vrot.lane.b32.xlu0 %v2105, 64
  %v2195 = vpop.permute.xlu0 %2194
  %2196 = vrot.lane.b32.xlu0 %v2109, 64
  %v2197 = vpop.permute.xlu0 %2196
  %2198 = vrot.lane.b32.xlu0 %v2113, 64
  %v2199 = vpop.permute.xlu0 %2198
  %2200 = vrot.lane.b32.xlu0 %v2117, 64
  %v2201 = vpop.permute.xlu0 %2200
  %2202 = vrot.lane.b32.xlu0 %v2121, 64
  %v2203 = vpop.permute.xlu0 %2202
  %2204 = vrot.lane.b32.xlu0 %v2125, 64
  %v2205 = vpop.permute.xlu0 %2204
  %2206 = vrot.lane.b32.xlu0 %v2129, 64
  %v2207 = vpop.permute.xlu0 %2206
  %2208 = vrot.lane.b32.xlu0 %v2133, 64
  %v2209 = vpop.permute.xlu0 %2208
  %2210 = vrot.lane.b32.xlu0 %v2137, 64
  %v2211 = vpop.permute.xlu0 %2210
  %2212 = vrot.lane.b32.xlu0 %v2141, 64
  %v2213 = vpop.permute.xlu0 %2212
  %2214 = vrot.lane.b32.xlu0 %v2145, 64
  %v2215 = vpop.permute.xlu0 %2214
  %2216 = vrot.lane.b32.xlu0 %v2149, 64
  %v2217 = vpop.permute.xlu0 %2216
  %2218 = vrot.lane.b32.xlu0 %v2153, 64
  %v2219 = vpop.permute.xlu0 %2218
  %2220 = vrot.lane.b32.xlu0 %v2157, 64
  %v2221 = vpop.permute.xlu0 %2220
  %v2254 = vsel %vm188, %v1593, %v2159
  %v2255 = vsel %vm188, %v1607, %v2161
  %v2256 = vsel %vm188, %v1615, %v2163
  %v2257 = vsel %vm188, %v1617, %v2165
  %v2258 = vsel %vm188, %v1600, %v2167
  %v2259 = vsel %vm188, %v1614, %v2169
  %v2260 = vsel %vm188, %v1616, %v2171
  %v2261 = vsel %vm188, %v1618, %v2173
  %v2262 = vsel %vm188, %v1642, %v2175
  %v2263 = vsel %vm188, %v1656, %v2177
  %v2264 = vsel %vm188, %v1664, %v2179
  %v2265 = vsel %vm188, %v1666, %v2181
  %v2266 = vsel %vm188, %v1649, %v2183
  %v2267 = vsel %vm188, %v1663, %v2185
  %v2268 = vsel %vm188, %v1665, %v2187
  %v2269 = vsel %vm188, %v1667, %v2189
  %v2270 = vsel %vm188, %v1691, %v2191
  %v2271 = vsel %vm188, %v1705, %v2193
  %v2272 = vsel %vm188, %v1713, %v2195
  %v2273 = vsel %vm188, %v1715, %v2197
  %v2274 = vsel %vm188, %v1698, %v2199
  %v2275 = vsel %vm188, %v1712, %v2201
  %v2276 = vsel %vm188, %v1714, %v2203
  %v2277 = vsel %vm188, %v1716, %v2205
  %v2278 = vsel %vm188, %v1740, %v2207
  %v2279 = vsel %vm188, %v1754, %v2209
  %v2280 = vsel %vm188, %v1762, %v2211
  %v2281 = vsel %vm188, %v1764, %v2213
  %v2282 = vsel %vm188, %v1747, %v2215
  %v2283 = vsel %vm188, %v1761, %v2217
  %v2284 = vsel %vm188, %v1763, %v2219
  %v2285 = vsel %vm188, %v1765, %v2221
  %v2286 = vlaneseq
  %v2287 = vshrl.u32 %v2286, 7
  %v2288 = vsub.s32 0, %v2287
  %v2289 = vrot.slane %v1825, %v2288
  %v2290 = vlaneseq
  %v2291 = vshrl.u32 %v2290, 7
  %v2292 = vsub.s32 0, %v2291
  %v2293 = vrot.slane %v1839, %v2292
  %v2294 = vlaneseq
  %v2295 = vshrl.u32 %v2294, 7
  %v2296 = vsub.s32 0, %v2295
  %v2297 = vrot.slane %v1847, %v2296
  %v2298 = vlaneseq
  %v2299 = vshrl.u32 %v2298, 7
  %v2300 = vsub.s32 0, %v2299
  %v2301 = vrot.slane %v1849, %v2300
  %v2302 = vlaneseq
  %v2303 = vshrl.u32 %v2302, 7
  %v2304 = vsub.s32 0, %v2303
  %v2305 = vrot.slane %v1832, %v2304
  %v2306 = vlaneseq
  %v2307 = vshrl.u32 %v2306, 7
  %v2308 = vsub.s32 0, %v2307
  %v2309 = vrot.slane %v1846, %v2308
  %v2310 = vlaneseq
  %v2311 = vshrl.u32 %v2310, 7
  %v2312 = vsub.s32 0, %v2311
  %v2313 = vrot.slane %v1848, %v2312
  %v2314 = vlaneseq
  %v2315 = vshrl.u32 %v2314, 7
  %v2316 = vsub.s32 0, %v2315
  %v2317 = vrot.slane %v1850, %v2316
  %v2318 = vlaneseq
  %v2319 = vshrl.u32 %v2318, 7
  %v2320 = vsub.s32 0, %v2319
  %v2321 = vrot.slane %v1874, %v2320
  %v2322 = vlaneseq
  %v2323 = vshrl.u32 %v2322, 7
  %v2324 = vsub.s32 0, %v2323
  %v2325 = vrot.slane %v1888, %v2324
  %v2326 = vlaneseq
  %v2327 = vshrl.u32 %v2326, 7
  %v2328 = vsub.s32 0, %v2327
  %v2329 = vrot.slane %v1896, %v2328
  %v2330 = vlaneseq
  %v2331 = vshrl.u32 %v2330, 7
  %v2332 = vsub.s32 0, %v2331
  %v2333 = vrot.slane %v1898, %v2332
  %v2334 = vlaneseq
  %v2335 = vshrl.u32 %v2334, 7
  %v2336 = vsub.s32 0, %v2335
  %v2337 = vrot.slane %v1881, %v2336
  %v2338 = vlaneseq
  %v2339 = vshrl.u32 %v2338, 7
  %v2340 = vsub.s32 0, %v2339
  %v2341 = vrot.slane %v1895, %v2340
  %v2342 = vlaneseq
  %v2343 = vshrl.u32 %v2342, 7
  %v2344 = vsub.s32 0, %v2343
  %v2345 = vrot.slane %v1897, %v2344
  %v2346 = vlaneseq
  %v2347 = vshrl.u32 %v2346, 7
  %v2348 = vsub.s32 0, %v2347
  %v2349 = vrot.slane %v1899, %v2348
  %v2350 = vlaneseq
  %v2351 = vshrl.u32 %v2350, 7
  %v2352 = vsub.s32 0, %v2351
  %v2353 = vrot.slane %v1923, %v2352
  %v2354 = vlaneseq
  %v2355 = vshrl.u32 %v2354, 7
  %v2356 = vsub.s32 0, %v2355
  %v2357 = vrot.slane %v1937, %v2356
  %v2358 = vlaneseq
  %v2359 = vshrl.u32 %v2358, 7
  %v2360 = vsub.s32 0, %v2359
  %v2361 = vrot.slane %v1945, %v2360
  %v2362 = vlaneseq
  %v2363 = vshrl.u32 %v2362, 7
  %v2364 = vsub.s32 0, %v2363
  %v2365 = vrot.slane %v1947, %v2364
  %v2366 = vlaneseq
  %v2367 = vshrl.u32 %v2366, 7
  %v2368 = vsub.s32 0, %v2367
  %v2369 = vrot.slane %v1930, %v2368
  %v2370 = vlaneseq
  %v2371 = vshrl.u32 %v2370, 7
  %v2372 = vsub.s32 0, %v2371
  %v2373 = vrot.slane %v1944, %v2372
  %v2374 = vlaneseq
  %v2375 = vshrl.u32 %v2374, 7
  %v2376 = vsub.s32 0, %v2375
  %v2377 = vrot.slane %v1946, %v2376
  %v2378 = vlaneseq
  %v2379 = vshrl.u32 %v2378, 7
  %v2380 = vsub.s32 0, %v2379
  %v2381 = vrot.slane %v1948, %v2380
  %v2382 = vlaneseq
  %v2383 = vshrl.u32 %v2382, 7
  %v2384 = vsub.s32 0, %v2383
  %v2385 = vrot.slane %v1972, %v2384
  %v2386 = vlaneseq
  %v2387 = vshrl.u32 %v2386, 7
  %v2388 = vsub.s32 0, %v2387
  %v2389 = vrot.slane %v1986, %v2388
  %v2390 = vlaneseq
  %v2391 = vshrl.u32 %v2390, 7
  %v2392 = vsub.s32 0, %v2391
  %v2393 = vrot.slane %v1994, %v2392
  %v2394 = vlaneseq
  %v2395 = vshrl.u32 %v2394, 7
  %v2396 = vsub.s32 0, %v2395
  %v2397 = vrot.slane %v1996, %v2396
  %v2398 = vlaneseq
  %v2399 = vshrl.u32 %v2398, 7
  %v2400 = vsub.s32 0, %v2399
  %v2401 = vrot.slane %v1979, %v2400
  %v2402 = vlaneseq
  %v2403 = vshrl.u32 %v2402, 7
  %v2404 = vsub.s32 0, %v2403
  %v2405 = vrot.slane %v1993, %v2404
  %v2406 = vlaneseq
  %v2407 = vshrl.u32 %v2406, 7
  %v2408 = vsub.s32 0, %v2407
  %v2409 = vrot.slane %v1995, %v2408
  %v2410 = vlaneseq
  %v2411 = vshrl.u32 %v2410, 7
  %v2412 = vsub.s32 0, %v2411
  %v2413 = vrot.slane %v1997, %v2412
  %2414 = vrot.lane.b32.xlu0 %v2289, 64
  %v2415 = vpop.permute.xlu0 %2414
  %2416 = vrot.lane.b32.xlu0 %v2293, 64
  %v2417 = vpop.permute.xlu0 %2416
  %2418 = vrot.lane.b32.xlu0 %v2297, 64
  %v2419 = vpop.permute.xlu0 %2418
  %2420 = vrot.lane.b32.xlu0 %v2301, 64
  %v2421 = vpop.permute.xlu0 %2420
  %2422 = vrot.lane.b32.xlu0 %v2305, 64
  %v2423 = vpop.permute.xlu0 %2422
  %2424 = vrot.lane.b32.xlu0 %v2309, 64
  %v2425 = vpop.permute.xlu0 %2424
  %2426 = vrot.lane.b32.xlu0 %v2313, 64
  %v2427 = vpop.permute.xlu0 %2426
  %2428 = vrot.lane.b32.xlu0 %v2317, 64
  %v2429 = vpop.permute.xlu0 %2428
  %2430 = vrot.lane.b32.xlu0 %v2321, 64
  %v2431 = vpop.permute.xlu0 %2430
  %2432 = vrot.lane.b32.xlu0 %v2325, 64
  %v2433 = vpop.permute.xlu0 %2432
  %2434 = vrot.lane.b32.xlu0 %v2329, 64
  %v2435 = vpop.permute.xlu0 %2434
  %2436 = vrot.lane.b32.xlu0 %v2333, 64
  %v2437 = vpop.permute.xlu0 %2436
  %2438 = vrot.lane.b32.xlu0 %v2337, 64
  %v2439 = vpop.permute.xlu0 %2438
  %2440 = vrot.lane.b32.xlu0 %v2341, 64
  %v2441 = vpop.permute.xlu0 %2440
  %2442 = vrot.lane.b32.xlu0 %v2345, 64
  %v2443 = vpop.permute.xlu0 %2442
  %2444 = vrot.lane.b32.xlu0 %v2349, 64
  %v2445 = vpop.permute.xlu0 %2444
  %2446 = vrot.lane.b32.xlu0 %v2353, 64
  %v2447 = vpop.permute.xlu0 %2446
  %2448 = vrot.lane.b32.xlu0 %v2357, 64
  %v2449 = vpop.permute.xlu0 %2448
  %2450 = vrot.lane.b32.xlu0 %v2361, 64
  %v2451 = vpop.permute.xlu0 %2450
  %2452 = vrot.lane.b32.xlu0 %v2365, 64
  %v2453 = vpop.permute.xlu0 %2452
  %2454 = vrot.lane.b32.xlu0 %v2369, 64
  %v2455 = vpop.permute.xlu0 %2454
  %2456 = vrot.lane.b32.xlu0 %v2373, 64
  %v2457 = vpop.permute.xlu0 %2456
  %2458 = vrot.lane.b32.xlu0 %v2377, 64
  %v2459 = vpop.permute.xlu0 %2458
  %2460 = vrot.lane.b32.xlu0 %v2381, 64
  %v2461 = vpop.permute.xlu0 %2460
  %2462 = vrot.lane.b32.xlu0 %v2385, 64
  %v2463 = vpop.permute.xlu0 %2462
  %2464 = vrot.lane.b32.xlu0 %v2389, 64
  %v2465 = vpop.permute.xlu0 %2464
  %2466 = vrot.lane.b32.xlu0 %v2393, 64
  %v2467 = vpop.permute.xlu0 %2466
  %2468 = vrot.lane.b32.xlu0 %v2397, 64
  %v2469 = vpop.permute.xlu0 %2468
  %2470 = vrot.lane.b32.xlu0 %v2401, 64
  %v2471 = vpop.permute.xlu0 %2470
  %2472 = vrot.lane.b32.xlu0 %v2405, 64
  %v2473 = vpop.permute.xlu0 %2472
  %2474 = vrot.lane.b32.xlu0 %v2409, 64
  %v2475 = vpop.permute.xlu0 %2474
  %2476 = vrot.lane.b32.xlu0 %v2413, 64
  %v2477 = vpop.permute.xlu0 %2476
  %v2510 = vsel %vm188, %v1825, %v2415
  %v2511 = vsel %vm188, %v1839, %v2417
  %v2512 = vsel %vm188, %v1847, %v2419
  %v2513 = vsel %vm188, %v1849, %v2421
  %v2514 = vsel %vm188, %v1832, %v2423
  %v2515 = vsel %vm188, %v1846, %v2425
  %v2516 = vsel %vm188, %v1848, %v2427
  %v2517 = vsel %vm188, %v1850, %v2429
  %v2518 = vsel %vm188, %v1874, %v2431
  %v2519 = vsel %vm188, %v1888, %v2433
  %v2520 = vsel %vm188, %v1896, %v2435
  %v2521 = vsel %vm188, %v1898, %v2437
  %v2522 = vsel %vm188, %v1881, %v2439
  %v2523 = vsel %vm188, %v1895, %v2441
  %v2524 = vsel %vm188, %v1897, %v2443
  %v2525 = vsel %vm188, %v1899, %v2445
  %v2526 = vsel %vm188, %v1923, %v2447
  %v2527 = vsel %vm188, %v1937, %v2449
  %v2528 = vsel %vm188, %v1945, %v2451
  %v2529 = vsel %vm188, %v1947, %v2453
  %v2530 = vsel %vm188, %v1930, %v2455
  %v2531 = vsel %vm188, %v1944, %v2457
  %v2532 = vsel %vm188, %v1946, %v2459
  %v2533 = vsel %vm188, %v1948, %v2461
  %v2534 = vsel %vm188, %v1972, %v2463
  %v2535 = vsel %vm188, %v1986, %v2465
  %v2536 = vsel %vm188, %v1994, %v2467
  %v2537 = vsel %vm188, %v1996, %v2469
  %v2538 = vsel %vm188, %v1979, %v2471
  %v2539 = vsel %vm188, %v1993, %v2473
  %v2540 = vsel %vm188, %v1995, %v2475
  %v2541 = vsel %vm188, %v1997, %v2477
  %v2606 = vcombine.low %v2254, %v2255
  %v2607 = vcombine.low %v2256, %v2257
  %v2609 = vunpack.c.l.s4 1983009808
  %v2610 = vunpack.c.0.s8 %v2609
  %v2611 = vlaneseq
  %v2612 = vshrl.u32 %v2611, 7
  %v2613 = vsub.s32 %v2610, %v2612
  %v2614 = vrot.slane %v2606, %v2613
  %v2616 = vunpack.c.l.s4 1983009808
  %v2617 = vunpack.c.0.s8 %v2616
  %v2618 = vlaneseq
  %v2619 = vshrl.u32 %v2618, 7
  %v2620 = vsub.s32 %v2617, %v2619
  %v2621 = vrot.slane %v2607, %v2620
  %v2622 = vcombine.low %v2614, %v2621
  %v2623 = vcombine.low %v2510, %v2511
  %v2624 = vcombine.low %v2512, %v2513
  %v2626 = vunpack.c.l.s4 1983009808
  %v2627 = vunpack.c.0.s8 %v2626
  %v2628 = vlaneseq
  %v2629 = vshrl.u32 %v2628, 7
  %v2630 = vsub.s32 %v2627, %v2629
  %v2631 = vrot.slane %v2623, %v2630
  %v2633 = vunpack.c.l.s4 1983009808
  %v2634 = vunpack.c.0.s8 %v2633
  %v2635 = vlaneseq
  %v2636 = vshrl.u32 %v2635, 7
  %v2637 = vsub.s32 %v2634, %v2636
  %v2638 = vrot.slane %v2624, %v2637
  %v2639 = vcombine.low %v2631, %v2638
  %v2640 = vcombine.low %v2258, %v2259
  %v2641 = vcombine.low %v2260, %v2261
  %v2643 = vunpack.c.l.s4 1983009808
  %v2644 = vunpack.c.0.s8 %v2643
  %v2645 = vlaneseq
  %v2646 = vshrl.u32 %v2645, 7
  %v2647 = vsub.s32 %v2644, %v2646
  %v2648 = vrot.slane %v2640, %v2647
  %v2650 = vunpack.c.l.s4 1983009808
  %v2651 = vunpack.c.0.s8 %v2650
  %v2652 = vlaneseq
  %v2653 = vshrl.u32 %v2652, 7
  %v2654 = vsub.s32 %v2651, %v2653
  %v2655 = vrot.slane %v2641, %v2654
  %v2656 = vcombine.low %v2648, %v2655
  %v2657 = vcombine.low %v2514, %v2515
  %v2658 = vcombine.low %v2516, %v2517
  %v2660 = vunpack.c.l.s4 1983009808
  %v2661 = vunpack.c.0.s8 %v2660
  %v2662 = vlaneseq
  %v2663 = vshrl.u32 %v2662, 7
  %v2664 = vsub.s32 %v2661, %v2663
  %v2665 = vrot.slane %v2657, %v2664
  %v2667 = vunpack.c.l.s4 1983009808
  %v2668 = vunpack.c.0.s8 %v2667
  %v2669 = vlaneseq
  %v2670 = vshrl.u32 %v2669, 7
  %v2671 = vsub.s32 %v2668, %v2670
  %v2672 = vrot.slane %v2658, %v2671
  %v2673 = vcombine.low %v2665, %v2672
  %v2674 = vcombine.low %v2262, %v2263
  %v2675 = vcombine.low %v2264, %v2265
  %v2677 = vunpack.c.l.s4 1983009808
  %v2678 = vunpack.c.0.s8 %v2677
  %v2679 = vlaneseq
  %v2680 = vshrl.u32 %v2679, 7
  %v2681 = vsub.s32 %v2678, %v2680
  %v2682 = vrot.slane %v2674, %v2681
  %v2684 = vunpack.c.l.s4 1983009808
  %v2685 = vunpack.c.0.s8 %v2684
  %v2686 = vlaneseq
  %v2687 = vshrl.u32 %v2686, 7
  %v2688 = vsub.s32 %v2685, %v2687
  %v2689 = vrot.slane %v2675, %v2688
  %v2690 = vcombine.low %v2682, %v2689
  %v2691 = vcombine.low %v2518, %v2519
  %v2692 = vcombine.low %v2520, %v2521
  %v2694 = vunpack.c.l.s4 1983009808
  %v2695 = vunpack.c.0.s8 %v2694
  %v2696 = vlaneseq
  %v2697 = vshrl.u32 %v2696, 7
  %v2698 = vsub.s32 %v2695, %v2697
  %v2699 = vrot.slane %v2691, %v2698
  %v2701 = vunpack.c.l.s4 1983009808
  %v2702 = vunpack.c.0.s8 %v2701
  %v2703 = vlaneseq
  %v2704 = vshrl.u32 %v2703, 7
  %v2705 = vsub.s32 %v2702, %v2704
  %v2706 = vrot.slane %v2692, %v2705
  %v2707 = vcombine.low %v2699, %v2706
  %v2708 = vcombine.low %v2266, %v2267
  %v2709 = vcombine.low %v2268, %v2269
  %v2711 = vunpack.c.l.s4 1983009808
  %v2712 = vunpack.c.0.s8 %v2711
  %v2713 = vlaneseq
  %v2714 = vshrl.u32 %v2713, 7
  %v2715 = vsub.s32 %v2712, %v2714
  %v2716 = vrot.slane %v2708, %v2715
  %v2718 = vunpack.c.l.s4 1983009808
  %v2719 = vunpack.c.0.s8 %v2718
  %v2720 = vlaneseq
  %v2721 = vshrl.u32 %v2720, 7
  %v2722 = vsub.s32 %v2719, %v2721
  %v2723 = vrot.slane %v2709, %v2722
  %v2724 = vcombine.low %v2716, %v2723
  %v2725 = vcombine.low %v2522, %v2523
  %v2726 = vcombine.low %v2524, %v2525
  %v2728 = vunpack.c.l.s4 1983009808
  %v2729 = vunpack.c.0.s8 %v2728
  %v2730 = vlaneseq
  %v2731 = vshrl.u32 %v2730, 7
  %v2732 = vsub.s32 %v2729, %v2731
  %v2733 = vrot.slane %v2725, %v2732
  %v2735 = vunpack.c.l.s4 1983009808
  %v2736 = vunpack.c.0.s8 %v2735
  %v2737 = vlaneseq
  %v2738 = vshrl.u32 %v2737, 7
  %v2739 = vsub.s32 %v2736, %v2738
  %v2740 = vrot.slane %v2726, %v2739
  %v2741 = vcombine.low %v2733, %v2740
  %v2742 = vcombine.low %v2270, %v2271
  %v2743 = vcombine.low %v2272, %v2273
  %v2745 = vunpack.c.l.s4 1983009808
  %v2746 = vunpack.c.0.s8 %v2745
  %v2747 = vlaneseq
  %v2748 = vshrl.u32 %v2747, 7
  %v2749 = vsub.s32 %v2746, %v2748
  %v2750 = vrot.slane %v2742, %v2749
  %v2752 = vunpack.c.l.s4 1983009808
  %v2753 = vunpack.c.0.s8 %v2752
  %v2754 = vlaneseq
  %v2755 = vshrl.u32 %v2754, 7
  %v2756 = vsub.s32 %v2753, %v2755
  %v2757 = vrot.slane %v2743, %v2756
  %v2758 = vcombine.low %v2750, %v2757
  %v2759 = vcombine.low %v2526, %v2527
  %v2760 = vcombine.low %v2528, %v2529
  %v2762 = vunpack.c.l.s4 1983009808
  %v2763 = vunpack.c.0.s8 %v2762
  %v2764 = vlaneseq
  %v2765 = vshrl.u32 %v2764, 7
  %v2766 = vsub.s32 %v2763, %v2765
  %v2767 = vrot.slane %v2759, %v2766
  %v2769 = vunpack.c.l.s4 1983009808
  %v2770 = vunpack.c.0.s8 %v2769
  %v2771 = vlaneseq
  %v2772 = vshrl.u32 %v2771, 7
  %v2773 = vsub.s32 %v2770, %v2772
  %v2774 = vrot.slane %v2760, %v2773
  %v2775 = vcombine.low %v2767, %v2774
  %v2776 = vcombine.low %v2274, %v2275
  %v2777 = vcombine.low %v2276, %v2277
  %v2779 = vunpack.c.l.s4 1983009808
  %v2780 = vunpack.c.0.s8 %v2779
  %v2781 = vlaneseq
  %v2782 = vshrl.u32 %v2781, 7
  %v2783 = vsub.s32 %v2780, %v2782
  %v2784 = vrot.slane %v2776, %v2783
  %v2786 = vunpack.c.l.s4 1983009808
  %v2787 = vunpack.c.0.s8 %v2786
  %v2788 = vlaneseq
  %v2789 = vshrl.u32 %v2788, 7
  %v2790 = vsub.s32 %v2787, %v2789
  %v2791 = vrot.slane %v2777, %v2790
  %v2792 = vcombine.low %v2784, %v2791
  %v2793 = vcombine.low %v2530, %v2531
  %v2794 = vcombine.low %v2532, %v2533
  %v2796 = vunpack.c.l.s4 1983009808
  %v2797 = vunpack.c.0.s8 %v2796
  %v2798 = vlaneseq
  %v2799 = vshrl.u32 %v2798, 7
  %v2800 = vsub.s32 %v2797, %v2799
  %v2801 = vrot.slane %v2793, %v2800
  %v2803 = vunpack.c.l.s4 1983009808
  %v2804 = vunpack.c.0.s8 %v2803
  %v2805 = vlaneseq
  %v2806 = vshrl.u32 %v2805, 7
  %v2807 = vsub.s32 %v2804, %v2806
  %v2808 = vrot.slane %v2794, %v2807
  %v2809 = vcombine.low %v2801, %v2808
  %v2810 = vcombine.low %v2278, %v2279
  %v2811 = vcombine.low %v2280, %v2281
  %v2813 = vunpack.c.l.s4 1983009808
  %v2814 = vunpack.c.0.s8 %v2813
  %v2815 = vlaneseq
  %v2816 = vshrl.u32 %v2815, 7
  %v2817 = vsub.s32 %v2814, %v2816
  %v2818 = vrot.slane %v2810, %v2817
  %v2820 = vunpack.c.l.s4 1983009808
  %v2821 = vunpack.c.0.s8 %v2820
  %v2822 = vlaneseq
  %v2823 = vshrl.u32 %v2822, 7
  %v2824 = vsub.s32 %v2821, %v2823
  %v2825 = vrot.slane %v2811, %v2824
  %v2826 = vcombine.low %v2818, %v2825
  %v2827 = vcombine.low %v2534, %v2535
  %v2828 = vcombine.low %v2536, %v2537
  %v2830 = vunpack.c.l.s4 1983009808
  %v2831 = vunpack.c.0.s8 %v2830
  %v2832 = vlaneseq
  %v2833 = vshrl.u32 %v2832, 7
  %v2834 = vsub.s32 %v2831, %v2833
  %v2835 = vrot.slane %v2827, %v2834
  %v2837 = vunpack.c.l.s4 1983009808
  %v2838 = vunpack.c.0.s8 %v2837
  %v2839 = vlaneseq
  %v2840 = vshrl.u32 %v2839, 7
  %v2841 = vsub.s32 %v2838, %v2840
  %v2842 = vrot.slane %v2828, %v2841
  %v2843 = vcombine.low %v2835, %v2842
  %v2844 = vcombine.low %v2282, %v2283
  %v2845 = vcombine.low %v2284, %v2285
  %v2847 = vunpack.c.l.s4 1983009808
  %v2848 = vunpack.c.0.s8 %v2847
  %v2849 = vlaneseq
  %v2850 = vshrl.u32 %v2849, 7
  %v2851 = vsub.s32 %v2848, %v2850
  %v2852 = vrot.slane %v2844, %v2851
  %v2854 = vunpack.c.l.s4 1983009808
  %v2855 = vunpack.c.0.s8 %v2854
  %v2856 = vlaneseq
  %v2857 = vshrl.u32 %v2856, 7
  %v2858 = vsub.s32 %v2855, %v2857
  %v2859 = vrot.slane %v2845, %v2858
  %v2860 = vcombine.low %v2852, %v2859
  %v2861 = vcombine.low %v2538, %v2539
  %v2862 = vcombine.low %v2540, %v2541
  %v2864 = vunpack.c.l.s4 1983009808
  %v2865 = vunpack.c.0.s8 %v2864
  %v2866 = vlaneseq
  %v2867 = vshrl.u32 %v2866, 7
  %v2868 = vsub.s32 %v2865, %v2867
  %v2869 = vrot.slane %v2861, %v2868
  %v2871 = vunpack.c.l.s4 1983009808
  %v2872 = vunpack.c.0.s8 %v2871
  %v2873 = vlaneseq
  %v2874 = vshrl.u32 %v2873, 7
  %v2875 = vsub.s32 %v2872, %v2874
  %v2876 = vrot.slane %v2862, %v2875
  %v2877 = vcombine.low %v2869, %v2876
  %v2894 = vsel %vm555, %v2622, 0.0
  %v2895 = vsel %vm555, %v2639, 0.0
  %v2896 = vadd.f32 %v2894, %v2895
  %v2897 = vsel %vm555, %v2656, 0.0
  %v2898 = vadd.f32 %v2896, %v2897
  %v2899 = vsel %vm555, %v2673, 0.0
  %v2900 = vadd.f32 %v2898, %v2899
  %v2901 = vsel %vm555, %v2690, 0.0
  %v2902 = vadd.f32 %v2900, %v2901
  %v2903 = vsel %vm555, %v2707, 0.0
  %v2904 = vadd.f32 %v2902, %v2903
  %v2905 = vsel %vm555, %v2724, 0.0
  %v2906 = vadd.f32 %v2904, %v2905
  %v2907 = vsel %vm555, %v2741, 0.0
  %v2908 = vadd.f32 %v2906, %v2907
  %v2909 = vsel %vm555, %v2758, 0.0
  %v2910 = vadd.f32 %v2908, %v2909
  %v2911 = vsel %vm555, %v2775, 0.0
  %v2912 = vadd.f32 %v2910, %v2911
  %v2913 = vsel %vm555, %v2792, 0.0
  %v2914 = vadd.f32 %v2912, %v2913
  %v2915 = vsel %vm555, %v2809, 0.0
  %v2916 = vadd.f32 %v2914, %v2915
  %v2917 = vsel %vm555, %v2826, 0.0
  %v2918 = vadd.f32 %v2916, %v2917
  %v2919 = vsel %vm555, %v2843, 0.0
  %v2920 = vadd.f32 %v2918, %v2919
  %v2921 = vsel %vm555, %v2860, 0.0
  %v2922 = vadd.f32 %v2920, %v2921
  %v2923 = vsel %vm555, %v2877, 0.0
  %v2924 = vadd.f32 %v2922, %v2923
  %v2925 = vrot.slane %v2924, 4
  %v2926 = vadd.f32 %v2924, %v2925
  %v2927 = vrot.slane %v2926, 2
  %v2928 = vadd.f32 %v2926, %v2927
  %v2929 = vrot.slane %v2928, 1
  %v2930 = vadd.f32 %v2928, %v2929
  %v2931 = vmul.f32 %v2930, 0.0078125
  %v2932 = vmul.f32 %v2254, %v2254
  %v2933 = vmul.f32 %v2255, %v2255
  %v2934 = vmul.f32 %v2256, %v2256
  %v2935 = vmul.f32 %v2257, %v2257
  %v2936 = vmul.f32 %v2510, %v2510
  %v2937 = vmul.f32 %v2511, %v2511
  %v2938 = vmul.f32 %v2512, %v2512
  %v2939 = vmul.f32 %v2513, %v2513
  %v2940 = vmul.f32 %v2258, %v2258
  %v2941 = vmul.f32 %v2259, %v2259
  %v2942 = vmul.f32 %v2260, %v2260
  %v2943 = vmul.f32 %v2261, %v2261
  %v2944 = vmul.f32 %v2514, %v2514
  %v2945 = vmul.f32 %v2515, %v2515
  %v2946 = vmul.f32 %v2516, %v2516
  %v2947 = vmul.f32 %v2517, %v2517
  %v2948 = vmul.f32 %v2262, %v2262
  %v2949 = vmul.f32 %v2263, %v2263
  %v2950 = vmul.f32 %v2264, %v2264
  %v2951 = vmul.f32 %v2265, %v2265
  %v2952 = vmul.f32 %v2518, %v2518
  %v2953 = vmul.f32 %v2519, %v2519
  %v2954 = vmul.f32 %v2520, %v2520
  %v2955 = vmul.f32 %v2521, %v2521
  %v2956 = vmul.f32 %v2266, %v2266
  %v2957 = vmul.f32 %v2267, %v2267
  %v2958 = vmul.f32 %v2268, %v2268
  %v2959 = vmul.f32 %v2269, %v2269
  %v2960 = vmul.f32 %v2522, %v2522
  %v2961 = vmul.f32 %v2523, %v2523
  %v2962 = vmul.f32 %v2524, %v2524
  %v2963 = vmul.f32 %v2525, %v2525
  %v2964 = vmul.f32 %v2270, %v2270
  %v2965 = vmul.f32 %v2271, %v2271
  %v2966 = vmul.f32 %v2272, %v2272
  %v2967 = vmul.f32 %v2273, %v2273
  %v2968 = vmul.f32 %v2526, %v2526
  %v2969 = vmul.f32 %v2527, %v2527
  %v2970 = vmul.f32 %v2528, %v2528
  %v2971 = vmul.f32 %v2529, %v2529
  %v2972 = vmul.f32 %v2274, %v2274
  %v2973 = vmul.f32 %v2275, %v2275
  %v2974 = vmul.f32 %v2276, %v2276
  %v2975 = vmul.f32 %v2277, %v2277
  %v2976 = vmul.f32 %v2530, %v2530
  %v2977 = vmul.f32 %v2531, %v2531
  %v2978 = vmul.f32 %v2532, %v2532
  %v2979 = vmul.f32 %v2533, %v2533
  %v2980 = vmul.f32 %v2278, %v2278
  %v2981 = vmul.f32 %v2279, %v2279
  %v2982 = vmul.f32 %v2280, %v2280
  %v2983 = vmul.f32 %v2281, %v2281
  %v2984 = vmul.f32 %v2534, %v2534
  %v2985 = vmul.f32 %v2535, %v2535
  %v2986 = vmul.f32 %v2536, %v2536
  %v2987 = vmul.f32 %v2537, %v2537
  %v2988 = vmul.f32 %v2282, %v2282
  %v2989 = vmul.f32 %v2283, %v2283
  %v2990 = vmul.f32 %v2284, %v2284
  %v2991 = vmul.f32 %v2285, %v2285
  %v2992 = vmul.f32 %v2538, %v2538
  %v2993 = vmul.f32 %v2539, %v2539
  %v2994 = vmul.f32 %v2540, %v2540
  %v2995 = vmul.f32 %v2541, %v2541
  %v3060 = vcombine.low %v2932, %v2933
  %v3061 = vcombine.low %v2934, %v2935
  %v3063 = vunpack.c.l.s4 1983009808
  %v3064 = vunpack.c.0.s8 %v3063
  %v3065 = vlaneseq
  %v3066 = vshrl.u32 %v3065, 7
  %v3067 = vsub.s32 %v3064, %v3066
  %v3068 = vrot.slane %v3060, %v3067
  %v3070 = vunpack.c.l.s4 1983009808
  %v3071 = vunpack.c.0.s8 %v3070
  %v3072 = vlaneseq
  %v3073 = vshrl.u32 %v3072, 7
  %v3074 = vsub.s32 %v3071, %v3073
  %v3075 = vrot.slane %v3061, %v3074
  %v3076 = vcombine.low %v3068, %v3075
  %v3077 = vcombine.low %v2936, %v2937
  %v3078 = vcombine.low %v2938, %v2939
  %v3080 = vunpack.c.l.s4 1983009808
  %v3081 = vunpack.c.0.s8 %v3080
  %v3082 = vlaneseq
  %v3083 = vshrl.u32 %v3082, 7
  %v3084 = vsub.s32 %v3081, %v3083
  %v3085 = vrot.slane %v3077, %v3084
  %v3087 = vunpack.c.l.s4 1983009808
  %v3088 = vunpack.c.0.s8 %v3087
  %v3089 = vlaneseq
  %v3090 = vshrl.u32 %v3089, 7
  %v3091 = vsub.s32 %v3088, %v3090
  %v3092 = vrot.slane %v3078, %v3091
  %v3093 = vcombine.low %v3085, %v3092
  %v3094 = vcombine.low %v2940, %v2941
  %v3095 = vcombine.low %v2942, %v2943
  %v3097 = vunpack.c.l.s4 1983009808
  %v3098 = vunpack.c.0.s8 %v3097
  %v3099 = vlaneseq
  %v3100 = vshrl.u32 %v3099, 7
  %v3101 = vsub.s32 %v3098, %v3100
  %v3102 = vrot.slane %v3094, %v3101
  %v3104 = vunpack.c.l.s4 1983009808
  %v3105 = vunpack.c.0.s8 %v3104
  %v3106 = vlaneseq
  %v3107 = vshrl.u32 %v3106, 7
  %v3108 = vsub.s32 %v3105, %v3107
  %v3109 = vrot.slane %v3095, %v3108
  %v3110 = vcombine.low %v3102, %v3109
  %v3111 = vcombine.low %v2944, %v2945
  %v3112 = vcombine.low %v2946, %v2947
  %v3114 = vunpack.c.l.s4 1983009808
  %v3115 = vunpack.c.0.s8 %v3114
  %v3116 = vlaneseq
  %v3117 = vshrl.u32 %v3116, 7
  %v3118 = vsub.s32 %v3115, %v3117
  %v3119 = vrot.slane %v3111, %v3118
  %v3121 = vunpack.c.l.s4 1983009808
  %v3122 = vunpack.c.0.s8 %v3121
  %v3123 = vlaneseq
  %v3124 = vshrl.u32 %v3123, 7
  %v3125 = vsub.s32 %v3122, %v3124
  %v3126 = vrot.slane %v3112, %v3125
  %v3127 = vcombine.low %v3119, %v3126
  %v3128 = vcombine.low %v2948, %v2949
  %v3129 = vcombine.low %v2950, %v2951
  %v3131 = vunpack.c.l.s4 1983009808
  %v3132 = vunpack.c.0.s8 %v3131
  %v3133 = vlaneseq
  %v3134 = vshrl.u32 %v3133, 7
  %v3135 = vsub.s32 %v3132, %v3134
  %v3136 = vrot.slane %v3128, %v3135
  %v3138 = vunpack.c.l.s4 1983009808
  %v3139 = vunpack.c.0.s8 %v3138
  %v3140 = vlaneseq
  %v3141 = vshrl.u32 %v3140, 7
  %v3142 = vsub.s32 %v3139, %v3141
  %v3143 = vrot.slane %v3129, %v3142
  %v3144 = vcombine.low %v3136, %v3143
  %v3145 = vcombine.low %v2952, %v2953
  %v3146 = vcombine.low %v2954, %v2955
  %v3148 = vunpack.c.l.s4 1983009808
  %v3149 = vunpack.c.0.s8 %v3148
  %v3150 = vlaneseq
  %v3151 = vshrl.u32 %v3150, 7
  %v3152 = vsub.s32 %v3149, %v3151
  %v3153 = vrot.slane %v3145, %v3152
  %v3155 = vunpack.c.l.s4 1983009808
  %v3156 = vunpack.c.0.s8 %v3155
  %v3157 = vlaneseq
  %v3158 = vshrl.u32 %v3157, 7
  %v3159 = vsub.s32 %v3156, %v3158
  %v3160 = vrot.slane %v3146, %v3159
  %v3161 = vcombine.low %v3153, %v3160
  %v3162 = vcombine.low %v2956, %v2957
  %v3163 = vcombine.low %v2958, %v2959
  %v3165 = vunpack.c.l.s4 1983009808
  %v3166 = vunpack.c.0.s8 %v3165
  %v3167 = vlaneseq
  %v3168 = vshrl.u32 %v3167, 7
  %v3169 = vsub.s32 %v3166, %v3168
  %v3170 = vrot.slane %v3162, %v3169
  %v3172 = vunpack.c.l.s4 1983009808
  %v3173 = vunpack.c.0.s8 %v3172
  %v3174 = vlaneseq
  %v3175 = vshrl.u32 %v3174, 7
  %v3176 = vsub.s32 %v3173, %v3175
  %v3177 = vrot.slane %v3163, %v3176
  %v3178 = vcombine.low %v3170, %v3177
  %v3179 = vcombine.low %v2960, %v2961
  %v3180 = vcombine.low %v2962, %v2963
  %v3182 = vunpack.c.l.s4 1983009808
  %v3183 = vunpack.c.0.s8 %v3182
  %v3184 = vlaneseq
  %v3185 = vshrl.u32 %v3184, 7
  %v3186 = vsub.s32 %v3183, %v3185
  %v3187 = vrot.slane %v3179, %v3186
  %v3189 = vunpack.c.l.s4 1983009808
  %v3190 = vunpack.c.0.s8 %v3189
  %v3191 = vlaneseq
  %v3192 = vshrl.u32 %v3191, 7
  %v3193 = vsub.s32 %v3190, %v3192
  %v3194 = vrot.slane %v3180, %v3193
  %v3195 = vcombine.low %v3187, %v3194
  %v3196 = vcombine.low %v2964, %v2965
  %v3197 = vcombine.low %v2966, %v2967
  %v3199 = vunpack.c.l.s4 1983009808
  %v3200 = vunpack.c.0.s8 %v3199
  %v3201 = vlaneseq
  %v3202 = vshrl.u32 %v3201, 7
  %v3203 = vsub.s32 %v3200, %v3202
  %v3204 = vrot.slane %v3196, %v3203
  %v3206 = vunpack.c.l.s4 1983009808
  %v3207 = vunpack.c.0.s8 %v3206
  %v3208 = vlaneseq
  %v3209 = vshrl.u32 %v3208, 7
  %v3210 = vsub.s32 %v3207, %v3209
  %v3211 = vrot.slane %v3197, %v3210
  %v3212 = vcombine.low %v3204, %v3211
  %v3213 = vcombine.low %v2968, %v2969
  %v3214 = vcombine.low %v2970, %v2971
  %v3216 = vunpack.c.l.s4 1983009808
  %v3217 = vunpack.c.0.s8 %v3216
  %v3218 = vlaneseq
  %v3219 = vshrl.u32 %v3218, 7
  %v3220 = vsub.s32 %v3217, %v3219
  %v3221 = vrot.slane %v3213, %v3220
  %v3223 = vunpack.c.l.s4 1983009808
  %v3224 = vunpack.c.0.s8 %v3223
  %v3225 = vlaneseq
  %v3226 = vshrl.u32 %v3225, 7
  %v3227 = vsub.s32 %v3224, %v3226
  %v3228 = vrot.slane %v3214, %v3227
  %v3229 = vcombine.low %v3221, %v3228
  %v3230 = vcombine.low %v2972, %v2973
  %v3231 = vcombine.low %v2974, %v2975
  %v3233 = vunpack.c.l.s4 1983009808
  %v3234 = vunpack.c.0.s8 %v3233
  %v3235 = vlaneseq
  %v3236 = vshrl.u32 %v3235, 7
  %v3237 = vsub.s32 %v3234, %v3236
  %v3238 = vrot.slane %v3230, %v3237
  %v3240 = vunpack.c.l.s4 1983009808
  %v3241 = vunpack.c.0.s8 %v3240
  %v3242 = vlaneseq
  %v3243 = vshrl.u32 %v3242, 7
  %v3244 = vsub.s32 %v3241, %v3243
  %v3245 = vrot.slane %v3231, %v3244
  %v3246 = vcombine.low %v3238, %v3245
  %v3247 = vcombine.low %v2976, %v2977
  %v3248 = vcombine.low %v2978, %v2979
  %v3250 = vunpack.c.l.s4 1983009808
  %v3251 = vunpack.c.0.s8 %v3250
  %v3252 = vlaneseq
  %v3253 = vshrl.u32 %v3252, 7
  %v3254 = vsub.s32 %v3251, %v3253
  %v3255 = vrot.slane %v3247, %v3254
  %v3257 = vunpack.c.l.s4 1983009808
  %v3258 = vunpack.c.0.s8 %v3257
  %v3259 = vlaneseq
  %v3260 = vshrl.u32 %v3259, 7
  %v3261 = vsub.s32 %v3258, %v3260
  %v3262 = vrot.slane %v3248, %v3261
  %v3263 = vcombine.low %v3255, %v3262
  %v3264 = vcombine.low %v2980, %v2981
  %v3265 = vcombine.low %v2982, %v2983
  %v3267 = vunpack.c.l.s4 1983009808
  %v3268 = vunpack.c.0.s8 %v3267
  %v3269 = vlaneseq
  %v3270 = vshrl.u32 %v3269, 7
  %v3271 = vsub.s32 %v3268, %v3270
  %v3272 = vrot.slane %v3264, %v3271
  %v3274 = vunpack.c.l.s4 1983009808
  %v3275 = vunpack.c.0.s8 %v3274
  %v3276 = vlaneseq
  %v3277 = vshrl.u32 %v3276, 7
  %v3278 = vsub.s32 %v3275, %v3277
  %v3279 = vrot.slane %v3265, %v3278
  %v3280 = vcombine.low %v3272, %v3279
  %v3281 = vcombine.low %v2984, %v2985
  %v3282 = vcombine.low %v2986, %v2987
  %v3284 = vunpack.c.l.s4 1983009808
  %v3285 = vunpack.c.0.s8 %v3284
  %v3286 = vlaneseq
  %v3287 = vshrl.u32 %v3286, 7
  %v3288 = vsub.s32 %v3285, %v3287
  %v3289 = vrot.slane %v3281, %v3288
  %v3291 = vunpack.c.l.s4 1983009808
  %v3292 = vunpack.c.0.s8 %v3291
  %v3293 = vlaneseq
  %v3294 = vshrl.u32 %v3293, 7
  %v3295 = vsub.s32 %v3292, %v3294
  %v3296 = vrot.slane %v3282, %v3295
  %v3297 = vcombine.low %v3289, %v3296
  %v3298 = vcombine.low %v2988, %v2989
  %v3299 = vcombine.low %v2990, %v2991
  %v3301 = vunpack.c.l.s4 1983009808
  %v3302 = vunpack.c.0.s8 %v3301
  %v3303 = vlaneseq
  %v3304 = vshrl.u32 %v3303, 7
  %v3305 = vsub.s32 %v3302, %v3304
  %v3306 = vrot.slane %v3298, %v3305
  %v3308 = vunpack.c.l.s4 1983009808
  %v3309 = vunpack.c.0.s8 %v3308
  %v3310 = vlaneseq
  %v3311 = vshrl.u32 %v3310, 7
  %v3312 = vsub.s32 %v3309, %v3311
  %v3313 = vrot.slane %v3299, %v3312
  %v3314 = vcombine.low %v3306, %v3313
  %v3315 = vcombine.low %v2992, %v2993
  %v3316 = vcombine.low %v2994, %v2995
  %v3318 = vunpack.c.l.s4 1983009808
  %v3319 = vunpack.c.0.s8 %v3318
  %v3320 = vlaneseq
  %v3321 = vshrl.u32 %v3320, 7
  %v3322 = vsub.s32 %v3319, %v3321
  %v3323 = vrot.slane %v3315, %v3322
  %v3325 = vunpack.c.l.s4 1983009808
  %v3326 = vunpack.c.0.s8 %v3325
  %v3327 = vlaneseq
  %v3328 = vshrl.u32 %v3327, 7
  %v3329 = vsub.s32 %v3326, %v3328
  %v3330 = vrot.slane %v3316, %v3329
  %v3331 = vcombine.low %v3323, %v3330
  %v3348 = vsel %vm555, %v3076, 0.0
  %v3349 = vsel %vm555, %v3093, 0.0
  %v3350 = vadd.f32 %v3348, %v3349
  %v3351 = vsel %vm555, %v3110, 0.0
  %v3352 = vadd.f32 %v3350, %v3351
  %v3353 = vsel %vm555, %v3127, 0.0
  %v3354 = vadd.f32 %v3352, %v3353
  %v3355 = vsel %vm555, %v3144, 0.0
  %v3356 = vadd.f32 %v3354, %v3355
  %v3357 = vsel %vm555, %v3161, 0.0
  %v3358 = vadd.f32 %v3356, %v3357
  %v3359 = vsel %vm555, %v3178, 0.0
  %v3360 = vadd.f32 %v3358, %v3359
  %v3361 = vsel %vm555, %v3195, 0.0
  %v3362 = vadd.f32 %v3360, %v3361
  %v3363 = vsel %vm555, %v3212, 0.0
  %v3364 = vadd.f32 %v3362, %v3363
  %v3365 = vsel %vm555, %v3229, 0.0
  %v3366 = vadd.f32 %v3364, %v3365
  %v3367 = vsel %vm555, %v3246, 0.0
  %v3368 = vadd.f32 %v3366, %v3367
  %v3369 = vsel %vm555, %v3263, 0.0
  %v3370 = vadd.f32 %v3368, %v3369
  %v3371 = vsel %vm555, %v3280, 0.0
  %v3372 = vadd.f32 %v3370, %v3371
  %v3373 = vsel %vm555, %v3297, 0.0
  %v3374 = vadd.f32 %v3372, %v3373
  %v3375 = vsel %vm555, %v3314, 0.0
  %v3376 = vadd.f32 %v3374, %v3375
  %v3377 = vsel %vm555, %v3331, 0.0
  %v3378 = vadd.f32 %v3376, %v3377
  %v3379 = vrot.slane %v3378, 4
  %v3380 = vadd.f32 %v3378, %v3379
  %v3381 = vrot.slane %v3380, 2
  %v3382 = vadd.f32 %v3380, %v3381
  %v3383 = vrot.slane %v3382, 1
  %v3384 = vadd.f32 %v3382, %v3383
  %v3385 = vmul.f32 %v3384, 0.0078125
  %v3386 = vmul.f32 %v2931, %v2931
  %v3387 = vsub.f32 %v3385, %v3386
  %v3388 = vld [vmem:[%s14] sm:$0x1]
  %v3389 = vadd.f32 %v3387, 1e-05
  %v3390 = vrsqrt.pop %v3389
  %v3391 = vmul.f32 %v3388, %v3390
  %v3392 = vld [vmem:[%s15] sm:$0x1]
  %v3393 = vmul.f32 %v2931, %v3391
  %v3394 = vsub.f32 %v3392, %v3393
  %v3396 = vlaneseq
  %v3397 = vshrl.u32 %v3396, 7
  %v3398 = vsub.s32 0, %v3397
  %v3399 = vrot.slane %v3391, %v3398
  %v3400 = vcombine.high %v3399, %v3399
  %v3402 = vunpack.c.l.s4 1983009808
  %v3403 = vunpack.c.0.s8 %v3402
  %v3404 = vlaneseq
  %v3405 = vshrl.u32 %v3404, 7
  %v3406 = vsub.s32 %v3403, %v3405
  %v3407 = vrot.slane %v3399, %v3406
  %v3409 = vunpack.c.l.s4 1983009808
  %v3410 = vunpack.c.0.s8 %v3409
  %v3411 = vlaneseq
  %v3412 = vshrl.u32 %v3411, 7
  %v3413 = vsub.s32 %v3410, %v3412
  %v3414 = vrot.slane %v3400, %v3413
  %v3415 = vcombine.high %v3407, %v3407
  %v3416 = vcombine.high %v3414, %v3414
  %v3421 = vmul.f32 %v2254, %v3407
  %v3422 = vmul.f32 %v2255, %v3415
  %v3423 = vmul.f32 %v2256, %v3414
  %v3424 = vmul.f32 %v2257, %v3416
  %v3425 = vmul.f32 %v2510, %v3407
  %v3426 = vmul.f32 %v2511, %v3415
  %v3427 = vmul.f32 %v2512, %v3414
  %v3428 = vmul.f32 %v2513, %v3416
  %v3429 = vmul.f32 %v2258, %v3407
  %v3430 = vmul.f32 %v2259, %v3415
  %v3431 = vmul.f32 %v2260, %v3414
  %v3432 = vmul.f32 %v2261, %v3416
  %v3433 = vmul.f32 %v2514, %v3407
  %v3434 = vmul.f32 %v2515, %v3415
  %v3435 = vmul.f32 %v2516, %v3414
  %v3436 = vmul.f32 %v2517, %v3416
  %v3437 = vmul.f32 %v2262, %v3407
  %v3438 = vmul.f32 %v2263, %v3415
  %v3439 = vmul.f32 %v2264, %v3414
  %v3440 = vmul.f32 %v2265, %v3416
  %v3441 = vmul.f32 %v2518, %v3407
  %v3442 = vmul.f32 %v2519, %v3415
  %v3443 = vmul.f32 %v2520, %v3414
  %v3444 = vmul.f32 %v2521, %v3416
  %v3445 = vmul.f32 %v2266, %v3407
  %v3446 = vmul.f32 %v2267, %v3415
  %v3447 = vmul.f32 %v2268, %v3414
  %v3448 = vmul.f32 %v2269, %v3416
  %v3449 = vmul.f32 %v2522, %v3407
  %v3450 = vmul.f32 %v2523, %v3415
  %v3451 = vmul.f32 %v2524, %v3414
  %v3452 = vmul.f32 %v2525, %v3416
  %v3453 = vmul.f32 %v2270, %v3407
  %v3454 = vmul.f32 %v2271, %v3415
  %v3455 = vmul.f32 %v2272, %v3414
  %v3456 = vmul.f32 %v2273, %v3416
  %v3457 = vmul.f32 %v2526, %v3407
  %v3458 = vmul.f32 %v2527, %v3415
  %v3459 = vmul.f32 %v2528, %v3414
  %v3460 = vmul.f32 %v2529, %v3416
  %v3461 = vmul.f32 %v2274, %v3407
  %v3462 = vmul.f32 %v2275, %v3415
  %v3463 = vmul.f32 %v2276, %v3414
  %v3464 = vmul.f32 %v2277, %v3416
  %v3465 = vmul.f32 %v2530, %v3407
  %v3466 = vmul.f32 %v2531, %v3415
  %v3467 = vmul.f32 %v2532, %v3414
  %v3468 = vmul.f32 %v2533, %v3416
  %v3469 = vmul.f32 %v2278, %v3407
  %v3470 = vmul.f32 %v2279, %v3415
  %v3471 = vmul.f32 %v2280, %v3414
  %v3472 = vmul.f32 %v2281, %v3416
  %v3473 = vmul.f32 %v2534, %v3407
  %v3474 = vmul.f32 %v2535, %v3415
  %v3475 = vmul.f32 %v2536, %v3414
  %v3476 = vmul.f32 %v2537, %v3416
  %v3477 = vmul.f32 %v2282, %v3407
  %v3478 = vmul.f32 %v2283, %v3415
  %v3479 = vmul.f32 %v2284, %v3414
  %v3480 = vmul.f32 %v2285, %v3416
  %v3481 = vmul.f32 %v2538, %v3407
  %v3482 = vmul.f32 %v2539, %v3415
  %v3483 = vmul.f32 %v2540, %v3414
  %v3484 = vmul.f32 %v2541, %v3416
  %v3486 = vlaneseq
  %v3487 = vshrl.u32 %v3486, 7
  %v3488 = vsub.s32 0, %v3487
  %v3489 = vrot.slane %v3394, %v3488
  %v3490 = vcombine.high %v3489, %v3489
  %v3492 = vunpack.c.l.s4 1983009808
  %v3493 = vunpack.c.0.s8 %v3492
  %v3494 = vlaneseq
  %v3495 = vshrl.u32 %v3494, 7
  %v3496 = vsub.s32 %v3493, %v3495
  %v3497 = vrot.slane %v3489, %v3496
  %v3499 = vunpack.c.l.s4 1983009808
  %v3500 = vunpack.c.0.s8 %v3499
  %v3501 = vlaneseq
  %v3502 = vshrl.u32 %v3501, 7
  %v3503 = vsub.s32 %v3500, %v3502
  %v3504 = vrot.slane %v3490, %v3503
  %v3505 = vcombine.high %v3497, %v3497
  %v3506 = vcombine.high %v3504, %v3504
  %v3511 = vadd.f32 %v3421, %v3497
  %v3512 = vadd.f32 %v3422, %v3505
  %v3513 = vadd.f32 %v3423, %v3504
  %v3514 = vadd.f32 %v3424, %v3506
  %v3515 = vadd.f32 %v3425, %v3497
  %v3516 = vadd.f32 %v3426, %v3505
  %v3517 = vadd.f32 %v3427, %v3504
  %v3518 = vadd.f32 %v3428, %v3506
  %v3519 = vadd.f32 %v3429, %v3497
  %v3520 = vadd.f32 %v3430, %v3505
  %v3521 = vadd.f32 %v3431, %v3504
  %v3522 = vadd.f32 %v3432, %v3506
  %v3523 = vadd.f32 %v3433, %v3497
  %v3524 = vadd.f32 %v3434, %v3505
  %v3525 = vadd.f32 %v3435, %v3504
  %v3526 = vadd.f32 %v3436, %v3506
  %v3527 = vadd.f32 %v3437, %v3497
  %v3528 = vadd.f32 %v3438, %v3505
  %v3529 = vadd.f32 %v3439, %v3504
  %v3530 = vadd.f32 %v3440, %v3506
  %v3531 = vadd.f32 %v3441, %v3497
  %v3532 = vadd.f32 %v3442, %v3505
  %v3533 = vadd.f32 %v3443, %v3504
  %v3534 = vadd.f32 %v3444, %v3506
  %v3535 = vadd.f32 %v3445, %v3497
  %v3536 = vadd.f32 %v3446, %v3505
  %v3537 = vadd.f32 %v3447, %v3504
  %v3538 = vadd.f32 %v3448, %v3506
  %v3539 = vadd.f32 %v3449, %v3497
  %v3540 = vadd.f32 %v3450, %v3505
  %v3541 = vadd.f32 %v3451, %v3504
  %v3542 = vadd.f32 %v3452, %v3506
  %v3543 = vadd.f32 %v3453, %v3497
  %v3544 = vadd.f32 %v3454, %v3505
  %v3545 = vadd.f32 %v3455, %v3504
  %v3546 = vadd.f32 %v3456, %v3506
  %v3547 = vadd.f32 %v3457, %v3497
  %v3548 = vadd.f32 %v3458, %v3505
  %v3549 = vadd.f32 %v3459, %v3504
  %v3550 = vadd.f32 %v3460, %v3506
  %v3551 = vadd.f32 %v3461, %v3497
  %v3552 = vadd.f32 %v3462, %v3505
  %v3553 = vadd.f32 %v3463, %v3504
  %v3554 = vadd.f32 %v3464, %v3506
  %v3555 = vadd.f32 %v3465, %v3497
  %v3556 = vadd.f32 %v3466, %v3505
  %v3557 = vadd.f32 %v3467, %v3504
  %v3558 = vadd.f32 %v3468, %v3506
  %v3559 = vadd.f32 %v3469, %v3497
  %v3560 = vadd.f32 %v3470, %v3505
  %v3561 = vadd.f32 %v3471, %v3504
  %v3562 = vadd.f32 %v3472, %v3506
  %v3563 = vadd.f32 %v3473, %v3497
  %v3564 = vadd.f32 %v3474, %v3505
  %v3565 = vadd.f32 %v3475, %v3504
  %v3566 = vadd.f32 %v3476, %v3506
  %v3567 = vadd.f32 %v3477, %v3497
  %v3568 = vadd.f32 %v3478, %v3505
  %v3569 = vadd.f32 %v3479, %v3504
  %v3570 = vadd.f32 %v3480, %v3506
  %v3571 = vadd.f32 %v3481, %v3497
  %v3572 = vadd.f32 %v3482, %v3505
  %v3573 = vadd.f32 %v3483, %v3504
  %v3574 = vadd.f32 %v3484, %v3506
  %v3639 = vcombine.low %v3511, %v3512
  %v3640 = vcombine.low %v3513, %v3514
  %v3642 = vunpack.c.l.s4 1983009808
  %v3643 = vunpack.c.0.s8 %v3642
  %v3644 = vlaneseq
  %v3645 = vshrl.u32 %v3644, 7
  %v3646 = vsub.s32 %v3643, %v3645
  %v3647 = vrot.slane %v3639, %v3646
  %v3649 = vunpack.c.l.s4 1983009808
  %v3650 = vunpack.c.0.s8 %v3649
  %v3651 = vlaneseq
  %v3652 = vshrl.u32 %v3651, 7
  %v3653 = vsub.s32 %v3650, %v3652
  %v3654 = vrot.slane %v3640, %v3653
  %v3655 = vcombine.low %v3647, %v3654
  %v3656 = vcombine.low %v3515, %v3516
  %v3657 = vcombine.low %v3517, %v3518
  %v3659 = vunpack.c.l.s4 1983009808
  %v3660 = vunpack.c.0.s8 %v3659
  %v3661 = vlaneseq
  %v3662 = vshrl.u32 %v3661, 7
  %v3663 = vsub.s32 %v3660, %v3662
  %v3664 = vrot.slane %v3656, %v3663
  %v3666 = vunpack.c.l.s4 1983009808
  %v3667 = vunpack.c.0.s8 %v3666
  %v3668 = vlaneseq
  %v3669 = vshrl.u32 %v3668, 7
  %v3670 = vsub.s32 %v3667, %v3669
  %v3671 = vrot.slane %v3657, %v3670
  %v3672 = vcombine.low %v3664, %v3671
  %v3673 = vcombine.low %v3519, %v3520
  %v3674 = vcombine.low %v3521, %v3522
  %v3676 = vunpack.c.l.s4 1983009808
  %v3677 = vunpack.c.0.s8 %v3676
  %v3678 = vlaneseq
  %v3679 = vshrl.u32 %v3678, 7
  %v3680 = vsub.s32 %v3677, %v3679
  %v3681 = vrot.slane %v3673, %v3680
  %v3683 = vunpack.c.l.s4 1983009808
  %v3684 = vunpack.c.0.s8 %v3683
  %v3685 = vlaneseq
  %v3686 = vshrl.u32 %v3685, 7
  %v3687 = vsub.s32 %v3684, %v3686
  %v3688 = vrot.slane %v3674, %v3687
  %v3689 = vcombine.low %v3681, %v3688
  %v3690 = vcombine.low %v3523, %v3524
  %v3691 = vcombine.low %v3525, %v3526
  %v3693 = vunpack.c.l.s4 1983009808
  %v3694 = vunpack.c.0.s8 %v3693
  %v3695 = vlaneseq
  %v3696 = vshrl.u32 %v3695, 7
  %v3697 = vsub.s32 %v3694, %v3696
  %v3698 = vrot.slane %v3690, %v3697
  %v3700 = vunpack.c.l.s4 1983009808
  %v3701 = vunpack.c.0.s8 %v3700
  %v3702 = vlaneseq
  %v3703 = vshrl.u32 %v3702, 7
  %v3704 = vsub.s32 %v3701, %v3703
  %v3705 = vrot.slane %v3691, %v3704
  %v3706 = vcombine.low %v3698, %v3705
  %v3707 = vcombine.low %v3527, %v3528
  %v3708 = vcombine.low %v3529, %v3530
  %v3710 = vunpack.c.l.s4 1983009808
  %v3711 = vunpack.c.0.s8 %v3710
  %v3712 = vlaneseq
  %v3713 = vshrl.u32 %v3712, 7
  %v3714 = vsub.s32 %v3711, %v3713
  %v3715 = vrot.slane %v3707, %v3714
  %v3717 = vunpack.c.l.s4 1983009808
  %v3718 = vunpack.c.0.s8 %v3717
  %v3719 = vlaneseq
  %v3720 = vshrl.u32 %v3719, 7
  %v3721 = vsub.s32 %v3718, %v3720
  %v3722 = vrot.slane %v3708, %v3721
  %v3723 = vcombine.low %v3715, %v3722
  %v3724 = vcombine.low %v3531, %v3532
  %v3725 = vcombine.low %v3533, %v3534
  %v3727 = vunpack.c.l.s4 1983009808
  %v3728 = vunpack.c.0.s8 %v3727
  %v3729 = vlaneseq
  %v3730 = vshrl.u32 %v3729, 7
  %v3731 = vsub.s32 %v3728, %v3730
  %v3732 = vrot.slane %v3724, %v3731
  %v3734 = vunpack.c.l.s4 1983009808
  %v3735 = vunpack.c.0.s8 %v3734
  %v3736 = vlaneseq
  %v3737 = vshrl.u32 %v3736, 7
  %v3738 = vsub.s32 %v3735, %v3737
  %v3739 = vrot.slane %v3725, %v3738
  %v3740 = vcombine.low %v3732, %v3739
  %v3741 = vcombine.low %v3535, %v3536
  %v3742 = vcombine.low %v3537, %v3538
  %v3744 = vunpack.c.l.s4 1983009808
  %v3745 = vunpack.c.0.s8 %v3744
  %v3746 = vlaneseq
  %v3747 = vshrl.u32 %v3746, 7
  %v3748 = vsub.s32 %v3745, %v3747
  %v3749 = vrot.slane %v3741, %v3748
  %v3751 = vunpack.c.l.s4 1983009808
  %v3752 = vunpack.c.0.s8 %v3751
  %v3753 = vlaneseq
  %v3754 = vshrl.u32 %v3753, 7
  %v3755 = vsub.s32 %v3752, %v3754
  %v3756 = vrot.slane %v3742, %v3755
  %v3757 = vcombine.low %v3749, %v3756
  %v3758 = vcombine.low %v3539, %v3540
  %v3759 = vcombine.low %v3541, %v3542
  %v3761 = vunpack.c.l.s4 1983009808
  %v3762 = vunpack.c.0.s8 %v3761
  %v3763 = vlaneseq
  %v3764 = vshrl.u32 %v3763, 7
  %v3765 = vsub.s32 %v3762, %v3764
  %v3766 = vrot.slane %v3758, %v3765
  %v3768 = vunpack.c.l.s4 1983009808
  %v3769 = vunpack.c.0.s8 %v3768
  %v3770 = vlaneseq
  %v3771 = vshrl.u32 %v3770, 7
  %v3772 = vsub.s32 %v3769, %v3771
  %v3773 = vrot.slane %v3759, %v3772
  %v3774 = vcombine.low %v3766, %v3773
  %v3775 = vcombine.low %v3543, %v3544
  %v3776 = vcombine.low %v3545, %v3546
  %v3778 = vunpack.c.l.s4 1983009808
  %v3779 = vunpack.c.0.s8 %v3778
  %v3780 = vlaneseq
  %v3781 = vshrl.u32 %v3780, 7
  %v3782 = vsub.s32 %v3779, %v3781
  %v3783 = vrot.slane %v3775, %v3782
  %v3785 = vunpack.c.l.s4 1983009808
  %v3786 = vunpack.c.0.s8 %v3785
  %v3787 = vlaneseq
  %v3788 = vshrl.u32 %v3787, 7
  %v3789 = vsub.s32 %v3786, %v3788
  %v3790 = vrot.slane %v3776, %v3789
  %v3791 = vcombine.low %v3783, %v3790
  %v3792 = vcombine.low %v3547, %v3548
  %v3793 = vcombine.low %v3549, %v3550
  %v3795 = vunpack.c.l.s4 1983009808
  %v3796 = vunpack.c.0.s8 %v3795
  %v3797 = vlaneseq
  %v3798 = vshrl.u32 %v3797, 7
  %v3799 = vsub.s32 %v3796, %v3798
  %v3800 = vrot.slane %v3792, %v3799
  %v3802 = vunpack.c.l.s4 1983009808
  %v3803 = vunpack.c.0.s8 %v3802
  %v3804 = vlaneseq
  %v3805 = vshrl.u32 %v3804, 7
  %v3806 = vsub.s32 %v3803, %v3805
  %v3807 = vrot.slane %v3793, %v3806
  %v3808 = vcombine.low %v3800, %v3807
  %v3809 = vcombine.low %v3551, %v3552
  %v3810 = vcombine.low %v3553, %v3554
  %v3812 = vunpack.c.l.s4 1983009808
  %v3813 = vunpack.c.0.s8 %v3812
  %v3814 = vlaneseq
  %v3815 = vshrl.u32 %v3814, 7
  %v3816 = vsub.s32 %v3813, %v3815
  %v3817 = vrot.slane %v3809, %v3816
  %v3819 = vunpack.c.l.s4 1983009808
  %v3820 = vunpack.c.0.s8 %v3819
  %v3821 = vlaneseq
  %v3822 = vshrl.u32 %v3821, 7
  %v3823 = vsub.s32 %v3820, %v3822
  %v3824 = vrot.slane %v3810, %v3823
  %v3825 = vcombine.low %v3817, %v3824
  %v3826 = vcombine.low %v3555, %v3556
  %v3827 = vcombine.low %v3557, %v3558
  %v3829 = vunpack.c.l.s4 1983009808
  %v3830 = vunpack.c.0.s8 %v3829
  %v3831 = vlaneseq
  %v3832 = vshrl.u32 %v3831, 7
  %v3833 = vsub.s32 %v3830, %v3832
  %v3834 = vrot.slane %v3826, %v3833
  %v3836 = vunpack.c.l.s4 1983009808
  %v3837 = vunpack.c.0.s8 %v3836
  %v3838 = vlaneseq
  %v3839 = vshrl.u32 %v3838, 7
  %v3840 = vsub.s32 %v3837, %v3839
  %v3841 = vrot.slane %v3827, %v3840
  %v3842 = vcombine.low %v3834, %v3841
  %v3843 = vcombine.low %v3559, %v3560
  %v3844 = vcombine.low %v3561, %v3562
  %v3846 = vunpack.c.l.s4 1983009808
  %v3847 = vunpack.c.0.s8 %v3846
  %v3848 = vlaneseq
  %v3849 = vshrl.u32 %v3848, 7
  %v3850 = vsub.s32 %v3847, %v3849
  %v3851 = vrot.slane %v3843, %v3850
  %v3853 = vunpack.c.l.s4 1983009808
  %v3854 = vunpack.c.0.s8 %v3853
  %v3855 = vlaneseq
  %v3856 = vshrl.u32 %v3855, 7
  %v3857 = vsub.s32 %v3854, %v3856
  %v3858 = vrot.slane %v3844, %v3857
  %v3859 = vcombine.low %v3851, %v3858
  %v3860 = vcombine.low %v3563, %v3564
  %v3861 = vcombine.low %v3565, %v3566
  %v3863 = vunpack.c.l.s4 1983009808
  %v3864 = vunpack.c.0.s8 %v3863
  %v3865 = vlaneseq
  %v3866 = vshrl.u32 %v3865, 7
  %v3867 = vsub.s32 %v3864, %v3866
  %v3868 = vrot.slane %v3860, %v3867
  %v3870 = vunpack.c.l.s4 1983009808
  %v3871 = vunpack.c.0.s8 %v3870
  %v3872 = vlaneseq
  %v3873 = vshrl.u32 %v3872, 7
  %v3874 = vsub.s32 %v3871, %v3873
  %v3875 = vrot.slane %v3861, %v3874
  %v3876 = vcombine.low %v3868, %v3875
  %v3877 = vcombine.low %v3567, %v3568
  %v3878 = vcombine.low %v3569, %v3570
  %v3880 = vunpack.c.l.s4 1983009808
  %v3881 = vunpack.c.0.s8 %v3880
  %v3882 = vlaneseq
  %v3883 = vshrl.u32 %v3882, 7
  %v3884 = vsub.s32 %v3881, %v3883
  %v3885 = vrot.slane %v3877, %v3884
  %v3887 = vunpack.c.l.s4 1983009808
  %v3888 = vunpack.c.0.s8 %v3887
  %v3889 = vlaneseq
  %v3890 = vshrl.u32 %v3889, 7
  %v3891 = vsub.s32 %v3888, %v3890
  %v3892 = vrot.slane %v3878, %v3891
  %v3893 = vcombine.low %v3885, %v3892
  %v3894 = vcombine.low %v3571, %v3572
  %v3895 = vcombine.low %v3573, %v3574
  %v3897 = vunpack.c.l.s4 1983009808
  %v3898 = vunpack.c.0.s8 %v3897
  %v3899 = vlaneseq
  %v3900 = vshrl.u32 %v3899, 7
  %v3901 = vsub.s32 %v3898, %v3900
  %v3902 = vrot.slane %v3894, %v3901
  %v3904 = vunpack.c.l.s4 1983009808
  %v3905 = vunpack.c.0.s8 %v3904
  %v3906 = vlaneseq
  %v3907 = vshrl.u32 %v3906, 7
  %v3908 = vsub.s32 %v3905, %v3907
  %v3909 = vrot.slane %v3895, %v3908
  %v3910 = vcombine.low %v3902, %v3909
  %v3927 = vpack.c.bf16 %v3672, %v3655
  %v3928 = vpack.c.bf16 %v3706, %v3689
  %v3929 = vpack.c.bf16 %v3740, %v3723
  %v3930 = vpack.c.bf16 %v3774, %v3757
  %v3931 = vpack.c.bf16 %v3808, %v3791
  %v3932 = vpack.c.bf16 %v3842, %v3825
  %v3933 = vpack.c.bf16 %v3876, %v3859
  %v3934 = vpack.c.bf16 %v3910, %v3893
  %vm3935 = vcmask 1046528
  %v3936 = vrot.slane %v3655, 1
  %v3937 = vrot.slane 0.0, 1
  %v3938 = vsel %vm3935, %v3936, %v3937
  %v3939 = vrot.slane %v3672, 1
  %v3940 = vsel %vm3935, %v3939, %v3937
  %v3941 = vrot.slane %v3689, 1
  %v3942 = vsel %vm3935, %v3941, %v3937
  %v3943 = vrot.slane %v3706, 1
  %v3944 = vsel %vm3935, %v3943, %v3937
  %v3945 = vrot.slane %v3723, 1
  %v3946 = vsel %vm3935, %v3945, %v3937
  %v3947 = vrot.slane %v3740, 1
  %v3948 = vsel %vm3935, %v3947, %v3937
  %v3949 = vrot.slane %v3757, 1
  %v3950 = vsel %vm3935, %v3949, %v3937
  %v3951 = vrot.slane %v3774, 1
  %v3952 = vsel %vm3935, %v3951, %v3937
  %v3953 = vrot.slane %v3791, 1
  %v3954 = vsel %vm3935, %v3953, %v3937
  %v3955 = vrot.slane %v3808, 1
  %v3956 = vsel %vm3935, %v3955, %v3937
  %v3957 = vrot.slane %v3825, 1
  %v3958 = vsel %vm3935, %v3957, %v3937
  %v3959 = vrot.slane %v3842, 1
  %v3960 = vsel %vm3935, %v3959, %v3937
  %v3961 = vrot.slane %v3859, 1
  %v3962 = vsel %vm3935, %v3961, %v3937
  %v3963 = vrot.slane %v3876, 1
  %v3964 = vsel %vm3935, %v3963, %v3937
  %v3965 = vrot.slane %v3893, 1
  %v3966 = vsel %vm3935, %v3965, %v3937
  %v3967 = vrot.slane %v3910, 1
  %v3968 = vsel %vm3935, %v3967, %v3937
  %v3985 = vpack.c.bf16 %v3940, %v3938
  %v3986 = vpack.c.bf16 %v3944, %v3942
  %v3987 = vpack.c.bf16 %v3948, %v3946
  %v3988 = vpack.c.bf16 %v3952, %v3950
  %v3989 = vpack.c.bf16 %v3956, %v3954
  %v3990 = vpack.c.bf16 %v3960, %v3958
  %v3991 = vpack.c.bf16 %v3964, %v3962
  %v3992 = vpack.c.bf16 %v3968, %v3966
  %v3993 = vpack.c.bf16 %v3689, %v3672
  %v3994 = vpack.c.bf16 %v3723, %v3706
  %v3995 = vpack.c.bf16 %v3757, %v3740
  %v3996 = vpack.c.bf16 0.0, %v3774
  %v3997 = vpack.c.bf16 %v3825, %v3808
  %v3998 = vpack.c.bf16 %v3859, %v3842
  %v3999 = vpack.c.bf16 %v3893, %v3876
  %v4000 = vpack.c.bf16 0.0, %v3910
  %v4001 = vsel %vm3935, %v3937, %v3937
  %v4003 = vpack.c.bf16 %v3942, %v3940
  %v4004 = vpack.c.bf16 %v3946, %v3944
  %v4005 = vpack.c.bf16 %v3950, %v3948
  %v4006 = vpack.c.bf16 %v4001, %v3952
  %v4007 = vpack.c.bf16 %v3958, %v3956
  %v4008 = vpack.c.bf16 %v3962, %v3960
  %v4009 = vpack.c.bf16 %v3966, %v3964
  %v4010 = vpack.c.bf16 %v4001, %v3968
  %v4011 = vld [vmem:[%s18] sm:$0x1]
  %4020 = vrot.lane.b32.xlu0 %v3985, 64
  %v4021 = vpop.permute.xlu0 %4020
  %4022 = vrot.lane.b32.xlu0 %v3986, 64
  %v4023 = vpop.permute.xlu0 %4022
  %4024 = vrot.lane.b32.xlu0 %v3987, 64
  %v4025 = vpop.permute.xlu0 %4024
  %4026 = vrot.lane.b32.xlu0 %v3988, 64
  %v4027 = vpop.permute.xlu0 %4026
  %4028 = vrot.lane.b32.xlu0 %v3989, 64
  %v4029 = vpop.permute.xlu0 %4028
  %4030 = vrot.lane.b32.xlu0 %v3990, 64
  %v4031 = vpop.permute.xlu0 %4030
  %4032 = vrot.lane.b32.xlu0 %v3991, 64
  %v4033 = vpop.permute.xlu0 %4032
  %4034 = vrot.lane.b32.xlu0 %v3992, 64
  %v4035 = vpop.permute.xlu0 %4034
  %v4038 = vsel %vm555, %v3927, %v4021
  %v4042 = vsel %vm555, %v3928, %v4023
  %v4046 = vsel %vm555, %v3929, %v4025
  %v4050 = vsel %vm555, %v3930, %v4027
  %v4054 = vsel %vm555, %v3931, %v4029
  %v4058 = vsel %vm555, %v3932, %v4031
  %v4062 = vsel %vm555, %v3933, %v4033
  %v4066 = vsel %vm555, %v3934, %v4035
  %v4068 = vld [vmem:[%s16] sm:$0xf]
  %v4069 = vld [vmem:[%s16 + $0x4] sm:$0xf]
  %v4070 = vld [vmem:[%s16 + $0x8] sm:$0xf]
  %v4071 = vld [vmem:[%s16 + $0xc] sm:$0xf]
  %v4072 = vld [vmem:[%s16 + $0x10] sm:$0xf]
  %v4073 = vld [vmem:[%s16 + $0x14] sm:$0xf]
  %v4074 = vld [vmem:[%s16 + $0x18] sm:$0xf]
  %v4075 = vld [vmem:[%s16 + $0x1c] sm:$0xf]
  %v4076 = vld [vmem:[%s16 + $0x20] sm:$0xf]
  %v4077 = vld [vmem:[%s16 + $0x24] sm:$0xf]
  %v4078 = vld [vmem:[%s16 + $0x28] sm:$0xf]
  %v4079 = vld [vmem:[%s16 + $0x2c] sm:$0xf]
  %v4080 = vld [vmem:[%s16 + $0x30] sm:$0xf]
  %v4081 = vld [vmem:[%s16 + $0x34] sm:$0xf]
  %v4082 = vld [vmem:[%s16 + $0x38] sm:$0xf]
  %v4083 = vld [vmem:[%s16 + $0x3c] sm:$0xf]
  %v4085 = vlaneseq
  %v4086 = vshrl.u32 %v4085, 7
  %v4087 = vsub.s32 0, %v4086
  %v4088 = vrot.slane %v4011, %v4087
  %v4106 = vunpack.c.l.b16 %v4068
  %v4107 = vunpack.c.l.b16 %v4069
  %v4108 = vunpack.c.l.b16 %v4070
  %v4109 = vunpack.c.l.b16 %v4071
  %v4110 = vunpack.c.l.b16 %v4072
  %v4111 = vunpack.c.l.b16 %v4073
  %v4112 = vunpack.c.l.b16 %v4074
  %v4113 = vunpack.c.l.b16 %v4075
  %v4114 = vunpack.c.l.b16 %v4076
  %v4115 = vunpack.c.l.b16 %v4077
  %v4116 = vunpack.c.l.b16 %v4078
  %v4117 = vunpack.c.l.b16 %v4079
  %v4118 = vunpack.c.l.b16 %v4080
  %v4119 = vunpack.c.l.b16 %v4081
  %v4120 = vunpack.c.l.b16 %v4082
  %v4121 = vunpack.c.l.b16 %v4083
  %v4122 = vpack.c.b16 %v4107, %v4106
  %v4123 = vpack.c.b16 %v4109, %v4108
  %v4124 = vpack.c.b16 %v4111, %v4110
  %v4125 = vpack.c.b16 %v4113, %v4112
  %v4126 = vpack.c.b16 %v4115, %v4114
  %v4127 = vpack.c.b16 %v4117, %v4116
  %v4128 = vpack.c.b16 %v4119, %v4118
  %v4129 = vpack.c.b16 %v4121, %v4120
  %4138 = vmatprep.subr.bf16.mxu0 0
  %4139 = vmatpush1.bf16.msra.mxu0 %v4122
  %4140 = vmatprep.subr.bf16.mxu0 0
  %4141 = vmatpush1.bf16.msra.mxu0 %v4123
  %4142 = vmatprep.subr.bf16.mxu0 0
  %4143 = vmatpush1.bf16.msra.mxu0 %v4124
  %4144 = vmatprep.subr.bf16.mxu0 0
  %4145 = vmatpush1.bf16.msra.mxu0 %v4125
  %4146 = vmatprep.subr.bf16.mxu0 0
  %4147 = vmatpush1.bf16.msra.mxu0 %v4126
  %4148 = vmatprep.subr.bf16.mxu0 0
  %4149 = vmatpush1.bf16.msra.mxu0 %v4127
  %4150 = vmatprep.subr.bf16.mxu0 0
  %4151 = vmatpush1.bf16.msra.mxu0 %v4128
  %4152 = vmatprep.subr.bf16.mxu0 0
  %4153 = vmatpush1.bf16.msra.mxu0 %v4129
  %4154 = vmatprep.subr.bf16.mxu0 0
  %4155 = vmatpush1.bf16.msra.mxu0 0
  %4156 = vmatprep.subr.bf16.mxu0 0
  %4157 = vmatpush1.bf16.msra.mxu0 0
  %4158 = vmatprep.subr.bf16.mxu0 0
  %4159 = vmatpush1.bf16.msra.mxu0 0
  %4160 = vmatprep.subr.bf16.mxu0 0
  %4161 = vmatpush1.bf16.msra.mxu0 0
  %4162 = vmatprep.subr.bf16.mxu0 0
  %4163 = vmatpush1.bf16.msra.mxu0 0
  %4164 = vmatprep.subr.bf16.mxu0 0
  %4165 = vmatpush1.bf16.msra.mxu0 0
  %4166 = vmatprep.subr.bf16.mxu0 0
  %4167 = vmatpush1.bf16.msra.mxu0 0
  %4168 = vmatprep.subr.bf16.mxu0 0
  %4169 = vmatpush1.bf16.msra.mxu0 0
  %4170 = vmatprep.mubr.bf16.mxu0 0
  %4171 = vmatmul.mubr.bf16.gmra.mrb[0].mxu0 %v4038
  %v4172 = vpop.f32.mrb[0].mxu0
  %v4173 = vadd.f32 %v4088, %v4172
  %v4174 = vpop.f32.mrb[0].mxu0
  %v4175 = vpop.f32.mrb[0].mxu0
  %v4176 = vadd.f32 %v4088, %v4175
  %v4177 = vpop.f32.mrb[0].mxu0
  %4178 = vmatprep.mubr.bf16.mxu0 0
  %4179 = vmatmul.mubr.bf16.gmra.mrb[0].mxu0 %v4042
  %v4180 = vpop.f32.mrb[0].mxu0
  %v4181 = vadd.f32 %v4088, %v4180
  %v4182 = vpop.f32.mrb[0].mxu0
  %v4183 = vpop.f32.mrb[0].mxu0
  %v4184 = vadd.f32 %v4088, %v4183
  %v4185 = vpop.f32.mrb[0].mxu0
  %4186 = vmatprep.mubr.bf16.mxu0 0
  %4187 = vmatmul.mubr.bf16.gmra.mrb[0].mxu0 %v4046
  %v4188 = vpop.f32.mrb[0].mxu0
  %v4189 = vadd.f32 %v4088, %v4188
  %v4190 = vpop.f32.mrb[0].mxu0
  %v4191 = vpop.f32.mrb[0].mxu0
  %v4192 = vadd.f32 %v4088, %v4191
  %v4193 = vpop.f32.mrb[0].mxu0
  %4194 = vmatprep.mubr.bf16.mxu0 0
  %4195 = vmatmul.mubr.bf16.gmra.mrb[0].mxu0 %v4050
  %v4196 = vpop.f32.mrb[0].mxu0
  %v4197 = vadd.f32 %v4088, %v4196
  %v4198 = vpop.f32.mrb[0].mxu0
  %v4199 = vpop.f32.mrb[0].mxu0
  %v4200 = vadd.f32 %v4088, %v4199
  %v4201 = vpop.f32.mrb[0].mxu0
  %4202 = vmatprep.mubr.bf16.mxu0 0
  %4203 = vmatmul.mubr.bf16.gmra.mrb[0].mxu0 %v4054
  %v4204 = vpop.f32.mrb[0].mxu0
  %v4205 = vadd.f32 %v4088, %v4204
  %v4206 = vpop.f32.mrb[0].mxu0
  %v4207 = vpop.f32.mrb[0].mxu0
  %v4208 = vadd.f32 %v4088, %v4207
  %v4209 = vpop.f32.mrb[0].mxu0
  %4210 = vmatprep.mubr.bf16.mxu0 0
  %4211 = vmatmul.mubr.bf16.gmra.mrb[0].mxu0 %v4058
  %v4212 = vpop.f32.mrb[0].mxu0
  %v4213 = vadd.f32 %v4088, %v4212
  %v4214 = vpop.f32.mrb[0].mxu0
  %v4215 = vpop.f32.mrb[0].mxu0
  %v4216 = vadd.f32 %v4088, %v4215
  %v4217 = vpop.f32.mrb[0].mxu0
  %4218 = vmatprep.mubr.bf16.mxu0 0
  %4219 = vmatmul.mubr.bf16.gmra.mrb[0].mxu0 %v4062
  %v4220 = vpop.f32.mrb[0].mxu0
  %v4221 = vadd.f32 %v4088, %v4220
  %v4222 = vpop.f32.mrb[0].mxu0
  %v4223 = vpop.f32.mrb[0].mxu0
  %v4224 = vadd.f32 %v4088, %v4223
  %v4225 = vpop.f32.mrb[0].mxu0
  %4226 = vmatprep.mubr.bf16.mxu0 0
  %4227 = vmatmul.mubr.bf16.gmra.mrb[0].mxu0 %v4066
  %v4228 = vpop.f32.mrb[0].mxu0
  %v4229 = vadd.f32 %v4088, %v4228
  %v4230 = vpop.f32.mrb[0].mxu0
  %v4231 = vpop.f32.mrb[0].mxu0
  %v4232 = vadd.f32 %v4088, %v4231
  %v4233 = vpop.f32.mrb[0].mxu0
  %4234 = vdwg.mxu0
  %4243 = vrot.lane.b32.xlu0 %v4003, 64
  %v4244 = vpop.permute.xlu0 %4243
  %4245 = vrot.lane.b32.xlu0 %v4004, 64
  %v4246 = vpop.permute.xlu0 %4245
  %4247 = vrot.lane.b32.xlu0 %v4005, 64
  %v4248 = vpop.permute.xlu0 %4247
  %4249 = vrot.lane.b32.xlu0 %v4006, 64
  %v4250 = vpop.permute.xlu0 %4249
  %4251 = vrot.lane.b32.xlu0 %v4007, 64
  %v4252 = vpop.permute.xlu0 %4251
  %4253 = vrot.lane.b32.xlu0 %v4008, 64
  %v4254 = vpop.permute.xlu0 %4253
  %4255 = vrot.lane.b32.xlu0 %v4009, 64
  %v4256 = vpop.permute.xlu0 %4255
  %4257 = vrot.lane.b32.xlu0 %v4010, 64
  %v4258 = vpop.permute.xlu0 %4257
  %v4261 = vsel %vm555, %v3993, %v4244
  %v4265 = vsel %vm555, %v3994, %v4246
  %v4269 = vsel %vm555, %v3995, %v4248
  %v4273 = vsel %vm555, %v3996, %v4250
  %v4277 = vsel %vm555, %v3997, %v4252
  %v4281 = vsel %vm555, %v3998, %v4254
  %v4285 = vsel %vm555, %v3999, %v4256
  %v4289 = vsel %vm555, %v4000, %v4258
  %v4291 = vld [vmem:[%s17] sm:$0xf]
  %v4292 = vld [vmem:[%s17 + $0x4] sm:$0xf]
  %v4293 = vld [vmem:[%s17 + $0x8] sm:$0xf]
  %v4294 = vld [vmem:[%s17 + $0xc] sm:$0xf]
  %v4295 = vld [vmem:[%s17 + $0x10] sm:$0xf]
  %v4296 = vld [vmem:[%s17 + $0x14] sm:$0xf]
  %v4297 = vld [vmem:[%s17 + $0x18] sm:$0xf]
  %v4298 = vld [vmem:[%s17 + $0x1c] sm:$0xf]
  %v4299 = vld [vmem:[%s17 + $0x20] sm:$0xf]
  %v4300 = vld [vmem:[%s17 + $0x24] sm:$0xf]
  %v4301 = vld [vmem:[%s17 + $0x28] sm:$0xf]
  %v4302 = vld [vmem:[%s17 + $0x2c] sm:$0xf]
  %v4303 = vld [vmem:[%s17 + $0x30] sm:$0xf]
  %v4304 = vld [vmem:[%s17 + $0x34] sm:$0xf]
  %v4305 = vld [vmem:[%s17 + $0x38] sm:$0xf]
  %v4306 = vld [vmem:[%s17 + $0x3c] sm:$0xf]
  %v4307 = vld [vmem:[%s17 + $0x40] sm:$0xf]
  %v4308 = vld [vmem:[%s17 + $0x44] sm:$0xf]
  %v4309 = vld [vmem:[%s17 + $0x48] sm:$0xf]
  %v4310 = vld [vmem:[%s17 + $0x4c] sm:$0xf]
  %v4311 = vld [vmem:[%s17 + $0x50] sm:$0xf]
  %v4312 = vld [vmem:[%s17 + $0x54] sm:$0xf]
  %v4313 = vld [vmem:[%s17 + $0x58] sm:$0xf]
  %v4314 = vld [vmem:[%s17 + $0x5c] sm:$0xf]
  %v4315 = vld [vmem:[%s17 + $0x60] sm:$0xf]
  %v4316 = vld [vmem:[%s17 + $0x64] sm:$0xf]
  %v4317 = vld [vmem:[%s17 + $0x68] sm:$0xf]
  %v4318 = vld [vmem:[%s17 + $0x6c] sm:$0xf]
  %v4319 = vld [vmem:[%s17 + $0x70] sm:$0xf]
  %v4320 = vld [vmem:[%s17 + $0x74] sm:$0xf]
  %v4321 = vld [vmem:[%s17 + $0x78] sm:$0xf]
  %v4322 = vld [vmem:[%s17 + $0x7c] sm:$0xf]
  %v4355 = vunpack.c.l.b16 %v4291
  %v4356 = vunpack.c.l.b16 %v4292
  %v4357 = vunpack.c.l.b16 %v4293
  %v4358 = vunpack.c.l.b16 %v4294
  %v4359 = vunpack.c.l.b16 %v4295
  %v4360 = vunpack.c.l.b16 %v4296
  %v4361 = vunpack.c.l.b16 %v4297
  %v4362 = vunpack.c.l.b16 %v4298
  %v4363 = vunpack.c.l.b16 %v4299
  %v4364 = vunpack.c.l.b16 %v4300
  %v4365 = vunpack.c.l.b16 %v4301
  %v4366 = vunpack.c.l.b16 %v4302
  %v4367 = vunpack.c.l.b16 %v4303
  %v4368 = vunpack.c.l.b16 %v4304
  %v4369 = vunpack.c.l.b16 %v4305
  %v4370 = vunpack.c.l.b16 %v4306
  %v4371 = vunpack.c.l.b16 %v4307
  %v4372 = vunpack.c.l.b16 %v4308
  %v4373 = vunpack.c.l.b16 %v4309
  %v4374 = vunpack.c.l.b16 %v4310
  %v4375 = vunpack.c.l.b16 %v4311
  %v4376 = vunpack.c.l.b16 %v4312
  %v4377 = vunpack.c.l.b16 %v4313
  %v4378 = vunpack.c.l.b16 %v4314
  %v4379 = vunpack.c.l.b16 %v4315
  %v4380 = vunpack.c.l.b16 %v4316
  %v4381 = vunpack.c.l.b16 %v4317
  %v4382 = vunpack.c.l.b16 %v4318
  %v4383 = vunpack.c.l.b16 %v4319
  %v4384 = vunpack.c.l.b16 %v4320
  %v4385 = vunpack.c.l.b16 %v4321
  %v4386 = vunpack.c.l.b16 %v4322
  %v4387 = vpack.c.b16 %v4356, %v4355
  %v4388 = vpack.c.b16 %v4358, %v4357
  %v4389 = vpack.c.b16 %v4360, %v4359
  %v4390 = vpack.c.b16 %v4362, %v4361
  %v4391 = vpack.c.b16 %v4364, %v4363
  %v4392 = vpack.c.b16 %v4366, %v4365
  %v4393 = vpack.c.b16 %v4368, %v4367
  %v4394 = vpack.c.b16 %v4370, %v4369
  %v4395 = vpack.c.b16 %v4372, %v4371
  %v4396 = vpack.c.b16 %v4374, %v4373
  %v4397 = vpack.c.b16 %v4376, %v4375
  %v4398 = vpack.c.b16 %v4378, %v4377
  %v4399 = vpack.c.b16 %v4380, %v4379
  %v4400 = vpack.c.b16 %v4382, %v4381
  %v4401 = vpack.c.b16 %v4384, %v4383
  %v4402 = vpack.c.b16 %v4386, %v4385
  %4419 = vmatprep.subr.bf16.mxu0 0
  %4420 = vmatpush1.bf16.msra.mxu0 %v4387
  %4421 = vmatprep.subr.bf16.mxu0 0
  %4422 = vmatpush1.bf16.msra.mxu0 %v4388
  %4423 = vmatprep.subr.bf16.mxu0 0
  %4424 = vmatpush1.bf16.msra.mxu0 %v4389
  %4425 = vmatprep.subr.bf16.mxu0 0
  %4426 = vmatpush1.bf16.msra.mxu0 %v4390
  %4427 = vmatprep.subr.bf16.mxu0 0
  %4428 = vmatpush1.bf16.msra.mxu0 %v4391
  %4429 = vmatprep.subr.bf16.mxu0 0
  %4430 = vmatpush1.bf16.msra.mxu0 %v4392
  %4431 = vmatprep.subr.bf16.mxu0 0
  %4432 = vmatpush1.bf16.msra.mxu0 %v4393
  %4433 = vmatprep.subr.bf16.mxu0 0
  %4434 = vmatpush1.bf16.msra.mxu0 %v4394
  %4435 = vmatprep.subr.bf16.mxu0 0
  %4436 = vmatpush1.bf16.msra.mxu0 %v4395
  %4437 = vmatprep.subr.bf16.mxu0 0
  %4438 = vmatpush1.bf16.msra.mxu0 %v4396
  %4439 = vmatprep.subr.bf16.mxu0 0
  %4440 = vmatpush1.bf16.msra.mxu0 %v4397
  %4441 = vmatprep.subr.bf16.mxu0 0
  %4442 = vmatpush1.bf16.msra.mxu0 %v4398
  %4443 = vmatprep.subr.bf16.mxu0 0
  %4444 = vmatpush1.bf16.msra.mxu0 %v4399
  %4445 = vmatprep.subr.bf16.mxu0 0
  %4446 = vmatpush1.bf16.msra.mxu0 %v4400
  %4447 = vmatprep.subr.bf16.mxu0 0
  %4448 = vmatpush1.bf16.msra.mxu0 %v4401
  %4449 = vmatprep.subr.bf16.mxu0 0
  %4450 = vmatpush1.bf16.msra.mxu0 %v4402
  %4451 = vmatprep.mubr.bf16.mxu0 %v4261
  %4452 = vmatmul.mubr.bf16.gmra.mrb[0].mxu0 %v4038
  %v4453 = vpop.f32.mrb[0].mxu0
  %v4454 = vadd.f32 %v4088, %v4453
  %v4455 = vpop.f32.mrb[0].mxu0
  %v4456 = vpop.f32.mrb[0].mxu0
  %v4457 = vadd.f32 %v4088, %v4456
  %v4458 = vpop.f32.mrb[0].mxu0
  %4459 = vmatprep.mubr.bf16.mxu0 %v4265
  %4460 = vmatmul.mubr.bf16.gmra.mrb[0].mxu0 %v4042
  %v4461 = vpop.f32.mrb[0].mxu0
  %v4462 = vadd.f32 %v4088, %v4461
  %v4463 = vpop.f32.mrb[0].mxu0
  %v4464 = vpop.f32.mrb[0].mxu0
  %v4465 = vadd.f32 %v4088, %v4464
  %v4466 = vpop.f32.mrb[0].mxu0
  %4467 = vmatprep.mubr.bf16.mxu0 %v4269
  %4468 = vmatmul.mubr.bf16.gmra.mrb[0].mxu0 %v4046
  %v4469 = vpop.f32.mrb[0].mxu0
  %v4470 = vadd.f32 %v4088, %v4469
  %v4471 = vpop.f32.mrb[0].mxu0
  %v4472 = vpop.f32.mrb[0].mxu0
  %v4473 = vadd.f32 %v4088, %v4472
  %v4474 = vpop.f32.mrb[0].mxu0
  %4475 = vmatprep.mubr.bf16.mxu0 %v4273
  %4476 = vmatmul.mubr.bf16.gmra.mrb[0].mxu0 %v4050
  %v4477 = vpop.f32.mrb[0].mxu0
  %v4478 = vadd.f32 %v4088, %v4477
  %v4479 = vpop.f32.mrb[0].mxu0
  %v4480 = vpop.f32.mrb[0].mxu0
  %v4481 = vadd.f32 %v4088, %v4480
  %v4482 = vpop.f32.mrb[0].mxu0
  %4483 = vmatprep.mubr.bf16.mxu0 %v4277
  %4484 = vmatmul.mubr.bf16.gmra.mrb[0].mxu0 %v4054
  %v4485 = vpop.f32.mrb[0].mxu0
  %v4486 = vadd.f32 %v4088, %v4485
  %v4487 = vpop.f32.mrb[0].mxu0
  %v4488 = vpop.f32.mrb[0].mxu0
  %v4489 = vadd.f32 %v4088, %v4488
  %v4490 = vpop.f32.mrb[0].mxu0
  %4491 = vmatprep.mubr.bf16.mxu0 %v4281
  %4492 = vmatmul.mubr.bf16.gmra.mrb[0].mxu0 %v4058
  %v4493 = vpop.f32.mrb[0].mxu0
  %v4494 = vadd.f32 %v4088, %v4493
  %v4495 = vpop.f32.mrb[0].mxu0
  %v4496 = vpop.f32.mrb[0].mxu0
  %v4497 = vadd.f32 %v4088, %v4496
  %v4498 = vpop.f32.mrb[0].mxu0
  %4499 = vmatprep.mubr.bf16.mxu0 %v4285
  %4500 = vmatmul.mubr.bf16.gmra.mrb[0].mxu0 %v4062
  %v4501 = vpop.f32.mrb[0].mxu0
  %v4502 = vadd.f32 %v4088, %v4501
  %v4503 = vpop.f32.mrb[0].mxu0
  %v4504 = vpop.f32.mrb[0].mxu0
  %v4505 = vadd.f32 %v4088, %v4504
  %v4506 = vpop.f32.mrb[0].mxu0
  %4507 = vmatprep.mubr.bf16.mxu0 %v4289
  %4508 = vmatmul.mubr.bf16.gmra.mrb[0].mxu0 %v4066
  %v4509 = vpop.f32.mrb[0].mxu0
  %v4510 = vadd.f32 %v4088, %v4509
  %v4511 = vpop.f32.mrb[0].mxu0
  %v4512 = vpop.f32.mrb[0].mxu0
  %v4513 = vadd.f32 %v4088, %v4512
  %v4514 = vpop.f32.mrb[0].mxu0
  %4515 = vdwg.mxu0
  %v4532 = vcombine.high %v4173, %v4173
  %v4534 = vunpack.c.l.s4 1966171168
  %v4535 = vunpack.c.0.s8 %v4534
  %v4536 = vlaneseq
  %v4537 = vshrl.u32 %v4536, 7
  %v4538 = vsub.s32 %v4535, %v4537
  %v4539 = vrot.slane %v4173, %v4538
  %v4541 = vunpack.c.l.s4 1966171168
  %v4542 = vunpack.c.0.s8 %v4541
  %v4543 = vlaneseq
  %v4544 = vshrl.u32 %v4543, 7
  %v4545 = vsub.s32 %v4542, %v4544
  %v4546 = vrot.slane %v4532, %v4545
  %v4547 = vcombine.high %v4539, %v4539
  %v4548 = vcombine.high %v4546, %v4546
  %v4550 = vunpack.c.l.s4 1966171168
  %v4551 = vunpack.c.0.s8 %v4550
  %v4552 = vlaneseq
  %v4553 = vshrl.u32 %v4552, 7
  %v4554 = vsub.s32 %v4551, %v4553
  %v4555 = vrot.slane %v4539, %v4554
  %v4557 = vunpack.c.l.s4 1966171168
  %v4558 = vunpack.c.0.s8 %v4557
  %v4559 = vlaneseq
  %v4560 = vshrl.u32 %v4559, 7
  %v4561 = vsub.s32 %v4558, %v4560
  %v4562 = vrot.slane %v4546, %v4561
  %v4564 = vunpack.c.l.s4 1966171168
  %v4565 = vunpack.c.0.s8 %v4564
  %v4566 = vlaneseq
  %v4567 = vshrl.u32 %v4566, 7
  %v4568 = vsub.s32 %v4565, %v4567
  %v4569 = vrot.slane %v4547, %v4568
  %v4571 = vunpack.c.l.s4 1966171168
  %v4572 = vunpack.c.0.s8 %v4571
  %v4573 = vlaneseq
  %v4574 = vshrl.u32 %v4573, 7
  %v4575 = vsub.s32 %v4572, %v4574
  %v4576 = vrot.slane %v4548, %v4575
  %v4577 = vcombine.high %v4555, %v4555
  %v4578 = vcombine.high %v4562, %v4562
  %v4579 = vcombine.high %v4569, %v4569
  %v4580 = vcombine.high %v4576, %v4576
  %v4581 = vcombine.high %v4176, %v4176
  %v4583 = vunpack.c.l.s4 1966171168
  %v4584 = vunpack.c.0.s8 %v4583
  %v4585 = vlaneseq
  %v4586 = vshrl.u32 %v4585, 7
  %v4587 = vsub.s32 %v4584, %v4586
  %v4588 = vrot.slane %v4176, %v4587
  %v4590 = vunpack.c.l.s4 1966171168
  %v4591 = vunpack.c.0.s8 %v4590
  %v4592 = vlaneseq
  %v4593 = vshrl.u32 %v4592, 7
  %v4594 = vsub.s32 %v4591, %v4593
  %v4595 = vrot.slane %v4581, %v4594
  %v4596 = vcombine.high %v4588, %v4588
  %v4597 = vcombine.high %v4595, %v4595
  %v4599 = vunpack.c.l.s4 1966171168
  %v4600 = vunpack.c.0.s8 %v4599
  %v4601 = vlaneseq
  %v4602 = vshrl.u32 %v4601, 7
  %v4603 = vsub.s32 %v4600, %v4602
  %v4604 = vrot.slane %v4588, %v4603
  %v4606 = vunpack.c.l.s4 1966171168
  %v4607 = vunpack.c.0.s8 %v4606
  %v4608 = vlaneseq
  %v4609 = vshrl.u32 %v4608, 7
  %v4610 = vsub.s32 %v4607, %v4609
  %v4611 = vrot.slane %v4595, %v4610
  %v4613 = vunpack.c.l.s4 1966171168
  %v4614 = vunpack.c.0.s8 %v4613
  %v4615 = vlaneseq
  %v4616 = vshrl.u32 %v4615, 7
  %v4617 = vsub.s32 %v4614, %v4616
  %v4618 = vrot.slane %v4596, %v4617
  %v4620 = vunpack.c.l.s4 1966171168
  %v4621 = vunpack.c.0.s8 %v4620
  %v4622 = vlaneseq
  %v4623 = vshrl.u32 %v4622, 7
  %v4624 = vsub.s32 %v4621, %v4623
  %v4625 = vrot.slane %v4597, %v4624
  %v4626 = vcombine.high %v4604, %v4604
  %v4627 = vcombine.high %v4611, %v4611
  %v4628 = vcombine.high %v4618, %v4618
  %v4629 = vcombine.high %v4625, %v4625
  %v4630 = vcombine.high %v4181, %v4181
  %v4632 = vunpack.c.l.s4 1966171168
  %v4633 = vunpack.c.0.s8 %v4632
  %v4634 = vlaneseq
  %v4635 = vshrl.u32 %v4634, 7
  %v4636 = vsub.s32 %v4633, %v4635
  %v4637 = vrot.slane %v4181, %v4636
  %v4639 = vunpack.c.l.s4 1966171168
  %v4640 = vunpack.c.0.s8 %v4639
  %v4641 = vlaneseq
  %v4642 = vshrl.u32 %v4641, 7
  %v4643 = vsub.s32 %v4640, %v4642
  %v4644 = vrot.slane %v4630, %v4643
  %v4645 = vcombine.high %v4637, %v4637
  %v4646 = vcombine.high %v4644, %v4644
  %v4648 = vunpack.c.l.s4 1966171168
  %v4649 = vunpack.c.0.s8 %v4648
  %v4650 = vlaneseq
  %v4651 = vshrl.u32 %v4650, 7
  %v4652 = vsub.s32 %v4649, %v4651
  %v4653 = vrot.slane %v4637, %v4652
  %v4655 = vunpack.c.l.s4 1966171168
  %v4656 = vunpack.c.0.s8 %v4655
  %v4657 = vlaneseq
  %v4658 = vshrl.u32 %v4657, 7
  %v4659 = vsub.s32 %v4656, %v4658
  %v4660 = vrot.slane %v4644, %v4659
  %v4662 = vunpack.c.l.s4 1966171168
  %v4663 = vunpack.c.0.s8 %v4662
  %v4664 = vlaneseq
  %v4665 = vshrl.u32 %v4664, 7
  %v4666 = vsub.s32 %v4663, %v4665
  %v4667 = vrot.slane %v4645, %v4666
  %v4669 = vunpack.c.l.s4 1966171168
  %v4670 = vunpack.c.0.s8 %v4669
  %v4671 = vlaneseq
  %v4672 = vshrl.u32 %v4671, 7
  %v4673 = vsub.s32 %v4670, %v4672
  %v4674 = vrot.slane %v4646, %v4673
  %v4675 = vcombine.high %v4653, %v4653
  %v4676 = vcombine.high %v4660, %v4660
  %v4677 = vcombine.high %v4667, %v4667
  %v4678 = vcombine.high %v4674, %v4674
  %v4679 = vcombine.high %v4184, %v4184
  %v4681 = vunpack.c.l.s4 1966171168
  %v4682 = vunpack.c.0.s8 %v4681
  %v4683 = vlaneseq
  %v4684 = vshrl.u32 %v4683, 7
  %v4685 = vsub.s32 %v4682, %v4684
  %v4686 = vrot.slane %v4184, %v4685
  %v4688 = vunpack.c.l.s4 1966171168
  %v4689 = vunpack.c.0.s8 %v4688
  %v4690 = vlaneseq
  %v4691 = vshrl.u32 %v4690, 7
  %v4692 = vsub.s32 %v4689, %v4691
  %v4693 = vrot.slane %v4679, %v4692
  %v4694 = vcombine.high %v4686, %v4686
  %v4695 = vcombine.high %v4693, %v4693
  %v4697 = vunpack.c.l.s4 1966171168
  %v4698 = vunpack.c.0.s8 %v4697
  %v4699 = vlaneseq
  %v4700 = vshrl.u32 %v4699, 7
  %v4701 = vsub.s32 %v4698, %v4700
  %v4702 = vrot.slane %v4686, %v4701
  %v4704 = vunpack.c.l.s4 1966171168
  %v4705 = vunpack.c.0.s8 %v4704
  %v4706 = vlaneseq
  %v4707 = vshrl.u32 %v4706, 7
  %v4708 = vsub.s32 %v4705, %v4707
  %v4709 = vrot.slane %v4693, %v4708
  %v4711 = vunpack.c.l.s4 1966171168
  %v4712 = vunpack.c.0.s8 %v4711
  %v4713 = vlaneseq
  %v4714 = vshrl.u32 %v4713, 7
  %v4715 = vsub.s32 %v4712, %v4714
  %v4716 = vrot.slane %v4694, %v4715
  %v4718 = vunpack.c.l.s4 1966171168
  %v4719 = vunpack.c.0.s8 %v4718
  %v4720 = vlaneseq
  %v4721 = vshrl.u32 %v4720, 7
  %v4722 = vsub.s32 %v4719, %v4721
  %v4723 = vrot.slane %v4695, %v4722
  %v4724 = vcombine.high %v4702, %v4702
  %v4725 = vcombine.high %v4709, %v4709
  %v4726 = vcombine.high %v4716, %v4716
  %v4727 = vcombine.high %v4723, %v4723
  %v4728 = vcombine.high %v4189, %v4189
  %v4730 = vunpack.c.l.s4 1966171168
  %v4731 = vunpack.c.0.s8 %v4730
  %v4732 = vlaneseq
  %v4733 = vshrl.u32 %v4732, 7
  %v4734 = vsub.s32 %v4731, %v4733
  %v4735 = vrot.slane %v4189, %v4734
  %v4737 = vunpack.c.l.s4 1966171168
  %v4738 = vunpack.c.0.s8 %v4737
  %v4739 = vlaneseq
  %v4740 = vshrl.u32 %v4739, 7
  %v4741 = vsub.s32 %v4738, %v4740
  %v4742 = vrot.slane %v4728, %v4741
  %v4743 = vcombine.high %v4735, %v4735
  %v4744 = vcombine.high %v4742, %v4742
  %v4746 = vunpack.c.l.s4 1966171168
  %v4747 = vunpack.c.0.s8 %v4746
  %v4748 = vlaneseq
  %v4749 = vshrl.u32 %v4748, 7
  %v4750 = vsub.s32 %v4747, %v4749
  %v4751 = vrot.slane %v4735, %v4750
  %v4753 = vunpack.c.l.s4 1966171168
  %v4754 = vunpack.c.0.s8 %v4753
  %v4755 = vlaneseq
  %v4756 = vshrl.u32 %v4755, 7
  %v4757 = vsub.s32 %v4754, %v4756
  %v4758 = vrot.slane %v4742, %v4757
  %v4760 = vunpack.c.l.s4 1966171168
  %v4761 = vunpack.c.0.s8 %v4760
  %v4762 = vlaneseq
  %v4763 = vshrl.u32 %v4762, 7
  %v4764 = vsub.s32 %v4761, %v4763
  %v4765 = vrot.slane %v4743, %v4764
  %v4767 = vunpack.c.l.s4 1966171168
  %v4768 = vunpack.c.0.s8 %v4767
  %v4769 = vlaneseq
  %v4770 = vshrl.u32 %v4769, 7
  %v4771 = vsub.s32 %v4768, %v4770
  %v4772 = vrot.slane %v4744, %v4771
  %v4773 = vcombine.high %v4751, %v4751
  %v4774 = vcombine.high %v4758, %v4758
  %v4775 = vcombine.high %v4765, %v4765
  %v4776 = vcombine.high %v4772, %v4772
  %v4777 = vcombine.high %v4192, %v4192
  %v4779 = vunpack.c.l.s4 1966171168
  %v4780 = vunpack.c.0.s8 %v4779
  %v4781 = vlaneseq
  %v4782 = vshrl.u32 %v4781, 7
  %v4783 = vsub.s32 %v4780, %v4782
  %v4784 = vrot.slane %v4192, %v4783
  %v4786 = vunpack.c.l.s4 1966171168
  %v4787 = vunpack.c.0.s8 %v4786
  %v4788 = vlaneseq
  %v4789 = vshrl.u32 %v4788, 7
  %v4790 = vsub.s32 %v4787, %v4789
  %v4791 = vrot.slane %v4777, %v4790
  %v4792 = vcombine.high %v4784, %v4784
  %v4793 = vcombine.high %v4791, %v4791
  %v4795 = vunpack.c.l.s4 1966171168
  %v4796 = vunpack.c.0.s8 %v4795
  %v4797 = vlaneseq
  %v4798 = vshrl.u32 %v4797, 7
  %v4799 = vsub.s32 %v4796, %v4798
  %v4800 = vrot.slane %v4784, %v4799
  %v4802 = vunpack.c.l.s4 1966171168
  %v4803 = vunpack.c.0.s8 %v4802
  %v4804 = vlaneseq
  %v4805 = vshrl.u32 %v4804, 7
  %v4806 = vsub.s32 %v4803, %v4805
  %v4807 = vrot.slane %v4791, %v4806
  %v4809 = vunpack.c.l.s4 1966171168
  %v4810 = vunpack.c.0.s8 %v4809
  %v4811 = vlaneseq
  %v4812 = vshrl.u32 %v4811, 7
  %v4813 = vsub.s32 %v4810, %v4812
  %v4814 = vrot.slane %v4792, %v4813
  %v4816 = vunpack.c.l.s4 1966171168
  %v4817 = vunpack.c.0.s8 %v4816
  %v4818 = vlaneseq
  %v4819 = vshrl.u32 %v4818, 7
  %v4820 = vsub.s32 %v4817, %v4819
  %v4821 = vrot.slane %v4793, %v4820
  %v4822 = vcombine.high %v4800, %v4800
  %v4823 = vcombine.high %v4807, %v4807
  %v4824 = vcombine.high %v4814, %v4814
  %v4825 = vcombine.high %v4821, %v4821
  %v4826 = vcombine.high %v4197, %v4197
  %v4828 = vunpack.c.l.s4 1966171168
  %v4829 = vunpack.c.0.s8 %v4828
  %v4830 = vlaneseq
  %v4831 = vshrl.u32 %v4830, 7
  %v4832 = vsub.s32 %v4829, %v4831
  %v4833 = vrot.slane %v4197, %v4832
  %v4835 = vunpack.c.l.s4 1966171168
  %v4836 = vunpack.c.0.s8 %v4835
  %v4837 = vlaneseq
  %v4838 = vshrl.u32 %v4837, 7
  %v4839 = vsub.s32 %v4836, %v4838
  %v4840 = vrot.slane %v4826, %v4839
  %v4841 = vcombine.high %v4833, %v4833
  %v4842 = vcombine.high %v4840, %v4840
  %v4844 = vunpack.c.l.s4 1966171168
  %v4845 = vunpack.c.0.s8 %v4844
  %v4846 = vlaneseq
  %v4847 = vshrl.u32 %v4846, 7
  %v4848 = vsub.s32 %v4845, %v4847
  %v4849 = vrot.slane %v4833, %v4848
  %v4851 = vunpack.c.l.s4 1966171168
  %v4852 = vunpack.c.0.s8 %v4851
  %v4853 = vlaneseq
  %v4854 = vshrl.u32 %v4853, 7
  %v4855 = vsub.s32 %v4852, %v4854
  %v4856 = vrot.slane %v4840, %v4855
  %v4858 = vunpack.c.l.s4 1966171168
  %v4859 = vunpack.c.0.s8 %v4858
  %v4860 = vlaneseq
  %v4861 = vshrl.u32 %v4860, 7
  %v4862 = vsub.s32 %v4859, %v4861
  %v4863 = vrot.slane %v4841, %v4862
  %v4865 = vunpack.c.l.s4 1966171168
  %v4866 = vunpack.c.0.s8 %v4865
  %v4867 = vlaneseq
  %v4868 = vshrl.u32 %v4867, 7
  %v4869 = vsub.s32 %v4866, %v4868
  %v4870 = vrot.slane %v4842, %v4869
  %v4871 = vcombine.high %v4849, %v4849
  %v4872 = vcombine.high %v4856, %v4856
  %v4873 = vcombine.high %v4863, %v4863
  %v4874 = vcombine.high %v4870, %v4870
  %v4875 = vcombine.high %v4200, %v4200
  %v4877 = vunpack.c.l.s4 1966171168
  %v4878 = vunpack.c.0.s8 %v4877
  %v4879 = vlaneseq
  %v4880 = vshrl.u32 %v4879, 7
  %v4881 = vsub.s32 %v4878, %v4880
  %v4882 = vrot.slane %v4200, %v4881
  %v4884 = vunpack.c.l.s4 1966171168
  %v4885 = vunpack.c.0.s8 %v4884
  %v4886 = vlaneseq
  %v4887 = vshrl.u32 %v4886, 7
  %v4888 = vsub.s32 %v4885, %v4887
  %v4889 = vrot.slane %v4875, %v4888
  %v4890 = vcombine.high %v4882, %v4882
  %v4891 = vcombine.high %v4889, %v4889
  %v4893 = vunpack.c.l.s4 1966171168
  %v4894 = vunpack.c.0.s8 %v4893
  %v4895 = vlaneseq
  %v4896 = vshrl.u32 %v4895, 7
  %v4897 = vsub.s32 %v4894, %v4896
  %v4898 = vrot.slane %v4882, %v4897
  %v4900 = vunpack.c.l.s4 1966171168
  %v4901 = vunpack.c.0.s8 %v4900
  %v4902 = vlaneseq
  %v4903 = vshrl.u32 %v4902, 7
  %v4904 = vsub.s32 %v4901, %v4903
  %v4905 = vrot.slane %v4889, %v4904
  %v4907 = vunpack.c.l.s4 1966171168
  %v4908 = vunpack.c.0.s8 %v4907
  %v4909 = vlaneseq
  %v4910 = vshrl.u32 %v4909, 7
  %v4911 = vsub.s32 %v4908, %v4910
  %v4912 = vrot.slane %v4890, %v4911
  %v4914 = vunpack.c.l.s4 1966171168
  %v4915 = vunpack.c.0.s8 %v4914
  %v4916 = vlaneseq
  %v4917 = vshrl.u32 %v4916, 7
  %v4918 = vsub.s32 %v4915, %v4917
  %v4919 = vrot.slane %v4891, %v4918
  %v4920 = vcombine.high %v4898, %v4898
  %v4921 = vcombine.high %v4905, %v4905
  %v4922 = vcombine.high %v4912, %v4912
  %v4923 = vcombine.high %v4919, %v4919
  %v4924 = vcombine.high %v4205, %v4205
  %v4926 = vunpack.c.l.s4 1966171168
  %v4927 = vunpack.c.0.s8 %v4926
  %v4928 = vlaneseq
  %v4929 = vshrl.u32 %v4928, 7
  %v4930 = vsub.s32 %v4927, %v4929
  %v4931 = vrot.slane %v4205, %v4930
  %v4933 = vunpack.c.l.s4 1966171168
  %v4934 = vunpack.c.0.s8 %v4933
  %v4935 = vlaneseq
  %v4936 = vshrl.u32 %v4935, 7
  %v4937 = vsub.s32 %v4934, %v4936
  %v4938 = vrot.slane %v4924, %v4937
  %v4939 = vcombine.high %v4931, %v4931
  %v4940 = vcombine.high %v4938, %v4938
  %v4942 = vunpack.c.l.s4 1966171168
  %v4943 = vunpack.c.0.s8 %v4942
  %v4944 = vlaneseq
  %v4945 = vshrl.u32 %v4944, 7
  %v4946 = vsub.s32 %v4943, %v4945
  %v4947 = vrot.slane %v4931, %v4946
  %v4949 = vunpack.c.l.s4 1966171168
  %v4950 = vunpack.c.0.s8 %v4949
  %v4951 = vlaneseq
  %v4952 = vshrl.u32 %v4951, 7
  %v4953 = vsub.s32 %v4950, %v4952
  %v4954 = vrot.slane %v4938, %v4953
  %v4956 = vunpack.c.l.s4 1966171168
  %v4957 = vunpack.c.0.s8 %v4956
  %v4958 = vlaneseq
  %v4959 = vshrl.u32 %v4958, 7
  %v4960 = vsub.s32 %v4957, %v4959
  %v4961 = vrot.slane %v4939, %v4960
  %v4963 = vunpack.c.l.s4 1966171168
  %v4964 = vunpack.c.0.s8 %v4963
  %v4965 = vlaneseq
  %v4966 = vshrl.u32 %v4965, 7
  %v4967 = vsub.s32 %v4964, %v4966
  %v4968 = vrot.slane %v4940, %v4967
  %v4969 = vcombine.high %v4947, %v4947
  %v4970 = vcombine.high %v4954, %v4954
  %v4971 = vcombine.high %v4961, %v4961
  %v4972 = vcombine.high %v4968, %v4968
  %v4973 = vcombine.high %v4208, %v4208
  %v4975 = vunpack.c.l.s4 1966171168
  %v4976 = vunpack.c.0.s8 %v4975
  %v4977 = vlaneseq
  %v4978 = vshrl.u32 %v4977, 7
  %v4979 = vsub.s32 %v4976, %v4978
  %v4980 = vrot.slane %v4208, %v4979
  %v4982 = vunpack.c.l.s4 1966171168
  %v4983 = vunpack.c.0.s8 %v4982
  %v4984 = vlaneseq
  %v4985 = vshrl.u32 %v4984, 7
  %v4986 = vsub.s32 %v4983, %v4985
  %v4987 = vrot.slane %v4973, %v4986
  %v4988 = vcombine.high %v4980, %v4980
  %v4989 = vcombine.high %v4987, %v4987
  %v4991 = vunpack.c.l.s4 1966171168
  %v4992 = vunpack.c.0.s8 %v4991
  %v4993 = vlaneseq
  %v4994 = vshrl.u32 %v4993, 7
  %v4995 = vsub.s32 %v4992, %v4994
  %v4996 = vrot.slane %v4980, %v4995
  %v4998 = vunpack.c.l.s4 1966171168
  %v4999 = vunpack.c.0.s8 %v4998
  %v5000 = vlaneseq
  %v5001 = vshrl.u32 %v5000, 7
  %v5002 = vsub.s32 %v4999, %v5001
  %v5003 = vrot.slane %v4987, %v5002
  %v5005 = vunpack.c.l.s4 1966171168
  %v5006 = vunpack.c.0.s8 %v5005
  %v5007 = vlaneseq
  %v5008 = vshrl.u32 %v5007, 7
  %v5009 = vsub.s32 %v5006, %v5008
  %v5010 = vrot.slane %v4988, %v5009
  %v5012 = vunpack.c.l.s4 1966171168
  %v5013 = vunpack.c.0.s8 %v5012
  %v5014 = vlaneseq
  %v5015 = vshrl.u32 %v5014, 7
  %v5016 = vsub.s32 %v5013, %v5015
  %v5017 = vrot.slane %v4989, %v5016
  %v5018 = vcombine.high %v4996, %v4996
  %v5019 = vcombine.high %v5003, %v5003
  %v5020 = vcombine.high %v5010, %v5010
  %v5021 = vcombine.high %v5017, %v5017
  %v5022 = vcombine.high %v4213, %v4213
  %v5024 = vunpack.c.l.s4 1966171168
  %v5025 = vunpack.c.0.s8 %v5024
  %v5026 = vlaneseq
  %v5027 = vshrl.u32 %v5026, 7
  %v5028 = vsub.s32 %v5025, %v5027
  %v5029 = vrot.slane %v4213, %v5028
  %v5031 = vunpack.c.l.s4 1966171168
  %v5032 = vunpack.c.0.s8 %v5031
  %v5033 = vlaneseq
  %v5034 = vshrl.u32 %v5033, 7
  %v5035 = vsub.s32 %v5032, %v5034
  %v5036 = vrot.slane %v5022, %v5035
  %v5037 = vcombine.high %v5029, %v5029
  %v5038 = vcombine.high %v5036, %v5036
  %v5040 = vunpack.c.l.s4 1966171168
  %v5041 = vunpack.c.0.s8 %v5040
  %v5042 = vlaneseq
  %v5043 = vshrl.u32 %v5042, 7
  %v5044 = vsub.s32 %v5041, %v5043
  %v5045 = vrot.slane %v5029, %v5044
  %v5047 = vunpack.c.l.s4 1966171168
  %v5048 = vunpack.c.0.s8 %v5047
  %v5049 = vlaneseq
  %v5050 = vshrl.u32 %v5049, 7
  %v5051 = vsub.s32 %v5048, %v5050
  %v5052 = vrot.slane %v5036, %v5051
  %v5054 = vunpack.c.l.s4 1966171168
  %v5055 = vunpack.c.0.s8 %v5054
  %v5056 = vlaneseq
  %v5057 = vshrl.u32 %v5056, 7
  %v5058 = vsub.s32 %v5055, %v5057
  %v5059 = vrot.slane %v5037, %v5058
  %v5061 = vunpack.c.l.s4 1966171168
  %v5062 = vunpack.c.0.s8 %v5061
  %v5063 = vlaneseq
  %v5064 = vshrl.u32 %v5063, 7
  %v5065 = vsub.s32 %v5062, %v5064
  %v5066 = vrot.slane %v5038, %v5065
  %v5067 = vcombine.high %v5045, %v5045
  %v5068 = vcombine.high %v5052, %v5052
  %v5069 = vcombine.high %v5059, %v5059
  %v5070 = vcombine.high %v5066, %v5066
  %v5071 = vcombine.high %v4216, %v4216
  %v5073 = vunpack.c.l.s4 1966171168
  %v5074 = vunpack.c.0.s8 %v5073
  %v5075 = vlaneseq
  %v5076 = vshrl.u32 %v5075, 7
  %v5077 = vsub.s32 %v5074, %v5076
  %v5078 = vrot.slane %v4216, %v5077
  %v5080 = vunpack.c.l.s4 1966171168
  %v5081 = vunpack.c.0.s8 %v5080
  %v5082 = vlaneseq
  %v5083 = vshrl.u32 %v5082, 7
  %v5084 = vsub.s32 %v5081, %v5083
  %v5085 = vrot.slane %v5071, %v5084
  %v5086 = vcombine.high %v5078, %v5078
  %v5087 = vcombine.high %v5085, %v5085
  %v5089 = vunpack.c.l.s4 1966171168
  %v5090 = vunpack.c.0.s8 %v5089
  %v5091 = vlaneseq
  %v5092 = vshrl.u32 %v5091, 7
  %v5093 = vsub.s32 %v5090, %v5092
  %v5094 = vrot.slane %v5078, %v5093
  %v5096 = vunpack.c.l.s4 1966171168
  %v5097 = vunpack.c.0.s8 %v5096
  %v5098 = vlaneseq
  %v5099 = vshrl.u32 %v5098, 7
  %v5100 = vsub.s32 %v5097, %v5099
  %v5101 = vrot.slane %v5085, %v5100
  %v5103 = vunpack.c.l.s4 1966171168
  %v5104 = vunpack.c.0.s8 %v5103
  %v5105 = vlaneseq
  %v5106 = vshrl.u32 %v5105, 7
  %v5107 = vsub.s32 %v5104, %v5106
  %v5108 = vrot.slane %v5086, %v5107
  %v5110 = vunpack.c.l.s4 1966171168
  %v5111 = vunpack.c.0.s8 %v5110
  %v5112 = vlaneseq
  %v5113 = vshrl.u32 %v5112, 7
  %v5114 = vsub.s32 %v5111, %v5113
  %v5115 = vrot.slane %v5087, %v5114
  %v5116 = vcombine.high %v5094, %v5094
  %v5117 = vcombine.high %v5101, %v5101
  %v5118 = vcombine.high %v5108, %v5108
  %v5119 = vcombine.high %v5115, %v5115
  %v5120 = vcombine.high %v4221, %v4221
  %v5122 = vunpack.c.l.s4 1966171168
  %v5123 = vunpack.c.0.s8 %v5122
  %v5124 = vlaneseq
  %v5125 = vshrl.u32 %v5124, 7
  %v5126 = vsub.s32 %v5123, %v5125
  %v5127 = vrot.slane %v4221, %v5126
  %v5129 = vunpack.c.l.s4 1966171168
  %v5130 = vunpack.c.0.s8 %v5129
  %v5131 = vlaneseq
  %v5132 = vshrl.u32 %v5131, 7
  %v5133 = vsub.s32 %v5130, %v5132
  %v5134 = vrot.slane %v5120, %v5133
  %v5135 = vcombine.high %v5127, %v5127
  %v5136 = vcombine.high %v5134, %v5134
  %v5138 = vunpack.c.l.s4 1966171168
  %v5139 = vunpack.c.0.s8 %v5138
  %v5140 = vlaneseq
  %v5141 = vshrl.u32 %v5140, 7
  %v5142 = vsub.s32 %v5139, %v5141
  %v5143 = vrot.slane %v5127, %v5142
  %v5145 = vunpack.c.l.s4 1966171168
  %v5146 = vunpack.c.0.s8 %v5145
  %v5147 = vlaneseq
  %v5148 = vshrl.u32 %v5147, 7
  %v5149 = vsub.s32 %v5146, %v5148
  %v5150 = vrot.slane %v5134, %v5149
  %v5152 = vunpack.c.l.s4 1966171168
  %v5153 = vunpack.c.0.s8 %v5152
  %v5154 = vlaneseq
  %v5155 = vshrl.u32 %v5154, 7
  %v5156 = vsub.s32 %v5153, %v5155
  %v5157 = vrot.slane %v5135, %v5156
  %v5159 = vunpack.c.l.s4 1966171168
  %v5160 = vunpack.c.0.s8 %v5159
  %v5161 = vlaneseq
  %v5162 = vshrl.u32 %v5161, 7
  %v5163 = vsub.s32 %v5160, %v5162
  %v5164 = vrot.slane %v5136, %v5163
  %v5165 = vcombine.high %v5143, %v5143
  %v5166 = vcombine.high %v5150, %v5150
  %v5167 = vcombine.high %v5157, %v5157
  %v5168 = vcombine.high %v5164, %v5164
  %v5169 = vcombine.high %v4224, %v4224
  %v5171 = vunpack.c.l.s4 1966171168
  %v5172 = vunpack.c.0.s8 %v5171
  %v5173 = vlaneseq
  %v5174 = vshrl.u32 %v5173, 7
  %v5175 = vsub.s32 %v5172, %v5174
  %v5176 = vrot.slane %v4224, %v5175
  %v5178 = vunpack.c.l.s4 1966171168
  %v5179 = vunpack.c.0.s8 %v5178
  %v5180 = vlaneseq
  %v5181 = vshrl.u32 %v5180, 7
  %v5182 = vsub.s32 %v5179, %v5181
  %v5183 = vrot.slane %v5169, %v5182
  %v5184 = vcombine.high %v5176, %v5176
  %v5185 = vcombine.high %v5183, %v5183
  %v5187 = vunpack.c.l.s4 1966171168
  %v5188 = vunpack.c.0.s8 %v5187
  %v5189 = vlaneseq
  %v5190 = vshrl.u32 %v5189, 7
  %v5191 = vsub.s32 %v5188, %v5190
  %v5192 = vrot.slane %v5176, %v5191
  %v5194 = vunpack.c.l.s4 1966171168
  %v5195 = vunpack.c.0.s8 %v5194
  %v5196 = vlaneseq
  %v5197 = vshrl.u32 %v5196, 7
  %v5198 = vsub.s32 %v5195, %v5197
  %v5199 = vrot.slane %v5183, %v5198
  %v5201 = vunpack.c.l.s4 1966171168
  %v5202 = vunpack.c.0.s8 %v5201
  %v5203 = vlaneseq
  %v5204 = vshrl.u32 %v5203, 7
  %v5205 = vsub.s32 %v5202, %v5204
  %v5206 = vrot.slane %v5184, %v5205
  %v5208 = vunpack.c.l.s4 1966171168
  %v5209 = vunpack.c.0.s8 %v5208
  %v5210 = vlaneseq
  %v5211 = vshrl.u32 %v5210, 7
  %v5212 = vsub.s32 %v5209, %v5211
  %v5213 = vrot.slane %v5185, %v5212
  %v5214 = vcombine.high %v5192, %v5192
  %v5215 = vcombine.high %v5199, %v5199
  %v5216 = vcombine.high %v5206, %v5206
  %v5217 = vcombine.high %v5213, %v5213
  %v5218 = vcombine.high %v4229, %v4229
  %v5220 = vunpack.c.l.s4 1966171168
  %v5221 = vunpack.c.0.s8 %v5220
  %v5222 = vlaneseq
  %v5223 = vshrl.u32 %v5222, 7
  %v5224 = vsub.s32 %v5221, %v5223
  %v5225 = vrot.slane %v4229, %v5224
  %v5227 = vunpack.c.l.s4 1966171168
  %v5228 = vunpack.c.0.s8 %v5227
  %v5229 = vlaneseq
  %v5230 = vshrl.u32 %v5229, 7
  %v5231 = vsub.s32 %v5228, %v5230
  %v5232 = vrot.slane %v5218, %v5231
  %v5233 = vcombine.high %v5225, %v5225
  %v5234 = vcombine.high %v5232, %v5232
  %v5236 = vunpack.c.l.s4 1966171168
  %v5237 = vunpack.c.0.s8 %v5236
  %v5238 = vlaneseq
  %v5239 = vshrl.u32 %v5238, 7
  %v5240 = vsub.s32 %v5237, %v5239
  %v5241 = vrot.slane %v5225, %v5240
  %v5243 = vunpack.c.l.s4 1966171168
  %v5244 = vunpack.c.0.s8 %v5243
  %v5245 = vlaneseq
  %v5246 = vshrl.u32 %v5245, 7
  %v5247 = vsub.s32 %v5244, %v5246
  %v5248 = vrot.slane %v5232, %v5247
  %v5250 = vunpack.c.l.s4 1966171168
  %v5251 = vunpack.c.0.s8 %v5250
  %v5252 = vlaneseq
  %v5253 = vshrl.u32 %v5252, 7
  %v5254 = vsub.s32 %v5251, %v5253
  %v5255 = vrot.slane %v5233, %v5254
  %v5257 = vunpack.c.l.s4 1966171168
  %v5258 = vunpack.c.0.s8 %v5257
  %v5259 = vlaneseq
  %v5260 = vshrl.u32 %v5259, 7
  %v5261 = vsub.s32 %v5258, %v5260
  %v5262 = vrot.slane %v5234, %v5261
  %v5263 = vcombine.high %v5241, %v5241
  %v5264 = vcombine.high %v5248, %v5248
  %v5265 = vcombine.high %v5255, %v5255
  %v5266 = vcombine.high %v5262, %v5262
  %v5267 = vcombine.high %v4232, %v4232
  %v5269 = vunpack.c.l.s4 1966171168
  %v5270 = vunpack.c.0.s8 %v5269
  %v5271 = vlaneseq
  %v5272 = vshrl.u32 %v5271, 7
  %v5273 = vsub.s32 %v5270, %v5272
  %v5274 = vrot.slane %v4232, %v5273
  %v5276 = vunpack.c.l.s4 1966171168
  %v5277 = vunpack.c.0.s8 %v5276
  %v5278 = vlaneseq
  %v5279 = vshrl.u32 %v5278, 7
  %v5280 = vsub.s32 %v5277, %v5279
  %v5281 = vrot.slane %v5267, %v5280
  %v5282 = vcombine.high %v5274, %v5274
  %v5283 = vcombine.high %v5281, %v5281
  %v5285 = vunpack.c.l.s4 1966171168
  %v5286 = vunpack.c.0.s8 %v5285
  %v5287 = vlaneseq
  %v5288 = vshrl.u32 %v5287, 7
  %v5289 = vsub.s32 %v5286, %v5288
  %v5290 = vrot.slane %v5274, %v5289
  %v5292 = vunpack.c.l.s4 1966171168
  %v5293 = vunpack.c.0.s8 %v5292
  %v5294 = vlaneseq
  %v5295 = vshrl.u32 %v5294, 7
  %v5296 = vsub.s32 %v5293, %v5295
  %v5297 = vrot.slane %v5281, %v5296
  %v5299 = vunpack.c.l.s4 1966171168
  %v5300 = vunpack.c.0.s8 %v5299
  %v5301 = vlaneseq
  %v5302 = vshrl.u32 %v5301, 7
  %v5303 = vsub.s32 %v5300, %v5302
  %v5304 = vrot.slane %v5282, %v5303
  %v5306 = vunpack.c.l.s4 1966171168
  %v5307 = vunpack.c.0.s8 %v5306
  %v5308 = vlaneseq
  %v5309 = vshrl.u32 %v5308, 7
  %v5310 = vsub.s32 %v5307, %v5309
  %v5311 = vrot.slane %v5283, %v5310
  %v5312 = vcombine.high %v5290, %v5290
  %v5313 = vcombine.high %v5297, %v5297
  %v5314 = vcombine.high %v5304, %v5304
  %v5315 = vcombine.high %v5311, %v5311
  %v5460 = vcombine.high %v4454, %v4454
  %v5462 = vunpack.c.l.s4 1966171168
  %v5463 = vunpack.c.0.s8 %v5462
  %v5464 = vlaneseq
  %v5465 = vshrl.u32 %v5464, 7
  %v5466 = vsub.s32 %v5463, %v5465
  %v5467 = vrot.slane %v4454, %v5466
  %v5469 = vunpack.c.l.s4 1966171168
  %v5470 = vunpack.c.0.s8 %v5469
  %v5471 = vlaneseq
  %v5472 = vshrl.u32 %v5471, 7
  %v5473 = vsub.s32 %v5470, %v5472
  %v5474 = vrot.slane %v5460, %v5473
  %v5475 = vcombine.high %v5467, %v5467
  %v5476 = vcombine.high %v5474, %v5474
  %v5478 = vunpack.c.l.s4 1966171168
  %v5479 = vunpack.c.0.s8 %v5478
  %v5480 = vlaneseq
  %v5481 = vshrl.u32 %v5480, 7
  %v5482 = vsub.s32 %v5479, %v5481
  %v5483 = vrot.slane %v5467, %v5482
  %v5485 = vunpack.c.l.s4 1966171168
  %v5486 = vunpack.c.0.s8 %v5485
  %v5487 = vlaneseq
  %v5488 = vshrl.u32 %v5487, 7
  %v5489 = vsub.s32 %v5486, %v5488
  %v5490 = vrot.slane %v5474, %v5489
  %v5492 = vunpack.c.l.s4 1966171168
  %v5493 = vunpack.c.0.s8 %v5492
  %v5494 = vlaneseq
  %v5495 = vshrl.u32 %v5494, 7
  %v5496 = vsub.s32 %v5493, %v5495
  %v5497 = vrot.slane %v5475, %v5496
  %v5499 = vunpack.c.l.s4 1966171168
  %v5500 = vunpack.c.0.s8 %v5499
  %v5501 = vlaneseq
  %v5502 = vshrl.u32 %v5501, 7
  %v5503 = vsub.s32 %v5500, %v5502
  %v5504 = vrot.slane %v5476, %v5503
  %v5505 = vcombine.high %v5483, %v5483
  %v5506 = vcombine.high %v5490, %v5490
  %v5507 = vcombine.high %v5497, %v5497
  %v5508 = vcombine.high %v5504, %v5504
  %v5509 = vcombine.high %v4457, %v4457
  %v5511 = vunpack.c.l.s4 1966171168
  %v5512 = vunpack.c.0.s8 %v5511
  %v5513 = vlaneseq
  %v5514 = vshrl.u32 %v5513, 7
  %v5515 = vsub.s32 %v5512, %v5514
  %v5516 = vrot.slane %v4457, %v5515
  %v5518 = vunpack.c.l.s4 1966171168
  %v5519 = vunpack.c.0.s8 %v5518
  %v5520 = vlaneseq
  %v5521 = vshrl.u32 %v5520, 7
  %v5522 = vsub.s32 %v5519, %v5521
  %v5523 = vrot.slane %v5509, %v5522
  %v5524 = vcombine.high %v5516, %v5516
  %v5525 = vcombine.high %v5523, %v5523
  %v5527 = vunpack.c.l.s4 1966171168
  %v5528 = vunpack.c.0.s8 %v5527
  %v5529 = vlaneseq
  %v5530 = vshrl.u32 %v5529, 7
  %v5531 = vsub.s32 %v5528, %v5530
  %v5532 = vrot.slane %v5516, %v5531
  %v5534 = vunpack.c.l.s4 1966171168
  %v5535 = vunpack.c.0.s8 %v5534
  %v5536 = vlaneseq
  %v5537 = vshrl.u32 %v5536, 7
  %v5538 = vsub.s32 %v5535, %v5537
  %v5539 = vrot.slane %v5523, %v5538
  %v5541 = vunpack.c.l.s4 1966171168
  %v5542 = vunpack.c.0.s8 %v5541
  %v5543 = vlaneseq
  %v5544 = vshrl.u32 %v5543, 7
  %v5545 = vsub.s32 %v5542, %v5544
  %v5546 = vrot.slane %v5524, %v5545
  %v5548 = vunpack.c.l.s4 1966171168
  %v5549 = vunpack.c.0.s8 %v5548
  %v5550 = vlaneseq
  %v5551 = vshrl.u32 %v5550, 7
  %v5552 = vsub.s32 %v5549, %v5551
  %v5553 = vrot.slane %v5525, %v5552
  %v5554 = vcombine.high %v5532, %v5532
  %v5555 = vcombine.high %v5539, %v5539
  %v5556 = vcombine.high %v5546, %v5546
  %v5557 = vcombine.high %v5553, %v5553
  %v5558 = vcombine.high %v4462, %v4462
  %v5560 = vunpack.c.l.s4 1966171168
  %v5561 = vunpack.c.0.s8 %v5560
  %v5562 = vlaneseq
  %v5563 = vshrl.u32 %v5562, 7
  %v5564 = vsub.s32 %v5561, %v5563
  %v5565 = vrot.slane %v4462, %v5564
  %v5567 = vunpack.c.l.s4 1966171168
  %v5568 = vunpack.c.0.s8 %v5567
  %v5569 = vlaneseq
  %v5570 = vshrl.u32 %v5569, 7
  %v5571 = vsub.s32 %v5568, %v5570
  %v5572 = vrot.slane %v5558, %v5571
  %v5573 = vcombine.high %v5565, %v5565
  %v5574 = vcombine.high %v5572, %v5572
  %v5576 = vunpack.c.l.s4 1966171168
  %v5577 = vunpack.c.0.s8 %v5576
  %v5578 = vlaneseq
  %v5579 = vshrl.u32 %v5578, 7
  %v5580 = vsub.s32 %v5577, %v5579
  %v5581 = vrot.slane %v5565, %v5580
  %v5583 = vunpack.c.l.s4 1966171168
  %v5584 = vunpack.c.0.s8 %v5583
  %v5585 = vlaneseq
  %v5586 = vshrl.u32 %v5585, 7
  %v5587 = vsub.s32 %v5584, %v5586
  %v5588 = vrot.slane %v5572, %v5587
  %v5590 = vunpack.c.l.s4 1966171168
  %v5591 = vunpack.c.0.s8 %v5590
  %v5592 = vlaneseq
  %v5593 = vshrl.u32 %v5592, 7
  %v5594 = vsub.s32 %v5591, %v5593
  %v5595 = vrot.slane %v5573, %v5594
  %v5597 = vunpack.c.l.s4 1966171168
  %v5598 = vunpack.c.0.s8 %v5597
  %v5599 = vlaneseq
  %v5600 = vshrl.u32 %v5599, 7
  %v5601 = vsub.s32 %v5598, %v5600
  %v5602 = vrot.slane %v5574, %v5601
  %v5603 = vcombine.high %v5581, %v5581
  %v5604 = vcombine.high %v5588, %v5588
  %v5605 = vcombine.high %v5595, %v5595
  %v5606 = vcombine.high %v5602, %v5602
  %v5607 = vcombine.high %v4465, %v4465
  %v5609 = vunpack.c.l.s4 1966171168
  %v5610 = vunpack.c.0.s8 %v5609
  %v5611 = vlaneseq
  %v5612 = vshrl.u32 %v5611, 7
  %v5613 = vsub.s32 %v5610, %v5612
  %v5614 = vrot.slane %v4465, %v5613
  %v5616 = vunpack.c.l.s4 1966171168
  %v5617 = vunpack.c.0.s8 %v5616
  %v5618 = vlaneseq
  %v5619 = vshrl.u32 %v5618, 7
  %v5620 = vsub.s32 %v5617, %v5619
  %v5621 = vrot.slane %v5607, %v5620
  %v5622 = vcombine.high %v5614, %v5614
  %v5623 = vcombine.high %v5621, %v5621
  %v5625 = vunpack.c.l.s4 1966171168
  %v5626 = vunpack.c.0.s8 %v5625
  %v5627 = vlaneseq
  %v5628 = vshrl.u32 %v5627, 7
  %v5629 = vsub.s32 %v5626, %v5628
  %v5630 = vrot.slane %v5614, %v5629
  %v5632 = vunpack.c.l.s4 1966171168
  %v5633 = vunpack.c.0.s8 %v5632
  %v5634 = vlaneseq
  %v5635 = vshrl.u32 %v5634, 7
  %v5636 = vsub.s32 %v5633, %v5635
  %v5637 = vrot.slane %v5621, %v5636
  %v5639 = vunpack.c.l.s4 1966171168
  %v5640 = vunpack.c.0.s8 %v5639
  %v5641 = vlaneseq
  %v5642 = vshrl.u32 %v5641, 7
  %v5643 = vsub.s32 %v5640, %v5642
  %v5644 = vrot.slane %v5622, %v5643
  %v5646 = vunpack.c.l.s4 1966171168
  %v5647 = vunpack.c.0.s8 %v5646
  %v5648 = vlaneseq
  %v5649 = vshrl.u32 %v5648, 7
  %v5650 = vsub.s32 %v5647, %v5649
  %v5651 = vrot.slane %v5623, %v5650
  %v5652 = vcombine.high %v5630, %v5630
  %v5653 = vcombine.high %v5637, %v5637
  %v5654 = vcombine.high %v5644, %v5644
  %v5655 = vcombine.high %v5651, %v5651
  %v5656 = vcombine.high %v4470, %v4470
  %v5658 = vunpack.c.l.s4 1966171168
  %v5659 = vunpack.c.0.s8 %v5658
  %v5660 = vlaneseq
  %v5661 = vshrl.u32 %v5660, 7
  %v5662 = vsub.s32 %v5659, %v5661
  %v5663 = vrot.slane %v4470, %v5662
  %v5665 = vunpack.c.l.s4 1966171168
  %v5666 = vunpack.c.0.s8 %v5665
  %v5667 = vlaneseq
  %v5668 = vshrl.u32 %v5667, 7
  %v5669 = vsub.s32 %v5666, %v5668
  %v5670 = vrot.slane %v5656, %v5669
  %v5671 = vcombine.high %v5663, %v5663
  %v5672 = vcombine.high %v5670, %v5670
  %v5674 = vunpack.c.l.s4 1966171168
  %v5675 = vunpack.c.0.s8 %v5674
  %v5676 = vlaneseq
  %v5677 = vshrl.u32 %v5676, 7
  %v5678 = vsub.s32 %v5675, %v5677
  %v5679 = vrot.slane %v5663, %v5678
  %v5681 = vunpack.c.l.s4 1966171168
  %v5682 = vunpack.c.0.s8 %v5681
  %v5683 = vlaneseq
  %v5684 = vshrl.u32 %v5683, 7
  %v5685 = vsub.s32 %v5682, %v5684
  %v5686 = vrot.slane %v5670, %v5685
  %v5688 = vunpack.c.l.s4 1966171168
  %v5689 = vunpack.c.0.s8 %v5688
  %v5690 = vlaneseq
  %v5691 = vshrl.u32 %v5690, 7
  %v5692 = vsub.s32 %v5689, %v5691
  %v5693 = vrot.slane %v5671, %v5692
  %v5695 = vunpack.c.l.s4 1966171168
  %v5696 = vunpack.c.0.s8 %v5695
  %v5697 = vlaneseq
  %v5698 = vshrl.u32 %v5697, 7
  %v5699 = vsub.s32 %v5696, %v5698
  %v5700 = vrot.slane %v5672, %v5699
  %v5701 = vcombine.high %v5679, %v5679
  %v5702 = vcombine.high %v5686, %v5686
  %v5703 = vcombine.high %v5693, %v5693
  %v5704 = vcombine.high %v5700, %v5700
  %v5705 = vcombine.high %v4473, %v4473
  %v5707 = vunpack.c.l.s4 1966171168
  %v5708 = vunpack.c.0.s8 %v5707
  %v5709 = vlaneseq
  %v5710 = vshrl.u32 %v5709, 7
  %v5711 = vsub.s32 %v5708, %v5710
  %v5712 = vrot.slane %v4473, %v5711
  %v5714 = vunpack.c.l.s4 1966171168
  %v5715 = vunpack.c.0.s8 %v5714
  %v5716 = vlaneseq
  %v5717 = vshrl.u32 %v5716, 7
  %v5718 = vsub.s32 %v5715, %v5717
  %v5719 = vrot.slane %v5705, %v5718
  %v5720 = vcombine.high %v5712, %v5712
  %v5721 = vcombine.high %v5719, %v5719
  %v5723 = vunpack.c.l.s4 1966171168
  %v5724 = vunpack.c.0.s8 %v5723
  %v5725 = vlaneseq
  %v5726 = vshrl.u32 %v5725, 7
  %v5727 = vsub.s32 %v5724, %v5726
  %v5728 = vrot.slane %v5712, %v5727
  %v5730 = vunpack.c.l.s4 1966171168
  %v5731 = vunpack.c.0.s8 %v5730
  %v5732 = vlaneseq
  %v5733 = vshrl.u32 %v5732, 7
  %v5734 = vsub.s32 %v5731, %v5733
  %v5735 = vrot.slane %v5719, %v5734
  %v5737 = vunpack.c.l.s4 1966171168
  %v5738 = vunpack.c.0.s8 %v5737
  %v5739 = vlaneseq
  %v5740 = vshrl.u32 %v5739, 7
  %v5741 = vsub.s32 %v5738, %v5740
  %v5742 = vrot.slane %v5720, %v5741
  %v5744 = vunpack.c.l.s4 1966171168
  %v5745 = vunpack.c.0.s8 %v5744
  %v5746 = vlaneseq
  %v5747 = vshrl.u32 %v5746, 7
  %v5748 = vsub.s32 %v5745, %v5747
  %v5749 = vrot.slane %v5721, %v5748
  %v5750 = vcombine.high %v5728, %v5728
  %v5751 = vcombine.high %v5735, %v5735
  %v5752 = vcombine.high %v5742, %v5742
  %v5753 = vcombine.high %v5749, %v5749
  %v5754 = vcombine.high %v4478, %v4478
  %v5756 = vunpack.c.l.s4 1966171168
  %v5757 = vunpack.c.0.s8 %v5756
  %v5758 = vlaneseq
  %v5759 = vshrl.u32 %v5758, 7
  %v5760 = vsub.s32 %v5757, %v5759
  %v5761 = vrot.slane %v4478, %v5760
  %v5763 = vunpack.c.l.s4 1966171168
  %v5764 = vunpack.c.0.s8 %v5763
  %v5765 = vlaneseq
  %v5766 = vshrl.u32 %v5765, 7
  %v5767 = vsub.s32 %v5764, %v5766
  %v5768 = vrot.slane %v5754, %v5767
  %v5769 = vcombine.high %v5761, %v5761
  %v5770 = vcombine.high %v5768, %v5768
  %v5772 = vunpack.c.l.s4 1966171168
  %v5773 = vunpack.c.0.s8 %v5772
  %v5774 = vlaneseq
  %v5775 = vshrl.u32 %v5774, 7
  %v5776 = vsub.s32 %v5773, %v5775
  %v5777 = vrot.slane %v5761, %v5776
  %v5779 = vunpack.c.l.s4 1966171168
  %v5780 = vunpack.c.0.s8 %v5779
  %v5781 = vlaneseq
  %v5782 = vshrl.u32 %v5781, 7
  %v5783 = vsub.s32 %v5780, %v5782
  %v5784 = vrot.slane %v5768, %v5783
  %v5786 = vunpack.c.l.s4 1966171168
  %v5787 = vunpack.c.0.s8 %v5786
  %v5788 = vlaneseq
  %v5789 = vshrl.u32 %v5788, 7
  %v5790 = vsub.s32 %v5787, %v5789
  %v5791 = vrot.slane %v5769, %v5790
  %v5793 = vunpack.c.l.s4 1966171168
  %v5794 = vunpack.c.0.s8 %v5793
  %v5795 = vlaneseq
  %v5796 = vshrl.u32 %v5795, 7
  %v5797 = vsub.s32 %v5794, %v5796
  %v5798 = vrot.slane %v5770, %v5797
  %v5799 = vcombine.high %v5777, %v5777
  %v5800 = vcombine.high %v5784, %v5784
  %v5801 = vcombine.high %v5791, %v5791
  %v5802 = vcombine.high %v5798, %v5798
  %v5803 = vcombine.high %v4481, %v4481
  %v5805 = vunpack.c.l.s4 1966171168
  %v5806 = vunpack.c.0.s8 %v5805
  %v5807 = vlaneseq
  %v5808 = vshrl.u32 %v5807, 7
  %v5809 = vsub.s32 %v5806, %v5808
  %v5810 = vrot.slane %v4481, %v5809
  %v5812 = vunpack.c.l.s4 1966171168
  %v5813 = vunpack.c.0.s8 %v5812
  %v5814 = vlaneseq
  %v5815 = vshrl.u32 %v5814, 7
  %v5816 = vsub.s32 %v5813, %v5815
  %v5817 = vrot.slane %v5803, %v5816
  %v5818 = vcombine.high %v5810, %v5810
  %v5819 = vcombine.high %v5817, %v5817
  %v5821 = vunpack.c.l.s4 1966171168
  %v5822 = vunpack.c.0.s8 %v5821
  %v5823 = vlaneseq
  %v5824 = vshrl.u32 %v5823, 7
  %v5825 = vsub.s32 %v5822, %v5824
  %v5826 = vrot.slane %v5810, %v5825
  %v5828 = vunpack.c.l.s4 1966171168
  %v5829 = vunpack.c.0.s8 %v5828
  %v5830 = vlaneseq
  %v5831 = vshrl.u32 %v5830, 7
  %v5832 = vsub.s32 %v5829, %v5831
  %v5833 = vrot.slane %v5817, %v5832
  %v5835 = vunpack.c.l.s4 1966171168
  %v5836 = vunpack.c.0.s8 %v5835
  %v5837 = vlaneseq
  %v5838 = vshrl.u32 %v5837, 7
  %v5839 = vsub.s32 %v5836, %v5838
  %v5840 = vrot.slane %v5818, %v5839
  %v5842 = vunpack.c.l.s4 1966171168
  %v5843 = vunpack.c.0.s8 %v5842
  %v5844 = vlaneseq
  %v5845 = vshrl.u32 %v5844, 7
  %v5846 = vsub.s32 %v5843, %v5845
  %v5847 = vrot.slane %v5819, %v5846
  %v5848 = vcombine.high %v5826, %v5826
  %v5849 = vcombine.high %v5833, %v5833
  %v5850 = vcombine.high %v5840, %v5840
  %v5851 = vcombine.high %v5847, %v5847
  %v5852 = vcombine.high %v4486, %v4486
  %v5854 = vunpack.c.l.s4 1966171168
  %v5855 = vunpack.c.0.s8 %v5854
  %v5856 = vlaneseq
  %v5857 = vshrl.u32 %v5856, 7
  %v5858 = vsub.s32 %v5855, %v5857
  %v5859 = vrot.slane %v4486, %v5858
  %v5861 = vunpack.c.l.s4 1966171168
  %v5862 = vunpack.c.0.s8 %v5861
  %v5863 = vlaneseq
  %v5864 = vshrl.u32 %v5863, 7
  %v5865 = vsub.s32 %v5862, %v5864
  %v5866 = vrot.slane %v5852, %v5865
  %v5867 = vcombine.high %v5859, %v5859
  %v5868 = vcombine.high %v5866, %v5866
  %v5870 = vunpack.c.l.s4 1966171168
  %v5871 = vunpack.c.0.s8 %v5870
  %v5872 = vlaneseq
  %v5873 = vshrl.u32 %v5872, 7
  %v5874 = vsub.s32 %v5871, %v5873
  %v5875 = vrot.slane %v5859, %v5874
  %v5877 = vunpack.c.l.s4 1966171168
  %v5878 = vunpack.c.0.s8 %v5877
  %v5879 = vlaneseq
  %v5880 = vshrl.u32 %v5879, 7
  %v5881 = vsub.s32 %v5878, %v5880
  %v5882 = vrot.slane %v5866, %v5881
  %v5884 = vunpack.c.l.s4 1966171168
  %v5885 = vunpack.c.0.s8 %v5884
  %v5886 = vlaneseq
  %v5887 = vshrl.u32 %v5886, 7
  %v5888 = vsub.s32 %v5885, %v5887
  %v5889 = vrot.slane %v5867, %v5888
  %v5891 = vunpack.c.l.s4 1966171168
  %v5892 = vunpack.c.0.s8 %v5891
  %v5893 = vlaneseq
  %v5894 = vshrl.u32 %v5893, 7
  %v5895 = vsub.s32 %v5892, %v5894
  %v5896 = vrot.slane %v5868, %v5895
  %v5897 = vcombine.high %v5875, %v5875
  %v5898 = vcombine.high %v5882, %v5882
  %v5899 = vcombine.high %v5889, %v5889
  %v5900 = vcombine.high %v5896, %v5896
  %v5901 = vcombine.high %v4489, %v4489
  %v5903 = vunpack.c.l.s4 1966171168
  %v5904 = vunpack.c.0.s8 %v5903
  %v5905 = vlaneseq
  %v5906 = vshrl.u32 %v5905, 7
  %v5907 = vsub.s32 %v5904, %v5906
  %v5908 = vrot.slane %v4489, %v5907
  %v5910 = vunpack.c.l.s4 1966171168
  %v5911 = vunpack.c.0.s8 %v5910
  %v5912 = vlaneseq
  %v5913 = vshrl.u32 %v5912, 7
  %v5914 = vsub.s32 %v5911, %v5913
  %v5915 = vrot.slane %v5901, %v5914
  %v5916 = vcombine.high %v5908, %v5908
  %v5917 = vcombine.high %v5915, %v5915
  %v5919 = vunpack.c.l.s4 1966171168
  %v5920 = vunpack.c.0.s8 %v5919
  %v5921 = vlaneseq
  %v5922 = vshrl.u32 %v5921, 7
  %v5923 = vsub.s32 %v5920, %v5922
  %v5924 = vrot.slane %v5908, %v5923
  %v5926 = vunpack.c.l.s4 1966171168
  %v5927 = vunpack.c.0.s8 %v5926
  %v5928 = vlaneseq
  %v5929 = vshrl.u32 %v5928, 7
  %v5930 = vsub.s32 %v5927, %v5929
  %v5931 = vrot.slane %v5915, %v5930
  %v5933 = vunpack.c.l.s4 1966171168
  %v5934 = vunpack.c.0.s8 %v5933
  %v5935 = vlaneseq
  %v5936 = vshrl.u32 %v5935, 7
  %v5937 = vsub.s32 %v5934, %v5936
  %v5938 = vrot.slane %v5916, %v5937
  %v5940 = vunpack.c.l.s4 1966171168
  %v5941 = vunpack.c.0.s8 %v5940
  %v5942 = vlaneseq
  %v5943 = vshrl.u32 %v5942, 7
  %v5944 = vsub.s32 %v5941, %v5943
  %v5945 = vrot.slane %v5917, %v5944
  %v5946 = vcombine.high %v5924, %v5924
  %v5947 = vcombine.high %v5931, %v5931
  %v5948 = vcombine.high %v5938, %v5938
  %v5949 = vcombine.high %v5945, %v5945
  %v5950 = vcombine.high %v4494, %v4494
  %v5952 = vunpack.c.l.s4 1966171168
  %v5953 = vunpack.c.0.s8 %v5952
  %v5954 = vlaneseq
  %v5955 = vshrl.u32 %v5954, 7
  %v5956 = vsub.s32 %v5953, %v5955
  %v5957 = vrot.slane %v4494, %v5956
  %v5959 = vunpack.c.l.s4 1966171168
  %v5960 = vunpack.c.0.s8 %v5959
  %v5961 = vlaneseq
  %v5962 = vshrl.u32 %v5961, 7
  %v5963 = vsub.s32 %v5960, %v5962
  %v5964 = vrot.slane %v5950, %v5963
  %v5965 = vcombine.high %v5957, %v5957
  %v5966 = vcombine.high %v5964, %v5964
  %v5968 = vunpack.c.l.s4 1966171168
  %v5969 = vunpack.c.0.s8 %v5968
  %v5970 = vlaneseq
  %v5971 = vshrl.u32 %v5970, 7
  %v5972 = vsub.s32 %v5969, %v5971
  %v5973 = vrot.slane %v5957, %v5972
  %v5975 = vunpack.c.l.s4 1966171168
  %v5976 = vunpack.c.0.s8 %v5975
  %v5977 = vlaneseq
  %v5978 = vshrl.u32 %v5977, 7
  %v5979 = vsub.s32 %v5976, %v5978
  %v5980 = vrot.slane %v5964, %v5979
  %v5982 = vunpack.c.l.s4 1966171168
  %v5983 = vunpack.c.0.s8 %v5982
  %v5984 = vlaneseq
  %v5985 = vshrl.u32 %v5984, 7
  %v5986 = vsub.s32 %v5983, %v5985
  %v5987 = vrot.slane %v5965, %v5986
  %v5989 = vunpack.c.l.s4 1966171168
  %v5990 = vunpack.c.0.s8 %v5989
  %v5991 = vlaneseq
  %v5992 = vshrl.u32 %v5991, 7
  %v5993 = vsub.s32 %v5990, %v5992
  %v5994 = vrot.slane %v5966, %v5993
  %v5995 = vcombine.high %v5973, %v5973
  %v5996 = vcombine.high %v5980, %v5980
  %v5997 = vcombine.high %v5987, %v5987
  %v5998 = vcombine.high %v5994, %v5994
  %v5999 = vcombine.high %v4497, %v4497
  %v6001 = vunpack.c.l.s4 1966171168
  %v6002 = vunpack.c.0.s8 %v6001
  %v6003 = vlaneseq
  %v6004 = vshrl.u32 %v6003, 7
  %v6005 = vsub.s32 %v6002, %v6004
  %v6006 = vrot.slane %v4497, %v6005
  %v6008 = vunpack.c.l.s4 1966171168
  %v6009 = vunpack.c.0.s8 %v6008
  %v6010 = vlaneseq
  %v6011 = vshrl.u32 %v6010, 7
  %v6012 = vsub.s32 %v6009, %v6011
  %v6013 = vrot.slane %v5999, %v6012
  %v6014 = vcombine.high %v6006, %v6006
  %v6015 = vcombine.high %v6013, %v6013
  %v6017 = vunpack.c.l.s4 1966171168
  %v6018 = vunpack.c.0.s8 %v6017
  %v6019 = vlaneseq
  %v6020 = vshrl.u32 %v6019, 7
  %v6021 = vsub.s32 %v6018, %v6020
  %v6022 = vrot.slane %v6006, %v6021
  %v6024 = vunpack.c.l.s4 1966171168
  %v6025 = vunpack.c.0.s8 %v6024
  %v6026 = vlaneseq
  %v6027 = vshrl.u32 %v6026, 7
  %v6028 = vsub.s32 %v6025, %v6027
  %v6029 = vrot.slane %v6013, %v6028
  %v6031 = vunpack.c.l.s4 1966171168
  %v6032 = vunpack.c.0.s8 %v6031
  %v6033 = vlaneseq
  %v6034 = vshrl.u32 %v6033, 7
  %v6035 = vsub.s32 %v6032, %v6034
  %v6036 = vrot.slane %v6014, %v6035
  %v6038 = vunpack.c.l.s4 1966171168
  %v6039 = vunpack.c.0.s8 %v6038
  %v6040 = vlaneseq
  %v6041 = vshrl.u32 %v6040, 7
  %v6042 = vsub.s32 %v6039, %v6041
  %v6043 = vrot.slane %v6015, %v6042
  %v6044 = vcombine.high %v6022, %v6022
  %v6045 = vcombine.high %v6029, %v6029
  %v6046 = vcombine.high %v6036, %v6036
  %v6047 = vcombine.high %v6043, %v6043
  %v6048 = vcombine.high %v4502, %v4502
  %v6050 = vunpack.c.l.s4 1966171168
  %v6051 = vunpack.c.0.s8 %v6050
  %v6052 = vlaneseq
  %v6053 = vshrl.u32 %v6052, 7
  %v6054 = vsub.s32 %v6051, %v6053
  %v6055 = vrot.slane %v4502, %v6054
  %v6057 = vunpack.c.l.s4 1966171168
  %v6058 = vunpack.c.0.s8 %v6057
  %v6059 = vlaneseq
  %v6060 = vshrl.u32 %v6059, 7
  %v6061 = vsub.s32 %v6058, %v6060
  %v6062 = vrot.slane %v6048, %v6061
  %v6063 = vcombine.high %v6055, %v6055
  %v6064 = vcombine.high %v6062, %v6062
  %v6066 = vunpack.c.l.s4 1966171168
  %v6067 = vunpack.c.0.s8 %v6066
  %v6068 = vlaneseq
  %v6069 = vshrl.u32 %v6068, 7
  %v6070 = vsub.s32 %v6067, %v6069
  %v6071 = vrot.slane %v6055, %v6070
  %v6073 = vunpack.c.l.s4 1966171168
  %v6074 = vunpack.c.0.s8 %v6073
  %v6075 = vlaneseq
  %v6076 = vshrl.u32 %v6075, 7
  %v6077 = vsub.s32 %v6074, %v6076
  %v6078 = vrot.slane %v6062, %v6077
  %v6080 = vunpack.c.l.s4 1966171168
  %v6081 = vunpack.c.0.s8 %v6080
  %v6082 = vlaneseq
  %v6083 = vshrl.u32 %v6082, 7
  %v6084 = vsub.s32 %v6081, %v6083
  %v6085 = vrot.slane %v6063, %v6084
  %v6087 = vunpack.c.l.s4 1966171168
  %v6088 = vunpack.c.0.s8 %v6087
  %v6089 = vlaneseq
  %v6090 = vshrl.u32 %v6089, 7
  %v6091 = vsub.s32 %v6088, %v6090
  %v6092 = vrot.slane %v6064, %v6091
  %v6093 = vcombine.high %v6071, %v6071
  %v6094 = vcombine.high %v6078, %v6078
  %v6095 = vcombine.high %v6085, %v6085
  %v6096 = vcombine.high %v6092, %v6092
  %v6097 = vcombine.high %v4505, %v4505
  %v6099 = vunpack.c.l.s4 1966171168
  %v6100 = vunpack.c.0.s8 %v6099
  %v6101 = vlaneseq
  %v6102 = vshrl.u32 %v6101, 7
  %v6103 = vsub.s32 %v6100, %v6102
  %v6104 = vrot.slane %v4505, %v6103
  %v6106 = vunpack.c.l.s4 1966171168
  %v6107 = vunpack.c.0.s8 %v6106
  %v6108 = vlaneseq
  %v6109 = vshrl.u32 %v6108, 7
  %v6110 = vsub.s32 %v6107, %v6109
  %v6111 = vrot.slane %v6097, %v6110
  %v6112 = vcombine.high %v6104, %v6104
  %v6113 = vcombine.high %v6111, %v6111
  %v6115 = vunpack.c.l.s4 1966171168
  %v6116 = vunpack.c.0.s8 %v6115
  %v6117 = vlaneseq
  %v6118 = vshrl.u32 %v6117, 7
  %v6119 = vsub.s32 %v6116, %v6118
  %v6120 = vrot.slane %v6104, %v6119
  %v6122 = vunpack.c.l.s4 1966171168
  %v6123 = vunpack.c.0.s8 %v6122
  %v6124 = vlaneseq
  %v6125 = vshrl.u32 %v6124, 7
  %v6126 = vsub.s32 %v6123, %v6125
  %v6127 = vrot.slane %v6111, %v6126
  %v6129 = vunpack.c.l.s4 1966171168
  %v6130 = vunpack.c.0.s8 %v6129
  %v6131 = vlaneseq
  %v6132 = vshrl.u32 %v6131, 7
  %v6133 = vsub.s32 %v6130, %v6132
  %v6134 = vrot.slane %v6112, %v6133
  %v6136 = vunpack.c.l.s4 1966171168
  %v6137 = vunpack.c.0.s8 %v6136
  %v6138 = vlaneseq
  %v6139 = vshrl.u32 %v6138, 7
  %v6140 = vsub.s32 %v6137, %v6139
  %v6141 = vrot.slane %v6113, %v6140
  %v6142 = vcombine.high %v6120, %v6120
  %v6143 = vcombine.high %v6127, %v6127
  %v6144 = vcombine.high %v6134, %v6134
  %v6145 = vcombine.high %v6141, %v6141
  %v6146 = vcombine.high %v4510, %v4510
  %v6148 = vunpack.c.l.s4 1966171168
  %v6149 = vunpack.c.0.s8 %v6148
  %v6150 = vlaneseq
  %v6151 = vshrl.u32 %v6150, 7
  %v6152 = vsub.s32 %v6149, %v6151
  %v6153 = vrot.slane %v4510, %v6152
  %v6155 = vunpack.c.l.s4 1966171168
  %v6156 = vunpack.c.0.s8 %v6155
  %v6157 = vlaneseq
  %v6158 = vshrl.u32 %v6157, 7
  %v6159 = vsub.s32 %v6156, %v6158
  %v6160 = vrot.slane %v6146, %v6159
  %v6161 = vcombine.high %v6153, %v6153
  %v6162 = vcombine.high %v6160, %v6160
  %v6164 = vunpack.c.l.s4 1966171168
  %v6165 = vunpack.c.0.s8 %v6164
  %v6166 = vlaneseq
  %v6167 = vshrl.u32 %v6166, 7
  %v6168 = vsub.s32 %v6165, %v6167
  %v6169 = vrot.slane %v6153, %v6168
  %v6171 = vunpack.c.l.s4 1966171168
  %v6172 = vunpack.c.0.s8 %v6171
  %v6173 = vlaneseq
  %v6174 = vshrl.u32 %v6173, 7
  %v6175 = vsub.s32 %v6172, %v6174
  %v6176 = vrot.slane %v6160, %v6175
  %v6178 = vunpack.c.l.s4 1966171168
  %v6179 = vunpack.c.0.s8 %v6178
  %v6180 = vlaneseq
  %v6181 = vshrl.u32 %v6180, 7
  %v6182 = vsub.s32 %v6179, %v6181
  %v6183 = vrot.slane %v6161, %v6182
  %v6185 = vunpack.c.l.s4 1966171168
  %v6186 = vunpack.c.0.s8 %v6185
  %v6187 = vlaneseq
  %v6188 = vshrl.u32 %v6187, 7
  %v6189 = vsub.s32 %v6186, %v6188
  %v6190 = vrot.slane %v6162, %v6189
  %v6191 = vcombine.high %v6169, %v6169
  %v6192 = vcombine.high %v6176, %v6176
  %v6193 = vcombine.high %v6183, %v6183
  %v6194 = vcombine.high %v6190, %v6190
  %v6195 = vcombine.high %v4513, %v4513
  %v6197 = vunpack.c.l.s4 1966171168
  %v6198 = vunpack.c.0.s8 %v6197
  %v6199 = vlaneseq
  %v6200 = vshrl.u32 %v6199, 7
  %v6201 = vsub.s32 %v6198, %v6200
  %v6202 = vrot.slane %v4513, %v6201
  %v6204 = vunpack.c.l.s4 1966171168
  %v6205 = vunpack.c.0.s8 %v6204
  %v6206 = vlaneseq
  %v6207 = vshrl.u32 %v6206, 7
  %v6208 = vsub.s32 %v6205, %v6207
  %v6209 = vrot.slane %v6195, %v6208
  %v6210 = vcombine.high %v6202, %v6202
  %v6211 = vcombine.high %v6209, %v6209
  %v6213 = vunpack.c.l.s4 1966171168
  %v6214 = vunpack.c.0.s8 %v6213
  %v6215 = vlaneseq
  %v6216 = vshrl.u32 %v6215, 7
  %v6217 = vsub.s32 %v6214, %v6216
  %v6218 = vrot.slane %v6202, %v6217
  %v6220 = vunpack.c.l.s4 1966171168
  %v6221 = vunpack.c.0.s8 %v6220
  %v6222 = vlaneseq
  %v6223 = vshrl.u32 %v6222, 7
  %v6224 = vsub.s32 %v6221, %v6223
  %v6225 = vrot.slane %v6209, %v6224
  %v6227 = vunpack.c.l.s4 1966171168
  %v6228 = vunpack.c.0.s8 %v6227
  %v6229 = vlaneseq
  %v6230 = vshrl.u32 %v6229, 7
  %v6231 = vsub.s32 %v6228, %v6230
  %v6232 = vrot.slane %v6210, %v6231
  %v6234 = vunpack.c.l.s4 1966171168
  %v6235 = vunpack.c.0.s8 %v6234
  %v6236 = vlaneseq
  %v6237 = vshrl.u32 %v6236, 7
  %v6238 = vsub.s32 %v6235, %v6237
  %v6239 = vrot.slane %v6211, %v6238
  %v6240 = vcombine.high %v6218, %v6218
  %v6241 = vcombine.high %v6225, %v6225
  %v6242 = vcombine.high %v6232, %v6232
  %v6243 = vcombine.high %v6239, %v6239
  %v6372 = vlaneseq
  %v6373 = vshrl.u32 %v6372, 7
  %v6374 = vsub.s32 0, %v6373
  %v6375 = vrot.slane %v4555, %v6374
  %v6376 = vlaneseq
  %v6377 = vshrl.u32 %v6376, 7
  %v6378 = vsub.s32 0, %v6377
  %v6379 = vrot.slane %v4569, %v6378
  %v6380 = vlaneseq
  %v6381 = vshrl.u32 %v6380, 7
  %v6382 = vsub.s32 0, %v6381
  %v6383 = vrot.slane %v4577, %v6382
  %v6384 = vlaneseq
  %v6385 = vshrl.u32 %v6384, 7
  %v6386 = vsub.s32 0, %v6385
  %v6387 = vrot.slane %v4579, %v6386
  %v6388 = vlaneseq
  %v6389 = vshrl.u32 %v6388, 7
  %v6390 = vsub.s32 0, %v6389
  %v6391 = vrot.slane %v4562, %v6390
  %v6392 = vlaneseq
  %v6393 = vshrl.u32 %v6392, 7
  %v6394 = vsub.s32 0, %v6393
  %v6395 = vrot.slane %v4576, %v6394
  %v6396 = vlaneseq
  %v6397 = vshrl.u32 %v6396, 7
  %v6398 = vsub.s32 0, %v6397
  %v6399 = vrot.slane %v4578, %v6398
  %v6400 = vlaneseq
  %v6401 = vshrl.u32 %v6400, 7
  %v6402 = vsub.s32 0, %v6401
  %v6403 = vrot.slane %v4580, %v6402
  %v6404 = vlaneseq
  %v6405 = vshrl.u32 %v6404, 7
  %v6406 = vsub.s32 0, %v6405
  %v6407 = vrot.slane %v4604, %v6406
  %v6408 = vlaneseq
  %v6409 = vshrl.u32 %v6408, 7
  %v6410 = vsub.s32 0, %v6409
  %v6411 = vrot.slane %v4618, %v6410
  %v6412 = vlaneseq
  %v6413 = vshrl.u32 %v6412, 7
  %v6414 = vsub.s32 0, %v6413
  %v6415 = vrot.slane %v4626, %v6414
  %v6416 = vlaneseq
  %v6417 = vshrl.u32 %v6416, 7
  %v6418 = vsub.s32 0, %v6417
  %v6419 = vrot.slane %v4628, %v6418
  %v6420 = vlaneseq
  %v6421 = vshrl.u32 %v6420, 7
  %v6422 = vsub.s32 0, %v6421
  %v6423 = vrot.slane %v4611, %v6422
  %v6424 = vlaneseq
  %v6425 = vshrl.u32 %v6424, 7
  %v6426 = vsub.s32 0, %v6425
  %v6427 = vrot.slane %v4625, %v6426
  %v6428 = vlaneseq
  %v6429 = vshrl.u32 %v6428, 7
  %v6430 = vsub.s32 0, %v6429
  %v6431 = vrot.slane %v4627, %v6430
  %v6432 = vlaneseq
  %v6433 = vshrl.u32 %v6432, 7
  %v6434 = vsub.s32 0, %v6433
  %v6435 = vrot.slane %v4629, %v6434
  %v6436 = vlaneseq
  %v6437 = vshrl.u32 %v6436, 7
  %v6438 = vsub.s32 0, %v6437
  %v6439 = vrot.slane %v4653, %v6438
  %v6440 = vlaneseq
  %v6441 = vshrl.u32 %v6440, 7
  %v6442 = vsub.s32 0, %v6441
  %v6443 = vrot.slane %v4667, %v6442
  %v6444 = vlaneseq
  %v6445 = vshrl.u32 %v6444, 7
  %v6446 = vsub.s32 0, %v6445
  %v6447 = vrot.slane %v4675, %v6446
  %v6448 = vlaneseq
  %v6449 = vshrl.u32 %v6448, 7
  %v6450 = vsub.s32 0, %v6449
  %v6451 = vrot.slane %v4677, %v6450
  %v6452 = vlaneseq
  %v6453 = vshrl.u32 %v6452, 7
  %v6454 = vsub.s32 0, %v6453
  %v6455 = vrot.slane %v4660, %v6454
  %v6456 = vlaneseq
  %v6457 = vshrl.u32 %v6456, 7
  %v6458 = vsub.s32 0, %v6457
  %v6459 = vrot.slane %v4674, %v6458
  %v6460 = vlaneseq
  %v6461 = vshrl.u32 %v6460, 7
  %v6462 = vsub.s32 0, %v6461
  %v6463 = vrot.slane %v4676, %v6462
  %v6464 = vlaneseq
  %v6465 = vshrl.u32 %v6464, 7
  %v6466 = vsub.s32 0, %v6465
  %v6467 = vrot.slane %v4678, %v6466
  %v6468 = vlaneseq
  %v6469 = vshrl.u32 %v6468, 7
  %v6470 = vsub.s32 0, %v6469
  %v6471 = vrot.slane %v4702, %v6470
  %v6472 = vlaneseq
  %v6473 = vshrl.u32 %v6472, 7
  %v6474 = vsub.s32 0, %v6473
  %v6475 = vrot.slane %v4716, %v6474
  %v6476 = vlaneseq
  %v6477 = vshrl.u32 %v6476, 7
  %v6478 = vsub.s32 0, %v6477
  %v6479 = vrot.slane %v4724, %v6478
  %v6480 = vlaneseq
  %v6481 = vshrl.u32 %v6480, 7
  %v6482 = vsub.s32 0, %v6481
  %v6483 = vrot.slane %v4726, %v6482
  %v6484 = vlaneseq
  %v6485 = vshrl.u32 %v6484, 7
  %v6486 = vsub.s32 0, %v6485
  %v6487 = vrot.slane %v4709, %v6486
  %v6488 = vlaneseq
  %v6489 = vshrl.u32 %v6488, 7
  %v6490 = vsub.s32 0, %v6489
  %v6491 = vrot.slane %v4723, %v6490
  %v6492 = vlaneseq
  %v6493 = vshrl.u32 %v6492, 7
  %v6494 = vsub.s32 0, %v6493
  %v6495 = vrot.slane %v4725, %v6494
  %v6496 = vlaneseq
  %v6497 = vshrl.u32 %v6496, 7
  %v6498 = vsub.s32 0, %v6497
  %v6499 = vrot.slane %v4727, %v6498
  %v6500 = vlaneseq
  %v6501 = vshrl.u32 %v6500, 7
  %v6502 = vsub.s32 0, %v6501
  %v6503 = vrot.slane %v4751, %v6502
  %v6504 = vlaneseq
  %v6505 = vshrl.u32 %v6504, 7
  %v6506 = vsub.s32 0, %v6505
  %v6507 = vrot.slane %v4765, %v6506
  %v6508 = vlaneseq
  %v6509 = vshrl.u32 %v6508, 7
  %v6510 = vsub.s32 0, %v6509
  %v6511 = vrot.slane %v4773, %v6510
  %v6512 = vlaneseq
  %v6513 = vshrl.u32 %v6512, 7
  %v6514 = vsub.s32 0, %v6513
  %v6515 = vrot.slane %v4775, %v6514
  %v6516 = vlaneseq
  %v6517 = vshrl.u32 %v6516, 7
  %v6518 = vsub.s32 0, %v6517
  %v6519 = vrot.slane %v4758, %v6518
  %v6520 = vlaneseq
  %v6521 = vshrl.u32 %v6520, 7
  %v6522 = vsub.s32 0, %v6521
  %v6523 = vrot.slane %v4772, %v6522
  %v6524 = vlaneseq
  %v6525 = vshrl.u32 %v6524, 7
  %v6526 = vsub.s32 0, %v6525
  %v6527 = vrot.slane %v4774, %v6526
  %v6528 = vlaneseq
  %v6529 = vshrl.u32 %v6528, 7
  %v6530 = vsub.s32 0, %v6529
  %v6531 = vrot.slane %v4776, %v6530
  %v6532 = vlaneseq
  %v6533 = vshrl.u32 %v6532, 7
  %v6534 = vsub.s32 0, %v6533
  %v6535 = vrot.slane %v4800, %v6534
  %v6536 = vlaneseq
  %v6537 = vshrl.u32 %v6536, 7
  %v6538 = vsub.s32 0, %v6537
  %v6539 = vrot.slane %v4814, %v6538
  %v6540 = vlaneseq
  %v6541 = vshrl.u32 %v6540, 7
  %v6542 = vsub.s32 0, %v6541
  %v6543 = vrot.slane %v4822, %v6542
  %v6544 = vlaneseq
  %v6545 = vshrl.u32 %v6544, 7
  %v6546 = vsub.s32 0, %v6545
  %v6547 = vrot.slane %v4824, %v6546
  %v6548 = vlaneseq
  %v6549 = vshrl.u32 %v6548, 7
  %v6550 = vsub.s32 0, %v6549
  %v6551 = vrot.slane %v4807, %v6550
  %v6552 = vlaneseq
  %v6553 = vshrl.u32 %v6552, 7
  %v6554 = vsub.s32 0, %v6553
  %v6555 = vrot.slane %v4821, %v6554
  %v6556 = vlaneseq
  %v6557 = vshrl.u32 %v6556, 7
  %v6558 = vsub.s32 0, %v6557
  %v6559 = vrot.slane %v4823, %v6558
  %v6560 = vlaneseq
  %v6561 = vshrl.u32 %v6560, 7
  %v6562 = vsub.s32 0, %v6561
  %v6563 = vrot.slane %v4825, %v6562
  %v6564 = vlaneseq
  %v6565 = vshrl.u32 %v6564, 7
  %v6566 = vsub.s32 0, %v6565
  %v6567 = vrot.slane %v4849, %v6566
  %v6568 = vlaneseq
  %v6569 = vshrl.u32 %v6568, 7
  %v6570 = vsub.s32 0, %v6569
  %v6571 = vrot.slane %v4863, %v6570
  %v6572 = vlaneseq
  %v6573 = vshrl.u32 %v6572, 7
  %v6574 = vsub.s32 0, %v6573
  %v6575 = vrot.slane %v4871, %v6574
  %v6576 = vlaneseq
  %v6577 = vshrl.u32 %v6576, 7
  %v6578 = vsub.s32 0, %v6577
  %v6579 = vrot.slane %v4873, %v6578
  %v6580 = vlaneseq
  %v6581 = vshrl.u32 %v6580, 7
  %v6582 = vsub.s32 0, %v6581
  %v6583 = vrot.slane %v4856, %v6582
  %v6584 = vlaneseq
  %v6585 = vshrl.u32 %v6584, 7
  %v6586 = vsub.s32 0, %v6585
  %v6587 = vrot.slane %v4870, %v6586
  %v6588 = vlaneseq
  %v6589 = vshrl.u32 %v6588, 7
  %v6590 = vsub.s32 0, %v6589
  %v6591 = vrot.slane %v4872, %v6590
  %v6592 = vlaneseq
  %v6593 = vshrl.u32 %v6592, 7
  %v6594 = vsub.s32 0, %v6593
  %v6595 = vrot.slane %v4874, %v6594
  %v6596 = vlaneseq
  %v6597 = vshrl.u32 %v6596, 7
  %v6598 = vsub.s32 0, %v6597
  %v6599 = vrot.slane %v4898, %v6598
  %v6600 = vlaneseq
  %v6601 = vshrl.u32 %v6600, 7
  %v6602 = vsub.s32 0, %v6601
  %v6603 = vrot.slane %v4912, %v6602
  %v6604 = vlaneseq
  %v6605 = vshrl.u32 %v6604, 7
  %v6606 = vsub.s32 0, %v6605
  %v6607 = vrot.slane %v4920, %v6606
  %v6608 = vlaneseq
  %v6609 = vshrl.u32 %v6608, 7
  %v6610 = vsub.s32 0, %v6609
  %v6611 = vrot.slane %v4922, %v6610
  %v6612 = vlaneseq
  %v6613 = vshrl.u32 %v6612, 7
  %v6614 = vsub.s32 0, %v6613
  %v6615 = vrot.slane %v4905, %v6614
  %v6616 = vlaneseq
  %v6617 = vshrl.u32 %v6616, 7
  %v6618 = vsub.s32 0, %v6617
  %v6619 = vrot.slane %v4919, %v6618
  %v6620 = vlaneseq
  %v6621 = vshrl.u32 %v6620, 7
  %v6622 = vsub.s32 0, %v6621
  %v6623 = vrot.slane %v4921, %v6622
  %v6624 = vlaneseq
  %v6625 = vshrl.u32 %v6624, 7
  %v6626 = vsub.s32 0, %v6625
  %v6627 = vrot.slane %v4923, %v6626
  %v6628 = vlaneseq
  %v6629 = vshrl.u32 %v6628, 7
  %v6630 = vsub.s32 0, %v6629
  %v6631 = vrot.slane %v4947, %v6630
  %v6632 = vlaneseq
  %v6633 = vshrl.u32 %v6632, 7
  %v6634 = vsub.s32 0, %v6633
  %v6635 = vrot.slane %v4961, %v6634
  %v6636 = vlaneseq
  %v6637 = vshrl.u32 %v6636, 7
  %v6638 = vsub.s32 0, %v6637
  %v6639 = vrot.slane %v4969, %v6638
  %v6640 = vlaneseq
  %v6641 = vshrl.u32 %v6640, 7
  %v6642 = vsub.s32 0, %v6641
  %v6643 = vrot.slane %v4971, %v6642
  %v6644 = vlaneseq
  %v6645 = vshrl.u32 %v6644, 7
  %v6646 = vsub.s32 0, %v6645
  %v6647 = vrot.slane %v4954, %v6646
  %v6648 = vlaneseq
  %v6649 = vshrl.u32 %v6648, 7
  %v6650 = vsub.s32 0, %v6649
  %v6651 = vrot.slane %v4968, %v6650
  %v6652 = vlaneseq
  %v6653 = vshrl.u32 %v6652, 7
  %v6654 = vsub.s32 0, %v6653
  %v6655 = vrot.slane %v4970, %v6654
  %v6656 = vlaneseq
  %v6657 = vshrl.u32 %v6656, 7
  %v6658 = vsub.s32 0, %v6657
  %v6659 = vrot.slane %v4972, %v6658
  %v6660 = vlaneseq
  %v6661 = vshrl.u32 %v6660, 7
  %v6662 = vsub.s32 0, %v6661
  %v6663 = vrot.slane %v4996, %v6662
  %v6664 = vlaneseq
  %v6665 = vshrl.u32 %v6664, 7
  %v6666 = vsub.s32 0, %v6665
  %v6667 = vrot.slane %v5010, %v6666
  %v6668 = vlaneseq
  %v6669 = vshrl.u32 %v6668, 7
  %v6670 = vsub.s32 0, %v6669
  %v6671 = vrot.slane %v5018, %v6670
  %v6672 = vlaneseq
  %v6673 = vshrl.u32 %v6672, 7
  %v6674 = vsub.s32 0, %v6673
  %v6675 = vrot.slane %v5020, %v6674
  %v6676 = vlaneseq
  %v6677 = vshrl.u32 %v6676, 7
  %v6678 = vsub.s32 0, %v6677
  %v6679 = vrot.slane %v5003, %v6678
  %v6680 = vlaneseq
  %v6681 = vshrl.u32 %v6680, 7
  %v6682 = vsub.s32 0, %v6681
  %v6683 = vrot.slane %v5017, %v6682
  %v6684 = vlaneseq
  %v6685 = vshrl.u32 %v6684, 7
  %v6686 = vsub.s32 0, %v6685
  %v6687 = vrot.slane %v5019, %v6686
  %v6688 = vlaneseq
  %v6689 = vshrl.u32 %v6688, 7
  %v6690 = vsub.s32 0, %v6689
  %v6691 = vrot.slane %v5021, %v6690
  %v6692 = vlaneseq
  %v6693 = vshrl.u32 %v6692, 7
  %v6694 = vsub.s32 0, %v6693
  %v6695 = vrot.slane %v5045, %v6694
  %v6696 = vlaneseq
  %v6697 = vshrl.u32 %v6696, 7
  %v6698 = vsub.s32 0, %v6697
  %v6699 = vrot.slane %v5059, %v6698
  %v6700 = vlaneseq
  %v6701 = vshrl.u32 %v6700, 7
  %v6702 = vsub.s32 0, %v6701
  %v6703 = vrot.slane %v5067, %v6702
  %v6704 = vlaneseq
  %v6705 = vshrl.u32 %v6704, 7
  %v6706 = vsub.s32 0, %v6705
  %v6707 = vrot.slane %v5069, %v6706
  %v6708 = vlaneseq
  %v6709 = vshrl.u32 %v6708, 7
  %v6710 = vsub.s32 0, %v6709
  %v6711 = vrot.slane %v5052, %v6710
  %v6712 = vlaneseq
  %v6713 = vshrl.u32 %v6712, 7
  %v6714 = vsub.s32 0, %v6713
  %v6715 = vrot.slane %v5066, %v6714
  %v6716 = vlaneseq
  %v6717 = vshrl.u32 %v6716, 7
  %v6718 = vsub.s32 0, %v6717
  %v6719 = vrot.slane %v5068, %v6718
  %v6720 = vlaneseq
  %v6721 = vshrl.u32 %v6720, 7
  %v6722 = vsub.s32 0, %v6721
  %v6723 = vrot.slane %v5070, %v6722
  %v6724 = vlaneseq
  %v6725 = vshrl.u32 %v6724, 7
  %v6726 = vsub.s32 0, %v6725
  %v6727 = vrot.slane %v5094, %v6726
  %v6728 = vlaneseq
  %v6729 = vshrl.u32 %v6728, 7
  %v6730 = vsub.s32 0, %v6729
  %v6731 = vrot.slane %v5108, %v6730
  %v6732 = vlaneseq
  %v6733 = vshrl.u32 %v6732, 7
  %v6734 = vsub.s32 0, %v6733
  %v6735 = vrot.slane %v5116, %v6734
  %v6736 = vlaneseq
  %v6737 = vshrl.u32 %v6736, 7
  %v6738 = vsub.s32 0, %v6737
  %v6739 = vrot.slane %v5118, %v6738
  %v6740 = vlaneseq
  %v6741 = vshrl.u32 %v6740, 7
  %v6742 = vsub.s32 0, %v6741
  %v6743 = vrot.slane %v5101, %v6742
  %v6744 = vlaneseq
  %v6745 = vshrl.u32 %v6744, 7
  %v6746 = vsub.s32 0, %v6745
  %v6747 = vrot.slane %v5115, %v6746
  %v6748 = vlaneseq
  %v6749 = vshrl.u32 %v6748, 7
  %v6750 = vsub.s32 0, %v6749
  %v6751 = vrot.slane %v5117, %v6750
  %v6752 = vlaneseq
  %v6753 = vshrl.u32 %v6752, 7
  %v6754 = vsub.s32 0, %v6753
  %v6755 = vrot.slane %v5119, %v6754
  %v6756 = vlaneseq
  %v6757 = vshrl.u32 %v6756, 7
  %v6758 = vsub.s32 0, %v6757
  %v6759 = vrot.slane %v5143, %v6758
  %v6760 = vlaneseq
  %v6761 = vshrl.u32 %v6760, 7
  %v6762 = vsub.s32 0, %v6761
  %v6763 = vrot.slane %v5157, %v6762
  %v6764 = vlaneseq
  %v6765 = vshrl.u32 %v6764, 7
  %v6766 = vsub.s32 0, %v6765
  %v6767 = vrot.slane %v5165, %v6766
  %v6768 = vlaneseq
  %v6769 = vshrl.u32 %v6768, 7
  %v6770 = vsub.s32 0, %v6769
  %v6771 = vrot.slane %v5167, %v6770
  %v6772 = vlaneseq
  %v6773 = vshrl.u32 %v6772, 7
  %v6774 = vsub.s32 0, %v6773
  %v6775 = vrot.slane %v5150, %v6774
  %v6776 = vlaneseq
  %v6777 = vshrl.u32 %v6776, 7
  %v6778 = vsub.s32 0, %v6777
  %v6779 = vrot.slane %v5164, %v6778
  %v6780 = vlaneseq
  %v6781 = vshrl.u32 %v6780, 7
  %v6782 = vsub.s32 0, %v6781
  %v6783 = vrot.slane %v5166, %v6782
  %v6784 = vlaneseq
  %v6785 = vshrl.u32 %v6784, 7
  %v6786 = vsub.s32 0, %v6785
  %v6787 = vrot.slane %v5168, %v6786
  %v6788 = vlaneseq
  %v6789 = vshrl.u32 %v6788, 7
  %v6790 = vsub.s32 0, %v6789
  %v6791 = vrot.slane %v5192, %v6790
  %v6792 = vlaneseq
  %v6793 = vshrl.u32 %v6792, 7
  %v6794 = vsub.s32 0, %v6793
  %v6795 = vrot.slane %v5206, %v6794
  %v6796 = vlaneseq
  %v6797 = vshrl.u32 %v6796, 7
  %v6798 = vsub.s32 0, %v6797
  %v6799 = vrot.slane %v5214, %v6798
  %v6800 = vlaneseq
  %v6801 = vshrl.u32 %v6800, 7
  %v6802 = vsub.s32 0, %v6801
  %v6803 = vrot.slane %v5216, %v6802
  %v6804 = vlaneseq
  %v6805 = vshrl.u32 %v6804, 7
  %v6806 = vsub.s32 0, %v6805
  %v6807 = vrot.slane %v5199, %v6806
  %v6808 = vlaneseq
  %v6809 = vshrl.u32 %v6808, 7
  %v6810 = vsub.s32 0, %v6809
  %v6811 = vrot.slane %v5213, %v6810
  %v6812 = vlaneseq
  %v6813 = vshrl.u32 %v6812, 7
  %v6814 = vsub.s32 0, %v6813
  %v6815 = vrot.slane %v5215, %v6814
  %v6816 = vlaneseq
  %v6817 = vshrl.u32 %v6816, 7
  %v6818 = vsub.s32 0, %v6817
  %v6819 = vrot.slane %v5217, %v6818
  %v6820 = vlaneseq
  %v6821 = vshrl.u32 %v6820, 7
  %v6822 = vsub.s32 0, %v6821
  %v6823 = vrot.slane %v5241, %v6822
  %v6824 = vlaneseq
  %v6825 = vshrl.u32 %v6824, 7
  %v6826 = vsub.s32 0, %v6825
  %v6827 = vrot.slane %v5255, %v6826
  %v6828 = vlaneseq
  %v6829 = vshrl.u32 %v6828, 7
  %v6830 = vsub.s32 0, %v6829
  %v6831 = vrot.slane %v5263, %v6830
  %v6832 = vlaneseq
  %v6833 = vshrl.u32 %v6832, 7
  %v6834 = vsub.s32 0, %v6833
  %v6835 = vrot.slane %v5265, %v6834
  %v6836 = vlaneseq
  %v6837 = vshrl.u32 %v6836, 7
  %v6838 = vsub.s32 0, %v6837
  %v6839 = vrot.slane %v5248, %v6838
  %v6840 = vlaneseq
  %v6841 = vshrl.u32 %v6840, 7
  %v6842 = vsub.s32 0, %v6841
  %v6843 = vrot.slane %v5262, %v6842
  %v6844 = vlaneseq
  %v6845 = vshrl.u32 %v6844, 7
  %v6846 = vsub.s32 0, %v6845
  %v6847 = vrot.slane %v5264, %v6846
  %v6848 = vlaneseq
  %v6849 = vshrl.u32 %v6848, 7
  %v6850 = vsub.s32 0, %v6849
  %v6851 = vrot.slane %v5266, %v6850
  %v6852 = vlaneseq
  %v6853 = vshrl.u32 %v6852, 7
  %v6854 = vsub.s32 0, %v6853
  %v6855 = vrot.slane %v5290, %v6854
  %v6856 = vlaneseq
  %v6857 = vshrl.u32 %v6856, 7
  %v6858 = vsub.s32 0, %v6857
  %v6859 = vrot.slane %v5304, %v6858
  %v6860 = vlaneseq
  %v6861 = vshrl.u32 %v6860, 7
  %v6862 = vsub.s32 0, %v6861
  %v6863 = vrot.slane %v5312, %v6862
  %v6864 = vlaneseq
  %v6865 = vshrl.u32 %v6864, 7
  %v6866 = vsub.s32 0, %v6865
  %v6867 = vrot.slane %v5314, %v6866
  %v6868 = vlaneseq
  %v6869 = vshrl.u32 %v6868, 7
  %v6870 = vsub.s32 0, %v6869
  %v6871 = vrot.slane %v5297, %v6870
  %v6872 = vlaneseq
  %v6873 = vshrl.u32 %v6872, 7
  %v6874 = vsub.s32 0, %v6873
  %v6875 = vrot.slane %v5311, %v6874
  %v6876 = vlaneseq
  %v6877 = vshrl.u32 %v6876, 7
  %v6878 = vsub.s32 0, %v6877
  %v6879 = vrot.slane %v5313, %v6878
  %v6880 = vlaneseq
  %v6881 = vshrl.u32 %v6880, 7
  %v6882 = vsub.s32 0, %v6881
  %v6883 = vrot.slane %v5315, %v6882
  %6884 = vrot.lane.b32.xlu0 %v6375, 125
  %v6885 = vpop.permute.xlu0 %6884
  %6886 = vrot.lane.b32.xlu0 %v6379, 125
  %v6887 = vpop.permute.xlu0 %6886
  %6888 = vrot.lane.b32.xlu0 %v6383, 125
  %v6889 = vpop.permute.xlu0 %6888
  %6890 = vrot.lane.b32.xlu0 %v6387, 125
  %v6891 = vpop.permute.xlu0 %6890
  %6892 = vrot.lane.b32.xlu0 %v6391, 125
  %v6893 = vpop.permute.xlu0 %6892
  %6894 = vrot.lane.b32.xlu0 %v6395, 125
  %v6895 = vpop.permute.xlu0 %6894
  %6896 = vrot.lane.b32.xlu0 %v6399, 125
  %v6897 = vpop.permute.xlu0 %6896
  %6898 = vrot.lane.b32.xlu0 %v6403, 125
  %v6899 = vpop.permute.xlu0 %6898
  %6900 = vrot.lane.b32.xlu0 %v6407, 125
  %v6901 = vpop.permute.xlu0 %6900
  %6902 = vrot.lane.b32.xlu0 %v6411, 125
  %v6903 = vpop.permute.xlu0 %6902
  %6904 = vrot.lane.b32.xlu0 %v6415, 125
  %v6905 = vpop.permute.xlu0 %6904
  %6906 = vrot.lane.b32.xlu0 %v6419, 125
  %v6907 = vpop.permute.xlu0 %6906
  %6908 = vrot.lane.b32.xlu0 %v6423, 125
  %v6909 = vpop.permute.xlu0 %6908
  %6910 = vrot.lane.b32.xlu0 %v6427, 125
  %v6911 = vpop.permute.xlu0 %6910
  %6912 = vrot.lane.b32.xlu0 %v6431, 125
  %v6913 = vpop.permute.xlu0 %6912
  %6914 = vrot.lane.b32.xlu0 %v6435, 125
  %v6915 = vpop.permute.xlu0 %6914
  %6916 = vrot.lane.b32.xlu0 %v6439, 125
  %v6917 = vpop.permute.xlu0 %6916
  %6918 = vrot.lane.b32.xlu0 %v6443, 125
  %v6919 = vpop.permute.xlu0 %6918
  %6920 = vrot.lane.b32.xlu0 %v6447, 125
  %v6921 = vpop.permute.xlu0 %6920
  %6922 = vrot.lane.b32.xlu0 %v6451, 125
  %v6923 = vpop.permute.xlu0 %6922
  %6924 = vrot.lane.b32.xlu0 %v6455, 125
  %v6925 = vpop.permute.xlu0 %6924
  %6926 = vrot.lane.b32.xlu0 %v6459, 125
  %v6927 = vpop.permute.xlu0 %6926
  %6928 = vrot.lane.b32.xlu0 %v6463, 125
  %v6929 = vpop.permute.xlu0 %6928
  %6930 = vrot.lane.b32.xlu0 %v6467, 125
  %v6931 = vpop.permute.xlu0 %6930
  %6932 = vrot.lane.b32.xlu0 %v6471, 125
  %v6933 = vpop.permute.xlu0 %6932
  %6934 = vrot.lane.b32.xlu0 %v6475, 125
  %v6935 = vpop.permute.xlu0 %6934
  %6936 = vrot.lane.b32.xlu0 %v6479, 125
  %v6937 = vpop.permute.xlu0 %6936
  %6938 = vrot.lane.b32.xlu0 %v6483, 125
  %v6939 = vpop.permute.xlu0 %6938
  %6940 = vrot.lane.b32.xlu0 %v6487, 125
  %v6941 = vpop.permute.xlu0 %6940
  %6942 = vrot.lane.b32.xlu0 %v6491, 125
  %v6943 = vpop.permute.xlu0 %6942
  %6944 = vrot.lane.b32.xlu0 %v6495, 125
  %v6945 = vpop.permute.xlu0 %6944
  %6946 = vrot.lane.b32.xlu0 %v6499, 125
  %v6947 = vpop.permute.xlu0 %6946
  %6948 = vrot.lane.b32.xlu0 %v6503, 125
  %v6949 = vpop.permute.xlu0 %6948
  %6950 = vrot.lane.b32.xlu0 %v6507, 125
  %v6951 = vpop.permute.xlu0 %6950
  %6952 = vrot.lane.b32.xlu0 %v6511, 125
  %v6953 = vpop.permute.xlu0 %6952
  %6954 = vrot.lane.b32.xlu0 %v6515, 125
  %v6955 = vpop.permute.xlu0 %6954
  %6956 = vrot.lane.b32.xlu0 %v6519, 125
  %v6957 = vpop.permute.xlu0 %6956
  %6958 = vrot.lane.b32.xlu0 %v6523, 125
  %v6959 = vpop.permute.xlu0 %6958
  %6960 = vrot.lane.b32.xlu0 %v6527, 125
  %v6961 = vpop.permute.xlu0 %6960
  %6962 = vrot.lane.b32.xlu0 %v6531, 125
  %v6963 = vpop.permute.xlu0 %6962
  %6964 = vrot.lane.b32.xlu0 %v6535, 125
  %v6965 = vpop.permute.xlu0 %6964
  %6966 = vrot.lane.b32.xlu0 %v6539, 125
  %v6967 = vpop.permute.xlu0 %6966
  %6968 = vrot.lane.b32.xlu0 %v6543, 125
  %v6969 = vpop.permute.xlu0 %6968
  %6970 = vrot.lane.b32.xlu0 %v6547, 125
  %v6971 = vpop.permute.xlu0 %6970
  %6972 = vrot.lane.b32.xlu0 %v6551, 125
  %v6973 = vpop.permute.xlu0 %6972
  %6974 = vrot.lane.b32.xlu0 %v6555, 125
  %v6975 = vpop.permute.xlu0 %6974
  %6976 = vrot.lane.b32.xlu0 %v6559, 125
  %v6977 = vpop.permute.xlu0 %6976
  %6978 = vrot.lane.b32.xlu0 %v6563, 125
  %v6979 = vpop.permute.xlu0 %6978
  %6980 = vrot.lane.b32.xlu0 %v6567, 125
  %v6981 = vpop.permute.xlu0 %6980
  %6982 = vrot.lane.b32.xlu0 %v6571, 125
  %v6983 = vpop.permute.xlu0 %6982
  %6984 = vrot.lane.b32.xlu0 %v6575, 125
  %v6985 = vpop.permute.xlu0 %6984
  %6986 = vrot.lane.b32.xlu0 %v6579, 125
  %v6987 = vpop.permute.xlu0 %6986
  %6988 = vrot.lane.b32.xlu0 %v6583, 125
  %v6989 = vpop.permute.xlu0 %6988
  %6990 = vrot.lane.b32.xlu0 %v6587, 125
  %v6991 = vpop.permute.xlu0 %6990
  %6992 = vrot.lane.b32.xlu0 %v6591, 125
  %v6993 = vpop.permute.xlu0 %6992
  %6994 = vrot.lane.b32.xlu0 %v6595, 125
  %v6995 = vpop.permute.xlu0 %6994
  %6996 = vrot.lane.b32.xlu0 %v6599, 125
  %v6997 = vpop.permute.xlu0 %6996
  %6998 = vrot.lane.b32.xlu0 %v6603, 125
  %v6999 = vpop.permute.xlu0 %6998
  %7000 = vrot.lane.b32.xlu0 %v6607, 125
  %v7001 = vpop.permute.xlu0 %7000
  %7002 = vrot.lane.b32.xlu0 %v6611, 125
  %v7003 = vpop.permute.xlu0 %7002
  %7004 = vrot.lane.b32.xlu0 %v6615, 125
  %v7005 = vpop.permute.xlu0 %7004
  %7006 = vrot.lane.b32.xlu0 %v6619, 125
  %v7007 = vpop.permute.xlu0 %7006
  %7008 = vrot.lane.b32.xlu0 %v6623, 125
  %v7009 = vpop.permute.xlu0 %7008
  %7010 = vrot.lane.b32.xlu0 %v6627, 125
  %v7011 = vpop.permute.xlu0 %7010
  %7012 = vrot.lane.b32.xlu0 %v6631, 125
  %v7013 = vpop.permute.xlu0 %7012
  %7014 = vrot.lane.b32.xlu0 %v6635, 125
  %v7015 = vpop.permute.xlu0 %7014
  %7016 = vrot.lane.b32.xlu0 %v6639, 125
  %v7017 = vpop.permute.xlu0 %7016
  %7018 = vrot.lane.b32.xlu0 %v6643, 125
  %v7019 = vpop.permute.xlu0 %7018
  %7020 = vrot.lane.b32.xlu0 %v6647, 125
  %v7021 = vpop.permute.xlu0 %7020
  %7022 = vrot.lane.b32.xlu0 %v6651, 125
  %v7023 = vpop.permute.xlu0 %7022
  %7024 = vrot.lane.b32.xlu0 %v6655, 125
  %v7025 = vpop.permute.xlu0 %7024
  %7026 = vrot.lane.b32.xlu0 %v6659, 125
  %v7027 = vpop.permute.xlu0 %7026
  %7028 = vrot.lane.b32.xlu0 %v6663, 125
  %v7029 = vpop.permute.xlu0 %7028
  %7030 = vrot.lane.b32.xlu0 %v6667, 125
  %v7031 = vpop.permute.xlu0 %7030
  %7032 = vrot.lane.b32.xlu0 %v6671, 125
  %v7033 = vpop.permute.xlu0 %7032
  %7034 = vrot.lane.b32.xlu0 %v6675, 125
  %v7035 = vpop.permute.xlu0 %7034
  %7036 = vrot.lane.b32.xlu0 %v6679, 125
  %v7037 = vpop.permute.xlu0 %7036
  %7038 = vrot.lane.b32.xlu0 %v6683, 125
  %v7039 = vpop.permute.xlu0 %7038
  %7040 = vrot.lane.b32.xlu0 %v6687, 125
  %v7041 = vpop.permute.xlu0 %7040
  %7042 = vrot.lane.b32.xlu0 %v6691, 125
  %v7043 = vpop.permute.xlu0 %7042
  %7044 = vrot.lane.b32.xlu0 %v6695, 125
  %v7045 = vpop.permute.xlu0 %7044
  %7046 = vrot.lane.b32.xlu0 %v6699, 125
  %v7047 = vpop.permute.xlu0 %7046
  %7048 = vrot.lane.b32.xlu0 %v6703, 125
  %v7049 = vpop.permute.xlu0 %7048
  %7050 = vrot.lane.b32.xlu0 %v6707, 125
  %v7051 = vpop.permute.xlu0 %7050
  %7052 = vrot.lane.b32.xlu0 %v6711, 125
  %v7053 = vpop.permute.xlu0 %7052
  %7054 = vrot.lane.b32.xlu0 %v6715, 125
  %v7055 = vpop.permute.xlu0 %7054
  %7056 = vrot.lane.b32.xlu0 %v6719, 125
  %v7057 = vpop.permute.xlu0 %7056
  %7058 = vrot.lane.b32.xlu0 %v6723, 125
  %v7059 = vpop.permute.xlu0 %7058
  %7060 = vrot.lane.b32.xlu0 %v6727, 125
  %v7061 = vpop.permute.xlu0 %7060
  %7062 = vrot.lane.b32.xlu0 %v6731, 125
  %v7063 = vpop.permute.xlu0 %7062
  %7064 = vrot.lane.b32.xlu0 %v6735, 125
  %v7065 = vpop.permute.xlu0 %7064
  %7066 = vrot.lane.b32.xlu0 %v6739, 125
  %v7067 = vpop.permute.xlu0 %7066
  %7068 = vrot.lane.b32.xlu0 %v6743, 125
  %v7069 = vpop.permute.xlu0 %7068
  %7070 = vrot.lane.b32.xlu0 %v6747, 125
  %v7071 = vpop.permute.xlu0 %7070
  %7072 = vrot.lane.b32.xlu0 %v6751, 125
  %v7073 = vpop.permute.xlu0 %7072
  %7074 = vrot.lane.b32.xlu0 %v6755, 125
  %v7075 = vpop.permute.xlu0 %7074
  %7076 = vrot.lane.b32.xlu0 %v6759, 125
  %v7077 = vpop.permute.xlu0 %7076
  %7078 = vrot.lane.b32.xlu0 %v6763, 125
  %v7079 = vpop.permute.xlu0 %7078
  %7080 = vrot.lane.b32.xlu0 %v6767, 125
  %v7081 = vpop.permute.xlu0 %7080
  %7082 = vrot.lane.b32.xlu0 %v6771, 125
  %v7083 = vpop.permute.xlu0 %7082
  %7084 = vrot.lane.b32.xlu0 %v6775, 125
  %v7085 = vpop.permute.xlu0 %7084
  %7086 = vrot.lane.b32.xlu0 %v6779, 125
  %v7087 = vpop.permute.xlu0 %7086
  %7088 = vrot.lane.b32.xlu0 %v6783, 125
  %v7089 = vpop.permute.xlu0 %7088
  %7090 = vrot.lane.b32.xlu0 %v6787, 125
  %v7091 = vpop.permute.xlu0 %7090
  %7092 = vrot.lane.b32.xlu0 %v6791, 125
  %v7093 = vpop.permute.xlu0 %7092
  %7094 = vrot.lane.b32.xlu0 %v6795, 125
  %v7095 = vpop.permute.xlu0 %7094
  %7096 = vrot.lane.b32.xlu0 %v6799, 125
  %v7097 = vpop.permute.xlu0 %7096
  %7098 = vrot.lane.b32.xlu0 %v6803, 125
  %v7099 = vpop.permute.xlu0 %7098
  %7100 = vrot.lane.b32.xlu0 %v6807, 125
  %v7101 = vpop.permute.xlu0 %7100
  %7102 = vrot.lane.b32.xlu0 %v6811, 125
  %v7103 = vpop.permute.xlu0 %7102
  %7104 = vrot.lane.b32.xlu0 %v6815, 125
  %v7105 = vpop.permute.xlu0 %7104
  %7106 = vrot.lane.b32.xlu0 %v6819, 125
  %v7107 = vpop.permute.xlu0 %7106
  %7108 = vrot.lane.b32.xlu0 %v6823, 125
  %v7109 = vpop.permute.xlu0 %7108
  %7110 = vrot.lane.b32.xlu0 %v6827, 125
  %v7111 = vpop.permute.xlu0 %7110
  %7112 = vrot.lane.b32.xlu0 %v6831, 125
  %v7113 = vpop.permute.xlu0 %7112
  %7114 = vrot.lane.b32.xlu0 %v6835, 125
  %v7115 = vpop.permute.xlu0 %7114
  %7116 = vrot.lane.b32.xlu0 %v6839, 125
  %v7117 = vpop.permute.xlu0 %7116
  %7118 = vrot.lane.b32.xlu0 %v6843, 125
  %v7119 = vpop.permute.xlu0 %7118
  %7120 = vrot.lane.b32.xlu0 %v6847, 125
  %v7121 = vpop.permute.xlu0 %7120
  %7122 = vrot.lane.b32.xlu0 %v6851, 125
  %v7123 = vpop.permute.xlu0 %7122
  %7124 = vrot.lane.b32.xlu0 %v6855, 125
  %v7125 = vpop.permute.xlu0 %7124
  %7126 = vrot.lane.b32.xlu0 %v6859, 125
  %v7127 = vpop.permute.xlu0 %7126
  %7128 = vrot.lane.b32.xlu0 %v6863, 125
  %v7129 = vpop.permute.xlu0 %7128
  %7130 = vrot.lane.b32.xlu0 %v6867, 125
  %v7131 = vpop.permute.xlu0 %7130
  %7132 = vrot.lane.b32.xlu0 %v6871, 125
  %v7133 = vpop.permute.xlu0 %7132
  %7134 = vrot.lane.b32.xlu0 %v6875, 125
  %v7135 = vpop.permute.xlu0 %7134
  %7136 = vrot.lane.b32.xlu0 %v6879, 125
  %v7137 = vpop.permute.xlu0 %7136
  %7138 = vrot.lane.b32.xlu0 %v6883, 125
  %v7139 = vpop.permute.xlu0 %7138
  %v7268 = vsel %vm188, %v4555, %v6885
  %v7269 = vsel %vm188, %v4569, %v6887
  %v7270 = vsel %vm188, %v4577, %v6889
  %v7271 = vsel %vm188, %v4579, %v6891
  %v7272 = vsel %vm188, %v4562, %v6893
  %v7273 = vsel %vm188, %v4576, %v6895
  %v7274 = vsel %vm188, %v4578, %v6897
  %v7275 = vsel %vm188, %v4580, %v6899
  %v7276 = vsel %vm188, %v4604, %v6901
  %v7277 = vsel %vm188, %v4618, %v6903
  %v7278 = vsel %vm188, %v4626, %v6905
  %v7279 = vsel %vm188, %v4628, %v6907
  %v7280 = vsel %vm188, %v4611, %v6909
  %v7281 = vsel %vm188, %v4625, %v6911
  %v7282 = vsel %vm188, %v4627, %v6913
  %v7283 = vsel %vm188, %v4629, %v6915
  %v7284 = vsel %vm188, %v4653, %v6917
  %v7285 = vsel %vm188, %v4667, %v6919
  %v7286 = vsel %vm188, %v4675, %v6921
  %v7287 = vsel %vm188, %v4677, %v6923
  %v7288 = vsel %vm188, %v4660, %v6925
  %v7289 = vsel %vm188, %v4674, %v6927
  %v7290 = vsel %vm188, %v4676, %v6929
  %v7291 = vsel %vm188, %v4678, %v6931
  %v7292 = vsel %vm188, %v4702, %v6933
  %v7293 = vsel %vm188, %v4716, %v6935
  %v7294 = vsel %vm188, %v4724, %v6937
  %v7295 = vsel %vm188, %v4726, %v6939
  %v7296 = vsel %vm188, %v4709, %v6941
  %v7297 = vsel %vm188, %v4723, %v6943
  %v7298 = vsel %vm188, %v4725, %v6945
  %v7299 = vsel %vm188, %v4727, %v6947
  %v7300 = vsel %vm188, %v4751, %v6949
  %v7301 = vsel %vm188, %v4765, %v6951
  %v7302 = vsel %vm188, %v4773, %v6953
  %v7303 = vsel %vm188, %v4775, %v6955
  %v7304 = vsel %vm188, %v4758, %v6957
  %v7305 = vsel %vm188, %v4772, %v6959
  %v7306 = vsel %vm188, %v4774, %v6961
  %v7307 = vsel %vm188, %v4776, %v6963
  %v7308 = vsel %vm188, %v4800, %v6965
  %v7309 = vsel %vm188, %v4814, %v6967
  %v7310 = vsel %vm188, %v4822, %v6969
  %v7311 = vsel %vm188, %v4824, %v6971
  %v7312 = vsel %vm188, %v4807, %v6973
  %v7313 = vsel %vm188, %v4821, %v6975
  %v7314 = vsel %vm188, %v4823, %v6977
  %v7315 = vsel %vm188, %v4825, %v6979
  %v7316 = vsel %vm188, %v4849, %v6981
  %v7317 = vsel %vm188, %v4863, %v6983
  %v7318 = vsel %vm188, %v4871, %v6985
  %v7319 = vsel %vm188, %v4873, %v6987
  %v7320 = vsel %vm188, %v4856, %v6989
  %v7321 = vsel %vm188, %v4870, %v6991
  %v7322 = vsel %vm188, %v4872, %v6993
  %v7323 = vsel %vm188, %v4874, %v6995
  %v7324 = vsel %vm188, %v4898, %v6997
  %v7325 = vsel %vm188, %v4912, %v6999
  %v7326 = vsel %vm188, %v4920, %v7001
  %v7327 = vsel %vm188, %v4922, %v7003
  %v7328 = vsel %vm188, %v4905, %v7005
  %v7329 = vsel %vm188, %v4919, %v7007
  %v7330 = vsel %vm188, %v4921, %v7009
  %v7331 = vsel %vm188, %v4923, %v7011
  %v7332 = vsel %vm188, %v4947, %v7013
  %v7333 = vsel %vm188, %v4961, %v7015
  %v7334 = vsel %vm188, %v4969, %v7017
  %v7335 = vsel %vm188, %v4971, %v7019
  %v7336 = vsel %vm188, %v4954, %v7021
  %v7337 = vsel %vm188, %v4968, %v7023
  %v7338 = vsel %vm188, %v4970, %v7025
  %v7339 = vsel %vm188, %v4972, %v7027
  %v7340 = vsel %vm188, %v4996, %v7029
  %v7341 = vsel %vm188, %v5010, %v7031
  %v7342 = vsel %vm188, %v5018, %v7033
  %v7343 = vsel %vm188, %v5020, %v7035
  %v7344 = vsel %vm188, %v5003, %v7037
  %v7345 = vsel %vm188, %v5017, %v7039
  %v7346 = vsel %vm188, %v5019, %v7041
  %v7347 = vsel %vm188, %v5021, %v7043
  %v7348 = vsel %vm188, %v5045, %v7045
  %v7349 = vsel %vm188, %v5059, %v7047
  %v7350 = vsel %vm188, %v5067, %v7049
  %v7351 = vsel %vm188, %v5069, %v7051
  %v7352 = vsel %vm188, %v5052, %v7053
  %v7353 = vsel %vm188, %v5066, %v7055
  %v7354 = vsel %vm188, %v5068, %v7057
  %v7355 = vsel %vm188, %v5070, %v7059
  %v7356 = vsel %vm188, %v5094, %v7061
  %v7357 = vsel %vm188, %v5108, %v7063
  %v7358 = vsel %vm188, %v5116, %v7065
  %v7359 = vsel %vm188, %v5118, %v7067
  %v7360 = vsel %vm188, %v5101, %v7069
  %v7361 = vsel %vm188, %v5115, %v7071
  %v7362 = vsel %vm188, %v5117, %v7073
  %v7363 = vsel %vm188, %v5119, %v7075
  %v7364 = vsel %vm188, %v5143, %v7077
  %v7365 = vsel %vm188, %v5157, %v7079
  %v7366 = vsel %vm188, %v5165, %v7081
  %v7367 = vsel %vm188, %v5167, %v7083
  %v7368 = vsel %vm188, %v5150, %v7085
  %v7369 = vsel %vm188, %v5164, %v7087
  %v7370 = vsel %vm188, %v5166, %v7089
  %v7371 = vsel %vm188, %v5168, %v7091
  %v7372 = vsel %vm188, %v5192, %v7093
  %v7373 = vsel %vm188, %v5206, %v7095
  %v7374 = vsel %vm188, %v5214, %v7097
  %v7375 = vsel %vm188, %v5216, %v7099
  %v7376 = vsel %vm188, %v5199, %v7101
  %v7377 = vsel %vm188, %v5213, %v7103
  %v7378 = vsel %vm188, %v5215, %v7105
  %v7379 = vsel %vm188, %v5217, %v7107
  %v7380 = vsel %vm188, %v5241, %v7109
  %v7381 = vsel %vm188, %v5255, %v7111
  %v7382 = vsel %vm188, %v5263, %v7113
  %v7383 = vsel %vm188, %v5265, %v7115
  %v7384 = vsel %vm188, %v5248, %v7117
  %v7385 = vsel %vm188, %v5262, %v7119
  %v7386 = vsel %vm188, %v5264, %v7121
  %v7387 = vsel %vm188, %v5266, %v7123
  %v7388 = vsel %vm188, %v5290, %v7125
  %v7389 = vsel %vm188, %v5304, %v7127
  %v7390 = vsel %vm188, %v5312, %v7129
  %v7391 = vsel %vm188, %v5314, %v7131
  %v7392 = vsel %vm188, %v5297, %v7133
  %v7393 = vsel %vm188, %v5311, %v7135
  %v7394 = vsel %vm188, %v5313, %v7137
  %v7395 = vsel %vm188, %v5315, %v7139
  %v7396 = vlaneseq
  %v7397 = vshrl.u32 %v7396, 7
  %v7398 = vsub.s32 0, %v7397
  %v7399 = vrot.slane %v5483, %v7398
  %v7400 = vlaneseq
  %v7401 = vshrl.u32 %v7400, 7
  %v7402 = vsub.s32 0, %v7401
  %v7403 = vrot.slane %v5497, %v7402
  %v7404 = vlaneseq
  %v7405 = vshrl.u32 %v7404, 7
  %v7406 = vsub.s32 0, %v7405
  %v7407 = vrot.slane %v5505, %v7406
  %v7408 = vlaneseq
  %v7409 = vshrl.u32 %v7408, 7
  %v7410 = vsub.s32 0, %v7409
  %v7411 = vrot.slane %v5507, %v7410
  %v7412 = vlaneseq
  %v7413 = vshrl.u32 %v7412, 7
  %v7414 = vsub.s32 0, %v7413
  %v7415 = vrot.slane %v5490, %v7414
  %v7416 = vlaneseq
  %v7417 = vshrl.u32 %v7416, 7
  %v7418 = vsub.s32 0, %v7417
  %v7419 = vrot.slane %v5504, %v7418
  %v7420 = vlaneseq
  %v7421 = vshrl.u32 %v7420, 7
  %v7422 = vsub.s32 0, %v7421
  %v7423 = vrot.slane %v5506, %v7422
  %v7424 = vlaneseq
  %v7425 = vshrl.u32 %v7424, 7
  %v7426 = vsub.s32 0, %v7425
  %v7427 = vrot.slane %v5508, %v7426
  %v7428 = vlaneseq
  %v7429 = vshrl.u32 %v7428, 7
  %v7430 = vsub.s32 0, %v7429
  %v7431 = vrot.slane %v5532, %v7430
  %v7432 = vlaneseq
  %v7433 = vshrl.u32 %v7432, 7
  %v7434 = vsub.s32 0, %v7433
  %v7435 = vrot.slane %v5546, %v7434
  %v7436 = vlaneseq
  %v7437 = vshrl.u32 %v7436, 7
  %v7438 = vsub.s32 0, %v7437
  %v7439 = vrot.slane %v5554, %v7438
  %v7440 = vlaneseq
  %v7441 = vshrl.u32 %v7440, 7
  %v7442 = vsub.s32 0, %v7441
  %v7443 = vrot.slane %v5556, %v7442
  %v7444 = vlaneseq
  %v7445 = vshrl.u32 %v7444, 7
  %v7446 = vsub.s32 0, %v7445
  %v7447 = vrot.slane %v5539, %v7446
  %v7448 = vlaneseq
  %v7449 = vshrl.u32 %v7448, 7
  %v7450 = vsub.s32 0, %v7449
  %v7451 = vrot.slane %v5553, %v7450
  %v7452 = vlaneseq
  %v7453 = vshrl.u32 %v7452, 7
  %v7454 = vsub.s32 0, %v7453
  %v7455 = vrot.slane %v5555, %v7454
  %v7456 = vlaneseq
  %v7457 = vshrl.u32 %v7456, 7
  %v7458 = vsub.s32 0, %v7457
  %v7459 = vrot.slane %v5557, %v7458
  %v7460 = vlaneseq
  %v7461 = vshrl.u32 %v7460, 7
  %v7462 = vsub.s32 0, %v7461
  %v7463 = vrot.slane %v5581, %v7462
  %v7464 = vlaneseq
  %v7465 = vshrl.u32 %v7464, 7
  %v7466 = vsub.s32 0, %v7465
  %v7467 = vrot.slane %v5595, %v7466
  %v7468 = vlaneseq
  %v7469 = vshrl.u32 %v7468, 7
  %v7470 = vsub.s32 0, %v7469
  %v7471 = vrot.slane %v5603, %v7470
  %v7472 = vlaneseq
  %v7473 = vshrl.u32 %v7472, 7
  %v7474 = vsub.s32 0, %v7473
  %v7475 = vrot.slane %v5605, %v7474
  %v7476 = vlaneseq
  %v7477 = vshrl.u32 %v7476, 7
  %v7478 = vsub.s32 0, %v7477
  %v7479 = vrot.slane %v5588, %v7478
  %v7480 = vlaneseq
  %v7481 = vshrl.u32 %v7480, 7
  %v7482 = vsub.s32 0, %v7481
  %v7483 = vrot.slane %v5602, %v7482
  %v7484 = vlaneseq
  %v7485 = vshrl.u32 %v7484, 7
  %v7486 = vsub.s32 0, %v7485
  %v7487 = vrot.slane %v5604, %v7486
  %v7488 = vlaneseq
  %v7489 = vshrl.u32 %v7488, 7
  %v7490 = vsub.s32 0, %v7489
  %v7491 = vrot.slane %v5606, %v7490
  %v7492 = vlaneseq
  %v7493 = vshrl.u32 %v7492, 7
  %v7494 = vsub.s32 0, %v7493
  %v7495 = vrot.slane %v5630, %v7494
  %v7496 = vlaneseq
  %v7497 = vshrl.u32 %v7496, 7
  %v7498 = vsub.s32 0, %v7497
  %v7499 = vrot.slane %v5644, %v7498
  %v7500 = vlaneseq
  %v7501 = vshrl.u32 %v7500, 7
  %v7502 = vsub.s32 0, %v7501
  %v7503 = vrot.slane %v5652, %v7502
  %v7504 = vlaneseq
  %v7505 = vshrl.u32 %v7504, 7
  %v7506 = vsub.s32 0, %v7505
  %v7507 = vrot.slane %v5654, %v7506
  %v7508 = vlaneseq
  %v7509 = vshrl.u32 %v7508, 7
  %v7510 = vsub.s32 0, %v7509
  %v7511 = vrot.slane %v5637, %v7510
  %v7512 = vlaneseq
  %v7513 = vshrl.u32 %v7512, 7
  %v7514 = vsub.s32 0, %v7513
  %v7515 = vrot.slane %v5651, %v7514
  %v7516 = vlaneseq
  %v7517 = vshrl.u32 %v7516, 7
  %v7518 = vsub.s32 0, %v7517
  %v7519 = vrot.slane %v5653, %v7518
  %v7520 = vlaneseq
  %v7521 = vshrl.u32 %v7520, 7
  %v7522 = vsub.s32 0, %v7521
  %v7523 = vrot.slane %v5655, %v7522
  %v7524 = vlaneseq
  %v7525 = vshrl.u32 %v7524, 7
  %v7526 = vsub.s32 0, %v7525
  %v7527 = vrot.slane %v5679, %v7526
  %v7528 = vlaneseq
  %v7529 = vshrl.u32 %v7528, 7
  %v7530 = vsub.s32 0, %v7529
  %v7531 = vrot.slane %v5693, %v7530
  %v7532 = vlaneseq
  %v7533 = vshrl.u32 %v7532, 7
  %v7534 = vsub.s32 0, %v7533
  %v7535 = vrot.slane %v5701, %v7534
  %v7536 = vlaneseq
  %v7537 = vshrl.u32 %v7536, 7
  %v7538 = vsub.s32 0, %v7537
  %v7539 = vrot.slane %v5703, %v7538
  %v7540 = vlaneseq
  %v7541 = vshrl.u32 %v7540, 7
  %v7542 = vsub.s32 0, %v7541
  %v7543 = vrot.slane %v5686, %v7542
  %v7544 = vlaneseq
  %v7545 = vshrl.u32 %v7544, 7
  %v7546 = vsub.s32 0, %v7545
  %v7547 = vrot.slane %v5700, %v7546
  %v7548 = vlaneseq
  %v7549 = vshrl.u32 %v7548, 7
  %v7550 = vsub.s32 0, %v7549
  %v7551 = vrot.slane %v5702, %v7550
  %v7552 = vlaneseq
  %v7553 = vshrl.u32 %v7552, 7
  %v7554 = vsub.s32 0, %v7553
  %v7555 = vrot.slane %v5704, %v7554
  %v7556 = vlaneseq
  %v7557 = vshrl.u32 %v7556, 7
  %v7558 = vsub.s32 0, %v7557
  %v7559 = vrot.slane %v5728, %v7558
  %v7560 = vlaneseq
  %v7561 = vshrl.u32 %v7560, 7
  %v7562 = vsub.s32 0, %v7561
  %v7563 = vrot.slane %v5742, %v7562
  %v7564 = vlaneseq
  %v7565 = vshrl.u32 %v7564, 7
  %v7566 = vsub.s32 0, %v7565
  %v7567 = vrot.slane %v5750, %v7566
  %v7568 = vlaneseq
  %v7569 = vshrl.u32 %v7568, 7
  %v7570 = vsub.s32 0, %v7569
  %v7571 = vrot.slane %v5752, %v7570
  %v7572 = vlaneseq
  %v7573 = vshrl.u32 %v7572, 7
  %v7574 = vsub.s32 0, %v7573
  %v7575 = vrot.slane %v5735, %v7574
  %v7576 = vlaneseq
  %v7577 = vshrl.u32 %v7576, 7
  %v7578 = vsub.s32 0, %v7577
  %v7579 = vrot.slane %v5749, %v7578
  %v7580 = vlaneseq
  %v7581 = vshrl.u32 %v7580, 7
  %v7582 = vsub.s32 0, %v7581
  %v7583 = vrot.slane %v5751, %v7582
  %v7584 = vlaneseq
  %v7585 = vshrl.u32 %v7584, 7
  %v7586 = vsub.s32 0, %v7585
  %v7587 = vrot.slane %v5753, %v7586
  %v7588 = vlaneseq
  %v7589 = vshrl.u32 %v7588, 7
  %v7590 = vsub.s32 0, %v7589
  %v7591 = vrot.slane %v5777, %v7590
  %v7592 = vlaneseq
  %v7593 = vshrl.u32 %v7592, 7
  %v7594 = vsub.s32 0, %v7593
  %v7595 = vrot.slane %v5791, %v7594
  %v7596 = vlaneseq
  %v7597 = vshrl.u32 %v7596, 7
  %v7598 = vsub.s32 0, %v7597
  %v7599 = vrot.slane %v5799, %v7598
  %v7600 = vlaneseq
  %v7601 = vshrl.u32 %v7600, 7
  %v7602 = vsub.s32 0, %v7601
  %v7603 = vrot.slane %v5801, %v7602
  %v7604 = vlaneseq
  %v7605 = vshrl.u32 %v7604, 7
  %v7606 = vsub.s32 0, %v7605
  %v7607 = vrot.slane %v5784, %v7606
  %v7608 = vlaneseq
  %v7609 = vshrl.u32 %v7608, 7
  %v7610 = vsub.s32 0, %v7609
  %v7611 = vrot.slane %v5798, %v7610
  %v7612 = vlaneseq
  %v7613 = vshrl.u32 %v7612, 7
  %v7614 = vsub.s32 0, %v7613
  %v7615 = vrot.slane %v5800, %v7614
  %v7616 = vlaneseq
  %v7617 = vshrl.u32 %v7616, 7
  %v7618 = vsub.s32 0, %v7617
  %v7619 = vrot.slane %v5802, %v7618
  %v7620 = vlaneseq
  %v7621 = vshrl.u32 %v7620, 7
  %v7622 = vsub.s32 0, %v7621
  %v7623 = vrot.slane %v5826, %v7622
  %v7624 = vlaneseq
  %v7625 = vshrl.u32 %v7624, 7
  %v7626 = vsub.s32 0, %v7625
  %v7627 = vrot.slane %v5840, %v7626
  %v7628 = vlaneseq
  %v7629 = vshrl.u32 %v7628, 7
  %v7630 = vsub.s32 0, %v7629
  %v7631 = vrot.slane %v5848, %v7630
  %v7632 = vlaneseq
  %v7633 = vshrl.u32 %v7632, 7
  %v7634 = vsub.s32 0, %v7633
  %v7635 = vrot.slane %v5850, %v7634
  %v7636 = vlaneseq
  %v7637 = vshrl.u32 %v7636, 7
  %v7638 = vsub.s32 0, %v7637
  %v7639 = vrot.slane %v5833, %v7638
  %v7640 = vlaneseq
  %v7641 = vshrl.u32 %v7640, 7
  %v7642 = vsub.s32 0, %v7641
  %v7643 = vrot.slane %v5847, %v7642
  %v7644 = vlaneseq
  %v7645 = vshrl.u32 %v7644, 7
  %v7646 = vsub.s32 0, %v7645
  %v7647 = vrot.slane %v5849, %v7646
  %v7648 = vlaneseq
  %v7649 = vshrl.u32 %v7648, 7
  %v7650 = vsub.s32 0, %v7649
  %v7651 = vrot.slane %v5851, %v7650
  %v7652 = vlaneseq
  %v7653 = vshrl.u32 %v7652, 7
  %v7654 = vsub.s32 0, %v7653
  %v7655 = vrot.slane %v5875, %v7654
  %v7656 = vlaneseq
  %v7657 = vshrl.u32 %v7656, 7
  %v7658 = vsub.s32 0, %v7657
  %v7659 = vrot.slane %v5889, %v7658
  %v7660 = vlaneseq
  %v7661 = vshrl.u32 %v7660, 7
  %v7662 = vsub.s32 0, %v7661
  %v7663 = vrot.slane %v5897, %v7662
  %v7664 = vlaneseq
  %v7665 = vshrl.u32 %v7664, 7
  %v7666 = vsub.s32 0, %v7665
  %v7667 = vrot.slane %v5899, %v7666
  %v7668 = vlaneseq
  %v7669 = vshrl.u32 %v7668, 7
  %v7670 = vsub.s32 0, %v7669
  %v7671 = vrot.slane %v5882, %v7670
  %v7672 = vlaneseq
  %v7673 = vshrl.u32 %v7672, 7
  %v7674 = vsub.s32 0, %v7673
  %v7675 = vrot.slane %v5896, %v7674
  %v7676 = vlaneseq
  %v7677 = vshrl.u32 %v7676, 7
  %v7678 = vsub.s32 0, %v7677
  %v7679 = vrot.slane %v5898, %v7678
  %v7680 = vlaneseq
  %v7681 = vshrl.u32 %v7680, 7
  %v7682 = vsub.s32 0, %v7681
  %v7683 = vrot.slane %v5900, %v7682
  %v7684 = vlaneseq
  %v7685 = vshrl.u32 %v7684, 7
  %v7686 = vsub.s32 0, %v7685
  %v7687 = vrot.slane %v5924, %v7686
  %v7688 = vlaneseq
  %v7689 = vshrl.u32 %v7688, 7
  %v7690 = vsub.s32 0, %v7689
  %v7691 = vrot.slane %v5938, %v7690
  %v7692 = vlaneseq
  %v7693 = vshrl.u32 %v7692, 7
  %v7694 = vsub.s32 0, %v7693
  %v7695 = vrot.slane %v5946, %v7694
  %v7696 = vlaneseq
  %v7697 = vshrl.u32 %v7696, 7
  %v7698 = vsub.s32 0, %v7697
  %v7699 = vrot.slane %v5948, %v7698
  %v7700 = vlaneseq
  %v7701 = vshrl.u32 %v7700, 7
  %v7702 = vsub.s32 0, %v7701
  %v7703 = vrot.slane %v5931, %v7702
  %v7704 = vlaneseq
  %v7705 = vshrl.u32 %v7704, 7
  %v7706 = vsub.s32 0, %v7705
  %v7707 = vrot.slane %v5945, %v7706
  %v7708 = vlaneseq
  %v7709 = vshrl.u32 %v7708, 7
  %v7710 = vsub.s32 0, %v7709
  %v7711 = vrot.slane %v5947, %v7710
  %v7712 = vlaneseq
  %v7713 = vshrl.u32 %v7712, 7
  %v7714 = vsub.s32 0, %v7713
  %v7715 = vrot.slane %v5949, %v7714
  %v7716 = vlaneseq
  %v7717 = vshrl.u32 %v7716, 7
  %v7718 = vsub.s32 0, %v7717
  %v7719 = vrot.slane %v5973, %v7718
  %v7720 = vlaneseq
  %v7721 = vshrl.u32 %v7720, 7
  %v7722 = vsub.s32 0, %v7721
  %v7723 = vrot.slane %v5987, %v7722
  %v7724 = vlaneseq
  %v7725 = vshrl.u32 %v7724, 7
  %v7726 = vsub.s32 0, %v7725
  %v7727 = vrot.slane %v5995, %v7726
  %v7728 = vlaneseq
  %v7729 = vshrl.u32 %v7728, 7
  %v7730 = vsub.s32 0, %v7729
  %v7731 = vrot.slane %v5997, %v7730
  %v7732 = vlaneseq
  %v7733 = vshrl.u32 %v7732, 7
  %v7734 = vsub.s32 0, %v7733
  %v7735 = vrot.slane %v5980, %v7734
  %v7736 = vlaneseq
  %v7737 = vshrl.u32 %v7736, 7
  %v7738 = vsub.s32 0, %v7737
  %v7739 = vrot.slane %v5994, %v7738
  %v7740 = vlaneseq
  %v7741 = vshrl.u32 %v7740, 7
  %v7742 = vsub.s32 0, %v7741
  %v7743 = vrot.slane %v5996, %v7742
  %v7744 = vlaneseq
  %v7745 = vshrl.u32 %v7744, 7
  %v7746 = vsub.s32 0, %v7745
  %v7747 = vrot.slane %v5998, %v7746
  %v7748 = vlaneseq
  %v7749 = vshrl.u32 %v7748, 7
  %v7750 = vsub.s32 0, %v7749
  %v7751 = vrot.slane %v6022, %v7750
  %v7752 = vlaneseq
  %v7753 = vshrl.u32 %v7752, 7
  %v7754 = vsub.s32 0, %v7753
  %v7755 = vrot.slane %v6036, %v7754
  %v7756 = vlaneseq
  %v7757 = vshrl.u32 %v7756, 7
  %v7758 = vsub.s32 0, %v7757
  %v7759 = vrot.slane %v6044, %v7758
  %v7760 = vlaneseq
  %v7761 = vshrl.u32 %v7760, 7
  %v7762 = vsub.s32 0, %v7761
  %v7763 = vrot.slane %v6046, %v7762
  %v7764 = vlaneseq
  %v7765 = vshrl.u32 %v7764, 7
  %v7766 = vsub.s32 0, %v7765
  %v7767 = vrot.slane %v6029, %v7766
  %v7768 = vlaneseq
  %v7769 = vshrl.u32 %v7768, 7
  %v7770 = vsub.s32 0, %v7769
  %v7771 = vrot.slane %v6043, %v7770
  %v7772 = vlaneseq
  %v7773 = vshrl.u32 %v7772, 7
  %v7774 = vsub.s32 0, %v7773
  %v7775 = vrot.slane %v6045, %v7774
  %v7776 = vlaneseq
  %v7777 = vshrl.u32 %v7776, 7
  %v7778 = vsub.s32 0, %v7777
  %v7779 = vrot.slane %v6047, %v7778
  %v7780 = vlaneseq
  %v7781 = vshrl.u32 %v7780, 7
  %v7782 = vsub.s32 0, %v7781
  %v7783 = vrot.slane %v6071, %v7782
  %v7784 = vlaneseq
  %v7785 = vshrl.u32 %v7784, 7
  %v7786 = vsub.s32 0, %v7785
  %v7787 = vrot.slane %v6085, %v7786
  %v7788 = vlaneseq
  %v7789 = vshrl.u32 %v7788, 7
  %v7790 = vsub.s32 0, %v7789
  %v7791 = vrot.slane %v6093, %v7790
  %v7792 = vlaneseq
  %v7793 = vshrl.u32 %v7792, 7
  %v7794 = vsub.s32 0, %v7793
  %v7795 = vrot.slane %v6095, %v7794
  %v7796 = vlaneseq
  %v7797 = vshrl.u32 %v7796, 7
  %v7798 = vsub.s32 0, %v7797
  %v7799 = vrot.slane %v6078, %v7798
  %v7800 = vlaneseq
  %v7801 = vshrl.u32 %v7800, 7
  %v7802 = vsub.s32 0, %v7801
  %v7803 = vrot.slane %v6092, %v7802
  %v7804 = vlaneseq
  %v7805 = vshrl.u32 %v7804, 7
  %v7806 = vsub.s32 0, %v7805
  %v7807 = vrot.slane %v6094, %v7806
  %v7808 = vlaneseq
  %v7809 = vshrl.u32 %v7808, 7
  %v7810 = vsub.s32 0, %v7809
  %v7811 = vrot.slane %v6096, %v7810
  %v7812 = vlaneseq
  %v7813 = vshrl.u32 %v7812, 7
  %v7814 = vsub.s32 0, %v7813
  %v7815 = vrot.slane %v6120, %v7814
  %v7816 = vlaneseq
  %v7817 = vshrl.u32 %v7816, 7
  %v7818 = vsub.s32 0, %v7817
  %v7819 = vrot.slane %v6134, %v7818
  %v7820 = vlaneseq
  %v7821 = vshrl.u32 %v7820, 7
  %v7822 = vsub.s32 0, %v7821
  %v7823 = vrot.slane %v6142, %v7822
  %v7824 = vlaneseq
  %v7825 = vshrl.u32 %v7824, 7
  %v7826 = vsub.s32 0, %v7825
  %v7827 = vrot.slane %v6144, %v7826
  %v7828 = vlaneseq
  %v7829 = vshrl.u32 %v7828, 7
  %v7830 = vsub.s32 0, %v7829
  %v7831 = vrot.slane %v6127, %v7830
  %v7832 = vlaneseq
  %v7833 = vshrl.u32 %v7832, 7
  %v7834 = vsub.s32 0, %v7833
  %v7835 = vrot.slane %v6141, %v7834
  %v7836 = vlaneseq
  %v7837 = vshrl.u32 %v7836, 7
  %v7838 = vsub.s32 0, %v7837
  %v7839 = vrot.slane %v6143, %v7838
  %v7840 = vlaneseq
  %v7841 = vshrl.u32 %v7840, 7
  %v7842 = vsub.s32 0, %v7841
  %v7843 = vrot.slane %v6145, %v7842
  %v7844 = vlaneseq
  %v7845 = vshrl.u32 %v7844, 7
  %v7846 = vsub.s32 0, %v7845
  %v7847 = vrot.slane %v6169, %v7846
  %v7848 = vlaneseq
  %v7849 = vshrl.u32 %v7848, 7
  %v7850 = vsub.s32 0, %v7849
  %v7851 = vrot.slane %v6183, %v7850
  %v7852 = vlaneseq
  %v7853 = vshrl.u32 %v7852, 7
  %v7854 = vsub.s32 0, %v7853
  %v7855 = vrot.slane %v6191, %v7854
  %v7856 = vlaneseq
  %v7857 = vshrl.u32 %v7856, 7
  %v7858 = vsub.s32 0, %v7857
  %v7859 = vrot.slane %v6193, %v7858
  %v7860 = vlaneseq
  %v7861 = vshrl.u32 %v7860, 7
  %v7862 = vsub.s32 0, %v7861
  %v7863 = vrot.slane %v6176, %v7862
  %v7864 = vlaneseq
  %v7865 = vshrl.u32 %v7864, 7
  %v7866 = vsub.s32 0, %v7865
  %v7867 = vrot.slane %v6190, %v7866
  %v7868 = vlaneseq
  %v7869 = vshrl.u32 %v7868, 7
  %v7870 = vsub.s32 0, %v7869
  %v7871 = vrot.slane %v6192, %v7870
  %v7872 = vlaneseq
  %v7873 = vshrl.u32 %v7872, 7
  %v7874 = vsub.s32 0, %v7873
  %v7875 = vrot.slane %v6194, %v7874
  %v7876 = vlaneseq
  %v7877 = vshrl.u32 %v7876, 7
  %v7878 = vsub.s32 0, %v7877
  %v7879 = vrot.slane %v6218, %v7878
  %v7880 = vlaneseq
  %v7881 = vshrl.u32 %v7880, 7
  %v7882 = vsub.s32 0, %v7881
  %v7883 = vrot.slane %v6232, %v7882
  %v7884 = vlaneseq
  %v7885 = vshrl.u32 %v7884, 7
  %v7886 = vsub.s32 0, %v7885
  %v7887 = vrot.slane %v6240, %v7886
  %v7888 = vlaneseq
  %v7889 = vshrl.u32 %v7888, 7
  %v7890 = vsub.s32 0, %v7889
  %v7891 = vrot.slane %v6242, %v7890
  %v7892 = vlaneseq
  %v7893 = vshrl.u32 %v7892, 7
  %v7894 = vsub.s32 0, %v7893
  %v7895 = vrot.slane %v6225, %v7894
  %v7896 = vlaneseq
  %v7897 = vshrl.u32 %v7896, 7
  %v7898 = vsub.s32 0, %v7897
  %v7899 = vrot.slane %v6239, %v7898
  %v7900 = vlaneseq
  %v7901 = vshrl.u32 %v7900, 7
  %v7902 = vsub.s32 0, %v7901
  %v7903 = vrot.slane %v6241, %v7902
  %v7904 = vlaneseq
  %v7905 = vshrl.u32 %v7904, 7
  %v7906 = vsub.s32 0, %v7905
  %v7907 = vrot.slane %v6243, %v7906
  %7908 = vrot.lane.b32.xlu0 %v7399, 125
  %v7909 = vpop.permute.xlu0 %7908
  %7910 = vrot.lane.b32.xlu0 %v7403, 125
  %v7911 = vpop.permute.xlu0 %7910
  %7912 = vrot.lane.b32.xlu0 %v7407, 125
  %v7913 = vpop.permute.xlu0 %7912
  %7914 = vrot.lane.b32.xlu0 %v7411, 125
  %v7915 = vpop.permute.xlu0 %7914
  %7916 = vrot.lane.b32.xlu0 %v7415, 125
  %v7917 = vpop.permute.xlu0 %7916
  %7918 = vrot.lane.b32.xlu0 %v7419, 125
  %v7919 = vpop.permute.xlu0 %7918
  %7920 = vrot.lane.b32.xlu0 %v7423, 125
  %v7921 = vpop.permute.xlu0 %7920
  %7922 = vrot.lane.b32.xlu0 %v7427, 125
  %v7923 = vpop.permute.xlu0 %7922
  %7924 = vrot.lane.b32.xlu0 %v7431, 125
  %v7925 = vpop.permute.xlu0 %7924
  %7926 = vrot.lane.b32.xlu0 %v7435, 125
  %v7927 = vpop.permute.xlu0 %7926
  %7928 = vrot.lane.b32.xlu0 %v7439, 125
  %v7929 = vpop.permute.xlu0 %7928
  %7930 = vrot.lane.b32.xlu0 %v7443, 125
  %v7931 = vpop.permute.xlu0 %7930
  %7932 = vrot.lane.b32.xlu0 %v7447, 125
  %v7933 = vpop.permute.xlu0 %7932
  %7934 = vrot.lane.b32.xlu0 %v7451, 125
  %v7935 = vpop.permute.xlu0 %7934
  %7936 = vrot.lane.b32.xlu0 %v7455, 125
  %v7937 = vpop.permute.xlu0 %7936
  %7938 = vrot.lane.b32.xlu0 %v7459, 125
  %v7939 = vpop.permute.xlu0 %7938
  %7940 = vrot.lane.b32.xlu0 %v7463, 125
  %v7941 = vpop.permute.xlu0 %7940
  %7942 = vrot.lane.b32.xlu0 %v7467, 125
  %v7943 = vpop.permute.xlu0 %7942
  %7944 = vrot.lane.b32.xlu0 %v7471, 125
  %v7945 = vpop.permute.xlu0 %7944
  %7946 = vrot.lane.b32.xlu0 %v7475, 125
  %v7947 = vpop.permute.xlu0 %7946
  %7948 = vrot.lane.b32.xlu0 %v7479, 125
  %v7949 = vpop.permute.xlu0 %7948
  %7950 = vrot.lane.b32.xlu0 %v7483, 125
  %v7951 = vpop.permute.xlu0 %7950
  %7952 = vrot.lane.b32.xlu0 %v7487, 125
  %v7953 = vpop.permute.xlu0 %7952
  %7954 = vrot.lane.b32.xlu0 %v7491, 125
  %v7955 = vpop.permute.xlu0 %7954
  %7956 = vrot.lane.b32.xlu0 %v7495, 125
  %v7957 = vpop.permute.xlu0 %7956
  %7958 = vrot.lane.b32.xlu0 %v7499, 125
  %v7959 = vpop.permute.xlu0 %7958
  %7960 = vrot.lane.b32.xlu0 %v7503, 125
  %v7961 = vpop.permute.xlu0 %7960
  %7962 = vrot.lane.b32.xlu0 %v7507, 125
  %v7963 = vpop.permute.xlu0 %7962
  %7964 = vrot.lane.b32.xlu0 %v7511, 125
  %v7965 = vpop.permute.xlu0 %7964
  %7966 = vrot.lane.b32.xlu0 %v7515, 125
  %v7967 = vpop.permute.xlu0 %7966
  %7968 = vrot.lane.b32.xlu0 %v7519, 125
  %v7969 = vpop.permute.xlu0 %7968
  %7970 = vrot.lane.b32.xlu0 %v7523, 125
  %v7971 = vpop.permute.xlu0 %7970
  %7972 = vrot.lane.b32.xlu0 %v7527, 125
  %v7973 = vpop.permute.xlu0 %7972
  %7974 = vrot.lane.b32.xlu0 %v7531, 125
  %v7975 = vpop.permute.xlu0 %7974
  %7976 = vrot.lane.b32.xlu0 %v7535, 125
  %v7977 = vpop.permute.xlu0 %7976
  %7978 = vrot.lane.b32.xlu0 %v7539, 125
  %v7979 = vpop.permute.xlu0 %7978
  %7980 = vrot.lane.b32.xlu0 %v7543, 125
  %v7981 = vpop.permute.xlu0 %7980
  %7982 = vrot.lane.b32.xlu0 %v7547, 125
  %v7983 = vpop.permute.xlu0 %7982
  %7984 = vrot.lane.b32.xlu0 %v7551, 125
  %v7985 = vpop.permute.xlu0 %7984
  %7986 = vrot.lane.b32.xlu0 %v7555, 125
  %v7987 = vpop.permute.xlu0 %7986
  %7988 = vrot.lane.b32.xlu0 %v7559, 125
  %v7989 = vpop.permute.xlu0 %7988
  %7990 = vrot.lane.b32.xlu0 %v7563, 125
  %v7991 = vpop.permute.xlu0 %7990
  %7992 = vrot.lane.b32.xlu0 %v7567, 125
  %v7993 = vpop.permute.xlu0 %7992
  %7994 = vrot.lane.b32.xlu0 %v7571, 125
  %v7995 = vpop.permute.xlu0 %7994
  %7996 = vrot.lane.b32.xlu0 %v7575, 125
  %v7997 = vpop.permute.xlu0 %7996
  %7998 = vrot.lane.b32.xlu0 %v7579, 125
  %v7999 = vpop.permute.xlu0 %7998
  %8000 = vrot.lane.b32.xlu0 %v7583, 125
  %v8001 = vpop.permute.xlu0 %8000
  %8002 = vrot.lane.b32.xlu0 %v7587, 125
  %v8003 = vpop.permute.xlu0 %8002
  %8004 = vrot.lane.b32.xlu0 %v7591, 125
  %v8005 = vpop.permute.xlu0 %8004
  %8006 = vrot.lane.b32.xlu0 %v7595, 125
  %v8007 = vpop.permute.xlu0 %8006
  %8008 = vrot.lane.b32.xlu0 %v7599, 125
  %v8009 = vpop.permute.xlu0 %8008
  %8010 = vrot.lane.b32.xlu0 %v7603, 125
  %v8011 = vpop.permute.xlu0 %8010
  %8012 = vrot.lane.b32.xlu0 %v7607, 125
  %v8013 = vpop.permute.xlu0 %8012
  %8014 = vrot.lane.b32.xlu0 %v7611, 125
  %v8015 = vpop.permute.xlu0 %8014
  %8016 = vrot.lane.b32.xlu0 %v7615, 125
  %v8017 = vpop.permute.xlu0 %8016
  %8018 = vrot.lane.b32.xlu0 %v7619, 125
  %v8019 = vpop.permute.xlu0 %8018
  %8020 = vrot.lane.b32.xlu0 %v7623, 125
  %v8021 = vpop.permute.xlu0 %8020
  %8022 = vrot.lane.b32.xlu0 %v7627, 125
  %v8023 = vpop.permute.xlu0 %8022
  %8024 = vrot.lane.b32.xlu0 %v7631, 125
  %v8025 = vpop.permute.xlu0 %8024
  %8026 = vrot.lane.b32.xlu0 %v7635, 125
  %v8027 = vpop.permute.xlu0 %8026
  %8028 = vrot.lane.b32.xlu0 %v7639, 125
  %v8029 = vpop.permute.xlu0 %8028
  %8030 = vrot.lane.b32.xlu0 %v7643, 125
  %v8031 = vpop.permute.xlu0 %8030
  %8032 = vrot.lane.b32.xlu0 %v7647, 125
  %v8033 = vpop.permute.xlu0 %8032
  %8034 = vrot.lane.b32.xlu0 %v7651, 125
  %v8035 = vpop.permute.xlu0 %8034
  %8036 = vrot.lane.b32.xlu0 %v7655, 125
  %v8037 = vpop.permute.xlu0 %8036
  %8038 = vrot.lane.b32.xlu0 %v7659, 125
  %v8039 = vpop.permute.xlu0 %8038
  %8040 = vrot.lane.b32.xlu0 %v7663, 125
  %v8041 = vpop.permute.xlu0 %8040
  %8042 = vrot.lane.b32.xlu0 %v7667, 125
  %v8043 = vpop.permute.xlu0 %8042
  %8044 = vrot.lane.b32.xlu0 %v7671, 125
  %v8045 = vpop.permute.xlu0 %8044
  %8046 = vrot.lane.b32.xlu0 %v7675, 125
  %v8047 = vpop.permute.xlu0 %8046
  %8048 = vrot.lane.b32.xlu0 %v7679, 125
  %v8049 = vpop.permute.xlu0 %8048
  %8050 = vrot.lane.b32.xlu0 %v7683, 125
  %v8051 = vpop.permute.xlu0 %8050
  %8052 = vrot.lane.b32.xlu0 %v7687, 125
  %v8053 = vpop.permute.xlu0 %8052
  %8054 = vrot.lane.b32.xlu0 %v7691, 125
  %v8055 = vpop.permute.xlu0 %8054
  %8056 = vrot.lane.b32.xlu0 %v7695, 125
  %v8057 = vpop.permute.xlu0 %8056
  %8058 = vrot.lane.b32.xlu0 %v7699, 125
  %v8059 = vpop.permute.xlu0 %8058
  %8060 = vrot.lane.b32.xlu0 %v7703, 125
  %v8061 = vpop.permute.xlu0 %8060
  %8062 = vrot.lane.b32.xlu0 %v7707, 125
  %v8063 = vpop.permute.xlu0 %8062
  %8064 = vrot.lane.b32.xlu0 %v7711, 125
  %v8065 = vpop.permute.xlu0 %8064
  %8066 = vrot.lane.b32.xlu0 %v7715, 125
  %v8067 = vpop.permute.xlu0 %8066
  %8068 = vrot.lane.b32.xlu0 %v7719, 125
  %v8069 = vpop.permute.xlu0 %8068
  %8070 = vrot.lane.b32.xlu0 %v7723, 125
  %v8071 = vpop.permute.xlu0 %8070
  %8072 = vrot.lane.b32.xlu0 %v7727, 125
  %v8073 = vpop.permute.xlu0 %8072
  %8074 = vrot.lane.b32.xlu0 %v7731, 125
  %v8075 = vpop.permute.xlu0 %8074
  %8076 = vrot.lane.b32.xlu0 %v7735, 125
  %v8077 = vpop.permute.xlu0 %8076
  %8078 = vrot.lane.b32.xlu0 %v7739, 125
  %v8079 = vpop.permute.xlu0 %8078
  %8080 = vrot.lane.b32.xlu0 %v7743, 125
  %v8081 = vpop.permute.xlu0 %8080
  %8082 = vrot.lane.b32.xlu0 %v7747, 125
  %v8083 = vpop.permute.xlu0 %8082
  %8084 = vrot.lane.b32.xlu0 %v7751, 125
  %v8085 = vpop.permute.xlu0 %8084
  %8086 = vrot.lane.b32.xlu0 %v7755, 125
  %v8087 = vpop.permute.xlu0 %8086
  %8088 = vrot.lane.b32.xlu0 %v7759, 125
  %v8089 = vpop.permute.xlu0 %8088
  %8090 = vrot.lane.b32.xlu0 %v7763, 125
  %v8091 = vpop.permute.xlu0 %8090
  %8092 = vrot.lane.b32.xlu0 %v7767, 125
  %v8093 = vpop.permute.xlu0 %8092
  %8094 = vrot.lane.b32.xlu0 %v7771, 125
  %v8095 = vpop.permute.xlu0 %8094
  %8096 = vrot.lane.b32.xlu0 %v7775, 125
  %v8097 = vpop.permute.xlu0 %8096
  %8098 = vrot.lane.b32.xlu0 %v7779, 125
  %v8099 = vpop.permute.xlu0 %8098
  %8100 = vrot.lane.b32.xlu0 %v7783, 125
  %v8101 = vpop.permute.xlu0 %8100
  %8102 = vrot.lane.b32.xlu0 %v7787, 125
  %v8103 = vpop.permute.xlu0 %8102
  %8104 = vrot.lane.b32.xlu0 %v7791, 125
  %v8105 = vpop.permute.xlu0 %8104
  %8106 = vrot.lane.b32.xlu0 %v7795, 125
  %v8107 = vpop.permute.xlu0 %8106
  %8108 = vrot.lane.b32.xlu0 %v7799, 125
  %v8109 = vpop.permute.xlu0 %8108
  %8110 = vrot.lane.b32.xlu0 %v7803, 125
  %v8111 = vpop.permute.xlu0 %8110
  %8112 = vrot.lane.b32.xlu0 %v7807, 125
  %v8113 = vpop.permute.xlu0 %8112
  %8114 = vrot.lane.b32.xlu0 %v7811, 125
  %v8115 = vpop.permute.xlu0 %8114
  %8116 = vrot.lane.b32.xlu0 %v7815, 125
  %v8117 = vpop.permute.xlu0 %8116
  %8118 = vrot.lane.b32.xlu0 %v7819, 125
  %v8119 = vpop.permute.xlu0 %8118
  %8120 = vrot.lane.b32.xlu0 %v7823, 125
  %v8121 = vpop.permute.xlu0 %8120
  %8122 = vrot.lane.b32.xlu0 %v7827, 125
  %v8123 = vpop.permute.xlu0 %8122
  %8124 = vrot.lane.b32.xlu0 %v7831, 125
  %v8125 = vpop.permute.xlu0 %8124
  %8126 = vrot.lane.b32.xlu0 %v7835, 125
  %v8127 = vpop.permute.xlu0 %8126
  %8128 = vrot.lane.b32.xlu0 %v7839, 125
  %v8129 = vpop.permute.xlu0 %8128
  %8130 = vrot.lane.b32.xlu0 %v7843, 125
  %v8131 = vpop.permute.xlu0 %8130
  %8132 = vrot.lane.b32.xlu0 %v7847, 125
  %v8133 = vpop.permute.xlu0 %8132
  %8134 = vrot.lane.b32.xlu0 %v7851, 125
  %v8135 = vpop.permute.xlu0 %8134
  %8136 = vrot.lane.b32.xlu0 %v7855, 125
  %v8137 = vpop.permute.xlu0 %8136
  %8138 = vrot.lane.b32.xlu0 %v7859, 125
  %v8139 = vpop.permute.xlu0 %8138
  %8140 = vrot.lane.b32.xlu0 %v7863, 125
  %v8141 = vpop.permute.xlu0 %8140
  %8142 = vrot.lane.b32.xlu0 %v7867, 125
  %v8143 = vpop.permute.xlu0 %8142
  %8144 = vrot.lane.b32.xlu0 %v7871, 125
  %v8145 = vpop.permute.xlu0 %8144
  %8146 = vrot.lane.b32.xlu0 %v7875, 125
  %v8147 = vpop.permute.xlu0 %8146
  %8148 = vrot.lane.b32.xlu0 %v7879, 125
  %v8149 = vpop.permute.xlu0 %8148
  %8150 = vrot.lane.b32.xlu0 %v7883, 125
  %v8151 = vpop.permute.xlu0 %8150
  %8152 = vrot.lane.b32.xlu0 %v7887, 125
  %v8153 = vpop.permute.xlu0 %8152
  %8154 = vrot.lane.b32.xlu0 %v7891, 125
  %v8155 = vpop.permute.xlu0 %8154
  %8156 = vrot.lane.b32.xlu0 %v7895, 125
  %v8157 = vpop.permute.xlu0 %8156
  %8158 = vrot.lane.b32.xlu0 %v7899, 125
  %v8159 = vpop.permute.xlu0 %8158
  %8160 = vrot.lane.b32.xlu0 %v7903, 125
  %v8161 = vpop.permute.xlu0 %8160
  %8162 = vrot.lane.b32.xlu0 %v7907, 125
  %v8163 = vpop.permute.xlu0 %8162
  %v8292 = vsel %vm188, %v5483, %v7909
  %v8293 = vsel %vm188, %v5497, %v7911
  %v8294 = vsel %vm188, %v5505, %v7913
  %v8295 = vsel %vm188, %v5507, %v7915
  %v8296 = vsel %vm188, %v5490, %v7917
  %v8297 = vsel %vm188, %v5504, %v7919
  %v8298 = vsel %vm188, %v5506, %v7921
  %v8299 = vsel %vm188, %v5508, %v7923
  %v8300 = vsel %vm188, %v5532, %v7925
  %v8301 = vsel %vm188, %v5546, %v7927
  %v8302 = vsel %vm188, %v5554, %v7929
  %v8303 = vsel %vm188, %v5556, %v7931
  %v8304 = vsel %vm188, %v5539, %v7933
  %v8305 = vsel %vm188, %v5553, %v7935
  %v8306 = vsel %vm188, %v5555, %v7937
  %v8307 = vsel %vm188, %v5557, %v7939
  %v8308 = vsel %vm188, %v5581, %v7941
  %v8309 = vsel %vm188, %v5595, %v7943
  %v8310 = vsel %vm188, %v5603, %v7945
  %v8311 = vsel %vm188, %v5605, %v7947
  %v8312 = vsel %vm188, %v5588, %v7949
  %v8313 = vsel %vm188, %v5602, %v7951
  %v8314 = vsel %vm188, %v5604, %v7953
  %v8315 = vsel %vm188, %v5606, %v7955
  %v8316 = vsel %vm188, %v5630, %v7957
  %v8317 = vsel %vm188, %v5644, %v7959
  %v8318 = vsel %vm188, %v5652, %v7961
  %v8319 = vsel %vm188, %v5654, %v7963
  %v8320 = vsel %vm188, %v5637, %v7965
  %v8321 = vsel %vm188, %v5651, %v7967
  %v8322 = vsel %vm188, %v5653, %v7969
  %v8323 = vsel %vm188, %v5655, %v7971
  %v8324 = vsel %vm188, %v5679, %v7973
  %v8325 = vsel %vm188, %v5693, %v7975
  %v8326 = vsel %vm188, %v5701, %v7977
  %v8327 = vsel %vm188, %v5703, %v7979
  %v8328 = vsel %vm188, %v5686, %v7981
  %v8329 = vsel %vm188, %v5700, %v7983
  %v8330 = vsel %vm188, %v5702, %v7985
  %v8331 = vsel %vm188, %v5704, %v7987
  %v8332 = vsel %vm188, %v5728, %v7989
  %v8333 = vsel %vm188, %v5742, %v7991
  %v8334 = vsel %vm188, %v5750, %v7993
  %v8335 = vsel %vm188, %v5752, %v7995
  %v8336 = vsel %vm188, %v5735, %v7997
  %v8337 = vsel %vm188, %v5749, %v7999
  %v8338 = vsel %vm188, %v5751, %v8001
  %v8339 = vsel %vm188, %v5753, %v8003
  %v8340 = vsel %vm188, %v5777, %v8005
  %v8341 = vsel %vm188, %v5791, %v8007
  %v8342 = vsel %vm188, %v5799, %v8009
  %v8343 = vsel %vm188, %v5801, %v8011
  %v8344 = vsel %vm188, %v5784, %v8013
  %v8345 = vsel %vm188, %v5798, %v8015
  %v8346 = vsel %vm188, %v5800, %v8017
  %v8347 = vsel %vm188, %v5802, %v8019
  %v8348 = vsel %vm188, %v5826, %v8021
  %v8349 = vsel %vm188, %v5840, %v8023
  %v8350 = vsel %vm188, %v5848, %v8025
  %v8351 = vsel %vm188, %v5850, %v8027
  %v8352 = vsel %vm188, %v5833, %v8029
  %v8353 = vsel %vm188, %v5847, %v8031
  %v8354 = vsel %vm188, %v5849, %v8033
  %v8355 = vsel %vm188, %v5851, %v8035
  %v8356 = vsel %vm188, %v5875, %v8037
  %v8357 = vsel %vm188, %v5889, %v8039
  %v8358 = vsel %vm188, %v5897, %v8041
  %v8359 = vsel %vm188, %v5899, %v8043
  %v8360 = vsel %vm188, %v5882, %v8045
  %v8361 = vsel %vm188, %v5896, %v8047
  %v8362 = vsel %vm188, %v5898, %v8049
  %v8363 = vsel %vm188, %v5900, %v8051
  %v8364 = vsel %vm188, %v5924, %v8053
  %v8365 = vsel %vm188, %v5938, %v8055
  %v8366 = vsel %vm188, %v5946, %v8057
  %v8367 = vsel %vm188, %v5948, %v8059
  %v8368 = vsel %vm188, %v5931, %v8061
  %v8369 = vsel %vm188, %v5945, %v8063
  %v8370 = vsel %vm188, %v5947, %v8065
  %v8371 = vsel %vm188, %v5949, %v8067
  %v8372 = vsel %vm188, %v5973, %v8069
  %v8373 = vsel %vm188, %v5987, %v8071
  %v8374 = vsel %vm188, %v5995, %v8073
  %v8375 = vsel %vm188, %v5997, %v8075
  %v8376 = vsel %vm188, %v5980, %v8077
  %v8377 = vsel %vm188, %v5994, %v8079
  %v8378 = vsel %vm188, %v5996, %v8081
  %v8379 = vsel %vm188, %v5998, %v8083
  %v8380 = vsel %vm188, %v6022, %v8085
  %v8381 = vsel %vm188, %v6036, %v8087
  %v8382 = vsel %vm188, %v6044, %v8089
  %v8383 = vsel %vm188, %v6046, %v8091
  %v8384 = vsel %vm188, %v6029, %v8093
  %v8385 = vsel %vm188, %v6043, %v8095
  %v8386 = vsel %vm188, %v6045, %v8097
  %v8387 = vsel %vm188, %v6047, %v8099
  %v8388 = vsel %vm188, %v6071, %v8101
  %v8389 = vsel %vm188, %v6085, %v8103
  %v8390 = vsel %vm188, %v6093, %v8105
  %v8391 = vsel %vm188, %v6095, %v8107
  %v8392 = vsel %vm188, %v6078, %v8109
  %v8393 = vsel %vm188, %v6092, %v8111
  %v8394 = vsel %vm188, %v6094, %v8113
  %v8395 = vsel %vm188, %v6096, %v8115
  %v8396 = vsel %vm188, %v6120, %v8117
  %v8397 = vsel %vm188, %v6134, %v8119
  %v8398 = vsel %vm188, %v6142, %v8121
  %v8399 = vsel %vm188, %v6144, %v8123
  %v8400 = vsel %vm188, %v6127, %v8125
  %v8401 = vsel %vm188, %v6141, %v8127
  %v8402 = vsel %vm188, %v6143, %v8129
  %v8403 = vsel %vm188, %v6145, %v8131
  %v8404 = vsel %vm188, %v6169, %v8133
  %v8405 = vsel %vm188, %v6183, %v8135
  %v8406 = vsel %vm188, %v6191, %v8137
  %v8407 = vsel %vm188, %v6193, %v8139
  %v8408 = vsel %vm188, %v6176, %v8141
  %v8409 = vsel %vm188, %v6190, %v8143
  %v8410 = vsel %vm188, %v6192, %v8145
  %v8411 = vsel %vm188, %v6194, %v8147
  %v8412 = vsel %vm188, %v6218, %v8149
  %v8413 = vsel %vm188, %v6232, %v8151
  %v8414 = vsel %vm188, %v6240, %v8153
  %v8415 = vsel %vm188, %v6242, %v8155
  %v8416 = vsel %vm188, %v6225, %v8157
  %v8417 = vsel %vm188, %v6239, %v8159
  %v8418 = vsel %vm188, %v6241, %v8161
  %v8419 = vsel %vm188, %v6243, %v8163
  %v8420 = vld [vmem:[%s3] sm:$0x7]
  %v8421 = vld [vmem:[%s3 + $0x4] sm:$0x7]
  %v8550 = vcombine.low %v7268, %v7269
  %v8551 = vcombine.low %v7270, %v7271
  %v8553 = vunpack.c.l.s4 1983009808
  %v8554 = vunpack.c.0.s8 %v8553
  %v8555 = vlaneseq
  %v8556 = vshrl.u32 %v8555, 7
  %v8557 = vsub.s32 %v8554, %v8556
  %v8558 = vrot.slane %v8550, %v8557
  %v8560 = vunpack.c.l.s4 1983009808
  %v8561 = vunpack.c.0.s8 %v8560
  %v8562 = vlaneseq
  %v8563 = vshrl.u32 %v8562, 7
  %v8564 = vsub.s32 %v8561, %v8563
  %v8565 = vrot.slane %v8551, %v8564
  %v8566 = vcombine.low %v8558, %v8565
  %v8567 = vcombine.low %v7272, %v7273
  %v8568 = vcombine.low %v7274, %v7275
  %v8570 = vunpack.c.l.s4 1983009808
  %v8571 = vunpack.c.0.s8 %v8570
  %v8572 = vlaneseq
  %v8573 = vshrl.u32 %v8572, 7
  %v8574 = vsub.s32 %v8571, %v8573
  %v8575 = vrot.slane %v8567, %v8574
  %v8577 = vunpack.c.l.s4 1983009808
  %v8578 = vunpack.c.0.s8 %v8577
  %v8579 = vlaneseq
  %v8580 = vshrl.u32 %v8579, 7
  %v8581 = vsub.s32 %v8578, %v8580
  %v8582 = vrot.slane %v8568, %v8581
  %v8583 = vcombine.low %v8575, %v8582
  %v8584 = vcombine.low %v8292, %v8293
  %v8585 = vcombine.low %v8294, %v8295
  %v8587 = vunpack.c.l.s4 1983009808
  %v8588 = vunpack.c.0.s8 %v8587
  %v8589 = vlaneseq
  %v8590 = vshrl.u32 %v8589, 7
  %v8591 = vsub.s32 %v8588, %v8590
  %v8592 = vrot.slane %v8584, %v8591
  %v8594 = vunpack.c.l.s4 1983009808
  %v8595 = vunpack.c.0.s8 %v8594
  %v8596 = vlaneseq
  %v8597 = vshrl.u32 %v8596, 7
  %v8598 = vsub.s32 %v8595, %v8597
  %v8599 = vrot.slane %v8585, %v8598
  %v8600 = vcombine.low %v8592, %v8599
  %v8601 = vcombine.low %v8296, %v8297
  %v8602 = vcombine.low %v8298, %v8299
  %v8604 = vunpack.c.l.s4 1983009808
  %v8605 = vunpack.c.0.s8 %v8604
  %v8606 = vlaneseq
  %v8607 = vshrl.u32 %v8606, 7
  %v8608 = vsub.s32 %v8605, %v8607
  %v8609 = vrot.slane %v8601, %v8608
  %v8611 = vunpack.c.l.s4 1983009808
  %v8612 = vunpack.c.0.s8 %v8611
  %v8613 = vlaneseq
  %v8614 = vshrl.u32 %v8613, 7
  %v8615 = vsub.s32 %v8612, %v8614
  %v8616 = vrot.slane %v8602, %v8615
  %v8617 = vcombine.low %v8609, %v8616
  %v8618 = vcombine.low %v7276, %v7277
  %v8619 = vcombine.low %v7278, %v7279
  %v8621 = vunpack.c.l.s4 1983009808
  %v8622 = vunpack.c.0.s8 %v8621
  %v8623 = vlaneseq
  %v8624 = vshrl.u32 %v8623, 7
  %v8625 = vsub.s32 %v8622, %v8624
  %v8626 = vrot.slane %v8618, %v8625
  %v8628 = vunpack.c.l.s4 1983009808
  %v8629 = vunpack.c.0.s8 %v8628
  %v8630 = vlaneseq
  %v8631 = vshrl.u32 %v8630, 7
  %v8632 = vsub.s32 %v8629, %v8631
  %v8633 = vrot.slane %v8619, %v8632
  %v8634 = vcombine.low %v8626, %v8633
  %v8635 = vcombine.low %v7280, %v7281
  %v8636 = vcombine.low %v7282, %v7283
  %v8638 = vunpack.c.l.s4 1983009808
  %v8639 = vunpack.c.0.s8 %v8638
  %v8640 = vlaneseq
  %v8641 = vshrl.u32 %v8640, 7
  %v8642 = vsub.s32 %v8639, %v8641
  %v8643 = vrot.slane %v8635, %v8642
  %v8645 = vunpack.c.l.s4 1983009808
  %v8646 = vunpack.c.0.s8 %v8645
  %v8647 = vlaneseq
  %v8648 = vshrl.u32 %v8647, 7
  %v8649 = vsub.s32 %v8646, %v8648
  %v8650 = vrot.slane %v8636, %v8649
  %v8651 = vcombine.low %v8643, %v8650
  %v8652 = vcombine.low %v8300, %v8301
  %v8653 = vcombine.low %v8302, %v8303
  %v8655 = vunpack.c.l.s4 1983009808
  %v8656 = vunpack.c.0.s8 %v8655
  %v8657 = vlaneseq
  %v8658 = vshrl.u32 %v8657, 7
  %v8659 = vsub.s32 %v8656, %v8658
  %v8660 = vrot.slane %v8652, %v8659
  %v8662 = vunpack.c.l.s4 1983009808
  %v8663 = vunpack.c.0.s8 %v8662
  %v8664 = vlaneseq
  %v8665 = vshrl.u32 %v8664, 7
  %v8666 = vsub.s32 %v8663, %v8665
  %v8667 = vrot.slane %v8653, %v8666
  %v8668 = vcombine.low %v8660, %v8667
  %v8669 = vcombine.low %v8304, %v8305
  %v8670 = vcombine.low %v8306, %v8307
  %v8672 = vunpack.c.l.s4 1983009808
  %v8673 = vunpack.c.0.s8 %v8672
  %v8674 = vlaneseq
  %v8675 = vshrl.u32 %v8674, 7
  %v8676 = vsub.s32 %v8673, %v8675
  %v8677 = vrot.slane %v8669, %v8676
  %v8679 = vunpack.c.l.s4 1983009808
  %v8680 = vunpack.c.0.s8 %v8679
  %v8681 = vlaneseq
  %v8682 = vshrl.u32 %v8681, 7
  %v8683 = vsub.s32 %v8680, %v8682
  %v8684 = vrot.slane %v8670, %v8683
  %v8685 = vcombine.low %v8677, %v8684
  %v8686 = vcombine.low %v7284, %v7285
  %v8687 = vcombine.low %v7286, %v7287
  %v8689 = vunpack.c.l.s4 1983009808
  %v8690 = vunpack.c.0.s8 %v8689
  %v8691 = vlaneseq
  %v8692 = vshrl.u32 %v8691, 7
  %v8693 = vsub.s32 %v8690, %v8692
  %v8694 = vrot.slane %v8686, %v8693
  %v8696 = vunpack.c.l.s4 1983009808
  %v8697 = vunpack.c.0.s8 %v8696
  %v8698 = vlaneseq
  %v8699 = vshrl.u32 %v8698, 7
  %v8700 = vsub.s32 %v8697, %v8699
  %v8701 = vrot.slane %v8687, %v8700
  %v8702 = vcombine.low %v8694, %v8701
  %v8703 = vcombine.low %v7288, %v7289
  %v8704 = vcombine.low %v7290, %v7291
  %v8706 = vunpack.c.l.s4 1983009808
  %v8707 = vunpack.c.0.s8 %v8706
  %v8708 = vlaneseq
  %v8709 = vshrl.u32 %v8708, 7
  %v8710 = vsub.s32 %v8707, %v8709
  %v8711 = vrot.slane %v8703, %v8710
  %v8713 = vunpack.c.l.s4 1983009808
  %v8714 = vunpack.c.0.s8 %v8713
  %v8715 = vlaneseq
  %v8716 = vshrl.u32 %v8715, 7
  %v8717 = vsub.s32 %v8714, %v8716
  %v8718 = vrot.slane %v8704, %v8717
  %v8719 = vcombine.low %v8711, %v8718
  %v8720 = vcombine.low %v8308, %v8309
  %v8721 = vcombine.low %v8310, %v8311
  %v8723 = vunpack.c.l.s4 1983009808
  %v8724 = vunpack.c.0.s8 %v8723
  %v8725 = vlaneseq
  %v8726 = vshrl.u32 %v8725, 7
  %v8727 = vsub.s32 %v8724, %v8726
  %v8728 = vrot.slane %v8720, %v8727
  %v8730 = vunpack.c.l.s4 1983009808
  %v8731 = vunpack.c.0.s8 %v8730
  %v8732 = vlaneseq
  %v8733 = vshrl.u32 %v8732, 7
  %v8734 = vsub.s32 %v8731, %v8733
  %v8735 = vrot.slane %v8721, %v8734
  %v8736 = vcombine.low %v8728, %v8735
  %v8737 = vcombine.low %v8312, %v8313
  %v8738 = vcombine.low %v8314, %v8315
  %v8740 = vunpack.c.l.s4 1983009808
  %v8741 = vunpack.c.0.s8 %v8740
  %v8742 = vlaneseq
  %v8743 = vshrl.u32 %v8742, 7
  %v8744 = vsub.s32 %v8741, %v8743
  %v8745 = vrot.slane %v8737, %v8744
  %v8747 = vunpack.c.l.s4 1983009808
  %v8748 = vunpack.c.0.s8 %v8747
  %v8749 = vlaneseq
  %v8750 = vshrl.u32 %v8749, 7
  %v8751 = vsub.s32 %v8748, %v8750
  %v8752 = vrot.slane %v8738, %v8751
  %v8753 = vcombine.low %v8745, %v8752
  %v8754 = vcombine.low %v7292, %v7293
  %v8755 = vcombine.low %v7294, %v7295
  %v8757 = vunpack.c.l.s4 1983009808
  %v8758 = vunpack.c.0.s8 %v8757
  %v8759 = vlaneseq
  %v8760 = vshrl.u32 %v8759, 7
  %v8761 = vsub.s32 %v8758, %v8760
  %v8762 = vrot.slane %v8754, %v8761
  %v8764 = vunpack.c.l.s4 1983009808
  %v8765 = vunpack.c.0.s8 %v8764
  %v8766 = vlaneseq
  %v8767 = vshrl.u32 %v8766, 7
  %v8768 = vsub.s32 %v8765, %v8767
  %v8769 = vrot.slane %v8755, %v8768
  %v8770 = vcombine.low %v8762, %v8769
  %v8771 = vcombine.low %v7296, %v7297
  %v8772 = vcombine.low %v7298, %v7299
  %v8774 = vunpack.c.l.s4 1983009808
  %v8775 = vunpack.c.0.s8 %v8774
  %v8776 = vlaneseq
  %v8777 = vshrl.u32 %v8776, 7
  %v8778 = vsub.s32 %v8775, %v8777
  %v8779 = vrot.slane %v8771, %v8778
  %v8781 = vunpack.c.l.s4 1983009808
  %v8782 = vunpack.c.0.s8 %v8781
  %v8783 = vlaneseq
  %v8784 = vshrl.u32 %v8783, 7
  %v8785 = vsub.s32 %v8782, %v8784
  %v8786 = vrot.slane %v8772, %v8785
  %v8787 = vcombine.low %v8779, %v8786
  %v8788 = vcombine.low %v8316, %v8317
  %v8789 = vcombine.low %v8318, %v8319
  %v8791 = vunpack.c.l.s4 1983009808
  %v8792 = vunpack.c.0.s8 %v8791
  %v8793 = vlaneseq
  %v8794 = vshrl.u32 %v8793, 7
  %v8795 = vsub.s32 %v8792, %v8794
  %v8796 = vrot.slane %v8788, %v8795
  %v8798 = vunpack.c.l.s4 1983009808
  %v8799 = vunpack.c.0.s8 %v8798
  %v8800 = vlaneseq
  %v8801 = vshrl.u32 %v8800, 7
  %v8802 = vsub.s32 %v8799, %v8801
  %v8803 = vrot.slane %v8789, %v8802
  %v8804 = vcombine.low %v8796, %v8803
  %v8805 = vcombine.low %v8320, %v8321
  %v8806 = vcombine.low %v8322, %v8323
  %v8808 = vunpack.c.l.s4 1983009808
  %v8809 = vunpack.c.0.s8 %v8808
  %v8810 = vlaneseq
  %v8811 = vshrl.u32 %v8810, 7
  %v8812 = vsub.s32 %v8809, %v8811
  %v8813 = vrot.slane %v8805, %v8812
  %v8815 = vunpack.c.l.s4 1983009808
  %v8816 = vunpack.c.0.s8 %v8815
  %v8817 = vlaneseq
  %v8818 = vshrl.u32 %v8817, 7
  %v8819 = vsub.s32 %v8816, %v8818
  %v8820 = vrot.slane %v8806, %v8819
  %v8821 = vcombine.low %v8813, %v8820
  %v8822 = vcombine.low %v7300, %v7301
  %v8823 = vcombine.low %v7302, %v7303
  %v8825 = vunpack.c.l.s4 1983009808
  %v8826 = vunpack.c.0.s8 %v8825
  %v8827 = vlaneseq
  %v8828 = vshrl.u32 %v8827, 7
  %v8829 = vsub.s32 %v8826, %v8828
  %v8830 = vrot.slane %v8822, %v8829
  %v8832 = vunpack.c.l.s4 1983009808
  %v8833 = vunpack.c.0.s8 %v8832
  %v8834 = vlaneseq
  %v8835 = vshrl.u32 %v8834, 7
  %v8836 = vsub.s32 %v8833, %v8835
  %v8837 = vrot.slane %v8823, %v8836
  %v8838 = vcombine.low %v8830, %v8837
  %v8839 = vcombine.low %v7304, %v7305
  %v8840 = vcombine.low %v7306, %v7307
  %v8842 = vunpack.c.l.s4 1983009808
  %v8843 = vunpack.c.0.s8 %v8842
  %v8844 = vlaneseq
  %v8845 = vshrl.u32 %v8844, 7
  %v8846 = vsub.s32 %v8843, %v8845
  %v8847 = vrot.slane %v8839, %v8846
  %v8849 = vunpack.c.l.s4 1983009808
  %v8850 = vunpack.c.0.s8 %v8849
  %v8851 = vlaneseq
  %v8852 = vshrl.u32 %v8851, 7
  %v8853 = vsub.s32 %v8850, %v8852
  %v8854 = vrot.slane %v8840, %v8853
  %v8855 = vcombine.low %v8847, %v8854
  %v8856 = vcombine.low %v8324, %v8325
  %v8857 = vcombine.low %v8326, %v8327
  %v8859 = vunpack.c.l.s4 1983009808
  %v8860 = vunpack.c.0.s8 %v8859
  %v8861 = vlaneseq
  %v8862 = vshrl.u32 %v8861, 7
  %v8863 = vsub.s32 %v8860, %v8862
  %v8864 = vrot.slane %v8856, %v8863
  %v8866 = vunpack.c.l.s4 1983009808
  %v8867 = vunpack.c.0.s8 %v8866
  %v8868 = vlaneseq
  %v8869 = vshrl.u32 %v8868, 7
  %v8870 = vsub.s32 %v8867, %v8869
  %v8871 = vrot.slane %v8857, %v8870
  %v8872 = vcombine.low %v8864, %v8871
  %v8873 = vcombine.low %v8328, %v8329
  %v8874 = vcombine.low %v8330, %v8331
  %v8876 = vunpack.c.l.s4 1983009808
  %v8877 = vunpack.c.0.s8 %v8876
  %v8878 = vlaneseq
  %v8879 = vshrl.u32 %v8878, 7
  %v8880 = vsub.s32 %v8877, %v8879
  %v8881 = vrot.slane %v8873, %v8880
  %v8883 = vunpack.c.l.s4 1983009808
  %v8884 = vunpack.c.0.s8 %v8883
  %v8885 = vlaneseq
  %v8886 = vshrl.u32 %v8885, 7
  %v8887 = vsub.s32 %v8884, %v8886
  %v8888 = vrot.slane %v8874, %v8887
  %v8889 = vcombine.low %v8881, %v8888
  %v8890 = vcombine.low %v7308, %v7309
  %v8891 = vcombine.low %v7310, %v7311
  %v8893 = vunpack.c.l.s4 1983009808
  %v8894 = vunpack.c.0.s8 %v8893
  %v8895 = vlaneseq
  %v8896 = vshrl.u32 %v8895, 7
  %v8897 = vsub.s32 %v8894, %v8896
  %v8898 = vrot.slane %v8890, %v8897
  %v8900 = vunpack.c.l.s4 1983009808
  %v8901 = vunpack.c.0.s8 %v8900
  %v8902 = vlaneseq
  %v8903 = vshrl.u32 %v8902, 7
  %v8904 = vsub.s32 %v8901, %v8903
  %v8905 = vrot.slane %v8891, %v8904
  %v8906 = vcombine.low %v8898, %v8905
  %v8907 = vcombine.low %v7312, %v7313
  %v8908 = vcombine.low %v7314, %v7315
  %v8910 = vunpack.c.l.s4 1983009808
  %v8911 = vunpack.c.0.s8 %v8910
  %v8912 = vlaneseq
  %v8913 = vshrl.u32 %v8912, 7
  %v8914 = vsub.s32 %v8911, %v8913
  %v8915 = vrot.slane %v8907, %v8914
  %v8917 = vunpack.c.l.s4 1983009808
  %v8918 = vunpack.c.0.s8 %v8917
  %v8919 = vlaneseq
  %v8920 = vshrl.u32 %v8919, 7
  %v8921 = vsub.s32 %v8918, %v8920
  %v8922 = vrot.slane %v8908, %v8921
  %v8923 = vcombine.low %v8915, %v8922
  %v8924 = vcombine.low %v8332, %v8333
  %v8925 = vcombine.low %v8334, %v8335
  %v8927 = vunpack.c.l.s4 1983009808
  %v8928 = vunpack.c.0.s8 %v8927
  %v8929 = vlaneseq
  %v8930 = vshrl.u32 %v8929, 7
  %v8931 = vsub.s32 %v8928, %v8930
  %v8932 = vrot.slane %v8924, %v8931
  %v8934 = vunpack.c.l.s4 1983009808
  %v8935 = vunpack.c.0.s8 %v8934
  %v8936 = vlaneseq
  %v8937 = vshrl.u32 %v8936, 7
  %v8938 = vsub.s32 %v8935, %v8937
  %v8939 = vrot.slane %v8925, %v8938
  %v8940 = vcombine.low %v8932, %v8939
  %v8941 = vcombine.low %v8336, %v8337
  %v8942 = vcombine.low %v8338, %v8339
  %v8944 = vunpack.c.l.s4 1983009808
  %v8945 = vunpack.c.0.s8 %v8944
  %v8946 = vlaneseq
  %v8947 = vshrl.u32 %v8946, 7
  %v8948 = vsub.s32 %v8945, %v8947
  %v8949 = vrot.slane %v8941, %v8948
  %v8951 = vunpack.c.l.s4 1983009808
  %v8952 = vunpack.c.0.s8 %v8951
  %v8953 = vlaneseq
  %v8954 = vshrl.u32 %v8953, 7
  %v8955 = vsub.s32 %v8952, %v8954
  %v8956 = vrot.slane %v8942, %v8955
  %v8957 = vcombine.low %v8949, %v8956
  %v8958 = vcombine.low %v7316, %v7317
  %v8959 = vcombine.low %v7318, %v7319
  %v8961 = vunpack.c.l.s4 1983009808
  %v8962 = vunpack.c.0.s8 %v8961
  %v8963 = vlaneseq
  %v8964 = vshrl.u32 %v8963, 7
  %v8965 = vsub.s32 %v8962, %v8964
  %v8966 = vrot.slane %v8958, %v8965
  %v8968 = vunpack.c.l.s4 1983009808
  %v8969 = vunpack.c.0.s8 %v8968
  %v8970 = vlaneseq
  %v8971 = vshrl.u32 %v8970, 7
  %v8972 = vsub.s32 %v8969, %v8971
  %v8973 = vrot.slane %v8959, %v8972
  %v8974 = vcombine.low %v8966, %v8973
  %v8975 = vcombine.low %v7320, %v7321
  %v8976 = vcombine.low %v7322, %v7323
  %v8978 = vunpack.c.l.s4 1983009808
  %v8979 = vunpack.c.0.s8 %v8978
  %v8980 = vlaneseq
  %v8981 = vshrl.u32 %v8980, 7
  %v8982 = vsub.s32 %v8979, %v8981
  %v8983 = vrot.slane %v8975, %v8982
  %v8985 = vunpack.c.l.s4 1983009808
  %v8986 = vunpack.c.0.s8 %v8985
  %v8987 = vlaneseq
  %v8988 = vshrl.u32 %v8987, 7
  %v8989 = vsub.s32 %v8986, %v8988
  %v8990 = vrot.slane %v8976, %v8989
  %v8991 = vcombine.low %v8983, %v8990
  %v8992 = vcombine.low %v8340, %v8341
  %v8993 = vcombine.low %v8342, %v8343
  %v8995 = vunpack.c.l.s4 1983009808
  %v8996 = vunpack.c.0.s8 %v8995
  %v8997 = vlaneseq
  %v8998 = vshrl.u32 %v8997, 7
  %v8999 = vsub.s32 %v8996, %v8998
  %v9000 = vrot.slane %v8992, %v8999
  %v9002 = vunpack.c.l.s4 1983009808
  %v9003 = vunpack.c.0.s8 %v9002
  %v9004 = vlaneseq
  %v9005 = vshrl.u32 %v9004, 7
  %v9006 = vsub.s32 %v9003, %v9005
  %v9007 = vrot.slane %v8993, %v9006
  %v9008 = vcombine.low %v9000, %v9007
  %v9009 = vcombine.low %v8344, %v8345
  %v9010 = vcombine.low %v8346, %v8347
  %v9012 = vunpack.c.l.s4 1983009808
  %v9013 = vunpack.c.0.s8 %v9012
  %v9014 = vlaneseq
  %v9015 = vshrl.u32 %v9014, 7
  %v9016 = vsub.s32 %v9013, %v9015
  %v9017 = vrot.slane %v9009, %v9016
  %v9019 = vunpack.c.l.s4 1983009808
  %v9020 = vunpack.c.0.s8 %v9019
  %v9021 = vlaneseq
  %v9022 = vshrl.u32 %v9021, 7
  %v9023 = vsub.s32 %v9020, %v9022
  %v9024 = vrot.slane %v9010, %v9023
  %v9025 = vcombine.low %v9017, %v9024
  %v9026 = vcombine.low %v7324, %v7325
  %v9027 = vcombine.low %v7326, %v7327
  %v9029 = vunpack.c.l.s4 1983009808
  %v9030 = vunpack.c.0.s8 %v9029
  %v9031 = vlaneseq
  %v9032 = vshrl.u32 %v9031, 7
  %v9033 = vsub.s32 %v9030, %v9032
  %v9034 = vrot.slane %v9026, %v9033
  %v9036 = vunpack.c.l.s4 1983009808
  %v9037 = vunpack.c.0.s8 %v9036
  %v9038 = vlaneseq
  %v9039 = vshrl.u32 %v9038, 7
  %v9040 = vsub.s32 %v9037, %v9039
  %v9041 = vrot.slane %v9027, %v9040
  %v9042 = vcombine.low %v9034, %v9041
  %v9043 = vcombine.low %v7328, %v7329
  %v9044 = vcombine.low %v7330, %v7331
  %v9046 = vunpack.c.l.s4 1983009808
  %v9047 = vunpack.c.0.s8 %v9046
  %v9048 = vlaneseq
  %v9049 = vshrl.u32 %v9048, 7
  %v9050 = vsub.s32 %v9047, %v9049
  %v9051 = vrot.slane %v9043, %v9050
  %v9053 = vunpack.c.l.s4 1983009808
  %v9054 = vunpack.c.0.s8 %v9053
  %v9055 = vlaneseq
  %v9056 = vshrl.u32 %v9055, 7
  %v9057 = vsub.s32 %v9054, %v9056
  %v9058 = vrot.slane %v9044, %v9057
  %v9059 = vcombine.low %v9051, %v9058
  %v9060 = vcombine.low %v8348, %v8349
  %v9061 = vcombine.low %v8350, %v8351
  %v9063 = vunpack.c.l.s4 1983009808
  %v9064 = vunpack.c.0.s8 %v9063
  %v9065 = vlaneseq
  %v9066 = vshrl.u32 %v9065, 7
  %v9067 = vsub.s32 %v9064, %v9066
  %v9068 = vrot.slane %v9060, %v9067
  %v9070 = vunpack.c.l.s4 1983009808
  %v9071 = vunpack.c.0.s8 %v9070
  %v9072 = vlaneseq
  %v9073 = vshrl.u32 %v9072, 7
  %v9074 = vsub.s32 %v9071, %v9073
  %v9075 = vrot.slane %v9061, %v9074
  %v9076 = vcombine.low %v9068, %v9075
  %v9077 = vcombine.low %v8352, %v8353
  %v9078 = vcombine.low %v8354, %v8355
  %v9080 = vunpack.c.l.s4 1983009808
  %v9081 = vunpack.c.0.s8 %v9080
  %v9082 = vlaneseq
  %v9083 = vshrl.u32 %v9082, 7
  %v9084 = vsub.s32 %v9081, %v9083
  %v9085 = vrot.slane %v9077, %v9084
  %v9087 = vunpack.c.l.s4 1983009808
  %v9088 = vunpack.c.0.s8 %v9087
  %v9089 = vlaneseq
  %v9090 = vshrl.u32 %v9089, 7
  %v9091 = vsub.s32 %v9088, %v9090
  %v9092 = vrot.slane %v9078, %v9091
  %v9093 = vcombine.low %v9085, %v9092
  %vm9094 = vcmask 23552
  %v9096 = vsel %vm9094, %v8420, 0
  %v9098 = vsel %vm9094, %v8566, 0
  %v9100 = vsel %vm9094, %v8583, 0
  %v9102 = vsel %vm9094, %v8600, 0
  %v9104 = vsel %vm9094, %v8617, 0
  %v9106 = vsel %vm9094, %v8634, 0
  %v9108 = vsel %vm9094, %v8651, 0
  %v9110 = vsel %vm9094, %v8668, 0
  %v9112 = vsel %vm9094, %v8685, 0
  %v9114 = vsel %vm9094, %v8702, 0
  %v9116 = vsel %vm9094, %v8719, 0
  %v9118 = vsel %vm9094, %v8736, 0
  %v9120 = vsel %vm9094, %v8753, 0
  %v9122 = vsel %vm9094, %v8770, 0
  %v9124 = vsel %vm9094, %v8787, 0
  %v9126 = vsel %vm9094, %v8804, 0
  %v9128 = vsel %vm9094, %v8821, 0
  %v9130 = vsel %vm9094, %v8838, 0
  %v9132 = vsel %vm9094, %v8855, 0
  %v9134 = vsel %vm9094, %v8872, 0
  %v9136 = vsel %vm9094, %v8889, 0
  %v9138 = vsel %vm9094, %v8906, 0
  %v9140 = vsel %vm9094, %v8923, 0
  %v9142 = vsel %vm9094, %v8940, 0
  %v9144 = vsel %vm9094, %v8957, 0
  %v9146 = vsel %vm9094, %v8974, 0
  %v9148 = vsel %vm9094, %v8991, 0
  %v9150 = vsel %vm9094, %v9008, 0
  %v9152 = vsel %vm9094, %v9025, 0
  %v9154 = vsel %vm9094, %v9042, 0
  %v9156 = vsel %vm9094, %v9059, 0
  %v9158 = vsel %vm9094, %v9076, 0
  %v9160 = vsel %vm9094, %v9093, 0
  %9162 = vmatprep.subr.mxu0 0.0
  %9163 = vmatpush1.xpose.msra.mxu0 %v9098
  %9164 = vmatprep.subr.mxu0 0.0
  %9165 = vmatpush1.xpose.msra.mxu0 %v9100
  %9166 = vmatprep.subr.mxu0 0.0
  %9167 = vmatpush1.xpose.msra.mxu0 %v9102
  %9168 = vmatprep.subr.mxu0 0.0
  %9169 = vmatpush1.xpose.msra.mxu0 %v9104
  %9170 = vmatprep.subr.mxu0 0.0
  %9171 = vmatpush1.xpose.msra.mxu0 %v9106
  %9172 = vmatprep.subr.mxu0 0.0
  %9173 = vmatpush1.xpose.msra.mxu0 %v9108
  %9174 = vmatprep.subr.mxu0 0.0
  %9175 = vmatpush1.xpose.msra.mxu0 %v9110
  %9176 = vmatprep.subr.mxu0 0.0
  %9177 = vmatpush1.xpose.msra.mxu0 %v9112
  %9178 = vmatprep.subr.mxu0 0.0
  %9179 = vmatpush1.xpose.msra.mxu0 %v9114
  %9180 = vmatprep.subr.mxu0 0.0
  %9181 = vmatpush1.xpose.msra.mxu0 %v9116
  %9182 = vmatprep.subr.mxu0 0.0
  %9183 = vmatpush1.xpose.msra.mxu0 %v9118
  %9184 = vmatprep.subr.mxu0 0.0
  %9185 = vmatpush1.xpose.msra.mxu0 %v9120
  %9186 = vmatprep.subr.mxu0 0.0
  %9187 = vmatpush1.xpose.msra.mxu0 %v9122
  %9188 = vmatprep.subr.mxu0 0.0
  %9189 = vmatpush1.xpose.msra.mxu0 %v9124
  %9190 = vmatprep.subr.mxu0 0.0
  %9191 = vmatpush1.xpose.msra.mxu0 %v9126
  %9192 = vmatprep.subr.mxu0 0.0
  %9193 = vmatpush1.xpose.msra.mxu0 %v9128
  %9194 = vmatprep.subr.mxu0 0.0
  %9195 = vmatpush1.xpose.msra.mxu0 %v9130
  %9196 = vmatprep.subr.mxu0 0.0
  %9197 = vmatpush1.xpose.msra.mxu0 %v9132
  %9198 = vmatprep.subr.mxu0 0.0
  %9199 = vmatpush1.xpose.msra.mxu0 %v9134
  %9200 = vmatprep.subr.mxu0 0.0
  %9201 = vmatpush1.xpose.msra.mxu0 %v9136
  %9202 = vmatprep.subr.mxu0 0.0
  %9203 = vmatpush1.xpose.msra.mxu0 %v9138
  %9204 = vmatprep.subr.mxu0 0.0
  %9205 = vmatpush1.xpose.msra.mxu0 %v9140
  %9206 = vmatprep.subr.mxu0 0.0
  %9207 = vmatpush1.xpose.msra.mxu0 %v9142
  %9208 = vmatprep.subr.mxu0 0.0
  %9209 = vmatpush1.xpose.msra.mxu0 %v9144
  %9210 = vmatprep.subr.mxu0 0.0
  %9211 = vmatpush1.xpose.msra.mxu0 %v9146
  %9212 = vmatprep.subr.mxu0 0.0
  %9213 = vmatpush1.xpose.msra.mxu0 %v9148
  %9214 = vmatprep.subr.mxu0 0.0
  %9215 = vmatpush1.xpose.msra.mxu0 %v9150
  %9216 = vmatprep.subr.mxu0 0.0
  %9217 = vmatpush1.xpose.msra.mxu0 %v9152
  %9218 = vmatprep.subr.mxu0 0.0
  %9219 = vmatpush1.xpose.msra.mxu0 %v9154
  %9220 = vmatprep.subr.mxu0 0.0
  %9221 = vmatpush1.xpose.msra.mxu0 %v9156
  %9222 = vmatprep.subr.mxu0 0.0
  %9223 = vmatpush1.xpose.msra.mxu0 %v9158
  %9224 = vmatprep.subr.mxu0 0.0
  %9225 = vmatpush1.xpose.msra.mxu0 %v9160
  %9226 = vmatprep.mubr.f32.mxu0 0.0
  %9227 = vmatmul.mubr.f32.gmra.mrb[0].mxu0 %v9096
  %v9228 = vpop.f32.mrb[0].mxu0
  %v9229 = vadd.f32 0.0, %v9228
  %v9230 = vpop.f32.mrb[0].mxu0
  %v9231 = vadd.f32 0.0, %v9230
  %9232 = vdwg.mxu0
  %v9361 = vcombine.low %v7332, %v7333
  %v9362 = vcombine.low %v7334, %v7335
  %v9364 = vunpack.c.l.s4 1983009808
  %v9365 = vunpack.c.0.s8 %v9364
  %v9366 = vlaneseq
  %v9367 = vshrl.u32 %v9366, 7
  %v9368 = vsub.s32 %v9365, %v9367
  %v9369 = vrot.slane %v9361, %v9368
  %v9371 = vunpack.c.l.s4 1983009808
  %v9372 = vunpack.c.0.s8 %v9371
  %v9373 = vlaneseq
  %v9374 = vshrl.u32 %v9373, 7
  %v9375 = vsub.s32 %v9372, %v9374
  %v9376 = vrot.slane %v9362, %v9375
  %v9377 = vcombine.low %v9369, %v9376
  %v9378 = vcombine.low %v7336, %v7337
  %v9379 = vcombine.low %v7338, %v7339
  %v9381 = vunpack.c.l.s4 1983009808
  %v9382 = vunpack.c.0.s8 %v9381
  %v9383 = vlaneseq
  %v9384 = vshrl.u32 %v9383, 7
  %v9385 = vsub.s32 %v9382, %v9384
  %v9386 = vrot.slane %v9378, %v9385
  %v9388 = vunpack.c.l.s4 1983009808
  %v9389 = vunpack.c.0.s8 %v9388
  %v9390 = vlaneseq
  %v9391 = vshrl.u32 %v9390, 7
  %v9392 = vsub.s32 %v9389, %v9391
  %v9393 = vrot.slane %v9379, %v9392
  %v9394 = vcombine.low %v9386, %v9393
  %v9395 = vcombine.low %v8356, %v8357
  %v9396 = vcombine.low %v8358, %v8359
  %v9398 = vunpack.c.l.s4 1983009808
  %v9399 = vunpack.c.0.s8 %v9398
  %v9400 = vlaneseq
  %v9401 = vshrl.u32 %v9400, 7
  %v9402 = vsub.s32 %v9399, %v9401
  %v9403 = vrot.slane %v9395, %v9402
  %v9405 = vunpack.c.l.s4 1983009808
  %v9406 = vunpack.c.0.s8 %v9405
  %v9407 = vlaneseq
  %v9408 = vshrl.u32 %v9407, 7
  %v9409 = vsub.s32 %v9406, %v9408
  %v9410 = vrot.slane %v9396, %v9409
  %v9411 = vcombine.low %v9403, %v9410
  %v9412 = vcombine.low %v8360, %v8361
  %v9413 = vcombine.low %v8362, %v8363
  %v9415 = vunpack.c.l.s4 1983009808
  %v9416 = vunpack.c.0.s8 %v9415
  %v9417 = vlaneseq
  %v9418 = vshrl.u32 %v9417, 7
  %v9419 = vsub.s32 %v9416, %v9418
  %v9420 = vrot.slane %v9412, %v9419
  %v9422 = vunpack.c.l.s4 1983009808
  %v9423 = vunpack.c.0.s8 %v9422
  %v9424 = vlaneseq
  %v9425 = vshrl.u32 %v9424, 7
  %v9426 = vsub.s32 %v9423, %v9425
  %v9427 = vrot.slane %v9413, %v9426
  %v9428 = vcombine.low %v9420, %v9427
  %v9429 = vcombine.low %v7340, %v7341
  %v9430 = vcombine.low %v7342, %v7343
  %v9432 = vunpack.c.l.s4 1983009808
  %v9433 = vunpack.c.0.s8 %v9432
  %v9434 = vlaneseq
  %v9435 = vshrl.u32 %v9434, 7
  %v9436 = vsub.s32 %v9433, %v9435
  %v9437 = vrot.slane %v9429, %v9436
  %v9439 = vunpack.c.l.s4 1983009808
  %v9440 = vunpack.c.0.s8 %v9439
  %v9441 = vlaneseq
  %v9442 = vshrl.u32 %v9441, 7
  %v9443 = vsub.s32 %v9440, %v9442
  %v9444 = vrot.slane %v9430, %v9443
  %v9445 = vcombine.low %v9437, %v9444
  %v9446 = vcombine.low %v7344, %v7345
  %v9447 = vcombine.low %v7346, %v7347
  %v9449 = vunpack.c.l.s4 1983009808
  %v9450 = vunpack.c.0.s8 %v9449
  %v9451 = vlaneseq
  %v9452 = vshrl.u32 %v9451, 7
  %v9453 = vsub.s32 %v9450, %v9452
  %v9454 = vrot.slane %v9446, %v9453
  %v9456 = vunpack.c.l.s4 1983009808
  %v9457 = vunpack.c.0.s8 %v9456
  %v9458 = vlaneseq
  %v9459 = vshrl.u32 %v9458, 7
  %v9460 = vsub.s32 %v9457, %v9459
  %v9461 = vrot.slane %v9447, %v9460
  %v9462 = vcombine.low %v9454, %v9461
  %v9463 = vcombine.low %v8364, %v8365
  %v9464 = vcombine.low %v8366, %v8367
  %v9466 = vunpack.c.l.s4 1983009808
  %v9467 = vunpack.c.0.s8 %v9466
  %v9468 = vlaneseq
  %v9469 = vshrl.u32 %v9468, 7
  %v9470 = vsub.s32 %v9467, %v9469
  %v9471 = vrot.slane %v9463, %v9470
  %v9473 = vunpack.c.l.s4 1983009808
  %v9474 = vunpack.c.0.s8 %v9473
  %v9475 = vlaneseq
  %v9476 = vshrl.u32 %v9475, 7
  %v9477 = vsub.s32 %v9474, %v9476
  %v9478 = vrot.slane %v9464, %v9477
  %v9479 = vcombine.low %v9471, %v9478
  %v9480 = vcombine.low %v8368, %v8369
  %v9481 = vcombine.low %v8370, %v8371
  %v9483 = vunpack.c.l.s4 1983009808
  %v9484 = vunpack.c.0.s8 %v9483
  %v9485 = vlaneseq
  %v9486 = vshrl.u32 %v9485, 7
  %v9487 = vsub.s32 %v9484, %v9486
  %v9488 = vrot.slane %v9480, %v9487
  %v9490 = vunpack.c.l.s4 1983009808
  %v9491 = vunpack.c.0.s8 %v9490
  %v9492 = vlaneseq
  %v9493 = vshrl.u32 %v9492, 7
  %v9494 = vsub.s32 %v9491, %v9493
  %v9495 = vrot.slane %v9481, %v9494
  %v9496 = vcombine.low %v9488, %v9495
  %v9497 = vcombine.low %v7348, %v7349
  %v9498 = vcombine.low %v7350, %v7351
  %v9500 = vunpack.c.l.s4 1983009808
  %v9501 = vunpack.c.0.s8 %v9500
  %v9502 = vlaneseq
  %v9503 = vshrl.u32 %v9502, 7
  %v9504 = vsub.s32 %v9501, %v9503
  %v9505 = vrot.slane %v9497, %v9504
  %v9507 = vunpack.c.l.s4 1983009808
  %v9508 = vunpack.c.0.s8 %v9507
  %v9509 = vlaneseq
  %v9510 = vshrl.u32 %v9509, 7
  %v9511 = vsub.s32 %v9508, %v9510
  %v9512 = vrot.slane %v9498, %v9511
  %v9513 = vcombine.low %v9505, %v9512
  %v9514 = vcombine.low %v7352, %v7353
  %v9515 = vcombine.low %v7354, %v7355
  %v9517 = vunpack.c.l.s4 1983009808
  %v9518 = vunpack.c.0.s8 %v9517
  %v9519 = vlaneseq
  %v9520 = vshrl.u32 %v9519, 7
  %v9521 = vsub.s32 %v9518, %v9520
  %v9522 = vrot.slane %v9514, %v9521
  %v9524 = vunpack.c.l.s4 1983009808
  %v9525 = vunpack.c.0.s8 %v9524
  %v9526 = vlaneseq
  %v9527 = vshrl.u32 %v9526, 7
  %v9528 = vsub.s32 %v9525, %v9527
  %v9529 = vrot.slane %v9515, %v9528
  %v9530 = vcombine.low %v9522, %v9529
  %v9531 = vcombine.low %v8372, %v8373
  %v9532 = vcombine.low %v8374, %v8375
  %v9534 = vunpack.c.l.s4 1983009808
  %v9535 = vunpack.c.0.s8 %v9534
  %v9536 = vlaneseq
  %v9537 = vshrl.u32 %v9536, 7
  %v9538 = vsub.s32 %v9535, %v9537
  %v9539 = vrot.slane %v9531, %v9538
  %v9541 = vunpack.c.l.s4 1983009808
  %v9542 = vunpack.c.0.s8 %v9541
  %v9543 = vlaneseq
  %v9544 = vshrl.u32 %v9543, 7
  %v9545 = vsub.s32 %v9542, %v9544
  %v9546 = vrot.slane %v9532, %v9545
  %v9547 = vcombine.low %v9539, %v9546
  %v9548 = vcombine.low %v8376, %v8377
  %v9549 = vcombine.low %v8378, %v8379
  %v9551 = vunpack.c.l.s4 1983009808
  %v9552 = vunpack.c.0.s8 %v9551
  %v9553 = vlaneseq
  %v9554 = vshrl.u32 %v9553, 7
  %v9555 = vsub.s32 %v9552, %v9554
  %v9556 = vrot.slane %v9548, %v9555
  %v9558 = vunpack.c.l.s4 1983009808
  %v9559 = vunpack.c.0.s8 %v9558
  %v9560 = vlaneseq
  %v9561 = vshrl.u32 %v9560, 7
  %v9562 = vsub.s32 %v9559, %v9561
  %v9563 = vrot.slane %v9549, %v9562
  %v9564 = vcombine.low %v9556, %v9563
  %v9565 = vcombine.low %v7356, %v7357
  %v9566 = vcombine.low %v7358, %v7359
  %v9568 = vunpack.c.l.s4 1983009808
  %v9569 = vunpack.c.0.s8 %v9568
  %v9570 = vlaneseq
  %v9571 = vshrl.u32 %v9570, 7
  %v9572 = vsub.s32 %v9569, %v9571
  %v9573 = vrot.slane %v9565, %v9572
  %v9575 = vunpack.c.l.s4 1983009808
  %v9576 = vunpack.c.0.s8 %v9575
  %v9577 = vlaneseq
  %v9578 = vshrl.u32 %v9577, 7
  %v9579 = vsub.s32 %v9576, %v9578
  %v9580 = vrot.slane %v9566, %v9579
  %v9581 = vcombine.low %v9573, %v9580
  %v9582 = vcombine.low %v7360, %v7361
  %v9583 = vcombine.low %v7362, %v7363
  %v9585 = vunpack.c.l.s4 1983009808
  %v9586 = vunpack.c.0.s8 %v9585
  %v9587 = vlaneseq
  %v9588 = vshrl.u32 %v9587, 7
  %v9589 = vsub.s32 %v9586, %v9588
  %v9590 = vrot.slane %v9582, %v9589
  %v9592 = vunpack.c.l.s4 1983009808
  %v9593 = vunpack.c.0.s8 %v9592
  %v9594 = vlaneseq
  %v9595 = vshrl.u32 %v9594, 7
  %v9596 = vsub.s32 %v9593, %v9595
  %v9597 = vrot.slane %v9583, %v9596
  %v9598 = vcombine.low %v9590, %v9597
  %v9599 = vcombine.low %v8380, %v8381
  %v9600 = vcombine.low %v8382, %v8383
  %v9602 = vunpack.c.l.s4 1983009808
  %v9603 = vunpack.c.0.s8 %v9602
  %v9604 = vlaneseq
  %v9605 = vshrl.u32 %v9604, 7
  %v9606 = vsub.s32 %v9603, %v9605
  %v9607 = vrot.slane %v9599, %v9606
  %v9609 = vunpack.c.l.s4 1983009808
  %v9610 = vunpack.c.0.s8 %v9609
  %v9611 = vlaneseq
  %v9612 = vshrl.u32 %v9611, 7
  %v9613 = vsub.s32 %v9610, %v9612
  %v9614 = vrot.slane %v9600, %v9613
  %v9615 = vcombine.low %v9607, %v9614
  %v9616 = vcombine.low %v8384, %v8385
  %v9617 = vcombine.low %v8386, %v8387
  %v9619 = vunpack.c.l.s4 1983009808
  %v9620 = vunpack.c.0.s8 %v9619
  %v9621 = vlaneseq
  %v9622 = vshrl.u32 %v9621, 7
  %v9623 = vsub.s32 %v9620, %v9622
  %v9624 = vrot.slane %v9616, %v9623
  %v9626 = vunpack.c.l.s4 1983009808
  %v9627 = vunpack.c.0.s8 %v9626
  %v9628 = vlaneseq
  %v9629 = vshrl.u32 %v9628, 7
  %v9630 = vsub.s32 %v9627, %v9629
  %v9631 = vrot.slane %v9617, %v9630
  %v9632 = vcombine.low %v9624, %v9631
  %v9633 = vcombine.low %v7364, %v7365
  %v9634 = vcombine.low %v7366, %v7367
  %v9636 = vunpack.c.l.s4 1983009808
  %v9637 = vunpack.c.0.s8 %v9636
  %v9638 = vlaneseq
  %v9639 = vshrl.u32 %v9638, 7
  %v9640 = vsub.s32 %v9637, %v9639
  %v9641 = vrot.slane %v9633, %v9640
  %v9643 = vunpack.c.l.s4 1983009808
  %v9644 = vunpack.c.0.s8 %v9643
  %v9645 = vlaneseq
  %v9646 = vshrl.u32 %v9645, 7
  %v9647 = vsub.s32 %v9644, %v9646
  %v9648 = vrot.slane %v9634, %v9647
  %v9649 = vcombine.low %v9641, %v9648
  %v9650 = vcombine.low %v7368, %v7369
  %v9651 = vcombine.low %v7370, %v7371
  %v9653 = vunpack.c.l.s4 1983009808
  %v9654 = vunpack.c.0.s8 %v9653
  %v9655 = vlaneseq
  %v9656 = vshrl.u32 %v9655, 7
  %v9657 = vsub.s32 %v9654, %v9656
  %v9658 = vrot.slane %v9650, %v9657
  %v9660 = vunpack.c.l.s4 1983009808
  %v9661 = vunpack.c.0.s8 %v9660
  %v9662 = vlaneseq
  %v9663 = vshrl.u32 %v9662, 7
  %v9664 = vsub.s32 %v9661, %v9663
  %v9665 = vrot.slane %v9651, %v9664
  %v9666 = vcombine.low %v9658, %v9665
  %v9667 = vcombine.low %v8388, %v8389
  %v9668 = vcombine.low %v8390, %v8391
  %v9670 = vunpack.c.l.s4 1983009808
  %v9671 = vunpack.c.0.s8 %v9670
  %v9672 = vlaneseq
  %v9673 = vshrl.u32 %v9672, 7
  %v9674 = vsub.s32 %v9671, %v9673
  %v9675 = vrot.slane %v9667, %v9674
  %v9677 = vunpack.c.l.s4 1983009808
  %v9678 = vunpack.c.0.s8 %v9677
  %v9679 = vlaneseq
  %v9680 = vshrl.u32 %v9679, 7
  %v9681 = vsub.s32 %v9678, %v9680
  %v9682 = vrot.slane %v9668, %v9681
  %v9683 = vcombine.low %v9675, %v9682
  %v9684 = vcombine.low %v8392, %v8393
  %v9685 = vcombine.low %v8394, %v8395
  %v9687 = vunpack.c.l.s4 1983009808
  %v9688 = vunpack.c.0.s8 %v9687
  %v9689 = vlaneseq
  %v9690 = vshrl.u32 %v9689, 7
  %v9691 = vsub.s32 %v9688, %v9690
  %v9692 = vrot.slane %v9684, %v9691
  %v9694 = vunpack.c.l.s4 1983009808
  %v9695 = vunpack.c.0.s8 %v9694
  %v9696 = vlaneseq
  %v9697 = vshrl.u32 %v9696, 7
  %v9698 = vsub.s32 %v9695, %v9697
  %v9699 = vrot.slane %v9685, %v9698
  %v9700 = vcombine.low %v9692, %v9699
  %v9701 = vcombine.low %v7372, %v7373
  %v9702 = vcombine.low %v7374, %v7375
  %v9704 = vunpack.c.l.s4 1983009808
  %v9705 = vunpack.c.0.s8 %v9704
  %v9706 = vlaneseq
  %v9707 = vshrl.u32 %v9706, 7
  %v9708 = vsub.s32 %v9705, %v9707
  %v9709 = vrot.slane %v9701, %v9708
  %v9711 = vunpack.c.l.s4 1983009808
  %v9712 = vunpack.c.0.s8 %v9711
  %v9713 = vlaneseq
  %v9714 = vshrl.u32 %v9713, 7
  %v9715 = vsub.s32 %v9712, %v9714
  %v9716 = vrot.slane %v9702, %v9715
  %v9717 = vcombine.low %v9709, %v9716
  %v9718 = vcombine.low %v7376, %v7377
  %v9719 = vcombine.low %v7378, %v7379
  %v9721 = vunpack.c.l.s4 1983009808
  %v9722 = vunpack.c.0.s8 %v9721
  %v9723 = vlaneseq
  %v9724 = vshrl.u32 %v9723, 7
  %v9725 = vsub.s32 %v9722, %v9724
  %v9726 = vrot.slane %v9718, %v9725
  %v9728 = vunpack.c.l.s4 1983009808
  %v9729 = vunpack.c.0.s8 %v9728
  %v9730 = vlaneseq
  %v9731 = vshrl.u32 %v9730, 7
  %v9732 = vsub.s32 %v9729, %v9731
  %v9733 = vrot.slane %v9719, %v9732
  %v9734 = vcombine.low %v9726, %v9733
  %v9735 = vcombine.low %v8396, %v8397
  %v9736 = vcombine.low %v8398, %v8399
  %v9738 = vunpack.c.l.s4 1983009808
  %v9739 = vunpack.c.0.s8 %v9738
  %v9740 = vlaneseq
  %v9741 = vshrl.u32 %v9740, 7
  %v9742 = vsub.s32 %v9739, %v9741
  %v9743 = vrot.slane %v9735, %v9742
  %v9745 = vunpack.c.l.s4 1983009808
  %v9746 = vunpack.c.0.s8 %v9745
  %v9747 = vlaneseq
  %v9748 = vshrl.u32 %v9747, 7
  %v9749 = vsub.s32 %v9746, %v9748
  %v9750 = vrot.slane %v9736, %v9749
  %v9751 = vcombine.low %v9743, %v9750
  %v9752 = vcombine.low %v8400, %v8401
  %v9753 = vcombine.low %v8402, %v8403
  %v9755 = vunpack.c.l.s4 1983009808
  %v9756 = vunpack.c.0.s8 %v9755
  %v9757 = vlaneseq
  %v9758 = vshrl.u32 %v9757, 7
  %v9759 = vsub.s32 %v9756, %v9758
  %v9760 = vrot.slane %v9752, %v9759
  %v9762 = vunpack.c.l.s4 1983009808
  %v9763 = vunpack.c.0.s8 %v9762
  %v9764 = vlaneseq
  %v9765 = vshrl.u32 %v9764, 7
  %v9766 = vsub.s32 %v9763, %v9765
  %v9767 = vrot.slane %v9753, %v9766
  %v9768 = vcombine.low %v9760, %v9767
  %v9769 = vcombine.low %v7380, %v7381
  %v9770 = vcombine.low %v7382, %v7383
  %v9772 = vunpack.c.l.s4 1983009808
  %v9773 = vunpack.c.0.s8 %v9772
  %v9774 = vlaneseq
  %v9775 = vshrl.u32 %v9774, 7
  %v9776 = vsub.s32 %v9773, %v9775
  %v9777 = vrot.slane %v9769, %v9776
  %v9779 = vunpack.c.l.s4 1983009808
  %v9780 = vunpack.c.0.s8 %v9779
  %v9781 = vlaneseq
  %v9782 = vshrl.u32 %v9781, 7
  %v9783 = vsub.s32 %v9780, %v9782
  %v9784 = vrot.slane %v9770, %v9783
  %v9785 = vcombine.low %v9777, %v9784
  %v9786 = vcombine.low %v7384, %v7385
  %v9787 = vcombine.low %v7386, %v7387
  %v9789 = vunpack.c.l.s4 1983009808
  %v9790 = vunpack.c.0.s8 %v9789
  %v9791 = vlaneseq
  %v9792 = vshrl.u32 %v9791, 7
  %v9793 = vsub.s32 %v9790, %v9792
  %v9794 = vrot.slane %v9786, %v9793
  %v9796 = vunpack.c.l.s4 1983009808
  %v9797 = vunpack.c.0.s8 %v9796
  %v9798 = vlaneseq
  %v9799 = vshrl.u32 %v9798, 7
  %v9800 = vsub.s32 %v9797, %v9799
  %v9801 = vrot.slane %v9787, %v9800
  %v9802 = vcombine.low %v9794, %v9801
  %v9803 = vcombine.low %v8404, %v8405
  %v9804 = vcombine.low %v8406, %v8407
  %v9806 = vunpack.c.l.s4 1983009808
  %v9807 = vunpack.c.0.s8 %v9806
  %v9808 = vlaneseq
  %v9809 = vshrl.u32 %v9808, 7
  %v9810 = vsub.s32 %v9807, %v9809
  %v9811 = vrot.slane %v9803, %v9810
  %v9813 = vunpack.c.l.s4 1983009808
  %v9814 = vunpack.c.0.s8 %v9813
  %v9815 = vlaneseq
  %v9816 = vshrl.u32 %v9815, 7
  %v9817 = vsub.s32 %v9814, %v9816
  %v9818 = vrot.slane %v9804, %v9817
  %v9819 = vcombine.low %v9811, %v9818
  %v9820 = vcombine.low %v8408, %v8409
  %v9821 = vcombine.low %v8410, %v8411
  %v9823 = vunpack.c.l.s4 1983009808
  %v9824 = vunpack.c.0.s8 %v9823
  %v9825 = vlaneseq
  %v9826 = vshrl.u32 %v9825, 7
  %v9827 = vsub.s32 %v9824, %v9826
  %v9828 = vrot.slane %v9820, %v9827
  %v9830 = vunpack.c.l.s4 1983009808
  %v9831 = vunpack.c.0.s8 %v9830
  %v9832 = vlaneseq
  %v9833 = vshrl.u32 %v9832, 7
  %v9834 = vsub.s32 %v9831, %v9833
  %v9835 = vrot.slane %v9821, %v9834
  %v9836 = vcombine.low %v9828, %v9835
  %v9837 = vcombine.low %v7388, %v7389
  %v9838 = vcombine.low %v7390, %v7391
  %v9840 = vunpack.c.l.s4 1983009808
  %v9841 = vunpack.c.0.s8 %v9840
  %v9842 = vlaneseq
  %v9843 = vshrl.u32 %v9842, 7
  %v9844 = vsub.s32 %v9841, %v9843
  %v9845 = vrot.slane %v9837, %v9844
  %v9847 = vunpack.c.l.s4 1983009808
  %v9848 = vunpack.c.0.s8 %v9847
  %v9849 = vlaneseq
  %v9850 = vshrl.u32 %v9849, 7
  %v9851 = vsub.s32 %v9848, %v9850
  %v9852 = vrot.slane %v9838, %v9851
  %v9853 = vcombine.low %v9845, %v9852
  %v9854 = vcombine.low %v7392, %v7393
  %v9855 = vcombine.low %v7394, %v7395
  %v9857 = vunpack.c.l.s4 1983009808
  %v9858 = vunpack.c.0.s8 %v9857
  %v9859 = vlaneseq
  %v9860 = vshrl.u32 %v9859, 7
  %v9861 = vsub.s32 %v9858, %v9860
  %v9862 = vrot.slane %v9854, %v9861
  %v9864 = vunpack.c.l.s4 1983009808
  %v9865 = vunpack.c.0.s8 %v9864
  %v9866 = vlaneseq
  %v9867 = vshrl.u32 %v9866, 7
  %v9868 = vsub.s32 %v9865, %v9867
  %v9869 = vrot.slane %v9855, %v9868
  %v9870 = vcombine.low %v9862, %v9869
  %v9871 = vcombine.low %v8412, %v8413
  %v9872 = vcombine.low %v8414, %v8415
  %v9874 = vunpack.c.l.s4 1983009808
  %v9875 = vunpack.c.0.s8 %v9874
  %v9876 = vlaneseq
  %v9877 = vshrl.u32 %v9876, 7
  %v9878 = vsub.s32 %v9875, %v9877
  %v9879 = vrot.slane %v9871, %v9878
  %v9881 = vunpack.c.l.s4 1983009808
  %v9882 = vunpack.c.0.s8 %v9881
  %v9883 = vlaneseq
  %v9884 = vshrl.u32 %v9883, 7
  %v9885 = vsub.s32 %v9882, %v9884
  %v9886 = vrot.slane %v9872, %v9885
  %v9887 = vcombine.low %v9879, %v9886
  %v9888 = vcombine.low %v8416, %v8417
  %v9889 = vcombine.low %v8418, %v8419
  %v9891 = vunpack.c.l.s4 1983009808
  %v9892 = vunpack.c.0.s8 %v9891
  %v9893 = vlaneseq
  %v9894 = vshrl.u32 %v9893, 7
  %v9895 = vsub.s32 %v9892, %v9894
  %v9896 = vrot.slane %v9888, %v9895
  %v9898 = vunpack.c.l.s4 1983009808
  %v9899 = vunpack.c.0.s8 %v9898
  %v9900 = vlaneseq
  %v9901 = vshrl.u32 %v9900, 7
  %v9902 = vsub.s32 %v9899, %v9901
  %v9903 = vrot.slane %v9889, %v9902
  %v9904 = vcombine.low %v9896, %v9903
  %v9906 = vsel %vm9094, %v8421, 0
  %v9908 = vsel %vm9094, %v9377, 0
  %v9910 = vsel %vm9094, %v9394, 0
  %v9912 = vsel %vm9094, %v9411, 0
  %v9914 = vsel %vm9094, %v9428, 0
  %v9916 = vsel %vm9094, %v9445, 0
  %v9918 = vsel %vm9094, %v9462, 0
  %v9920 = vsel %vm9094, %v9479, 0
  %v9922 = vsel %vm9094, %v9496, 0
  %v9924 = vsel %vm9094, %v9513, 0
  %v9926 = vsel %vm9094, %v9530, 0
  %v9928 = vsel %vm9094, %v9547, 0
  %v9930 = vsel %vm9094, %v9564, 0
  %v9932 = vsel %vm9094, %v9581, 0
  %v9934 = vsel %vm9094, %v9598, 0
  %v9936 = vsel %vm9094, %v9615, 0
  %v9938 = vsel %vm9094, %v9632, 0
  %v9940 = vsel %vm9094, %v9649, 0
  %v9942 = vsel %vm9094, %v9666, 0
  %v9944 = vsel %vm9094, %v9683, 0
  %v9946 = vsel %vm9094, %v9700, 0
  %v9948 = vsel %vm9094, %v9717, 0
  %v9950 = vsel %vm9094, %v9734, 0
  %v9952 = vsel %vm9094, %v9751, 0
  %v9954 = vsel %vm9094, %v9768, 0
  %v9956 = vsel %vm9094, %v9785, 0
  %v9958 = vsel %vm9094, %v9802, 0
  %v9960 = vsel %vm9094, %v9819, 0
  %v9962 = vsel %vm9094, %v9836, 0
  %v9964 = vsel %vm9094, %v9853, 0
  %v9966 = vsel %vm9094, %v9870, 0
  %v9968 = vsel %vm9094, %v9887, 0
  %v9970 = vsel %vm9094, %v9904, 0
  %9972 = vmatprep.subr.mxu0 0.0
  %9973 = vmatpush1.xpose.msra.mxu0 %v9908
  %9974 = vmatprep.subr.mxu0 0.0
  %9975 = vmatpush1.xpose.msra.mxu0 %v9910
  %9976 = vmatprep.subr.mxu0 0.0
  %9977 = vmatpush1.xpose.msra.mxu0 %v9912
  %9978 = vmatprep.subr.mxu0 0.0
  %9979 = vmatpush1.xpose.msra.mxu0 %v9914
  %9980 = vmatprep.subr.mxu0 0.0
  %9981 = vmatpush1.xpose.msra.mxu0 %v9916
  %9982 = vmatprep.subr.mxu0 0.0
  %9983 = vmatpush1.xpose.msra.mxu0 %v9918
  %9984 = vmatprep.subr.mxu0 0.0
  %9985 = vmatpush1.xpose.msra.mxu0 %v9920
  %9986 = vmatprep.subr.mxu0 0.0
  %9987 = vmatpush1.xpose.msra.mxu0 %v9922
  %9988 = vmatprep.subr.mxu0 0.0
  %9989 = vmatpush1.xpose.msra.mxu0 %v9924
  %9990 = vmatprep.subr.mxu0 0.0
  %9991 = vmatpush1.xpose.msra.mxu0 %v9926
  %9992 = vmatprep.subr.mxu0 0.0
  %9993 = vmatpush1.xpose.msra.mxu0 %v9928
  %9994 = vmatprep.subr.mxu0 0.0
  %9995 = vmatpush1.xpose.msra.mxu0 %v9930
  %9996 = vmatprep.subr.mxu0 0.0
  %9997 = vmatpush1.xpose.msra.mxu0 %v9932
  %9998 = vmatprep.subr.mxu0 0.0
  %9999 = vmatpush1.xpose.msra.mxu0 %v9934
  %10000 = vmatprep.subr.mxu0 0.0
  %10001 = vmatpush1.xpose.msra.mxu0 %v9936
  %10002 = vmatprep.subr.mxu0 0.0
  %10003 = vmatpush1.xpose.msra.mxu0 %v9938
  %10004 = vmatprep.subr.mxu0 0.0
  %10005 = vmatpush1.xpose.msra.mxu0 %v9940
  %10006 = vmatprep.subr.mxu0 0.0
  %10007 = vmatpush1.xpose.msra.mxu0 %v9942
  %10008 = vmatprep.subr.mxu0 0.0
  %10009 = vmatpush1.xpose.msra.mxu0 %v9944
  %10010 = vmatprep.subr.mxu0 0.0
  %10011 = vmatpush1.xpose.msra.mxu0 %v9946
  %10012 = vmatprep.subr.mxu0 0.0
  %10013 = vmatpush1.xpose.msra.mxu0 %v9948
  %10014 = vmatprep.subr.mxu0 0.0
  %10015 = vmatpush1.xpose.msra.mxu0 %v9950
  %10016 = vmatprep.subr.mxu0 0.0
  %10017 = vmatpush1.xpose.msra.mxu0 %v9952
  %10018 = vmatprep.subr.mxu0 0.0
  %10019 = vmatpush1.xpose.msra.mxu0 %v9954
  %10020 = vmatprep.subr.mxu0 0.0
  %10021 = vmatpush1.xpose.msra.mxu0 %v9956
  %10022 = vmatprep.subr.mxu0 0.0
  %10023 = vmatpush1.xpose.msra.mxu0 %v9958
  %10024 = vmatprep.subr.mxu0 0.0
  %10025 = vmatpush1.xpose.msra.mxu0 %v9960
  %10026 = vmatprep.subr.mxu0 0.0
  %10027 = vmatpush1.xpose.msra.mxu0 %v9962
  %10028 = vmatprep.subr.mxu0 0.0
  %10029 = vmatpush1.xpose.msra.mxu0 %v9964
  %10030 = vmatprep.subr.mxu0 0.0
  %10031 = vmatpush1.xpose.msra.mxu0 %v9966
  %10032 = vmatprep.subr.mxu0 0.0
  %10033 = vmatpush1.xpose.msra.mxu0 %v9968
  %10034 = vmatprep.subr.mxu0 0.0
  %10035 = vmatpush1.xpose.msra.mxu0 %v9970
  %10036 = vmatprep.mubr.f32.mxu0 0.0
  %10037 = vmatmul.mubr.f32.gmra.mrb[0].mxu0 %v9906
  %v10038 = vpop.f32.mrb[0].mxu0
  %v10039 = vadd.f32 0.0, %v10038
  %v10040 = vpop.f32.mrb[0].mxu0
  %v10041 = vadd.f32 0.0, %v10040
  %10042 = vdwg.mxu0
  %v10043 = vtanh.pop %v9229
  %v10044 = vtanh.pop %v9231
  %v10045 = vtanh.pop %v10039
  %v10046 = vtanh.pop %v10041
  %v10051 = vcombine.low %v10043, %v10044
  %v10052 = vcombine.low %v10045, %v10046
  %10055 = vst [vmem:[%s19] sm:$0x77] %v10051
  %10056 = vst [vmem:[%s19 + $0x8] sm:$0x77] %v10052
  // Predicated region
  $region78: #{dcgan_generator_forward.1} parent=0 // pred_check
    _
  $region79: #{dcgan_generator_forward.1} parent=0 // pred_check_branch
    %10058 = sbr.rel (0) target = $region81
  $region80: #{dcgan_generator_forward.1} parent=0 // pred_region
    _
  $region81: #{dcgan_generator_forward.1} parent=0 // pred_fallthru
    _
  // Predicated region
  $region82: #{dcgan_generator_forward.1} parent=0 // pred_check
    _
  $region83: #{dcgan_generator_forward.1} parent=0 // pred_check_branch
    %10060 = sbr.rel (0) target = $region85
  $region84: #{dcgan_generator_forward.1} parent=0 // pred_region
    _
  $region85: #{dcgan_generator_forward.1} parent=0 // pred_fallthru
    _

</llo_original>
